<compile_context>
chip_gen: v7x
topology: tpu7x:2x2x1
jax: 0.10.0
libtpu: 0.0.40
codegen_flags: <defaults>
</compile_context>

<pallas_src>
import functools
import math
import numpy as np
import jax
import jax.numpy as jnp
from jax.experimental import pallas as pl
from jax.experimental.pallas import tpu as pltpu

D_PE = 32    # GPO positional-encoding dim
D_HID = 32   # GPO GRU hidden dim

MASK_FILL = -10000.0     # matches the reference masked_fill value


def positional_encoding_1d(d_model, length):
    position = jnp.arange(length, dtype=jnp.float32)[:, None]
    div_term = jnp.exp(jnp.arange(0, d_model, 2, dtype=jnp.float32)
                       * -(math.log(10000.0) / d_model))
    pe = jnp.zeros((length, d_model), jnp.float32)
    pe = pe.at[:, 0::2].set(jnp.sin(position * div_term))
    pe = pe.at[:, 1::2].set(jnp.cos(position * div_term))
    return pe


# ----------------------------------------------------------------------------
# GPO attention weights (PE + lengths only): biGRU -> Linear -> masked softmax.
# Plain JAX (never touches the image features).
# ----------------------------------------------------------------------------
def _gpo_pool_weights(lengths_f, K, params):
    B = lengths_f.shape[0]
    pe = positional_encoding_1d(D_PE, K)                             # (K, P)

    def run_dir(wi, wh, bi, bh, reverse):
        H = wh.shape[-1]
        # Input-gate projections depend only on the PE: precompute all K steps once.
        gi = jnp.einsum('kp,gph->kgh', pe, wi) + bi[None, :, 0, :]   # (K, 3, H)
        # Fuse the 3 recurrent matmuls into a single (B,H) @ (H,3H).
        wh_cat = jnp.concatenate([wh[0], wh[1], wh[2]], axis=1)      # (H, 3H)
        bh_cat = jnp.concatenate([bh[0], bh[1], bh[2]], axis=1)      # (1, 3H)
        t_seq = jnp.arange(K, dtype=jnp.float32)
        if reverse:
            gi, t_seq = gi[::-1], t_seq[::-1]

        def step(h, inp):
            gi_t, t = inp                                            # (3, H), scalar
            gh = h @ wh_cat + bh_cat                                 # (B, 3H)
            gh_r, gh_z, gh_n = gh[:, :H], gh[:, H:2 * H], gh[:, 2 * H:]
            r = jax.nn.sigmoid(gi_t[0] + gh_r)
            z = jax.nn.sigmoid(gi_t[1] + gh_z)
            n = jnp.tanh(gi_t[2] + r * gh_n)
            h_new = (1.0 - z) * n + z * h
            # Packed-sequence semantics: freeze the state once t >= length.
            h = jnp.where(lengths_f > t, h_new, h)
            return h, h

        _, hs = jax.lax.scan(step, jnp.zeros((B, H), jnp.float32), (gi, t_seq))
        if reverse:
            hs = hs[::-1]
        return hs                                                    # (K, B, H)

    hf = run_dir(params['wfi'], params['wfh'], params['bfi'], params['bfh'], False)
    hb = run_dir(params['wbi'], params['wbh'], params['bbi'], params['bbh'], True)
    out_emb = 0.5 * (hf + hb)                                        # (K, B, H)
    scores = jnp.einsum('kbh,hx->bk', out_emb, params['wlin'])       # (B, K)
    mask = jnp.arange(K, dtype=jnp.float32)[None, :] < lengths_f     # (B, K) bool
    scores = jnp.where(mask, scores, MASK_FILL)
    w = jax.nn.softmax(scores / 0.1, axis=1)
    # Exact zeros at padded ranks so 0 * MASK_FILL stays 0 in the kernel.
    w = jnp.where(mask, w, 0.0)
    return w, mask.astype(jnp.float32)


# ----------------------------------------------------------------------------
# Pruned descending bitonic network.  `None` marks a wire that statically holds
# the global minimum (power-of-two padding), so its compare-exchanges fold away.
# ----------------------------------------------------------------------------
def _compare_exchange(a, b, max_first):
    if a is None and b is None:
        hi, lo = None, None
    elif a is None:
        hi, lo = b, None
    elif b is None:
        hi, lo = a, None
    else:
        hi, lo = jnp.maximum(a, b), jnp.minimum(a, b)
    return (hi, lo) if max_first else (lo, hi)


def _bitonic_descending(wires):
    n = len(wires)
    assert n & (n - 1) == 0, "wire count must be a power of two"
    wires = list(wires)
    k = 2
    while k <= n:
        j = k // 2
        while j >= 1:
            for i in range(n):
                l = i ^ j
                if l > i:
                    wires[i], wires[l] = _compare_exchange(
                        wires[i], wires[l], max_first=(i & k) == 0)
            j //= 2
        k *= 2
    return wires


# ----------------------------------------------------------------------------
# Pallas kernel: masked per-(b,d) descending sort + weighted pool + fused l2norm.
# ----------------------------------------------------------------------------
def _pool_l2norm_kernel(feat_ref, w_ref, mask_ref, out_ref, *, chunk):
    # feat_ref: (TB, K, D)  region features, natural (B, K, D) layout
    # w_ref:    (TB, K)     GPO pooling weights (exactly 0 at padded ranks)
    # mask_ref: (TB, K)     1.0 valid region / 0.0 padding
    # out_ref:  (TB, D)     pooled + l2-normalised features
    TB, K, D = feat_ref.shape
    w = w_ref[...]                                                   # (TB, K)
    mask3 = mask_ref[...][:, :, None] > 0.5                          # (TB, K, 1)

    n_pad = 1
    while n_pad < K:
        n_pad *= 2

    ssq = jnp.zeros((TB, 1), jnp.float32)
    for c in range(D // chunk):
        c0 = c * chunk
        # Masked chunk: padded regions take MASK_FILL so they sort behind real data.
        xm = jnp.where(mask3, feat_ref[:, :, c0:c0 + chunk], MASK_FILL)  # (TB,K,CH)
        wires = [xm[:, t, :] for t in range(K)] + [None] * (n_pad - K)
        wires = _bitonic_descending(wires)

        # Weighted, tree-reduced sum over the first K ranks.  Ranks beyond a row's
        # length hold MASK_FILL but their weight is exactly 0; statically-sentinel
        # (None) wires can only end up at ranks >= K so they never enter the sum.
        terms = []
        for r in range(K):
            assert wires[r] is not None
            terms.append(wires[r] * w[:, r:r + 1])
        while len(terms) > 1:
            nxt = [terms[i] + terms[i + 1] for i in range(0, len(terms) - 1, 2)]
            if len(terms) % 2:
                nxt.append(terms[-1])
            terms = nxt
        pooled = terms[0]                                            # (TB, CH)

        ssq = ssq + jnp.sum(pooled * pooled, axis=-1, keepdims=True)
        out_ref[:, c0:c0 + chunk] = pooled

    # Fused l2norm over the full embedding dim (keep the reference epsilon placement).
    norm = jnp.sqrt(ssq) + 1e-8
    out_ref[...] = out_ref[...] / norm


def _pick_batch_tile(B, K):
    # Multiple-of-8 batch tile; keep >= 2 grid steps when possible (v7x megacore) and
    # keep K * TB * 128-lane wires within the ~32-vreg sort budget.
    cap = max(8, min(32, (256 // max(K, 1)) // 8 * 8))
    tb = 8
    for cand in (32, 24, 16, 8):
        if cand <= cap and B % cand == 0 and B // cand >= 2:
            tb = cand
            break
    if B % tb != 0:
        tb = B
    return tb


def _pick_lane_chunk(D, K, TB, budget_bytes=128 * 1024):
    # Largest multiple-of-128 chunk dividing D with K*TB*CH*4B <= ~32 vregs.
    if D % 128 != 0:
        return D
    best = 128
    c = 128
    while c <= D:
        if D % c == 0 and K * TB * c * 4 <= budget_bytes:
            best = c
        c += 128
    return best


@jax.jit
def _forward(feats_bkd, lengths_f, params):
    B, K, D = feats_bkd.shape

    # Attention / pooling weights: PE + lengths only -> plain JAX.
    w, mask = _gpo_pool_weights(lengths_f, K, params)                # (B, K) each

    TB = _pick_batch_tile(B, K)
    CH = _pick_lane_chunk(D, K, TB)

    kernel = functools.partial(_pool_l2norm_kernel, chunk=CH)
    out = pl.pallas_call(
        kernel,
        out_shape=jax.ShapeDtypeStruct((B, D), jnp.float32),
        grid_spec=pltpu.PrefetchScalarGridSpec(
            num_scalar_prefetch=0,
            grid=(B // TB,),
            in_specs=[
                pl.BlockSpec((TB, K, D), lambda b: (b, 0, 0)),
                pl.BlockSpec((TB, K), lambda b: (b, 0)),
                pl.BlockSpec((TB, K), lambda b: (b, 0)),
            ],
            out_specs=pl.BlockSpec((TB, D), lambda b: (b, 0)),
        ),
        compiler_params=pltpu.CompilerParams(
            dimension_semantics=("parallel",),
            vmem_limit_bytes=32 * 1024 * 1024,
        ),
    )(feats_bkd, w, mask)
    return out


def encoder_image_aggr(images, image_lengths, params):
    B, Kmax, D = images.shape
    lengths_np = np.asarray(image_lengths)
    K = int(lengths_np.max())
    feats = jnp.asarray(images, jnp.float32)
    if K != Kmax:
        feats = feats[:, :K, :]
    lengths_f = jnp.asarray(lengths_np, jnp.float32).reshape(B, 1)
    return _forward(feats, lengths_f, params)


def init_params(key):
    """Deterministic GPO parameters (shapes from GPO(32, 32))."""
    k = 1.0 / math.sqrt(D_HID)
    shapes = {
        'wfi': (3, D_PE, D_HID), 'wfh': (3, D_HID, D_HID),
        'bfi': (3, 1, D_HID),    'bfh': (3, 1, D_HID),
        'wbi': (3, D_PE, D_HID), 'wbh': (3, D_HID, D_HID),
        'bbi': (3, 1, D_HID),    'bbh': (3, 1, D_HID),
        'wlin': (D_HID, 1),
    }
    names = list(shapes)
    keys = jax.random.split(key, len(names))
    return {n: jax.random.uniform(kk, shapes[n], jnp.float32, -k, k)
            for n, kk in zip(names, keys)}


def reference(images, image_lengths, params):
    """Pure-JAX reference with identical semantics (uses jnp.sort)."""
    B, _, D = images.shape
    lengths_np = np.asarray(image_lengths)
    K = int(lengths_np.max())
    feats = jnp.asarray(images[:, :K, :], jnp.float32)
    pe = positional_encoding_1d(D_PE, K)
    lengths_f = jnp.asarray(lengths_np, jnp.float32).reshape(B, 1)

    def run_dir(wi, wh, bi, bh, reverse):
        h = jnp.zeros((B, D_HID), jnp.float32)
        outs = [None] * K
        steps = range(K - 1, -1, -1) if reverse else range(K)
        for t in steps:
            x_t = pe[t][None, :]
            r = jax.nn.sigmoid(x_t @ wi[0] + bi[0] + h @ wh[0] + bh[0])
            z = jax.nn.sigmoid(x_t @ wi[1] + bi[1] + h @ wh[1] + bh[1])
            n = jnp.tanh(x_t @ wi[2] + bi[2] + r * (h @ wh[2] + bh[2]))
            h_new = (1.0 - z) * n + z * h
            h = jnp.where(lengths_f > t, h_new, h)
            outs[t] = h
        return jnp.stack(outs, axis=1)                               # (B, K, H)

    hf = run_dir(params['wfi'], params['wfh'], params['bfi'], params['bfh'], False)
    hb = run_dir(params['wbi'], params['wbh'], params['bbi'], params['bbh'], True)
    out_emb = 0.5 * (hf + hb)
    scores = jnp.einsum('bkh,ho->bk', out_emb, params['wlin'])
    mask = jnp.arange(K)[None, :] < lengths_f                        # (B, K)
    scores = jnp.where(mask, scores, -10000.0)
    w = jax.nn.softmax(scores / 0.1, axis=1)
    xm = jnp.where(mask[:, :, None], feats, -10000.0)
    xs = -jnp.sort(-xm, axis=1)                                      # descending
    xs = jnp.where(mask[:, :, None], xs, 0.0)
    pooled = jnp.sum(xs * w[:, :, None], axis=1)
    norm = jnp.sqrt(jnp.sum(pooled ** 2, -1, keepdims=True)) + 1e-8
    return pooled / norm


if __name__ == "__main__":
    key = jax.random.PRNGKey(0)
    kp, kx = jax.random.split(key)
    params = init_params(kp)

    # Small but tiling-exercising shapes: B=16 -> 2 'parallel' grid steps (TB=8),
    # D=1024 -> 4 in-kernel lane chunks of 256, K=10 regions (6 folded pad wires).
    B, K, D = 16, 10, 1024
    images = jax.random.normal(kx, (B, K, D), jnp.float32)
    image_lengths = np.array([10, 7, 5, 10, 3, 8, 9, 6,
                              10, 4, 2, 7, 10, 9, 1, 5], dtype=np.int32)

    out = jax.block_until_ready(encoder_image_aggr(images, image_lengths, params))
    ref = jax.block_until_ready(reference(images, image_lengths, params))
    if not np.allclose(np.asarray(out), np.asarray(ref), atol=1e-4, rtol=1e-4):
        raise AssertionError("Pallas kernel does not match JAX reference")
    print("KERNEL_OK")
</pallas_src>

<mosaic_0001>
module attributes {stable_mosaic.version = 11 : i64} {
  func.func @_pool_l2norm_kernel(%arg0: i32, %arg1: memref<8x10x1024xf32, #tpu.memory_space<vmem>>, %arg2: memref<8x10xf32, #tpu.memory_space<vmem>>, %arg3: memref<8x10xf32, #tpu.memory_space<vmem>>, %arg4: memref<8x1024xf32, #tpu.memory_space<vmem>>) attributes {dimension_semantics = [#tpu.dimension_semantics<parallel>], iteration_bounds = array<i64: 2>, scalar_prefetch = 0 : i64, scratch_operands = 0 : i64, tpu.core_type = #tpu.core_type<tc>, window_params = [{transform_indices = @transform_0, window_bounds = array<i64: 8, 10, 1024>}, {transform_indices = @transform_1, window_bounds = array<i64: 8, 10>}, {transform_indices = @transform_2, window_bounds = array<i64: 8, 10>}, {transform_indices = @transform_3, window_bounds = array<i64: 8, 1024>}]} {
    %c0 = arith.constant 0 : index
    %c0_0 = arith.constant 0 : index
    %0 = vector.load %arg2[%c0, %c0_0] : memref<8x10xf32, #tpu.memory_space<vmem>>, vector<8x10xf32>
    %c0_1 = arith.constant 0 : index
    %c0_2 = arith.constant 0 : index
    %1 = vector.load %arg3[%c0_1, %c0_2] : memref<8x10xf32, #tpu.memory_space<vmem>>, vector<8x10xf32>
    %2 = vector.shape_cast %1 : vector<8x10xf32> to vector<8x10x1xf32>
    %cst = arith.constant 5.000000e-01 : f32
    %3 = vector.broadcast %cst : f32 to vector<8x10x1xf32>
    %4 = arith.cmpf ogt, %2, %3 : vector<8x10x1xf32>
    %cst_3 = arith.constant 0.000000e+00 : f32
    %5 = vector.broadcast %cst_3 : f32 to vector<8x1xf32>
    %c0_4 = arith.constant 0 : index
    %c0_5 = arith.constant 0 : index
    %c0_6 = arith.constant 0 : index
    %6 = vector.load %arg1[%c0_4, %c0_5, %c0_6] : memref<8x10x1024xf32, #tpu.memory_space<vmem>>, vector<8x10x256xf32>
    %cst_7 = arith.constant -1.000000e+04 : f32
    %7 = vector.shape_cast %4 : vector<8x10x1xi1> to vector<8x10x1xi1>
    %8 = vector.broadcast %7 : vector<8x10x1xi1> to vector<8x10x256xi1>
    %9 = vector.broadcast %cst_7 : f32 to vector<8x10x256xf32>
    %10 = arith.select %8, %6, %9 : vector<8x10x256xi1>, vector<8x10x256xf32>
    %11 = vector.extract_strided_slice %10 {offsets = [0, 0, 0], sizes = [8, 1, 256], strides = [1, 1, 1]} : vector<8x10x256xf32> to vector<8x1x256xf32>
    %12 = vector.shape_cast %11 : vector<8x1x256xf32> to vector<8x256xf32>
    %13 = vector.extract_strided_slice %10 {offsets = [0, 1, 0], sizes = [8, 1, 256], strides = [1, 1, 1]} : vector<8x10x256xf32> to vector<8x1x256xf32>
    %14 = vector.shape_cast %13 : vector<8x1x256xf32> to vector<8x256xf32>
    %15 = vector.extract_strided_slice %10 {offsets = [0, 2, 0], sizes = [8, 1, 256], strides = [1, 1, 1]} : vector<8x10x256xf32> to vector<8x1x256xf32>
    %16 = vector.shape_cast %15 : vector<8x1x256xf32> to vector<8x256xf32>
    %17 = vector.extract_strided_slice %10 {offsets = [0, 3, 0], sizes = [8, 1, 256], strides = [1, 1, 1]} : vector<8x10x256xf32> to vector<8x1x256xf32>
    %18 = vector.shape_cast %17 : vector<8x1x256xf32> to vector<8x256xf32>
    %19 = vector.extract_strided_slice %10 {offsets = [0, 4, 0], sizes = [8, 1, 256], strides = [1, 1, 1]} : vector<8x10x256xf32> to vector<8x1x256xf32>
    %20 = vector.shape_cast %19 : vector<8x1x256xf32> to vector<8x256xf32>
    %21 = vector.extract_strided_slice %10 {offsets = [0, 5, 0], sizes = [8, 1, 256], strides = [1, 1, 1]} : vector<8x10x256xf32> to vector<8x1x256xf32>
    %22 = vector.shape_cast %21 : vector<8x1x256xf32> to vector<8x256xf32>
    %23 = vector.extract_strided_slice %10 {offsets = [0, 6, 0], sizes = [8, 1, 256], strides = [1, 1, 1]} : vector<8x10x256xf32> to vector<8x1x256xf32>
    %24 = vector.shape_cast %23 : vector<8x1x256xf32> to vector<8x256xf32>
    %25 = vector.extract_strided_slice %10 {offsets = [0, 7, 0], sizes = [8, 1, 256], strides = [1, 1, 1]} : vector<8x10x256xf32> to vector<8x1x256xf32>
    %26 = vector.shape_cast %25 : vector<8x1x256xf32> to vector<8x256xf32>
    %27 = vector.extract_strided_slice %10 {offsets = [0, 8, 0], sizes = [8, 1, 256], strides = [1, 1, 1]} : vector<8x10x256xf32> to vector<8x1x256xf32>
    %28 = vector.shape_cast %27 : vector<8x1x256xf32> to vector<8x256xf32>
    %29 = vector.extract_strided_slice %10 {offsets = [0, 9, 0], sizes = [8, 1, 256], strides = [1, 1, 1]} : vector<8x10x256xf32> to vector<8x1x256xf32>
    %30 = vector.shape_cast %29 : vector<8x1x256xf32> to vector<8x256xf32>
    %31 = arith.maximumf %12, %14 : vector<8x256xf32>
    %32 = arith.minimumf %12, %14 : vector<8x256xf32>
    %33 = arith.maximumf %16, %18 : vector<8x256xf32>
    %34 = arith.minimumf %16, %18 : vector<8x256xf32>
    %35 = arith.maximumf %20, %22 : vector<8x256xf32>
    %36 = arith.minimumf %20, %22 : vector<8x256xf32>
    %37 = arith.maximumf %24, %26 : vector<8x256xf32>
    %38 = arith.minimumf %24, %26 : vector<8x256xf32>
    %39 = arith.maximumf %28, %30 : vector<8x256xf32>
    %40 = arith.minimumf %28, %30 : vector<8x256xf32>
    %41 = arith.maximumf %31, %34 : vector<8x256xf32>
    %42 = arith.minimumf %31, %34 : vector<8x256xf32>
    %43 = arith.maximumf %32, %33 : vector<8x256xf32>
    %44 = arith.minimumf %32, %33 : vector<8x256xf32>
    %45 = arith.maximumf %35, %38 : vector<8x256xf32>
    %46 = arith.minimumf %35, %38 : vector<8x256xf32>
    %47 = arith.maximumf %36, %37 : vector<8x256xf32>
    %48 = arith.minimumf %36, %37 : vector<8x256xf32>
    %49 = arith.maximumf %41, %43 : vector<8x256xf32>
    %50 = arith.minimumf %41, %43 : vector<8x256xf32>
    %51 = arith.maximumf %42, %44 : vector<8x256xf32>
    %52 = arith.minimumf %42, %44 : vector<8x256xf32>
    %53 = arith.maximumf %46, %48 : vector<8x256xf32>
    %54 = arith.minimumf %46, %48 : vector<8x256xf32>
    %55 = arith.maximumf %45, %47 : vector<8x256xf32>
    %56 = arith.minimumf %45, %47 : vector<8x256xf32>
    %57 = arith.maximumf %39, %40 : vector<8x256xf32>
    %58 = arith.minimumf %39, %40 : vector<8x256xf32>
    %59 = arith.maximumf %49, %54 : vector<8x256xf32>
    %60 = arith.minimumf %49, %54 : vector<8x256xf32>
    %61 = arith.maximumf %50, %53 : vector<8x256xf32>
    %62 = arith.minimumf %50, %53 : vector<8x256xf32>
    %63 = arith.maximumf %51, %56 : vector<8x256xf32>
    %64 = arith.minimumf %51, %56 : vector<8x256xf32>
    %65 = arith.maximumf %52, %55 : vector<8x256xf32>
    %66 = arith.minimumf %52, %55 : vector<8x256xf32>
    %67 = arith.maximumf %59, %63 : vector<8x256xf32>
    %68 = arith.minimumf %59, %63 : vector<8x256xf32>
    %69 = arith.maximumf %61, %65 : vector<8x256xf32>
    %70 = arith.minimumf %61, %65 : vector<8x256xf32>
    %71 = arith.maximumf %60, %64 : vector<8x256xf32>
    %72 = arith.minimumf %60, %64 : vector<8x256xf32>
    %73 = arith.maximumf %62, %66 : vector<8x256xf32>
    %74 = arith.minimumf %62, %66 : vector<8x256xf32>
    %75 = arith.maximumf %67, %69 : vector<8x256xf32>
    %76 = arith.minimumf %67, %69 : vector<8x256xf32>
    %77 = arith.maximumf %68, %70 : vector<8x256xf32>
    %78 = arith.minimumf %68, %70 : vector<8x256xf32>
    %79 = arith.maximumf %71, %73 : vector<8x256xf32>
    %80 = arith.minimumf %71, %73 : vector<8x256xf32>
    %81 = arith.maximumf %72, %74 : vector<8x256xf32>
    %82 = arith.minimumf %72, %74 : vector<8x256xf32>
    %83 = arith.maximumf %57, %58 : vector<8x256xf32>
    %84 = arith.minimumf %57, %58 : vector<8x256xf32>
    %85 = arith.maximumf %81, %84 : vector<8x256xf32>
    %86 = arith.minimumf %81, %84 : vector<8x256xf32>
    %87 = arith.maximumf %82, %83 : vector<8x256xf32>
    %88 = arith.minimumf %82, %83 : vector<8x256xf32>
    %89 = arith.maximumf %75, %79 : vector<8x256xf32>
    %90 = arith.minimumf %75, %79 : vector<8x256xf32>
    %91 = arith.maximumf %76, %80 : vector<8x256xf32>
    %92 = arith.minimumf %76, %80 : vector<8x256xf32>
    %93 = arith.maximumf %77, %85 : vector<8x256xf32>
    %94 = arith.minimumf %77, %85 : vector<8x256xf32>
    %95 = arith.maximumf %78, %87 : vector<8x256xf32>
    %96 = arith.minimumf %78, %87 : vector<8x256xf32>
    %97 = arith.maximumf %89, %93 : vector<8x256xf32>
    %98 = arith.minimumf %89, %93 : vector<8x256xf32>
    %99 = arith.maximumf %91, %95 : vector<8x256xf32>
    %100 = arith.minimumf %91, %95 : vector<8x256xf32>
    %101 = arith.maximumf %90, %94 : vector<8x256xf32>
    %102 = arith.minimumf %90, %94 : vector<8x256xf32>
    %103 = arith.maximumf %92, %96 : vector<8x256xf32>
    %104 = arith.minimumf %92, %96 : vector<8x256xf32>
    %105 = arith.maximumf %97, %99 : vector<8x256xf32>
    %106 = arith.minimumf %97, %99 : vector<8x256xf32>
    %107 = arith.maximumf %98, %100 : vector<8x256xf32>
    %108 = arith.minimumf %98, %100 : vector<8x256xf32>
    %109 = arith.maximumf %101, %103 : vector<8x256xf32>
    %110 = arith.minimumf %101, %103 : vector<8x256xf32>
    %111 = arith.maximumf %102, %104 : vector<8x256xf32>
    %112 = arith.minimumf %102, %104 : vector<8x256xf32>
    %113 = arith.maximumf %86, %88 : vector<8x256xf32>
    %114 = arith.minimumf %86, %88 : vector<8x256xf32>
    %115 = vector.extract_strided_slice %0 {offsets = [0, 0], sizes = [8, 1], strides = [1, 1]} : vector<8x10xf32> to vector<8x1xf32>
    %116 = vector.broadcast %115 : vector<8x1xf32> to vector<8x256xf32>
    %117 = arith.mulf %105, %116 : vector<8x256xf32>
    %118 = vector.extract_strided_slice %0 {offsets = [0, 1], sizes = [8, 1], strides = [1, 1]} : vector<8x10xf32> to vector<8x1xf32>
    %119 = vector.broadcast %118 : vector<8x1xf32> to vector<8x256xf32>
    %120 = arith.mulf %106, %119 : vector<8x256xf32>
    %121 = vector.extract_strided_slice %0 {offsets = [0, 2], sizes = [8, 1], strides = [1, 1]} : vector<8x10xf32> to vector<8x1xf32>
    %122 = vector.broadcast %121 : vector<8x1xf32> to vector<8x256xf32>
    %123 = arith.mulf %107, %122 : vector<8x256xf32>
    %124 = vector.extract_strided_slice %0 {offsets = [0, 3], sizes = [8, 1], strides = [1, 1]} : vector<8x10xf32> to vector<8x1xf32>
    %125 = vector.broadcast %124 : vector<8x1xf32> to vector<8x256xf32>
    %126 = arith.mulf %108, %125 : vector<8x256xf32>
    %127 = vector.extract_strided_slice %0 {offsets = [0, 4], sizes = [8, 1], strides = [1, 1]} : vector<8x10xf32> to vector<8x1xf32>
    %128 = vector.broadcast %127 : vector<8x1xf32> to vector<8x256xf32>
    %129 = arith.mulf %109, %128 : vector<8x256xf32>
    %130 = vector.extract_strided_slice %0 {offsets = [0, 5], sizes = [8, 1], strides = [1, 1]} : vector<8x10xf32> to vector<8x1xf32>
    %131 = vector.broadcast %130 : vector<8x1xf32> to vector<8x256xf32>
    %132 = arith.mulf %110, %131 : vector<8x256xf32>
    %133 = vector.extract_strided_slice %0 {offsets = [0, 6], sizes = [8, 1], strides = [1, 1]} : vector<8x10xf32> to vector<8x1xf32>
    %134 = vector.broadcast %133 : vector<8x1xf32> to vector<8x256xf32>
    %135 = arith.mulf %111, %134 : vector<8x256xf32>
    %136 = vector.extract_strided_slice %0 {offsets = [0, 7], sizes = [8, 1], strides = [1, 1]} : vector<8x10xf32> to vector<8x1xf32>
    %137 = vector.broadcast %136 : vector<8x1xf32> to vector<8x256xf32>
    %138 = arith.mulf %112, %137 : vector<8x256xf32>
    %139 = vector.extract_strided_slice %0 {offsets = [0, 8], sizes = [8, 1], strides = [1, 1]} : vector<8x10xf32> to vector<8x1xf32>
    %140 = vector.broadcast %139 : vector<8x1xf32> to vector<8x256xf32>
    %141 = arith.mulf %113, %140 : vector<8x256xf32>
    %142 = vector.extract_strided_slice %0 {offsets = [0, 9], sizes = [8, 1], strides = [1, 1]} : vector<8x10xf32> to vector<8x1xf32>
    %143 = vector.broadcast %142 : vector<8x1xf32> to vector<8x256xf32>
    %144 = arith.mulf %114, %143 : vector<8x256xf32>
    %145 = arith.addf %117, %120 : vector<8x256xf32>
    %146 = arith.addf %123, %126 : vector<8x256xf32>
    %147 = arith.addf %129, %132 : vector<8x256xf32>
    %148 = arith.addf %135, %138 : vector<8x256xf32>
    %149 = arith.addf %141, %144 : vector<8x256xf32>
    %150 = arith.addf %145, %146 : vector<8x256xf32>
    %151 = arith.addf %147, %148 : vector<8x256xf32>
    %152 = arith.addf %150, %151 : vector<8x256xf32>
    %153 = arith.addf %152, %149 : vector<8x256xf32>
    %154 = arith.mulf %153, %153 : vector<8x256xf32>
    %cst_8 = arith.constant dense<0.000000e+00> : vector<8xf32>
    %155 = vector.multi_reduction <add>, %154, %cst_8 [1] : vector<8x256xf32> to vector<8xf32>
    %156 = vector.shape_cast %155 : vector<8xf32> to vector<8x1xf32>
    %157 = arith.addf %5, %156 : vector<8x1xf32>
    %c0_9 = arith.constant 0 : index
    %c0_10 = arith.constant 0 : index
    %158 = vector.load %arg4[%c0_9, %c0_10] : memref<8x1024xf32, #tpu.memory_space<vmem>>, vector<8x256xf32>
    tpu.vector_store %arg4[%c0_9, %c0_10], %153 {strides = array<i32>} : memref<8x1024xf32, #tpu.memory_space<vmem>>, vector<8x256xf32>,
    %c0_11 = arith.constant 0 : index
    %c0_12 = arith.constant 0 : index
    %c256 = arith.constant 256 : index
    %159 = vector.load %arg1[%c0_11, %c0_12, %c256] : memref<8x10x1024xf32, #tpu.memory_space<vmem>>, vector<8x10x256xf32>
    %cst_13 = arith.constant -1.000000e+04 : f32
    %160 = vector.shape_cast %4 : vector<8x10x1xi1> to vector<8x10x1xi1>
    %161 = vector.broadcast %160 : vector<8x10x1xi1> to vector<8x10x256xi1>
    %162 = vector.broadcast %cst_13 : f32 to vector<8x10x256xf32>
    %163 = arith.select %161, %159, %162 : vector<8x10x256xi1>, vector<8x10x256xf32>
    %164 = vector.extract_strided_slice %163 {offsets = [0, 0, 0], sizes = [8, 1, 256], strides = [1, 1, 1]} : vector<8x10x256xf32> to vector<8x1x256xf32>
    %165 = vector.shape_cast %164 : vector<8x1x256xf32> to vector<8x256xf32>
    %166 = vector.extract_strided_slice %163 {offsets = [0, 1, 0], sizes = [8, 1, 256], strides = [1, 1, 1]} : vector<8x10x256xf32> to vector<8x1x256xf32>
    %167 = vector.shape_cast %166 : vector<8x1x256xf32> to vector<8x256xf32>
    %168 = vector.extract_strided_slice %163 {offsets = [0, 2, 0], sizes = [8, 1, 256], strides = [1, 1, 1]} : vector<8x10x256xf32> to vector<8x1x256xf32>
    %169 = vector.shape_cast %168 : vector<8x1x256xf32> to vector<8x256xf32>
    %170 = vector.extract_strided_slice %163 {offsets = [0, 3, 0], sizes = [8, 1, 256], strides = [1, 1, 1]} : vector<8x10x256xf32> to vector<8x1x256xf32>
    %171 = vector.shape_cast %170 : vector<8x1x256xf32> to vector<8x256xf32>
    %172 = vector.extract_strided_slice %163 {offsets = [0, 4, 0], sizes = [8, 1, 256], strides = [1, 1, 1]} : vector<8x10x256xf32> to vector<8x1x256xf32>
    %173 = vector.shape_cast %172 : vector<8x1x256xf32> to vector<8x256xf32>
    %174 = vector.extract_strided_slice %163 {offsets = [0, 5, 0], sizes = [8, 1, 256], strides = [1, 1, 1]} : vector<8x10x256xf32> to vector<8x1x256xf32>
    %175 = vector.shape_cast %174 : vector<8x1x256xf32> to vector<8x256xf32>
    %176 = vector.extract_strided_slice %163 {offsets = [0, 6, 0], sizes = [8, 1, 256], strides = [1, 1, 1]} : vector<8x10x256xf32> to vector<8x1x256xf32>
    %177 = vector.shape_cast %176 : vector<8x1x256xf32> to vector<8x256xf32>
    %178 = vector.extract_strided_slice %163 {offsets = [0, 7, 0], sizes = [8, 1, 256], strides = [1, 1, 1]} : vector<8x10x256xf32> to vector<8x1x256xf32>
    %179 = vector.shape_cast %178 : vector<8x1x256xf32> to vector<8x256xf32>
    %180 = vector.extract_strided_slice %163 {offsets = [0, 8, 0], sizes = [8, 1, 256], strides = [1, 1, 1]} : vector<8x10x256xf32> to vector<8x1x256xf32>
    %181 = vector.shape_cast %180 : vector<8x1x256xf32> to vector<8x256xf32>
    %182 = vector.extract_strided_slice %163 {offsets = [0, 9, 0], sizes = [8, 1, 256], strides = [1, 1, 1]} : vector<8x10x256xf32> to vector<8x1x256xf32>
    %183 = vector.shape_cast %182 : vector<8x1x256xf32> to vector<8x256xf32>
    %184 = arith.maximumf %165, %167 : vector<8x256xf32>
    %185 = arith.minimumf %165, %167 : vector<8x256xf32>
    %186 = arith.maximumf %169, %171 : vector<8x256xf32>
    %187 = arith.minimumf %169, %171 : vector<8x256xf32>
    %188 = arith.maximumf %173, %175 : vector<8x256xf32>
    %189 = arith.minimumf %173, %175 : vector<8x256xf32>
    %190 = arith.maximumf %177, %179 : vector<8x256xf32>
    %191 = arith.minimumf %177, %179 : vector<8x256xf32>
    %192 = arith.maximumf %181, %183 : vector<8x256xf32>
    %193 = arith.minimumf %181, %183 : vector<8x256xf32>
    %194 = arith.maximumf %184, %187 : vector<8x256xf32>
    %195 = arith.minimumf %184, %187 : vector<8x256xf32>
    %196 = arith.maximumf %185, %186 : vector<8x256xf32>
    %197 = arith.minimumf %185, %186 : vector<8x256xf32>
    %198 = arith.maximumf %188, %191 : vector<8x256xf32>
    %199 = arith.minimumf %188, %191 : vector<8x256xf32>
    %200 = arith.maximumf %189, %190 : vector<8x256xf32>
    %201 = arith.minimumf %189, %190 : vector<8x256xf32>
    %202 = arith.maximumf %194, %196 : vector<8x256xf32>
    %203 = arith.minimumf %194, %196 : vector<8x256xf32>
    %204 = arith.maximumf %195, %197 : vector<8x256xf32>
    %205 = arith.minimumf %195, %197 : vector<8x256xf32>
    %206 = arith.maximumf %199, %201 : vector<8x256xf32>
    %207 = arith.minimumf %199, %201 : vector<8x256xf32>
    %208 = arith.maximumf %198, %200 : vector<8x256xf32>
    %209 = arith.minimumf %198, %200 : vector<8x256xf32>
    %210 = arith.maximumf %192, %193 : vector<8x256xf32>
    %211 = arith.minimumf %192, %193 : vector<8x256xf32>
    %212 = arith.maximumf %202, %207 : vector<8x256xf32>
    %213 = arith.minimumf %202, %207 : vector<8x256xf32>
    %214 = arith.maximumf %203, %206 : vector<8x256xf32>
    %215 = arith.minimumf %203, %206 : vector<8x256xf32>
    %216 = arith.maximumf %204, %209 : vector<8x256xf32>
    %217 = arith.minimumf %204, %209 : vector<8x256xf32>
    %218 = arith.maximumf %205, %208 : vector<8x256xf32>
    %219 = arith.minimumf %205, %208 : vector<8x256xf32>
    %220 = arith.maximumf %212, %216 : vector<8x256xf32>
    %221 = arith.minimumf %212, %216 : vector<8x256xf32>
    %222 = arith.maximumf %214, %218 : vector<8x256xf32>
    %223 = arith.minimumf %214, %218 : vector<8x256xf32>
    %224 = arith.maximumf %213, %217 : vector<8x256xf32>
    %225 = arith.minimumf %213, %217 : vector<8x256xf32>
    %226 = arith.maximumf %215, %219 : vector<8x256xf32>
    %227 = arith.minimumf %215, %219 : vector<8x256xf32>
    %228 = arith.maximumf %220, %222 : vector<8x256xf32>
    %229 = arith.minimumf %220, %222 : vector<8x256xf32>
    %230 = arith.maximumf %221, %223 : vector<8x256xf32>
    %231 = arith.minimumf %221, %223 : vector<8x256xf32>
    %232 = arith.maximumf %224, %226 : vector<8x256xf32>
    %233 = arith.minimumf %224, %226 : vector<8x256xf32>
    %234 = arith.maximumf %225, %227 : vector<8x256xf32>
    %235 = arith.minimumf %225, %227 : vector<8x256xf32>
    %236 = arith.maximumf %210, %211 : vector<8x256xf32>
    %237 = arith.minimumf %210, %211 : vector<8x256xf32>
    %238 = arith.maximumf %234, %237 : vector<8x256xf32>
    %239 = arith.minimumf %234, %237 : vector<8x256xf32>
    %240 = arith.maximumf %235, %236 : vector<8x256xf32>
    %241 = arith.minimumf %235, %236 : vector<8x256xf32>
    %242 = arith.maximumf %228, %232 : vector<8x256xf32>
    %243 = arith.minimumf %228, %232 : vector<8x256xf32>
    %244 = arith.maximumf %229, %233 : vector<8x256xf32>
    %245 = arith.minimumf %229, %233 : vector<8x256xf32>
    %246 = arith.maximumf %230, %238 : vector<8x256xf32>
    %247 = arith.minimumf %230, %238 : vector<8x256xf32>
    %248 = arith.maximumf %231, %240 : vector<8x256xf32>
    %249 = arith.minimumf %231, %240 : vector<8x256xf32>
    %250 = arith.maximumf %242, %246 : vector<8x256xf32>
    %251 = arith.minimumf %242, %246 : vector<8x256xf32>
    %252 = arith.maximumf %244, %248 : vector<8x256xf32>
    %253 = arith.minimumf %244, %248 : vector<8x256xf32>
    %254 = arith.maximumf %243, %247 : vector<8x256xf32>
    %255 = arith.minimumf %243, %247 : vector<8x256xf32>
    %256 = arith.maximumf %245, %249 : vector<8x256xf32>
    %257 = arith.minimumf %245, %249 : vector<8x256xf32>
    %258 = arith.maximumf %250, %252 : vector<8x256xf32>
    %259 = arith.minimumf %250, %252 : vector<8x256xf32>
    %260 = arith.maximumf %251, %253 : vector<8x256xf32>
    %261 = arith.minimumf %251, %253 : vector<8x256xf32>
    %262 = arith.maximumf %254, %256 : vector<8x256xf32>
    %263 = arith.minimumf %254, %256 : vector<8x256xf32>
    %264 = arith.maximumf %255, %257 : vector<8x256xf32>
    %265 = arith.minimumf %255, %257 : vector<8x256xf32>
    %266 = arith.maximumf %239, %241 : vector<8x256xf32>
    %267 = arith.minimumf %239, %241 : vector<8x256xf32>
    %268 = vector.extract_strided_slice %0 {offsets = [0, 0], sizes = [8, 1], strides = [1, 1]} : vector<8x10xf32> to vector<8x1xf32>
    %269 = vector.broadcast %268 : vector<8x1xf32> to vector<8x256xf32>
    %270 = arith.mulf %258, %269 : vector<8x256xf32>
    %271 = vector.extract_strided_slice %0 {offsets = [0, 1], sizes = [8, 1], strides = [1, 1]} : vector<8x10xf32> to vector<8x1xf32>
    %272 = vector.broadcast %271 : vector<8x1xf32> to vector<8x256xf32>
    %273 = arith.mulf %259, %272 : vector<8x256xf32>
    %274 = vector.extract_strided_slice %0 {offsets = [0, 2], sizes = [8, 1], strides = [1, 1]} : vector<8x10xf32> to vector<8x1xf32>
    %275 = vector.broadcast %274 : vector<8x1xf32> to vector<8x256xf32>
    %276 = arith.mulf %260, %275 : vector<8x256xf32>
    %277 = vector.extract_strided_slice %0 {offsets = [0, 3], sizes = [8, 1], strides = [1, 1]} : vector<8x10xf32> to vector<8x1xf32>
    %278 = vector.broadcast %277 : vector<8x1xf32> to vector<8x256xf32>
    %279 = arith.mulf %261, %278 : vector<8x256xf32>
    %280 = vector.extract_strided_slice %0 {offsets = [0, 4], sizes = [8, 1], strides = [1, 1]} : vector<8x10xf32> to vector<8x1xf32>
    %281 = vector.broadcast %280 : vector<8x1xf32> to vector<8x256xf32>
    %282 = arith.mulf %262, %281 : vector<8x256xf32>
    %283 = vector.extract_strided_slice %0 {offsets = [0, 5], sizes = [8, 1], strides = [1, 1]} : vector<8x10xf32> to vector<8x1xf32>
    %284 = vector.broadcast %283 : vector<8x1xf32> to vector<8x256xf32>
    %285 = arith.mulf %263, %284 : vector<8x256xf32>
    %286 = vector.extract_strided_slice %0 {offsets = [0, 6], sizes = [8, 1], strides = [1, 1]} : vector<8x10xf32> to vector<8x1xf32>
    %287 = vector.broadcast %286 : vector<8x1xf32> to vector<8x256xf32>
    %288 = arith.mulf %264, %287 : vector<8x256xf32>
    %289 = vector.extract_strided_slice %0 {offsets = [0, 7], sizes = [8, 1], strides = [1, 1]} : vector<8x10xf32> to vector<8x1xf32>
    %290 = vector.broadcast %289 : vector<8x1xf32> to vector<8x256xf32>
    %291 = arith.mulf %265, %290 : vector<8x256xf32>
    %292 = vector.extract_strided_slice %0 {offsets = [0, 8], sizes = [8, 1], strides = [1, 1]} : vector<8x10xf32> to vector<8x1xf32>
    %293 = vector.broadcast %292 : vector<8x1xf32> to vector<8x256xf32>
    %294 = arith.mulf %266, %293 : vector<8x256xf32>
    %295 = vector.extract_strided_slice %0 {offsets = [0, 9], sizes = [8, 1], strides = [1, 1]} : vector<8x10xf32> to vector<8x1xf32>
    %296 = vector.broadcast %295 : vector<8x1xf32> to vector<8x256xf32>
    %297 = arith.mulf %267, %296 : vector<8x256xf32>
    %298 = arith.addf %270, %273 : vector<8x256xf32>
    %299 = arith.addf %276, %279 : vector<8x256xf32>
    %300 = arith.addf %282, %285 : vector<8x256xf32>
    %301 = arith.addf %288, %291 : vector<8x256xf32>
    %302 = arith.addf %294, %297 : vector<8x256xf32>
    %303 = arith.addf %298, %299 : vector<8x256xf32>
    %304 = arith.addf %300, %301 : vector<8x256xf32>
    %305 = arith.addf %303, %304 : vector<8x256xf32>
    %306 = arith.addf %305, %302 : vector<8x256xf32>
    %307 = arith.mulf %306, %306 : vector<8x256xf32>
    %cst_14 = arith.constant dense<0.000000e+00> : vector<8xf32>
    %308 = vector.multi_reduction <add>, %307, %cst_14 [1] : vector<8x256xf32> to vector<8xf32>
    %309 = vector.shape_cast %308 : vector<8xf32> to vector<8x1xf32>
    %310 = arith.addf %157, %309 : vector<8x1xf32>
    %c0_15 = arith.constant 0 : index
    %c256_16 = arith.constant 256 : index
    %311 = vector.load %arg4[%c0_15, %c256_16] : memref<8x1024xf32, #tpu.memory_space<vmem>>, vector<8x256xf32>
    tpu.vector_store %arg4[%c0_15, %c256_16], %306 {strides = array<i32>} : memref<8x1024xf32, #tpu.memory_space<vmem>>, vector<8x256xf32>,
    %c0_17 = arith.constant 0 : index
    %c0_18 = arith.constant 0 : index
    %c512 = arith.constant 512 : index
    %312 = vector.load %arg1[%c0_17, %c0_18, %c512] : memref<8x10x1024xf32, #tpu.memory_space<vmem>>, vector<8x10x256xf32>
    %cst_19 = arith.constant -1.000000e+04 : f32
    %313 = vector.shape_cast %4 : vector<8x10x1xi1> to vector<8x10x1xi1>
    %314 = vector.broadcast %313 : vector<8x10x1xi1> to vector<8x10x256xi1>
    %315 = vector.broadcast %cst_19 : f32 to vector<8x10x256xf32>
    %316 = arith.select %314, %312, %315 : vector<8x10x256xi1>, vector<8x10x256xf32>
    %317 = vector.extract_strided_slice %316 {offsets = [0, 0, 0], sizes = [8, 1, 256], strides = [1, 1, 1]} : vector<8x10x256xf32> to vector<8x1x256xf32>
    %318 = vector.shape_cast %317 : vector<8x1x256xf32> to vector<8x256xf32>
    %319 = vector.extract_strided_slice %316 {offsets = [0, 1, 0], sizes = [8, 1, 256], strides = [1, 1, 1]} : vector<8x10x256xf32> to vector<8x1x256xf32>
    %320 = vector.shape_cast %319 : vector<8x1x256xf32> to vector<8x256xf32>
    %321 = vector.extract_strided_slice %316 {offsets = [0, 2, 0], sizes = [8, 1, 256], strides = [1, 1, 1]} : vector<8x10x256xf32> to vector<8x1x256xf32>
    %322 = vector.shape_cast %321 : vector<8x1x256xf32> to vector<8x256xf32>
    %323 = vector.extract_strided_slice %316 {offsets = [0, 3, 0], sizes = [8, 1, 256], strides = [1, 1, 1]} : vector<8x10x256xf32> to vector<8x1x256xf32>
    %324 = vector.shape_cast %323 : vector<8x1x256xf32> to vector<8x256xf32>
    %325 = vector.extract_strided_slice %316 {offsets = [0, 4, 0], sizes = [8, 1, 256], strides = [1, 1, 1]} : vector<8x10x256xf32> to vector<8x1x256xf32>
    %326 = vector.shape_cast %325 : vector<8x1x256xf32> to vector<8x256xf32>
    %327 = vector.extract_strided_slice %316 {offsets = [0, 5, 0], sizes = [8, 1, 256], strides = [1, 1, 1]} : vector<8x10x256xf32> to vector<8x1x256xf32>
    %328 = vector.shape_cast %327 : vector<8x1x256xf32> to vector<8x256xf32>
    %329 = vector.extract_strided_slice %316 {offsets = [0, 6, 0], sizes = [8, 1, 256], strides = [1, 1, 1]} : vector<8x10x256xf32> to vector<8x1x256xf32>
    %330 = vector.shape_cast %329 : vector<8x1x256xf32> to vector<8x256xf32>
    %331 = vector.extract_strided_slice %316 {offsets = [0, 7, 0], sizes = [8, 1, 256], strides = [1, 1, 1]} : vector<8x10x256xf32> to vector<8x1x256xf32>
    %332 = vector.shape_cast %331 : vector<8x1x256xf32> to vector<8x256xf32>
    %333 = vector.extract_strided_slice %316 {offsets = [0, 8, 0], sizes = [8, 1, 256], strides = [1, 1, 1]} : vector<8x10x256xf32> to vector<8x1x256xf32>
    %334 = vector.shape_cast %333 : vector<8x1x256xf32> to vector<8x256xf32>
    %335 = vector.extract_strided_slice %316 {offsets = [0, 9, 0], sizes = [8, 1, 256], strides = [1, 1, 1]} : vector<8x10x256xf32> to vector<8x1x256xf32>
    %336 = vector.shape_cast %335 : vector<8x1x256xf32> to vector<8x256xf32>
    %337 = arith.maximumf %318, %320 : vector<8x256xf32>
    %338 = arith.minimumf %318, %320 : vector<8x256xf32>
    %339 = arith.maximumf %322, %324 : vector<8x256xf32>
    %340 = arith.minimumf %322, %324 : vector<8x256xf32>
    %341 = arith.maximumf %326, %328 : vector<8x256xf32>
    %342 = arith.minimumf %326, %328 : vector<8x256xf32>
    %343 = arith.maximumf %330, %332 : vector<8x256xf32>
    %344 = arith.minimumf %330, %332 : vector<8x256xf32>
    %345 = arith.maximumf %334, %336 : vector<8x256xf32>
    %346 = arith.minimumf %334, %336 : vector<8x256xf32>
    %347 = arith.maximumf %337, %340 : vector<8x256xf32>
    %348 = arith.minimumf %337, %340 : vector<8x256xf32>
    %349 = arith.maximumf %338, %339 : vector<8x256xf32>
    %350 = arith.minimumf %338, %339 : vector<8x256xf32>
    %351 = arith.maximumf %341, %344 : vector<8x256xf32>
    %352 = arith.minimumf %341, %344 : vector<8x256xf32>
    %353 = arith.maximumf %342, %343 : vector<8x256xf32>
    %354 = arith.minimumf %342, %343 : vector<8x256xf32>
    %355 = arith.maximumf %347, %349 : vector<8x256xf32>
    %356 = arith.minimumf %347, %349 : vector<8x256xf32>
    %357 = arith.maximumf %348, %350 : vector<8x256xf32>
    %358 = arith.minimumf %348, %350 : vector<8x256xf32>
    %359 = arith.maximumf %352, %354 : vector<8x256xf32>
    %360 = arith.minimumf %352, %354 : vector<8x256xf32>
    %361 = arith.maximumf %351, %353 : vector<8x256xf32>
    %362 = arith.minimumf %351, %353 : vector<8x256xf32>
    %363 = arith.maximumf %345, %346 : vector<8x256xf32>
    %364 = arith.minimumf %345, %346 : vector<8x256xf32>
    %365 = arith.maximumf %355, %360 : vector<8x256xf32>
    %366 = arith.minimumf %355, %360 : vector<8x256xf32>
    %367 = arith.maximumf %356, %359 : vector<8x256xf32>
    %368 = arith.minimumf %356, %359 : vector<8x256xf32>
    %369 = arith.maximumf %357, %362 : vector<8x256xf32>
    %370 = arith.minimumf %357, %362 : vector<8x256xf32>
    %371 = arith.maximumf %358, %361 : vector<8x256xf32>
    %372 = arith.minimumf %358, %361 : vector<8x256xf32>
    %373 = arith.maximumf %365, %369 : vector<8x256xf32>
    %374 = arith.minimumf %365, %369 : vector<8x256xf32>
    %375 = arith.maximumf %367, %371 : vector<8x256xf32>
    %376 = arith.minimumf %367, %371 : vector<8x256xf32>
    %377 = arith.maximumf %366, %370 : vector<8x256xf32>
    %378 = arith.minimumf %366, %370 : vector<8x256xf32>
    %379 = arith.maximumf %368, %372 : vector<8x256xf32>
    %380 = arith.minimumf %368, %372 : vector<8x256xf32>
    %381 = arith.maximumf %373, %375 : vector<8x256xf32>
    %382 = arith.minimumf %373, %375 : vector<8x256xf32>
    %383 = arith.maximumf %374, %376 : vector<8x256xf32>
    %384 = arith.minimumf %374, %376 : vector<8x256xf32>
    %385 = arith.maximumf %377, %379 : vector<8x256xf32>
    %386 = arith.minimumf %377, %379 : vector<8x256xf32>
    %387 = arith.maximumf %378, %380 : vector<8x256xf32>
    %388 = arith.minimumf %378, %380 : vector<8x256xf32>
    %389 = arith.maximumf %363, %364 : vector<8x256xf32>
    %390 = arith.minimumf %363, %364 : vector<8x256xf32>
    %391 = arith.maximumf %387, %390 : vector<8x256xf32>
    %392 = arith.minimumf %387, %390 : vector<8x256xf32>
    %393 = arith.maximumf %388, %389 : vector<8x256xf32>
    %394 = arith.minimumf %388, %389 : vector<8x256xf32>
    %395 = arith.maximumf %381, %385 : vector<8x256xf32>
    %396 = arith.minimumf %381, %385 : vector<8x256xf32>
    %397 = arith.maximumf %382, %386 : vector<8x256xf32>
    %398 = arith.minimumf %382, %386 : vector<8x256xf32>
    %399 = arith.maximumf %383, %391 : vector<8x256xf32>
    %400 = arith.minimumf %383, %391 : vector<8x256xf32>
    %401 = arith.maximumf %384, %393 : vector<8x256xf32>
    %402 = arith.minimumf %384, %393 : vector<8x256xf32>
    %403 = arith.maximumf %395, %399 : vector<8x256xf32>
    %404 = arith.minimumf %395, %399 : vector<8x256xf32>
    %405 = arith.maximumf %397, %401 : vector<8x256xf32>
    %406 = arith.minimumf %397, %401 : vector<8x256xf32>
    %407 = arith.maximumf %396, %400 : vector<8x256xf32>
    %408 = arith.minimumf %396, %400 : vector<8x256xf32>
    %409 = arith.maximumf %398, %402 : vector<8x256xf32>
    %410 = arith.minimumf %398, %402 : vector<8x256xf32>
    %411 = arith.maximumf %403, %405 : vector<8x256xf32>
    %412 = arith.minimumf %403, %405 : vector<8x256xf32>
    %413 = arith.maximumf %404, %406 : vector<8x256xf32>
    %414 = arith.minimumf %404, %406 : vector<8x256xf32>
    %415 = arith.maximumf %407, %409 : vector<8x256xf32>
    %416 = arith.minimumf %407, %409 : vector<8x256xf32>
    %417 = arith.maximumf %408, %410 : vector<8x256xf32>
    %418 = arith.minimumf %408, %410 : vector<8x256xf32>
    %419 = arith.maximumf %392, %394 : vector<8x256xf32>
    %420 = arith.minimumf %392, %394 : vector<8x256xf32>
    %421 = vector.extract_strided_slice %0 {offsets = [0, 0], sizes = [8, 1], strides = [1, 1]} : vector<8x10xf32> to vector<8x1xf32>
    %422 = vector.broadcast %421 : vector<8x1xf32> to vector<8x256xf32>
    %423 = arith.mulf %411, %422 : vector<8x256xf32>
    %424 = vector.extract_strided_slice %0 {offsets = [0, 1], sizes = [8, 1], strides = [1, 1]} : vector<8x10xf32> to vector<8x1xf32>
    %425 = vector.broadcast %424 : vector<8x1xf32> to vector<8x256xf32>
    %426 = arith.mulf %412, %425 : vector<8x256xf32>
    %427 = vector.extract_strided_slice %0 {offsets = [0, 2], sizes = [8, 1], strides = [1, 1]} : vector<8x10xf32> to vector<8x1xf32>
    %428 = vector.broadcast %427 : vector<8x1xf32> to vector<8x256xf32>
    %429 = arith.mulf %413, %428 : vector<8x256xf32>
    %430 = vector.extract_strided_slice %0 {offsets = [0, 3], sizes = [8, 1], strides = [1, 1]} : vector<8x10xf32> to vector<8x1xf32>
    %431 = vector.broadcast %430 : vector<8x1xf32> to vector<8x256xf32>
    %432 = arith.mulf %414, %431 : vector<8x256xf32>
    %433 = vector.extract_strided_slice %0 {offsets = [0, 4], sizes = [8, 1], strides = [1, 1]} : vector<8x10xf32> to vector<8x1xf32>
    %434 = vector.broadcast %433 : vector<8x1xf32> to vector<8x256xf32>
    %435 = arith.mulf %415, %434 : vector<8x256xf32>
    %436 = vector.extract_strided_slice %0 {offsets = [0, 5], sizes = [8, 1], strides = [1, 1]} : vector<8x10xf32> to vector<8x1xf32>
    %437 = vector.broadcast %436 : vector<8x1xf32> to vector<8x256xf32>
    %438 = arith.mulf %416, %437 : vector<8x256xf32>
    %439 = vector.extract_strided_slice %0 {offsets = [0, 6], sizes = [8, 1], strides = [1, 1]} : vector<8x10xf32> to vector<8x1xf32>
    %440 = vector.broadcast %439 : vector<8x1xf32> to vector<8x256xf32>
    %441 = arith.mulf %417, %440 : vector<8x256xf32>
    %442 = vector.extract_strided_slice %0 {offsets = [0, 7], sizes = [8, 1], strides = [1, 1]} : vector<8x10xf32> to vector<8x1xf32>
    %443 = vector.broadcast %442 : vector<8x1xf32> to vector<8x256xf32>
    %444 = arith.mulf %418, %443 : vector<8x256xf32>
    %445 = vector.extract_strided_slice %0 {offsets = [0, 8], sizes = [8, 1], strides = [1, 1]} : vector<8x10xf32> to vector<8x1xf32>
    %446 = vector.broadcast %445 : vector<8x1xf32> to vector<8x256xf32>
    %447 = arith.mulf %419, %446 : vector<8x256xf32>
    %448 = vector.extract_strided_slice %0 {offsets = [0, 9], sizes = [8, 1], strides = [1, 1]} : vector<8x10xf32> to vector<8x1xf32>
    %449 = vector.broadcast %448 : vector<8x1xf32> to vector<8x256xf32>
    %450 = arith.mulf %420, %449 : vector<8x256xf32>
    %451 = arith.addf %423, %426 : vector<8x256xf32>
    %452 = arith.addf %429, %432 : vector<8x256xf32>
    %453 = arith.addf %435, %438 : vector<8x256xf32>
    %454 = arith.addf %441, %444 : vector<8x256xf32>
    %455 = arith.addf %447, %450 : vector<8x256xf32>
    %456 = arith.addf %451, %452 : vector<8x256xf32>
    %457 = arith.addf %453, %454 : vector<8x256xf32>
    %458 = arith.addf %456, %457 : vector<8x256xf32>
    %459 = arith.addf %458, %455 : vector<8x256xf32>
    %460 = arith.mulf %459, %459 : vector<8x256xf32>
    %cst_20 = arith.constant dense<0.000000e+00> : vector<8xf32>
    %461 = vector.multi_reduction <add>, %460, %cst_20 [1] : vector<8x256xf32> to vector<8xf32>
    %462 = vector.shape_cast %461 : vector<8xf32> to vector<8x1xf32>
    %463 = arith.addf %310, %462 : vector<8x1xf32>
    %c0_21 = arith.constant 0 : index
    %c512_22 = arith.constant 512 : index
    %464 = vector.load %arg4[%c0_21, %c512_22] : memref<8x1024xf32, #tpu.memory_space<vmem>>, vector<8x256xf32>
    tpu.vector_store %arg4[%c0_21, %c512_22], %459 {strides = array<i32>} : memref<8x1024xf32, #tpu.memory_space<vmem>>, vector<8x256xf32>,
    %c0_23 = arith.constant 0 : index
    %c0_24 = arith.constant 0 : index
    %c768 = arith.constant 768 : index
    %465 = vector.load %arg1[%c0_23, %c0_24, %c768] : memref<8x10x1024xf32, #tpu.memory_space<vmem>>, vector<8x10x256xf32>
    %cst_25 = arith.constant -1.000000e+04 : f32
    %466 = vector.shape_cast %4 : vector<8x10x1xi1> to vector<8x10x1xi1>
    %467 = vector.broadcast %466 : vector<8x10x1xi1> to vector<8x10x256xi1>
    %468 = vector.broadcast %cst_25 : f32 to vector<8x10x256xf32>
    %469 = arith.select %467, %465, %468 : vector<8x10x256xi1>, vector<8x10x256xf32>
    %470 = vector.extract_strided_slice %469 {offsets = [0, 0, 0], sizes = [8, 1, 256], strides = [1, 1, 1]} : vector<8x10x256xf32> to vector<8x1x256xf32>
    %471 = vector.shape_cast %470 : vector<8x1x256xf32> to vector<8x256xf32>
    %472 = vector.extract_strided_slice %469 {offsets = [0, 1, 0], sizes = [8, 1, 256], strides = [1, 1, 1]} : vector<8x10x256xf32> to vector<8x1x256xf32>
    %473 = vector.shape_cast %472 : vector<8x1x256xf32> to vector<8x256xf32>
    %474 = vector.extract_strided_slice %469 {offsets = [0, 2, 0], sizes = [8, 1, 256], strides = [1, 1, 1]} : vector<8x10x256xf32> to vector<8x1x256xf32>
    %475 = vector.shape_cast %474 : vector<8x1x256xf32> to vector<8x256xf32>
    %476 = vector.extract_strided_slice %469 {offsets = [0, 3, 0], sizes = [8, 1, 256], strides = [1, 1, 1]} : vector<8x10x256xf32> to vector<8x1x256xf32>
    %477 = vector.shape_cast %476 : vector<8x1x256xf32> to vector<8x256xf32>
    %478 = vector.extract_strided_slice %469 {offsets = [0, 4, 0], sizes = [8, 1, 256], strides = [1, 1, 1]} : vector<8x10x256xf32> to vector<8x1x256xf32>
    %479 = vector.shape_cast %478 : vector<8x1x256xf32> to vector<8x256xf32>
    %480 = vector.extract_strided_slice %469 {offsets = [0, 5, 0], sizes = [8, 1, 256], strides = [1, 1, 1]} : vector<8x10x256xf32> to vector<8x1x256xf32>
    %481 = vector.shape_cast %480 : vector<8x1x256xf32> to vector<8x256xf32>
    %482 = vector.extract_strided_slice %469 {offsets = [0, 6, 0], sizes = [8, 1, 256], strides = [1, 1, 1]} : vector<8x10x256xf32> to vector<8x1x256xf32>
    %483 = vector.shape_cast %482 : vector<8x1x256xf32> to vector<8x256xf32>
    %484 = vector.extract_strided_slice %469 {offsets = [0, 7, 0], sizes = [8, 1, 256], strides = [1, 1, 1]} : vector<8x10x256xf32> to vector<8x1x256xf32>
    %485 = vector.shape_cast %484 : vector<8x1x256xf32> to vector<8x256xf32>
    %486 = vector.extract_strided_slice %469 {offsets = [0, 8, 0], sizes = [8, 1, 256], strides = [1, 1, 1]} : vector<8x10x256xf32> to vector<8x1x256xf32>
    %487 = vector.shape_cast %486 : vector<8x1x256xf32> to vector<8x256xf32>
    %488 = vector.extract_strided_slice %469 {offsets = [0, 9, 0], sizes = [8, 1, 256], strides = [1, 1, 1]} : vector<8x10x256xf32> to vector<8x1x256xf32>
    %489 = vector.shape_cast %488 : vector<8x1x256xf32> to vector<8x256xf32>
    %490 = arith.maximumf %471, %473 : vector<8x256xf32>
    %491 = arith.minimumf %471, %473 : vector<8x256xf32>
    %492 = arith.maximumf %475, %477 : vector<8x256xf32>
    %493 = arith.minimumf %475, %477 : vector<8x256xf32>
    %494 = arith.maximumf %479, %481 : vector<8x256xf32>
    %495 = arith.minimumf %479, %481 : vector<8x256xf32>
    %496 = arith.maximumf %483, %485 : vector<8x256xf32>
    %497 = arith.minimumf %483, %485 : vector<8x256xf32>
    %498 = arith.maximumf %487, %489 : vector<8x256xf32>
    %499 = arith.minimumf %487, %489 : vector<8x256xf32>
    %500 = arith.maximumf %490, %493 : vector<8x256xf32>
    %501 = arith.minimumf %490, %493 : vector<8x256xf32>
    %502 = arith.maximumf %491, %492 : vector<8x256xf32>
    %503 = arith.minimumf %491, %492 : vector<8x256xf32>
    %504 = arith.maximumf %494, %497 : vector<8x256xf32>
    %505 = arith.minimumf %494, %497 : vector<8x256xf32>
    %506 = arith.maximumf %495, %496 : vector<8x256xf32>
    %507 = arith.minimumf %495, %496 : vector<8x256xf32>
    %508 = arith.maximumf %500, %502 : vector<8x256xf32>
    %509 = arith.minimumf %500, %502 : vector<8x256xf32>
    %510 = arith.maximumf %501, %503 : vector<8x256xf32>
    %511 = arith.minimumf %501, %503 : vector<8x256xf32>
    %512 = arith.maximumf %505, %507 : vector<8x256xf32>
    %513 = arith.minimumf %505, %507 : vector<8x256xf32>
    %514 = arith.maximumf %504, %506 : vector<8x256xf32>
    %515 = arith.minimumf %504, %506 : vector<8x256xf32>
    %516 = arith.maximumf %498, %499 : vector<8x256xf32>
    %517 = arith.minimumf %498, %499 : vector<8x256xf32>
    %518 = arith.maximumf %508, %513 : vector<8x256xf32>
    %519 = arith.minimumf %508, %513 : vector<8x256xf32>
    %520 = arith.maximumf %509, %512 : vector<8x256xf32>
    %521 = arith.minimumf %509, %512 : vector<8x256xf32>
    %522 = arith.maximumf %510, %515 : vector<8x256xf32>
    %523 = arith.minimumf %510, %515 : vector<8x256xf32>
    %524 = arith.maximumf %511, %514 : vector<8x256xf32>
    %525 = arith.minimumf %511, %514 : vector<8x256xf32>
    %526 = arith.maximumf %518, %522 : vector<8x256xf32>
    %527 = arith.minimumf %518, %522 : vector<8x256xf32>
    %528 = arith.maximumf %520, %524 : vector<8x256xf32>
    %529 = arith.minimumf %520, %524 : vector<8x256xf32>
    %530 = arith.maximumf %519, %523 : vector<8x256xf32>
    %531 = arith.minimumf %519, %523 : vector<8x256xf32>
    %532 = arith.maximumf %521, %525 : vector<8x256xf32>
    %533 = arith.minimumf %521, %525 : vector<8x256xf32>
    %534 = arith.maximumf %526, %528 : vector<8x256xf32>
    %535 = arith.minimumf %526, %528 : vector<8x256xf32>
    %536 = arith.maximumf %527, %529 : vector<8x256xf32>
    %537 = arith.minimumf %527, %529 : vector<8x256xf32>
    %538 = arith.maximumf %530, %532 : vector<8x256xf32>
    %539 = arith.minimumf %530, %532 : vector<8x256xf32>
    %540 = arith.maximumf %531, %533 : vector<8x256xf32>
    %541 = arith.minimumf %531, %533 : vector<8x256xf32>
    %542 = arith.maximumf %516, %517 : vector<8x256xf32>
    %543 = arith.minimumf %516, %517 : vector<8x256xf32>
    %544 = arith.maximumf %540, %543 : vector<8x256xf32>
    %545 = arith.minimumf %540, %543 : vector<8x256xf32>
    %546 = arith.maximumf %541, %542 : vector<8x256xf32>
    %547 = arith.minimumf %541, %542 : vector<8x256xf32>
    %548 = arith.maximumf %534, %538 : vector<8x256xf32>
    %549 = arith.minimumf %534, %538 : vector<8x256xf32>
    %550 = arith.maximumf %535, %539 : vector<8x256xf32>
    %551 = arith.minimumf %535, %539 : vector<8x256xf32>
    %552 = arith.maximumf %536, %544 : vector<8x256xf32>
    %553 = arith.minimumf %536, %544 : vector<8x256xf32>
    %554 = arith.maximumf %537, %546 : vector<8x256xf32>
    %555 = arith.minimumf %537, %546 : vector<8x256xf32>
    %556 = arith.maximumf %548, %552 : vector<8x256xf32>
    %557 = arith.minimumf %548, %552 : vector<8x256xf32>
    %558 = arith.maximumf %550, %554 : vector<8x256xf32>
    %559 = arith.minimumf %550, %554 : vector<8x256xf32>
    %560 = arith.maximumf %549, %553 : vector<8x256xf32>
    %561 = arith.minimumf %549, %553 : vector<8x256xf32>
    %562 = arith.maximumf %551, %555 : vector<8x256xf32>
    %563 = arith.minimumf %551, %555 : vector<8x256xf32>
    %564 = arith.maximumf %556, %558 : vector<8x256xf32>
    %565 = arith.minimumf %556, %558 : vector<8x256xf32>
    %566 = arith.maximumf %557, %559 : vector<8x256xf32>
    %567 = arith.minimumf %557, %559 : vector<8x256xf32>
    %568 = arith.maximumf %560, %562 : vector<8x256xf32>
    %569 = arith.minimumf %560, %562 : vector<8x256xf32>
    %570 = arith.maximumf %561, %563 : vector<8x256xf32>
    %571 = arith.minimumf %561, %563 : vector<8x256xf32>
    %572 = arith.maximumf %545, %547 : vector<8x256xf32>
    %573 = arith.minimumf %545, %547 : vector<8x256xf32>
    %574 = vector.extract_strided_slice %0 {offsets = [0, 0], sizes = [8, 1], strides = [1, 1]} : vector<8x10xf32> to vector<8x1xf32>
    %575 = vector.broadcast %574 : vector<8x1xf32> to vector<8x256xf32>
    %576 = arith.mulf %564, %575 : vector<8x256xf32>
    %577 = vector.extract_strided_slice %0 {offsets = [0, 1], sizes = [8, 1], strides = [1, 1]} : vector<8x10xf32> to vector<8x1xf32>
    %578 = vector.broadcast %577 : vector<8x1xf32> to vector<8x256xf32>
    %579 = arith.mulf %565, %578 : vector<8x256xf32>
    %580 = vector.extract_strided_slice %0 {offsets = [0, 2], sizes = [8, 1], strides = [1, 1]} : vector<8x10xf32> to vector<8x1xf32>
    %581 = vector.broadcast %580 : vector<8x1xf32> to vector<8x256xf32>
    %582 = arith.mulf %566, %581 : vector<8x256xf32>
    %583 = vector.extract_strided_slice %0 {offsets = [0, 3], sizes = [8, 1], strides = [1, 1]} : vector<8x10xf32> to vector<8x1xf32>
    %584 = vector.broadcast %583 : vector<8x1xf32> to vector<8x256xf32>
    %585 = arith.mulf %567, %584 : vector<8x256xf32>
    %586 = vector.extract_strided_slice %0 {offsets = [0, 4], sizes = [8, 1], strides = [1, 1]} : vector<8x10xf32> to vector<8x1xf32>
    %587 = vector.broadcast %586 : vector<8x1xf32> to vector<8x256xf32>
    %588 = arith.mulf %568, %587 : vector<8x256xf32>
    %589 = vector.extract_strided_slice %0 {offsets = [0, 5], sizes = [8, 1], strides = [1, 1]} : vector<8x10xf32> to vector<8x1xf32>
    %590 = vector.broadcast %589 : vector<8x1xf32> to vector<8x256xf32>
    %591 = arith.mulf %569, %590 : vector<8x256xf32>
    %592 = vector.extract_strided_slice %0 {offsets = [0, 6], sizes = [8, 1], strides = [1, 1]} : vector<8x10xf32> to vector<8x1xf32>
    %593 = vector.broadcast %592 : vector<8x1xf32> to vector<8x256xf32>
    %594 = arith.mulf %570, %593 : vector<8x256xf32>
    %595 = vector.extract_strided_slice %0 {offsets = [0, 7], sizes = [8, 1], strides = [1, 1]} : vector<8x10xf32> to vector<8x1xf32>
    %596 = vector.broadcast %595 : vector<8x1xf32> to vector<8x256xf32>
    %597 = arith.mulf %571, %596 : vector<8x256xf32>
    %598 = vector.extract_strided_slice %0 {offsets = [0, 8], sizes = [8, 1], strides = [1, 1]} : vector<8x10xf32> to vector<8x1xf32>
    %599 = vector.broadcast %598 : vector<8x1xf32> to vector<8x256xf32>
    %600 = arith.mulf %572, %599 : vector<8x256xf32>
    %601 = vector.extract_strided_slice %0 {offsets = [0, 9], sizes = [8, 1], strides = [1, 1]} : vector<8x10xf32> to vector<8x1xf32>
    %602 = vector.broadcast %601 : vector<8x1xf32> to vector<8x256xf32>
    %603 = arith.mulf %573, %602 : vector<8x256xf32>
    %604 = arith.addf %576, %579 : vector<8x256xf32>
    %605 = arith.addf %582, %585 : vector<8x256xf32>
    %606 = arith.addf %588, %591 : vector<8x256xf32>
    %607 = arith.addf %594, %597 : vector<8x256xf32>
    %608 = arith.addf %600, %603 : vector<8x256xf32>
    %609 = arith.addf %604, %605 : vector<8x256xf32>
    %610 = arith.addf %606, %607 : vector<8x256xf32>
    %611 = arith.addf %609, %610 : vector<8x256xf32>
    %612 = arith.addf %611, %608 : vector<8x256xf32>
    %613 = arith.mulf %612, %612 : vector<8x256xf32>
    %cst_26 = arith.constant dense<0.000000e+00> : vector<8xf32>
    %614 = vector.multi_reduction <add>, %613, %cst_26 [1] : vector<8x256xf32> to vector<8xf32>
    %615 = vector.shape_cast %614 : vector<8xf32> to vector<8x1xf32>
    %616 = arith.addf %463, %615 : vector<8x1xf32>
    %c0_27 = arith.constant 0 : index
    %c768_28 = arith.constant 768 : index
    %617 = vector.load %arg4[%c0_27, %c768_28] : memref<8x1024xf32, #tpu.memory_space<vmem>>, vector<8x256xf32>
    tpu.vector_store %arg4[%c0_27, %c768_28], %612 {strides = array<i32>} : memref<8x1024xf32, #tpu.memory_space<vmem>>, vector<8x256xf32>,
    %618 = math.sqrt %616 : vector<8x1xf32>
    %cst_29 = arith.constant 9.99999993E-9 : f32
    %619 = vector.broadcast %cst_29 : f32 to vector<8x1xf32>
    %620 = arith.addf %618, %619 : vector<8x1xf32>
    %c0_30 = arith.constant 0 : index
    %c0_31 = arith.constant 0 : index
    %621 = vector.load %arg4[%c0_30, %c0_31] : memref<8x1024xf32, #tpu.memory_space<vmem>>, vector<8x1024xf32>
    %622 = vector.broadcast %620 : vector<8x1xf32> to vector<8x1024xf32>
    %623 = arith.divf %621, %622 : vector<8x1024xf32>
    %c0_32 = arith.constant 0 : index
    %c0_33 = arith.constant 0 : index
    %624 = vector.load %arg4[%c0_32, %c0_33] : memref<8x1024xf32, #tpu.memory_space<vmem>>, vector<8x1024xf32>
    tpu.vector_store %arg4[%c0_32, %c0_33], %623 {strides = array<i32>} : memref<8x1024xf32, #tpu.memory_space<vmem>>, vector<8x1024xf32>,
    return
  }
  func.func @transform_0(%arg0: i32) -> (i32, i32, i32) {
    %c0_i32 = arith.constant 0 : i32
    %c0_i32_0 = arith.constant 0 : i32
    %c0_i32_1 = arith.constant 0 : i32
    return %arg0, %c0_i32, %c0_i32_0 : i32, i32, i32
  }
  func.func @transform_1(%arg0: i32) -> (i32, i32) {
    %c0_i32 = arith.constant 0 : i32
    %c0_i32_0 = arith.constant 0 : i32
    return %arg0, %c0_i32 : i32, i32
  }
  func.func @transform_2(%arg0: i32) -> (i32, i32) {
    %c0_i32 = arith.constant 0 : i32
    %c0_i32_0 = arith.constant 0 : i32
    return %arg0, %c0_i32 : i32, i32
  }
  func.func @transform_3(%arg0: i32) -> (i32, i32) {
    %c0_i32 = arith.constant 0 : i32
    %c0_i32_0 = arith.constant 0 : i32
    return %arg0, %c0_i32 : i32, i32
  }
}

</mosaic_0001>

<llo_original>
// kernel: custom-call.1
$region0: #{custom-call.1}
  %s0 = inlined_call_operand.vmem [shape: f32[16,32], index: 0, kind: output, shape index: {}]

// kernel: _forward.1
$region0: #{_forward.1}
  #allocation0 [shape = 'u32[]', space=smem, size = 0x4, offset = 0x4, fixed_abs, tag = 'smem constant byte address 0x4 - core index']
  #allocation1 [shape = 'u32[144,128]{1,0:T(1,128)}', space=vmem, size = 0x12000, scoped, tag = 'internal scratch']
  %s0 = inlined_call_operand.vmem [shape: f32[16,10,1024], index: 0, kind: input, shape index: {}]
  %s1 = inlined_call_operand.vmem [shape: f32[16,10], index: 1, kind: input, shape index: {}]
  %s2 = inlined_call_operand.vmem [shape: f32[16,10], index: 2, kind: input, shape index: {}]
  %s3 = inlined_call_operand.hbm [shape: f32[16,1024], index: 3, kind: output, shape index: {}]
  %s4 = sld [smem:[#allocation0]]
  $region45: #{_forward.1} parent=0
    _
  %s6 = ssub.s32 1, %s4
  %s7 = scalar_select 0, %s6, %s4
  $region1: #{_forward.1} parent=0
    #allocation2 [shape = 'u8[65536]{0}', space=vmem, size = 0x10000, scoped, tag = 'output window, operand 0']
    #allocation3 [shape = 's32[2]{0}', space=sflag, size = 0x8, scoped, tag = 'scoped memory for _forward.1']
    %8 = vsyncpa [#allocation3], 0
    %s9 = scalar_lea.sflag [#allocation3], 1
    %10 = vsyncpa %s9, 0
    loop: start=0, step=1, limit=4
    $region2: #{_forward.1} parent=1 // loop_pre_header
      _
    $region3: #{_forward.1} parent=1 // loop_header
      %s12 = sphi 0, %s16
      %p13 = scmp.ge.s32.totalorder %s12, 4
      %s22 = sphi 0, %s24
      %s25 = sphi 0, %s22
      %s26 = sphi 0, %s25
      %s42 = sphi 0, %s26
      %s48 = sphi 0, %s50
      %s51 = sphi 0, %s48
      %s52 = sphi 0, %s51
      %s68 = sphi 0, %s52
      %s74 = sphi 0, %s76
      %s77 = sphi 0, %s74
      %s78 = sphi 0, %s77
      %s94 = sphi 0, %s78
      %s100 = sphi 0, %s102
      %s103 = sphi 0, %s100
      %s104 = sphi 0, %s103
      %s120 = sphi 0, %s104
    $region4: #{_forward.1} parent=1 // loop_header_branch
      %15 = sbr.rel (%p13) target = $region8
    $region5: #{_forward.1} parent=1 // loop_body
      %s17 = ssub.s32 %s12, 1
      %s18 = ssub.s32 %s12, 2
      %s19 = sadd.s32 %s12, 1
      %s20 = ssub.s32 %s12, %s19
      %p21 = scmp.eq.s32.totalorder %s20, 0
      %s23 = sadd.s32 %s22, 1
      %s24 = scalar_select %p21, %s22, %s23
      %p27 = pneg %p21
      %p28 = scmp.eq.s32.totalorder %s12, 1
      %p29 = por %p27, %p28
      %p30 = scmp.ne.s32.totalorder %s22, %s25
      %p31 = scmp.eq.s32.totalorder %s12, 0
      %p32 = por %p30, %p31
      %p33 = scmp.ne.s32.totalorder %s22, %s25
      %p34 = scmp.eq.s32.totalorder %s17, 1
      %p35 = por %p33, %p34
      %p36 = scmp.ne.s32.totalorder %s25, %s26
      %p37 = scmp.eq.s32.totalorder %s17, 0
      %p38 = por %p36, %p37
      %p39 = scmp.ne.s32.totalorder %s25, %s26
      %p40 = scmp.eq.s32.totalorder %s18, 1
      %p41 = por %p39, %p40
      %p43 = scmp.ne.s32.totalorder %s26, %s42
      %p44 = scmp.eq.s32.totalorder %s18, 0
      %p45 = por %p43, %p44
      %s46 = ssub.s32 %s12, %s19
      %p47 = scmp.eq.s32.totalorder %s46, 0
      %s49 = sadd.s32 %s48, 1
      %s50 = scalar_select %p47, %s48, %s49
      %p53 = pneg %p47
      %p54 = scmp.eq.s32.totalorder %s12, 1
      %p55 = por %p53, %p54
      %p56 = scmp.ne.s32.totalorder %s48, %s51
      %p57 = scmp.eq.s32.totalorder %s12, 0
      %p58 = por %p56, %p57
      %p59 = scmp.ne.s32.totalorder %s48, %s51
      %p60 = scmp.eq.s32.totalorder %s17, 1
      %p61 = por %p59, %p60
      %p62 = scmp.ne.s32.totalorder %s51, %s52
      %p63 = scmp.eq.s32.totalorder %s17, 0
      %p64 = por %p62, %p63
      %p65 = scmp.ne.s32.totalorder %s51, %s52
      %p66 = scmp.eq.s32.totalorder %s18, 1
      %p67 = por %p65, %p66
      %p69 = scmp.ne.s32.totalorder %s52, %s68
      %p70 = scmp.eq.s32.totalorder %s18, 0
      %p71 = por %p69, %p70
      %s72 = ssub.s32 %s12, %s19
      %p73 = scmp.eq.s32.totalorder %s72, 0
      %s75 = sadd.s32 %s74, 1
      %s76 = scalar_select %p73, %s74, %s75
      %p79 = pneg %p73
      %p80 = scmp.eq.s32.totalorder %s12, 1
      %p81 = por %p79, %p80
      %p82 = scmp.ne.s32.totalorder %s74, %s77
      %p83 = scmp.eq.s32.totalorder %s12, 0
      %p84 = por %p82, %p83
      %p85 = scmp.ne.s32.totalorder %s74, %s77
      %p86 = scmp.eq.s32.totalorder %s17, 1
      %p87 = por %p85, %p86
      %p88 = scmp.ne.s32.totalorder %s77, %s78
      %p89 = scmp.eq.s32.totalorder %s17, 0
      %p90 = por %p88, %p89
      %p91 = scmp.ne.s32.totalorder %s77, %s78
      %p92 = scmp.eq.s32.totalorder %s18, 1
      %p93 = por %p91, %p92
      %p95 = scmp.ne.s32.totalorder %s78, %s94
      %p96 = scmp.eq.s32.totalorder %s18, 0
      %p97 = por %p95, %p96
      %s98 = ssub.s32 %s12, %s19
      %p99 = scmp.eq.s32.totalorder %s98, 0
      %s101 = sadd.s32 %s100, 1
      %s102 = scalar_select %p99, %s100, %s101
      %p105 = pneg %p99
      %p106 = scmp.eq.s32.totalorder %s12, 1
      %p107 = por %p105, %p106
      %p108 = scmp.ne.s32.totalorder %s100, %s103
      %p109 = scmp.eq.s32.totalorder %s12, 0
      %p110 = por %p108, %p109
      %p111 = scmp.ne.s32.totalorder %s100, %s103
      %p112 = scmp.eq.s32.totalorder %s17, 1
      %p113 = por %p111, %p112
      %p114 = scmp.ne.s32.totalorder %s103, %s104
      %p115 = scmp.eq.s32.totalorder %s17, 0
      %p116 = por %p114, %p115
      %p117 = scmp.ne.s32.totalorder %s103, %s104
      %p118 = scmp.eq.s32.totalorder %s18, 1
      %p119 = por %p117, %p118
      %p121 = scmp.ne.s32.totalorder %s104, %s120
      %p122 = scmp.eq.s32.totalorder %s18, 0
      %p123 = por %p121, %p122
      %p124 = scmp.le.s32.totalorder 1, %s12
      %p125 = scmp.lt.s32.totalorder %s12, 3
      %p126 = pnand %p124, %p125
      %p127 = pneg %p126
      // Predicated region
      $region9: #{_forward.1} parent=5 // pred_check
        _
      $region10: #{_forward.1} parent=5 // pred_check_branch
        %129 = sbr.rel (%p126) target = $region12
      $region11: #{_forward.1} parent=5 // pred_region
        %s130 = ssub.s32 %s12, 1
      $region12: #{_forward.1} parent=5 // pred_fallthru
        _
      %p131 = scmp.lt.s32.totalorder %s12, 2
      // Predicated region
      $region13: #{_forward.1} parent=5 // pred_check
        %p132 = pneg %p131
      $region14: #{_forward.1} parent=5 // pred_check_branch
        %134 = sbr.rel (%p132) target = $region16
      $region15: #{_forward.1} parent=5 // pred_region
        // Predicated region
        $region17: #{_forward.1} parent=15 // pred_check
          %p135 = pneg %p32
        $region18: #{_forward.1} parent=15 // pred_check_branch
          %137 = sbr.rel (%p135) target = $region20
        $region19: #{_forward.1} parent=15 // pred_region
          %s138 = smul.u32 8, %s12
          %p139 = scmp.lt.s32.totalorder %s138, 15
          %s140 = scalar_select %p139, %s138, 15
          %s141 = smul.addr %s140, 16
          %s142 = smul.addr %s141, 8
          %s143 = scalar_lea.vmem %s0, %s142
          %s144 = smul.u32 8, %s12
        $region20: #{_forward.1} parent=15 // pred_fallthru
          _
        // Predicated region
        $region21: #{_forward.1} parent=15 // pred_check
          %p145 = pneg %p58
        $region22: #{_forward.1} parent=15 // pred_check_branch
          %147 = sbr.rel (%p145) target = $region24
        $region23: #{_forward.1} parent=15 // pred_region
          %p148 = scmp.lt.s32.totalorder %s12, 1
          %s149 = scalar_select %p148, %s12, 1
          %s150 = smul.addr %s149, 8
          %s151 = scalar_lea.vmem %s1, %s150
        $region24: #{_forward.1} parent=15 // pred_fallthru
          _
        // Predicated region
        $region25: #{_forward.1} parent=15 // pred_check
          %p152 = pneg %p84
        $region26: #{_forward.1} parent=15 // pred_check_branch
          %154 = sbr.rel (%p152) target = $region28
        $region27: #{_forward.1} parent=15 // pred_region
          %p155 = scmp.lt.s32.totalorder %s12, 1
          %s156 = scalar_select %p155, %s12, 1
          %s157 = smul.addr %s156, 8
          %s158 = scalar_lea.vmem %s2, %s157
        $region28: #{_forward.1} parent=15 // pred_fallthru
          _
      $region16: #{_forward.1} parent=5 // pred_fallthru
        _
      %p159 = scmp.le.s32.totalorder 1, %s12
      %p160 = scmp.lt.s32.totalorder %s12, 3
      %p161 = pnand %p159, %p160
      %p162 = pneg %p161
      // Predicated region
      $region29: #{_forward.1} parent=5 // pred_check
        _
      $region30: #{_forward.1} parent=5 // pred_check_branch
        %164 = sbr.rel (%p161) target = $region32
      $region31: #{_forward.1} parent=5 // pred_region
        %s165 = ssub.s32 %s12, 1
        %s166 = smul.u32 8, %s17
        %p167 = scmp.lt.s32.totalorder %s166, 15
        %s168 = scalar_select %p167, %s166, 15
        %s169 = smul.addr %s168, 16
        %s170 = smul.addr %s169, 8
        %s171 = scalar_lea.vmem %s0, %s170
        %p172 = pneg %p38
        %p173 = pneg %p35
        %p174 = scmp.lt.s32.totalorder %s17, 1
        %s175 = scalar_select %p174, %s17, 1
        %s176 = smul.addr %s175, 8
        %s177 = scalar_lea.vmem %s1, %s176
        %p178 = pneg %p64
        %p179 = pneg %p61
        %p180 = scmp.lt.s32.totalorder %s17, 1
        %s181 = scalar_select %p180, %s17, 1
        %s182 = smul.addr %s181, 8
        %s183 = scalar_lea.vmem %s2, %s182
        %p184 = pneg %p90
        %p185 = pneg %p87
        %p186 = pneg %p116
        %p187 = pneg %p113
        %s188 = sand.u32 %s103, 1
        %s189 = scalar_lea.sflag [#allocation3], %s188
        %s190 = sand.u32 %s103, 1
        %s191 = smul.addr %s190, 64
        %s192 = scalar_lea.vmem [#allocation2], %s191
        %s193 = smul.u32 8, %s17
        %p194 = scmp.lt.s32.totalorder %s193, 15
        %s195 = scalar_select %p194, %s193, 15
        %s196 = smul.addr %s195, 16
        %s197 = smul.addr %s196, 8
        %s198 = scalar_lea.vmem %s0, %s197
        %s199 = smul.u32 8, %s17
        %p200 = scmp.lt.s32.totalorder %s17, 1
        %s201 = scalar_select %p200, %s17, 1
        %s202 = smul.addr %s201, 8
        %s203 = scalar_lea.vmem %s1, %s202
        %p204 = scmp.lt.s32.totalorder %s17, 1
        %s205 = scalar_select %p204, %s17, 1
        %s206 = smul.addr %s205, 8
        %s207 = scalar_lea.vmem %s2, %s206
        %v208 = vld [vmem:[%s203] sm:$0xff]
        %v209 = vld [vmem:[%s207] sm:$0xff]
        %v210 = vlaneseq
        %v211 = vshrl.u32 %v210, 7
        %v212 = vsub.s32 0, %v211
        %v213 = vrot.slane %v209, %v212
        %215 = vbcast.lane.b32.xlu0 %v213, 256
        %v216 = vpop.permute.xlu0 %215
        %s218 = sor.u32 256, 8
        %219 = vbcast.lane.b32.xlu0 %v213, %s218
        %v220 = vpop.permute.xlu0 %219
        %v221 = vlaneseq
        %v222 = vshrl.u32 %v221, 7
        %v223 = vsub.s32 1, %v222
        %v224 = vrot.slane %v209, %v223
        %226 = vbcast.lane.b32.xlu0 %v224, 256
        %v227 = vpop.permute.xlu0 %226
        %s229 = sor.u32 256, 8
        %230 = vbcast.lane.b32.xlu0 %v224, %s229
        %v231 = vpop.permute.xlu0 %230
        %v232 = vlaneseq
        %v233 = vshrl.u32 %v232, 7
        %v234 = vsub.s32 2, %v233
        %v235 = vrot.slane %v209, %v234
        %237 = vbcast.lane.b32.xlu0 %v235, 256
        %v238 = vpop.permute.xlu0 %237
        %s240 = sor.u32 256, 8
        %241 = vbcast.lane.b32.xlu0 %v235, %s240
        %v242 = vpop.permute.xlu0 %241
        %v243 = vlaneseq
        %v244 = vshrl.u32 %v243, 7
        %v245 = vsub.s32 3, %v244
        %v246 = vrot.slane %v209, %v245
        %248 = vbcast.lane.b32.xlu0 %v246, 256
        %v249 = vpop.permute.xlu0 %248
        %s251 = sor.u32 256, 8
        %252 = vbcast.lane.b32.xlu0 %v246, %s251
        %v253 = vpop.permute.xlu0 %252
        %v254 = vlaneseq
        %v255 = vshrl.u32 %v254, 7
        %v256 = vsub.s32 4, %v255
        %v257 = vrot.slane %v209, %v256
        %259 = vbcast.lane.b32.xlu0 %v257, 256
        %v260 = vpop.permute.xlu0 %259
        %s262 = sor.u32 256, 8
        %263 = vbcast.lane.b32.xlu0 %v257, %s262
        %v264 = vpop.permute.xlu0 %263
        %v265 = vlaneseq
        %v266 = vshrl.u32 %v265, 7
        %v267 = vsub.s32 5, %v266
        %v268 = vrot.slane %v209, %v267
        %270 = vbcast.lane.b32.xlu0 %v268, 256
        %v271 = vpop.permute.xlu0 %270
        %s273 = sor.u32 256, 8
        %274 = vbcast.lane.b32.xlu0 %v268, %s273
        %v275 = vpop.permute.xlu0 %274
        %v276 = vlaneseq
        %v277 = vshrl.u32 %v276, 7
        %v278 = vsub.s32 6, %v277
        %v279 = vrot.slane %v209, %v278
        %281 = vbcast.lane.b32.xlu0 %v279, 256
        %v282 = vpop.permute.xlu0 %281
        %s284 = sor.u32 256, 8
        %285 = vbcast.lane.b32.xlu0 %v279, %s284
        %v286 = vpop.permute.xlu0 %285
        %v287 = vlaneseq
        %v288 = vshrl.u32 %v287, 7
        %v289 = vsub.s32 7, %v288
        %v290 = vrot.slane %v209, %v289
        %292 = vbcast.lane.b32.xlu0 %v290, 256
        %v293 = vpop.permute.xlu0 %292
        %s295 = sor.u32 256, 8
        %296 = vbcast.lane.b32.xlu0 %v290, %s295
        %v297 = vpop.permute.xlu0 %296
        %vm298 = vcmp.gt.f32.partialorder %v216, 0.5
        %vm299 = vcmp.gt.f32.partialorder %v220, 0.5
        %vm300 = vcmp.gt.f32.partialorder %v227, 0.5
        %vm301 = vcmp.gt.f32.partialorder %v231, 0.5
        %vm302 = vcmp.gt.f32.partialorder %v238, 0.5
        %vm303 = vcmp.gt.f32.partialorder %v242, 0.5
        %vm304 = vcmp.gt.f32.partialorder %v249, 0.5
        %vm305 = vcmp.gt.f32.partialorder %v253, 0.5
        %vm306 = vcmp.gt.f32.partialorder %v260, 0.5
        %vm307 = vcmp.gt.f32.partialorder %v264, 0.5
        %vm308 = vcmp.gt.f32.partialorder %v271, 0.5
        %vm309 = vcmp.gt.f32.partialorder %v275, 0.5
        %vm310 = vcmp.gt.f32.partialorder %v282, 0.5
        %vm311 = vcmp.gt.f32.partialorder %v286, 0.5
        %vm312 = vcmp.gt.f32.partialorder %v293, 0.5
        %vm313 = vcmp.gt.f32.partialorder %v297, 0.5
        %v314 = vld [vmem:[%s198] sm:$0xff]
        %v315 = vld [vmem:[%s198 + $0x8] sm:$0xff]
        %v316 = vld [vmem:[%s198 + $0x40] sm:$0x3]
        %v317 = vld [vmem:[%s198 + $0x48] sm:$0x3]
        %v318 = vld [vmem:[%s198 + $0x80] sm:$0xff]
        %v319 = vld [vmem:[%s198 + $0x88] sm:$0xff]
        %v320 = vld [vmem:[%s198 + $0xc0] sm:$0x3]
        %v321 = vld [vmem:[%s198 + $0xc8] sm:$0x3]
        %v322 = vld [vmem:[%s198 + $0x100] sm:$0xff]
        %v323 = vld [vmem:[%s198 + $0x108] sm:$0xff]
        %v324 = vld [vmem:[%s198 + $0x140] sm:$0x3]
        %v325 = vld [vmem:[%s198 + $0x148] sm:$0x3]
        %v326 = vld [vmem:[%s198 + $0x180] sm:$0xff]
        %v327 = vld [vmem:[%s198 + $0x188] sm:$0xff]
        %v328 = vld [vmem:[%s198 + $0x1c0] sm:$0x3]
        %v329 = vld [vmem:[%s198 + $0x1c8] sm:$0x3]
        %v330 = vld [vmem:[%s198 + $0x200] sm:$0xff]
        %v331 = vld [vmem:[%s198 + $0x208] sm:$0xff]
        %v332 = vld [vmem:[%s198 + $0x240] sm:$0x3]
        %v333 = vld [vmem:[%s198 + $0x248] sm:$0x3]
        %v334 = vld [vmem:[%s198 + $0x280] sm:$0xff]
        %v335 = vld [vmem:[%s198 + $0x288] sm:$0xff]
        %v336 = vld [vmem:[%s198 + $0x2c0] sm:$0x3]
        %v337 = vld [vmem:[%s198 + $0x2c8] sm:$0x3]
        %v338 = vld [vmem:[%s198 + $0x300] sm:$0xff]
        %v339 = vld [vmem:[%s198 + $0x308] sm:$0xff]
        %v340 = vld [vmem:[%s198 + $0x340] sm:$0x3]
        %v341 = vld [vmem:[%s198 + $0x348] sm:$0x3]
        %v342 = vld [vmem:[%s198 + $0x380] sm:$0xff]
        %v343 = vld [vmem:[%s198 + $0x388] sm:$0xff]
        %v344 = vld [vmem:[%s198 + $0x3c0] sm:$0x3]
        %v345 = vld [vmem:[%s198 + $0x3c8] sm:$0x3]
        %v346 = vsel %vm298, 1, 0
        %v347 = vsel %vm299, 1, 0
        %v348 = vsel %vm300, 1, 0
        %v349 = vsel %vm301, 1, 0
        %v350 = vsel %vm302, 1, 0
        %v351 = vsel %vm303, 1, 0
        %v352 = vsel %vm304, 1, 0
        %v353 = vsel %vm305, 1, 0
        %v354 = vsel %vm306, 1, 0
        %v355 = vsel %vm307, 1, 0
        %v356 = vsel %vm308, 1, 0
        %v357 = vsel %vm309, 1, 0
        %v358 = vsel %vm310, 1, 0
        %v359 = vsel %vm311, 1, 0
        %v360 = vsel %vm312, 1, 0
        %v361 = vsel %vm313, 1, 0
        %vm362 = vcmp.eq.s32.totalorder %v346, 1
        %vm363 = vcmp.eq.s32.totalorder %v347, 1
        %vm364 = vcmp.eq.s32.totalorder %v348, 1
        %vm365 = vcmp.eq.s32.totalorder %v349, 1
        %vm366 = vcmp.eq.s32.totalorder %v350, 1
        %vm367 = vcmp.eq.s32.totalorder %v351, 1
        %vm368 = vcmp.eq.s32.totalorder %v352, 1
        %vm369 = vcmp.eq.s32.totalorder %v353, 1
        %vm370 = vcmp.eq.s32.totalorder %v354, 1
        %vm371 = vcmp.eq.s32.totalorder %v355, 1
        %vm372 = vcmp.eq.s32.totalorder %v356, 1
        %vm373 = vcmp.eq.s32.totalorder %v357, 1
        %vm374 = vcmp.eq.s32.totalorder %v358, 1
        %vm375 = vcmp.eq.s32.totalorder %v359, 1
        %vm376 = vcmp.eq.s32.totalorder %v360, 1
        %vm377 = vcmp.eq.s32.totalorder %v361, 1
        %v378 = vsel %vm362, %v314, -10000.0
        %v379 = vsel %vm362, %v315, -10000.0
        %v380 = vsel %vm363, %v316, -10000.0
        %v381 = vsel %vm363, %v317, -10000.0
        %v382 = vsel %vm364, %v318, -10000.0
        %v383 = vsel %vm364, %v319, -10000.0
        %v384 = vsel %vm365, %v320, -10000.0
        %v385 = vsel %vm365, %v321, -10000.0
        %v386 = vsel %vm366, %v322, -10000.0
        %v387 = vsel %vm366, %v323, -10000.0
        %v388 = vsel %vm367, %v324, -10000.0
        %v389 = vsel %vm367, %v325, -10000.0
        %v390 = vsel %vm368, %v326, -10000.0
        %v391 = vsel %vm368, %v327, -10000.0
        %v392 = vsel %vm369, %v328, -10000.0
        %v393 = vsel %vm369, %v329, -10000.0
        %v394 = vsel %vm370, %v330, -10000.0
        %v395 = vsel %vm370, %v331, -10000.0
        %v396 = vsel %vm371, %v332, -10000.0
        %v397 = vsel %vm371, %v333, -10000.0
        %v398 = vsel %vm372, %v334, -10000.0
        %v399 = vsel %vm372, %v335, -10000.0
        %v400 = vsel %vm373, %v336, -10000.0
        %v401 = vsel %vm373, %v337, -10000.0
        %v402 = vsel %vm374, %v338, -10000.0
        %v403 = vsel %vm374, %v339, -10000.0
        %v404 = vsel %vm375, %v340, -10000.0
        %v405 = vsel %vm375, %v341, -10000.0
        %v406 = vsel %vm376, %v342, -10000.0
        %v407 = vsel %vm376, %v343, -10000.0
        %v408 = vsel %vm377, %v344, -10000.0
        %v409 = vsel %vm377, %v345, -10000.0
        %v426 = vrot.slane %v378, 1
        %v427 = vrot.slane %v379, 1
        %v428 = vrot.slane %v382, 1
        %v429 = vrot.slane %v383, 1
        %v430 = vrot.slane %v386, 1
        %v431 = vrot.slane %v387, 1
        %v432 = vrot.slane %v390, 1
        %v433 = vrot.slane %v391, 1
        %v434 = vrot.slane %v394, 1
        %v435 = vrot.slane %v395, 1
        %v436 = vrot.slane %v398, 1
        %v437 = vrot.slane %v399, 1
        %v438 = vrot.slane %v402, 1
        %v439 = vrot.slane %v403, 1
        %v440 = vrot.slane %v406, 1
        %v441 = vrot.slane %v407, 1
        %v458 = vmax.f32 %v378, %v426
        %v459 = vmax.f32 %v379, %v427
        %v460 = vmax.f32 %v382, %v428
        %v461 = vmax.f32 %v383, %v429
        %v462 = vmax.f32 %v386, %v430
        %v463 = vmax.f32 %v387, %v431
        %v464 = vmax.f32 %v390, %v432
        %v465 = vmax.f32 %v391, %v433
        %v466 = vmax.f32 %v394, %v434
        %v467 = vmax.f32 %v395, %v435
        %v468 = vmax.f32 %v398, %v436
        %v469 = vmax.f32 %v399, %v437
        %v470 = vmax.f32 %v402, %v438
        %v471 = vmax.f32 %v403, %v439
        %v472 = vmax.f32 %v406, %v440
        %v473 = vmax.f32 %v407, %v441
        %v474 = vmin.f32 %v378, %v426
        %v475 = vmin.f32 %v379, %v427
        %v476 = vmin.f32 %v382, %v428
        %v477 = vmin.f32 %v383, %v429
        %v478 = vmin.f32 %v386, %v430
        %v479 = vmin.f32 %v387, %v431
        %v480 = vmin.f32 %v390, %v432
        %v481 = vmin.f32 %v391, %v433
        %v482 = vmin.f32 %v394, %v434
        %v483 = vmin.f32 %v395, %v435
        %v484 = vmin.f32 %v398, %v436
        %v485 = vmin.f32 %v399, %v437
        %v486 = vmin.f32 %v402, %v438
        %v487 = vmin.f32 %v403, %v439
        %v488 = vmin.f32 %v406, %v440
        %v489 = vmin.f32 %v407, %v441
        %v506 = vrot.slane %v380, 1
        %v507 = vrot.slane %v381, 1
        %v508 = vrot.slane %v384, 1
        %v509 = vrot.slane %v385, 1
        %v510 = vrot.slane %v388, 1
        %v511 = vrot.slane %v389, 1
        %v512 = vrot.slane %v392, 1
        %v513 = vrot.slane %v393, 1
        %v514 = vrot.slane %v396, 1
        %v515 = vrot.slane %v397, 1
        %v516 = vrot.slane %v400, 1
        %v517 = vrot.slane %v401, 1
        %v518 = vrot.slane %v404, 1
        %v519 = vrot.slane %v405, 1
        %v520 = vrot.slane %v408, 1
        %v521 = vrot.slane %v409, 1
        %v538 = vmax.f32 %v380, %v506
        %v539 = vmax.f32 %v381, %v507
        %v540 = vmax.f32 %v384, %v508
        %v541 = vmax.f32 %v385, %v509
        %v542 = vmax.f32 %v388, %v510
        %v543 = vmax.f32 %v389, %v511
        %v544 = vmax.f32 %v392, %v512
        %v545 = vmax.f32 %v393, %v513
        %v546 = vmax.f32 %v396, %v514
        %v547 = vmax.f32 %v397, %v515
        %v548 = vmax.f32 %v400, %v516
        %v549 = vmax.f32 %v401, %v517
        %v550 = vmax.f32 %v404, %v518
        %v551 = vmax.f32 %v405, %v519
        %v552 = vmax.f32 %v408, %v520
        %v553 = vmax.f32 %v409, %v521
        %v554 = vmin.f32 %v380, %v506
        %v555 = vmin.f32 %v381, %v507
        %v556 = vmin.f32 %v384, %v508
        %v557 = vmin.f32 %v385, %v509
        %v558 = vmin.f32 %v388, %v510
        %v559 = vmin.f32 %v389, %v511
        %v560 = vmin.f32 %v392, %v512
        %v561 = vmin.f32 %v393, %v513
        %v562 = vmin.f32 %v396, %v514
        %v563 = vmin.f32 %v397, %v515
        %v564 = vmin.f32 %v400, %v516
        %v565 = vmin.f32 %v401, %v517
        %v566 = vmin.f32 %v404, %v518
        %v567 = vmin.f32 %v405, %v519
        %v568 = vmin.f32 %v408, %v520
        %v569 = vmin.f32 %v409, %v521
        %v586 = vrot.slane %v474, 2
        %v587 = vrot.slane %v475, 2
        %v588 = vrot.slane %v476, 2
        %v589 = vrot.slane %v477, 2
        %v590 = vrot.slane %v478, 2
        %v591 = vrot.slane %v479, 2
        %v592 = vrot.slane %v480, 2
        %v593 = vrot.slane %v481, 2
        %v594 = vrot.slane %v482, 2
        %v595 = vrot.slane %v483, 2
        %v596 = vrot.slane %v484, 2
        %v597 = vrot.slane %v485, 2
        %v598 = vrot.slane %v486, 2
        %v599 = vrot.slane %v487, 2
        %v600 = vrot.slane %v488, 2
        %v601 = vrot.slane %v489, 2
        %v618 = vmax.f32 %v458, %v586
        %v619 = vmax.f32 %v459, %v587
        %v620 = vmax.f32 %v460, %v588
        %v621 = vmax.f32 %v461, %v589
        %v622 = vmax.f32 %v462, %v590
        %v623 = vmax.f32 %v463, %v591
        %v624 = vmax.f32 %v464, %v592
        %v625 = vmax.f32 %v465, %v593
        %v626 = vmax.f32 %v466, %v594
        %v627 = vmax.f32 %v467, %v595
        %v628 = vmax.f32 %v468, %v596
        %v629 = vmax.f32 %v469, %v597
        %v630 = vmax.f32 %v470, %v598
        %v631 = vmax.f32 %v471, %v599
        %v632 = vmax.f32 %v472, %v600
        %v633 = vmax.f32 %v473, %v601
        %v634 = vmin.f32 %v458, %v586
        %v635 = vmin.f32 %v459, %v587
        %v636 = vmin.f32 %v460, %v588
        %v637 = vmin.f32 %v461, %v589
        %v638 = vmin.f32 %v462, %v590
        %v639 = vmin.f32 %v463, %v591
        %v640 = vmin.f32 %v464, %v592
        %v641 = vmin.f32 %v465, %v593
        %v642 = vmin.f32 %v466, %v594
        %v643 = vmin.f32 %v467, %v595
        %v644 = vmin.f32 %v468, %v596
        %v645 = vmin.f32 %v469, %v597
        %v646 = vmin.f32 %v470, %v598
        %v647 = vmin.f32 %v471, %v599
        %v648 = vmin.f32 %v472, %v600
        %v649 = vmin.f32 %v473, %v601
        %v666 = vrot.slane %v458, 2
        %v667 = vrot.slane %v459, 2
        %v668 = vrot.slane %v460, 2
        %v669 = vrot.slane %v461, 2
        %v670 = vrot.slane %v462, 2
        %v671 = vrot.slane %v463, 2
        %v672 = vrot.slane %v464, 2
        %v673 = vrot.slane %v465, 2
        %v674 = vrot.slane %v466, 2
        %v675 = vrot.slane %v467, 2
        %v676 = vrot.slane %v468, 2
        %v677 = vrot.slane %v469, 2
        %v678 = vrot.slane %v470, 2
        %v679 = vrot.slane %v471, 2
        %v680 = vrot.slane %v472, 2
        %v681 = vrot.slane %v473, 2
        %v698 = vmax.f32 %v474, %v666
        %v699 = vmax.f32 %v475, %v667
        %v700 = vmax.f32 %v476, %v668
        %v701 = vmax.f32 %v477, %v669
        %v702 = vmax.f32 %v478, %v670
        %v703 = vmax.f32 %v479, %v671
        %v704 = vmax.f32 %v480, %v672
        %v705 = vmax.f32 %v481, %v673
        %v706 = vmax.f32 %v482, %v674
        %v707 = vmax.f32 %v483, %v675
        %v708 = vmax.f32 %v484, %v676
        %v709 = vmax.f32 %v485, %v677
        %v710 = vmax.f32 %v486, %v678
        %v711 = vmax.f32 %v487, %v679
        %v712 = vmax.f32 %v488, %v680
        %v713 = vmax.f32 %v489, %v681
        %v714 = vmin.f32 %v474, %v666
        %v715 = vmin.f32 %v475, %v667
        %v716 = vmin.f32 %v476, %v668
        %v717 = vmin.f32 %v477, %v669
        %v718 = vmin.f32 %v478, %v670
        %v719 = vmin.f32 %v479, %v671
        %v720 = vmin.f32 %v480, %v672
        %v721 = vmin.f32 %v481, %v673
        %v722 = vmin.f32 %v482, %v674
        %v723 = vmin.f32 %v483, %v675
        %v724 = vmin.f32 %v484, %v676
        %v725 = vmin.f32 %v485, %v677
        %v726 = vmin.f32 %v486, %v678
        %v727 = vmin.f32 %v487, %v679
        %v728 = vmin.f32 %v488, %v680
        %v729 = vmin.f32 %v489, %v681
        %v730 = vmax.f32 %v618, %v698
        %v731 = vmax.f32 %v619, %v699
        %v732 = vmax.f32 %v620, %v700
        %v733 = vmax.f32 %v621, %v701
        %v734 = vmax.f32 %v622, %v702
        %v735 = vmax.f32 %v623, %v703
        %v736 = vmax.f32 %v624, %v704
        %v737 = vmax.f32 %v625, %v705
        %v738 = vmax.f32 %v626, %v706
        %v739 = vmax.f32 %v627, %v707
        %v740 = vmax.f32 %v628, %v708
        %v741 = vmax.f32 %v629, %v709
        %v742 = vmax.f32 %v630, %v710
        %v743 = vmax.f32 %v631, %v711
        %v744 = vmax.f32 %v632, %v712
        %v745 = vmax.f32 %v633, %v713
        %v746 = vmin.f32 %v618, %v698
        %v747 = vmin.f32 %v619, %v699
        %v748 = vmin.f32 %v620, %v700
        %v749 = vmin.f32 %v621, %v701
        %v750 = vmin.f32 %v622, %v702
        %v751 = vmin.f32 %v623, %v703
        %v752 = vmin.f32 %v624, %v704
        %v753 = vmin.f32 %v625, %v705
        %v754 = vmin.f32 %v626, %v706
        %v755 = vmin.f32 %v627, %v707
        %v756 = vmin.f32 %v628, %v708
        %v757 = vmin.f32 %v629, %v709
        %v758 = vmin.f32 %v630, %v710
        %v759 = vmin.f32 %v631, %v711
        %v760 = vmin.f32 %v632, %v712
        %v761 = vmin.f32 %v633, %v713
        %v762 = vmax.f32 %v634, %v714
        %v763 = vmax.f32 %v635, %v715
        %v764 = vmax.f32 %v636, %v716
        %v765 = vmax.f32 %v637, %v717
        %v766 = vmax.f32 %v638, %v718
        %v767 = vmax.f32 %v639, %v719
        %v768 = vmax.f32 %v640, %v720
        %v769 = vmax.f32 %v641, %v721
        %v770 = vmax.f32 %v642, %v722
        %v771 = vmax.f32 %v643, %v723
        %v772 = vmax.f32 %v644, %v724
        %v773 = vmax.f32 %v645, %v725
        %v774 = vmax.f32 %v646, %v726
        %v775 = vmax.f32 %v647, %v727
        %v776 = vmax.f32 %v648, %v728
        %v777 = vmax.f32 %v649, %v729
        %v778 = vmin.f32 %v634, %v714
        %v779 = vmin.f32 %v635, %v715
        %v780 = vmin.f32 %v636, %v716
        %v781 = vmin.f32 %v637, %v717
        %v782 = vmin.f32 %v638, %v718
        %v783 = vmin.f32 %v639, %v719
        %v784 = vmin.f32 %v640, %v720
        %v785 = vmin.f32 %v641, %v721
        %v786 = vmin.f32 %v642, %v722
        %v787 = vmin.f32 %v643, %v723
        %v788 = vmin.f32 %v644, %v724
        %v789 = vmin.f32 %v645, %v725
        %v790 = vmin.f32 %v646, %v726
        %v791 = vmin.f32 %v647, %v727
        %v792 = vmin.f32 %v648, %v728
        %v793 = vmin.f32 %v649, %v729
        %v794 = vmax.f32 %v538, %v554
        %v795 = vmax.f32 %v539, %v555
        %v796 = vmax.f32 %v540, %v556
        %v797 = vmax.f32 %v541, %v557
        %v798 = vmax.f32 %v542, %v558
        %v799 = vmax.f32 %v543, %v559
        %v800 = vmax.f32 %v544, %v560
        %v801 = vmax.f32 %v545, %v561
        %v802 = vmax.f32 %v546, %v562
        %v803 = vmax.f32 %v547, %v563
        %v804 = vmax.f32 %v548, %v564
        %v805 = vmax.f32 %v549, %v565
        %v806 = vmax.f32 %v550, %v566
        %v807 = vmax.f32 %v551, %v567
        %v808 = vmax.f32 %v552, %v568
        %v809 = vmax.f32 %v553, %v569
        %v810 = vmin.f32 %v538, %v554
        %v811 = vmin.f32 %v539, %v555
        %v812 = vmin.f32 %v540, %v556
        %v813 = vmin.f32 %v541, %v557
        %v814 = vmin.f32 %v542, %v558
        %v815 = vmin.f32 %v543, %v559
        %v816 = vmin.f32 %v544, %v560
        %v817 = vmin.f32 %v545, %v561
        %v818 = vmin.f32 %v546, %v562
        %v819 = vmin.f32 %v547, %v563
        %v820 = vmin.f32 %v548, %v564
        %v821 = vmin.f32 %v549, %v565
        %v822 = vmin.f32 %v550, %v566
        %v823 = vmin.f32 %v551, %v567
        %v824 = vmin.f32 %v552, %v568
        %v825 = vmin.f32 %v553, %v569
        %v842 = vrot.slane %v778, 4
        %v843 = vrot.slane %v779, 4
        %v844 = vrot.slane %v780, 4
        %v845 = vrot.slane %v781, 4
        %v846 = vrot.slane %v782, 4
        %v847 = vrot.slane %v783, 4
        %v848 = vrot.slane %v784, 4
        %v849 = vrot.slane %v785, 4
        %v850 = vrot.slane %v786, 4
        %v851 = vrot.slane %v787, 4
        %v852 = vrot.slane %v788, 4
        %v853 = vrot.slane %v789, 4
        %v854 = vrot.slane %v790, 4
        %v855 = vrot.slane %v791, 4
        %v856 = vrot.slane %v792, 4
        %v857 = vrot.slane %v793, 4
        %v874 = vmax.f32 %v730, %v842
        %v875 = vmax.f32 %v731, %v843
        %v876 = vmax.f32 %v732, %v844
        %v877 = vmax.f32 %v733, %v845
        %v878 = vmax.f32 %v734, %v846
        %v879 = vmax.f32 %v735, %v847
        %v880 = vmax.f32 %v736, %v848
        %v881 = vmax.f32 %v737, %v849
        %v882 = vmax.f32 %v738, %v850
        %v883 = vmax.f32 %v739, %v851
        %v884 = vmax.f32 %v740, %v852
        %v885 = vmax.f32 %v741, %v853
        %v886 = vmax.f32 %v742, %v854
        %v887 = vmax.f32 %v743, %v855
        %v888 = vmax.f32 %v744, %v856
        %v889 = vmax.f32 %v745, %v857
        %v890 = vmin.f32 %v730, %v842
        %v891 = vmin.f32 %v731, %v843
        %v892 = vmin.f32 %v732, %v844
        %v893 = vmin.f32 %v733, %v845
        %v894 = vmin.f32 %v734, %v846
        %v895 = vmin.f32 %v735, %v847
        %v896 = vmin.f32 %v736, %v848
        %v897 = vmin.f32 %v737, %v849
        %v898 = vmin.f32 %v738, %v850
        %v899 = vmin.f32 %v739, %v851
        %v900 = vmin.f32 %v740, %v852
        %v901 = vmin.f32 %v741, %v853
        %v902 = vmin.f32 %v742, %v854
        %v903 = vmin.f32 %v743, %v855
        %v904 = vmin.f32 %v744, %v856
        %v905 = vmin.f32 %v745, %v857
        %v922 = vrot.slane %v762, 4
        %v923 = vrot.slane %v763, 4
        %v924 = vrot.slane %v764, 4
        %v925 = vrot.slane %v765, 4
        %v926 = vrot.slane %v766, 4
        %v927 = vrot.slane %v767, 4
        %v928 = vrot.slane %v768, 4
        %v929 = vrot.slane %v769, 4
        %v930 = vrot.slane %v770, 4
        %v931 = vrot.slane %v771, 4
        %v932 = vrot.slane %v772, 4
        %v933 = vrot.slane %v773, 4
        %v934 = vrot.slane %v774, 4
        %v935 = vrot.slane %v775, 4
        %v936 = vrot.slane %v776, 4
        %v937 = vrot.slane %v777, 4
        %v954 = vmax.f32 %v746, %v922
        %v955 = vmax.f32 %v747, %v923
        %v956 = vmax.f32 %v748, %v924
        %v957 = vmax.f32 %v749, %v925
        %v958 = vmax.f32 %v750, %v926
        %v959 = vmax.f32 %v751, %v927
        %v960 = vmax.f32 %v752, %v928
        %v961 = vmax.f32 %v753, %v929
        %v962 = vmax.f32 %v754, %v930
        %v963 = vmax.f32 %v755, %v931
        %v964 = vmax.f32 %v756, %v932
        %v965 = vmax.f32 %v757, %v933
        %v966 = vmax.f32 %v758, %v934
        %v967 = vmax.f32 %v759, %v935
        %v968 = vmax.f32 %v760, %v936
        %v969 = vmax.f32 %v761, %v937
        %v970 = vmin.f32 %v746, %v922
        %v971 = vmin.f32 %v747, %v923
        %v972 = vmin.f32 %v748, %v924
        %v973 = vmin.f32 %v749, %v925
        %v974 = vmin.f32 %v750, %v926
        %v975 = vmin.f32 %v751, %v927
        %v976 = vmin.f32 %v752, %v928
        %v977 = vmin.f32 %v753, %v929
        %v978 = vmin.f32 %v754, %v930
        %v979 = vmin.f32 %v755, %v931
        %v980 = vmin.f32 %v756, %v932
        %v981 = vmin.f32 %v757, %v933
        %v982 = vmin.f32 %v758, %v934
        %v983 = vmin.f32 %v759, %v935
        %v984 = vmin.f32 %v760, %v936
        %v985 = vmin.f32 %v761, %v937
        %v1002 = vrot.slane %v746, 4
        %v1003 = vrot.slane %v747, 4
        %v1004 = vrot.slane %v748, 4
        %v1005 = vrot.slane %v749, 4
        %v1006 = vrot.slane %v750, 4
        %v1007 = vrot.slane %v751, 4
        %v1008 = vrot.slane %v752, 4
        %v1009 = vrot.slane %v753, 4
        %v1010 = vrot.slane %v754, 4
        %v1011 = vrot.slane %v755, 4
        %v1012 = vrot.slane %v756, 4
        %v1013 = vrot.slane %v757, 4
        %v1014 = vrot.slane %v758, 4
        %v1015 = vrot.slane %v759, 4
        %v1016 = vrot.slane %v760, 4
        %v1017 = vrot.slane %v761, 4
        %v1034 = vmax.f32 %v762, %v1002
        %v1035 = vmax.f32 %v763, %v1003
        %v1036 = vmax.f32 %v764, %v1004
        %v1037 = vmax.f32 %v765, %v1005
        %v1038 = vmax.f32 %v766, %v1006
        %v1039 = vmax.f32 %v767, %v1007
        %v1040 = vmax.f32 %v768, %v1008
        %v1041 = vmax.f32 %v769, %v1009
        %v1042 = vmax.f32 %v770, %v1010
        %v1043 = vmax.f32 %v771, %v1011
        %v1044 = vmax.f32 %v772, %v1012
        %v1045 = vmax.f32 %v773, %v1013
        %v1046 = vmax.f32 %v774, %v1014
        %v1047 = vmax.f32 %v775, %v1015
        %v1048 = vmax.f32 %v776, %v1016
        %v1049 = vmax.f32 %v777, %v1017
        %v1050 = vmin.f32 %v762, %v1002
        %v1051 = vmin.f32 %v763, %v1003
        %v1052 = vmin.f32 %v764, %v1004
        %v1053 = vmin.f32 %v765, %v1005
        %v1054 = vmin.f32 %v766, %v1006
        %v1055 = vmin.f32 %v767, %v1007
        %v1056 = vmin.f32 %v768, %v1008
        %v1057 = vmin.f32 %v769, %v1009
        %v1058 = vmin.f32 %v770, %v1010
        %v1059 = vmin.f32 %v771, %v1011
        %v1060 = vmin.f32 %v772, %v1012
        %v1061 = vmin.f32 %v773, %v1013
        %v1062 = vmin.f32 %v774, %v1014
        %v1063 = vmin.f32 %v775, %v1015
        %v1064 = vmin.f32 %v776, %v1016
        %v1065 = vmin.f32 %v777, %v1017
        %v1082 = vrot.slane %v730, 4
        %v1083 = vrot.slane %v731, 4
        %v1084 = vrot.slane %v732, 4
        %v1085 = vrot.slane %v733, 4
        %v1086 = vrot.slane %v734, 4
        %v1087 = vrot.slane %v735, 4
        %v1088 = vrot.slane %v736, 4
        %v1089 = vrot.slane %v737, 4
        %v1090 = vrot.slane %v738, 4
        %v1091 = vrot.slane %v739, 4
        %v1092 = vrot.slane %v740, 4
        %v1093 = vrot.slane %v741, 4
        %v1094 = vrot.slane %v742, 4
        %v1095 = vrot.slane %v743, 4
        %v1096 = vrot.slane %v744, 4
        %v1097 = vrot.slane %v745, 4
        %v1114 = vmax.f32 %v778, %v1082
        %v1115 = vmax.f32 %v779, %v1083
        %v1116 = vmax.f32 %v780, %v1084
        %v1117 = vmax.f32 %v781, %v1085
        %v1118 = vmax.f32 %v782, %v1086
        %v1119 = vmax.f32 %v783, %v1087
        %v1120 = vmax.f32 %v784, %v1088
        %v1121 = vmax.f32 %v785, %v1089
        %v1122 = vmax.f32 %v786, %v1090
        %v1123 = vmax.f32 %v787, %v1091
        %v1124 = vmax.f32 %v788, %v1092
        %v1125 = vmax.f32 %v789, %v1093
        %v1126 = vmax.f32 %v790, %v1094
        %v1127 = vmax.f32 %v791, %v1095
        %v1128 = vmax.f32 %v792, %v1096
        %v1129 = vmax.f32 %v793, %v1097
        %v1130 = vmin.f32 %v778, %v1082
        %v1131 = vmin.f32 %v779, %v1083
        %v1132 = vmin.f32 %v780, %v1084
        %v1133 = vmin.f32 %v781, %v1085
        %v1134 = vmin.f32 %v782, %v1086
        %v1135 = vmin.f32 %v783, %v1087
        %v1136 = vmin.f32 %v784, %v1088
        %v1137 = vmin.f32 %v785, %v1089
        %v1138 = vmin.f32 %v786, %v1090
        %v1139 = vmin.f32 %v787, %v1091
        %v1140 = vmin.f32 %v788, %v1092
        %v1141 = vmin.f32 %v789, %v1093
        %v1142 = vmin.f32 %v790, %v1094
        %v1143 = vmin.f32 %v791, %v1095
        %v1144 = vmin.f32 %v792, %v1096
        %v1145 = vmin.f32 %v793, %v1097
        %v1146 = vmax.f32 %v874, %v1034
        %v1147 = vmax.f32 %v875, %v1035
        %v1148 = vmax.f32 %v876, %v1036
        %v1149 = vmax.f32 %v877, %v1037
        %v1150 = vmax.f32 %v878, %v1038
        %v1151 = vmax.f32 %v879, %v1039
        %v1152 = vmax.f32 %v880, %v1040
        %v1153 = vmax.f32 %v881, %v1041
        %v1154 = vmax.f32 %v882, %v1042
        %v1155 = vmax.f32 %v883, %v1043
        %v1156 = vmax.f32 %v884, %v1044
        %v1157 = vmax.f32 %v885, %v1045
        %v1158 = vmax.f32 %v886, %v1046
        %v1159 = vmax.f32 %v887, %v1047
        %v1160 = vmax.f32 %v888, %v1048
        %v1161 = vmax.f32 %v889, %v1049
        %v1162 = vmin.f32 %v874, %v1034
        %v1163 = vmin.f32 %v875, %v1035
        %v1164 = vmin.f32 %v876, %v1036
        %v1165 = vmin.f32 %v877, %v1037
        %v1166 = vmin.f32 %v878, %v1038
        %v1167 = vmin.f32 %v879, %v1039
        %v1168 = vmin.f32 %v880, %v1040
        %v1169 = vmin.f32 %v881, %v1041
        %v1170 = vmin.f32 %v882, %v1042
        %v1171 = vmin.f32 %v883, %v1043
        %v1172 = vmin.f32 %v884, %v1044
        %v1173 = vmin.f32 %v885, %v1045
        %v1174 = vmin.f32 %v886, %v1046
        %v1175 = vmin.f32 %v887, %v1047
        %v1176 = vmin.f32 %v888, %v1048
        %v1177 = vmin.f32 %v889, %v1049
        %v1178 = vmax.f32 %v954, %v1114
        %v1179 = vmax.f32 %v955, %v1115
        %v1180 = vmax.f32 %v956, %v1116
        %v1181 = vmax.f32 %v957, %v1117
        %v1182 = vmax.f32 %v958, %v1118
        %v1183 = vmax.f32 %v959, %v1119
        %v1184 = vmax.f32 %v960, %v1120
        %v1185 = vmax.f32 %v961, %v1121
        %v1186 = vmax.f32 %v962, %v1122
        %v1187 = vmax.f32 %v963, %v1123
        %v1188 = vmax.f32 %v964, %v1124
        %v1189 = vmax.f32 %v965, %v1125
        %v1190 = vmax.f32 %v966, %v1126
        %v1191 = vmax.f32 %v967, %v1127
        %v1192 = vmax.f32 %v968, %v1128
        %v1193 = vmax.f32 %v969, %v1129
        %v1194 = vmin.f32 %v954, %v1114
        %v1195 = vmin.f32 %v955, %v1115
        %v1196 = vmin.f32 %v956, %v1116
        %v1197 = vmin.f32 %v957, %v1117
        %v1198 = vmin.f32 %v958, %v1118
        %v1199 = vmin.f32 %v959, %v1119
        %v1200 = vmin.f32 %v960, %v1120
        %v1201 = vmin.f32 %v961, %v1121
        %v1202 = vmin.f32 %v962, %v1122
        %v1203 = vmin.f32 %v963, %v1123
        %v1204 = vmin.f32 %v964, %v1124
        %v1205 = vmin.f32 %v965, %v1125
        %v1206 = vmin.f32 %v966, %v1126
        %v1207 = vmin.f32 %v967, %v1127
        %v1208 = vmin.f32 %v968, %v1128
        %v1209 = vmin.f32 %v969, %v1129
        %v1210 = vmax.f32 %v890, %v1050
        %v1211 = vmax.f32 %v891, %v1051
        %v1212 = vmax.f32 %v892, %v1052
        %v1213 = vmax.f32 %v893, %v1053
        %v1214 = vmax.f32 %v894, %v1054
        %v1215 = vmax.f32 %v895, %v1055
        %v1216 = vmax.f32 %v896, %v1056
        %v1217 = vmax.f32 %v897, %v1057
        %v1218 = vmax.f32 %v898, %v1058
        %v1219 = vmax.f32 %v899, %v1059
        %v1220 = vmax.f32 %v900, %v1060
        %v1221 = vmax.f32 %v901, %v1061
        %v1222 = vmax.f32 %v902, %v1062
        %v1223 = vmax.f32 %v903, %v1063
        %v1224 = vmax.f32 %v904, %v1064
        %v1225 = vmax.f32 %v905, %v1065
        %v1226 = vmin.f32 %v890, %v1050
        %v1227 = vmin.f32 %v891, %v1051
        %v1228 = vmin.f32 %v892, %v1052
        %v1229 = vmin.f32 %v893, %v1053
        %v1230 = vmin.f32 %v894, %v1054
        %v1231 = vmin.f32 %v895, %v1055
        %v1232 = vmin.f32 %v896, %v1056
        %v1233 = vmin.f32 %v897, %v1057
        %v1234 = vmin.f32 %v898, %v1058
        %v1235 = vmin.f32 %v899, %v1059
        %v1236 = vmin.f32 %v900, %v1060
        %v1237 = vmin.f32 %v901, %v1061
        %v1238 = vmin.f32 %v902, %v1062
        %v1239 = vmin.f32 %v903, %v1063
        %v1240 = vmin.f32 %v904, %v1064
        %v1241 = vmin.f32 %v905, %v1065
        %v1242 = vmax.f32 %v970, %v1130
        %v1243 = vmax.f32 %v971, %v1131
        %v1244 = vmax.f32 %v972, %v1132
        %v1245 = vmax.f32 %v973, %v1133
        %v1246 = vmax.f32 %v974, %v1134
        %v1247 = vmax.f32 %v975, %v1135
        %v1248 = vmax.f32 %v976, %v1136
        %v1249 = vmax.f32 %v977, %v1137
        %v1250 = vmax.f32 %v978, %v1138
        %v1251 = vmax.f32 %v979, %v1139
        %v1252 = vmax.f32 %v980, %v1140
        %v1253 = vmax.f32 %v981, %v1141
        %v1254 = vmax.f32 %v982, %v1142
        %v1255 = vmax.f32 %v983, %v1143
        %v1256 = vmax.f32 %v984, %v1144
        %v1257 = vmax.f32 %v985, %v1145
        %v1258 = vmin.f32 %v970, %v1130
        %v1259 = vmin.f32 %v971, %v1131
        %v1260 = vmin.f32 %v972, %v1132
        %v1261 = vmin.f32 %v973, %v1133
        %v1262 = vmin.f32 %v974, %v1134
        %v1263 = vmin.f32 %v975, %v1135
        %v1264 = vmin.f32 %v976, %v1136
        %v1265 = vmin.f32 %v977, %v1137
        %v1266 = vmin.f32 %v978, %v1138
        %v1267 = vmin.f32 %v979, %v1139
        %v1268 = vmin.f32 %v980, %v1140
        %v1269 = vmin.f32 %v981, %v1141
        %v1270 = vmin.f32 %v982, %v1142
        %v1271 = vmin.f32 %v983, %v1143
        %v1272 = vmin.f32 %v984, %v1144
        %v1273 = vmin.f32 %v985, %v1145
        %v1274 = vmax.f32 %v1146, %v1178
        %v1275 = vmax.f32 %v1147, %v1179
        %v1276 = vmax.f32 %v1148, %v1180
        %v1277 = vmax.f32 %v1149, %v1181
        %v1278 = vmax.f32 %v1150, %v1182
        %v1279 = vmax.f32 %v1151, %v1183
        %v1280 = vmax.f32 %v1152, %v1184
        %v1281 = vmax.f32 %v1153, %v1185
        %v1282 = vmax.f32 %v1154, %v1186
        %v1283 = vmax.f32 %v1155, %v1187
        %v1284 = vmax.f32 %v1156, %v1188
        %v1285 = vmax.f32 %v1157, %v1189
        %v1286 = vmax.f32 %v1158, %v1190
        %v1287 = vmax.f32 %v1159, %v1191
        %v1288 = vmax.f32 %v1160, %v1192
        %v1289 = vmax.f32 %v1161, %v1193
        %v1290 = vmin.f32 %v1146, %v1178
        %v1291 = vmin.f32 %v1147, %v1179
        %v1292 = vmin.f32 %v1148, %v1180
        %v1293 = vmin.f32 %v1149, %v1181
        %v1294 = vmin.f32 %v1150, %v1182
        %v1295 = vmin.f32 %v1151, %v1183
        %v1296 = vmin.f32 %v1152, %v1184
        %v1297 = vmin.f32 %v1153, %v1185
        %v1298 = vmin.f32 %v1154, %v1186
        %v1299 = vmin.f32 %v1155, %v1187
        %v1300 = vmin.f32 %v1156, %v1188
        %v1301 = vmin.f32 %v1157, %v1189
        %v1302 = vmin.f32 %v1158, %v1190
        %v1303 = vmin.f32 %v1159, %v1191
        %v1304 = vmin.f32 %v1160, %v1192
        %v1305 = vmin.f32 %v1161, %v1193
        %v1306 = vmax.f32 %v1162, %v1194
        %v1307 = vmax.f32 %v1163, %v1195
        %v1308 = vmax.f32 %v1164, %v1196
        %v1309 = vmax.f32 %v1165, %v1197
        %v1310 = vmax.f32 %v1166, %v1198
        %v1311 = vmax.f32 %v1167, %v1199
        %v1312 = vmax.f32 %v1168, %v1200
        %v1313 = vmax.f32 %v1169, %v1201
        %v1314 = vmax.f32 %v1170, %v1202
        %v1315 = vmax.f32 %v1171, %v1203
        %v1316 = vmax.f32 %v1172, %v1204
        %v1317 = vmax.f32 %v1173, %v1205
        %v1318 = vmax.f32 %v1174, %v1206
        %v1319 = vmax.f32 %v1175, %v1207
        %v1320 = vmax.f32 %v1176, %v1208
        %v1321 = vmax.f32 %v1177, %v1209
        %v1322 = vmin.f32 %v1162, %v1194
        %v1323 = vmin.f32 %v1163, %v1195
        %v1324 = vmin.f32 %v1164, %v1196
        %v1325 = vmin.f32 %v1165, %v1197
        %v1326 = vmin.f32 %v1166, %v1198
        %v1327 = vmin.f32 %v1167, %v1199
        %v1328 = vmin.f32 %v1168, %v1200
        %v1329 = vmin.f32 %v1169, %v1201
        %v1330 = vmin.f32 %v1170, %v1202
        %v1331 = vmin.f32 %v1171, %v1203
        %v1332 = vmin.f32 %v1172, %v1204
        %v1333 = vmin.f32 %v1173, %v1205
        %v1334 = vmin.f32 %v1174, %v1206
        %v1335 = vmin.f32 %v1175, %v1207
        %v1336 = vmin.f32 %v1176, %v1208
        %v1337 = vmin.f32 %v1177, %v1209
        %v1338 = vmax.f32 %v1210, %v1242
        %v1339 = vmax.f32 %v1211, %v1243
        %v1340 = vmax.f32 %v1212, %v1244
        %v1341 = vmax.f32 %v1213, %v1245
        %v1342 = vmax.f32 %v1214, %v1246
        %v1343 = vmax.f32 %v1215, %v1247
        %v1344 = vmax.f32 %v1216, %v1248
        %v1345 = vmax.f32 %v1217, %v1249
        %v1346 = vmax.f32 %v1218, %v1250
        %v1347 = vmax.f32 %v1219, %v1251
        %v1348 = vmax.f32 %v1220, %v1252
        %v1349 = vmax.f32 %v1221, %v1253
        %v1350 = vmax.f32 %v1222, %v1254
        %v1351 = vmax.f32 %v1223, %v1255
        %v1352 = vmax.f32 %v1224, %v1256
        %v1353 = vmax.f32 %v1225, %v1257
        %v1354 = vmin.f32 %v1210, %v1242
        %v1355 = vmin.f32 %v1211, %v1243
        %v1356 = vmin.f32 %v1212, %v1244
        %v1357 = vmin.f32 %v1213, %v1245
        %v1358 = vmin.f32 %v1214, %v1246
        %v1359 = vmin.f32 %v1215, %v1247
        %v1360 = vmin.f32 %v1216, %v1248
        %v1361 = vmin.f32 %v1217, %v1249
        %v1362 = vmin.f32 %v1218, %v1250
        %v1363 = vmin.f32 %v1219, %v1251
        %v1364 = vmin.f32 %v1220, %v1252
        %v1365 = vmin.f32 %v1221, %v1253
        %v1366 = vmin.f32 %v1222, %v1254
        %v1367 = vmin.f32 %v1223, %v1255
        %v1368 = vmin.f32 %v1224, %v1256
        %v1369 = vmin.f32 %v1225, %v1257
        %v1370 = vmax.f32 %v1226, %v1258
        %v1371 = vmax.f32 %v1227, %v1259
        %v1372 = vmax.f32 %v1228, %v1260
        %v1373 = vmax.f32 %v1229, %v1261
        %v1374 = vmax.f32 %v1230, %v1262
        %v1375 = vmax.f32 %v1231, %v1263
        %v1376 = vmax.f32 %v1232, %v1264
        %v1377 = vmax.f32 %v1233, %v1265
        %v1378 = vmax.f32 %v1234, %v1266
        %v1379 = vmax.f32 %v1235, %v1267
        %v1380 = vmax.f32 %v1236, %v1268
        %v1381 = vmax.f32 %v1237, %v1269
        %v1382 = vmax.f32 %v1238, %v1270
        %v1383 = vmax.f32 %v1239, %v1271
        %v1384 = vmax.f32 %v1240, %v1272
        %v1385 = vmax.f32 %v1241, %v1273
        %v1386 = vmin.f32 %v1226, %v1258
        %v1387 = vmin.f32 %v1227, %v1259
        %v1388 = vmin.f32 %v1228, %v1260
        %v1389 = vmin.f32 %v1229, %v1261
        %v1390 = vmin.f32 %v1230, %v1262
        %v1391 = vmin.f32 %v1231, %v1263
        %v1392 = vmin.f32 %v1232, %v1264
        %v1393 = vmin.f32 %v1233, %v1265
        %v1394 = vmin.f32 %v1234, %v1266
        %v1395 = vmin.f32 %v1235, %v1267
        %v1396 = vmin.f32 %v1236, %v1268
        %v1397 = vmin.f32 %v1237, %v1269
        %v1398 = vmin.f32 %v1238, %v1270
        %v1399 = vmin.f32 %v1239, %v1271
        %v1400 = vmin.f32 %v1240, %v1272
        %v1401 = vmin.f32 %v1241, %v1273
        %v1402 = vmax.f32 %v794, %v810
        %v1403 = vmax.f32 %v795, %v811
        %v1404 = vmax.f32 %v796, %v812
        %v1405 = vmax.f32 %v797, %v813
        %v1406 = vmax.f32 %v798, %v814
        %v1407 = vmax.f32 %v799, %v815
        %v1408 = vmax.f32 %v800, %v816
        %v1409 = vmax.f32 %v801, %v817
        %v1410 = vmax.f32 %v802, %v818
        %v1411 = vmax.f32 %v803, %v819
        %v1412 = vmax.f32 %v804, %v820
        %v1413 = vmax.f32 %v805, %v821
        %v1414 = vmax.f32 %v806, %v822
        %v1415 = vmax.f32 %v807, %v823
        %v1416 = vmax.f32 %v808, %v824
        %v1417 = vmax.f32 %v809, %v825
        %v1418 = vmin.f32 %v794, %v810
        %v1419 = vmin.f32 %v795, %v811
        %v1420 = vmin.f32 %v796, %v812
        %v1421 = vmin.f32 %v797, %v813
        %v1422 = vmin.f32 %v798, %v814
        %v1423 = vmin.f32 %v799, %v815
        %v1424 = vmin.f32 %v800, %v816
        %v1425 = vmin.f32 %v801, %v817
        %v1426 = vmin.f32 %v802, %v818
        %v1427 = vmin.f32 %v803, %v819
        %v1428 = vmin.f32 %v804, %v820
        %v1429 = vmin.f32 %v805, %v821
        %v1430 = vmin.f32 %v806, %v822
        %v1431 = vmin.f32 %v807, %v823
        %v1432 = vmin.f32 %v808, %v824
        %v1433 = vmin.f32 %v809, %v825
        %v1434 = vmax.f32 %v1370, %v1418
        %v1435 = vmax.f32 %v1371, %v1419
        %v1436 = vmax.f32 %v1372, %v1420
        %v1437 = vmax.f32 %v1373, %v1421
        %v1438 = vmax.f32 %v1374, %v1422
        %v1439 = vmax.f32 %v1375, %v1423
        %v1440 = vmax.f32 %v1376, %v1424
        %v1441 = vmax.f32 %v1377, %v1425
        %v1442 = vmax.f32 %v1378, %v1426
        %v1443 = vmax.f32 %v1379, %v1427
        %v1444 = vmax.f32 %v1380, %v1428
        %v1445 = vmax.f32 %v1381, %v1429
        %v1446 = vmax.f32 %v1382, %v1430
        %v1447 = vmax.f32 %v1383, %v1431
        %v1448 = vmax.f32 %v1384, %v1432
        %v1449 = vmax.f32 %v1385, %v1433
        %v1450 = vmin.f32 %v1370, %v1418
        %v1451 = vmin.f32 %v1371, %v1419
        %v1452 = vmin.f32 %v1372, %v1420
        %v1453 = vmin.f32 %v1373, %v1421
        %v1454 = vmin.f32 %v1374, %v1422
        %v1455 = vmin.f32 %v1375, %v1423
        %v1456 = vmin.f32 %v1376, %v1424
        %v1457 = vmin.f32 %v1377, %v1425
        %v1458 = vmin.f32 %v1378, %v1426
        %v1459 = vmin.f32 %v1379, %v1427
        %v1460 = vmin.f32 %v1380, %v1428
        %v1461 = vmin.f32 %v1381, %v1429
        %v1462 = vmin.f32 %v1382, %v1430
        %v1463 = vmin.f32 %v1383, %v1431
        %v1464 = vmin.f32 %v1384, %v1432
        %v1465 = vmin.f32 %v1385, %v1433
        %v1466 = vmax.f32 %v1386, %v1402
        %v1467 = vmax.f32 %v1387, %v1403
        %v1468 = vmax.f32 %v1388, %v1404
        %v1469 = vmax.f32 %v1389, %v1405
        %v1470 = vmax.f32 %v1390, %v1406
        %v1471 = vmax.f32 %v1391, %v1407
        %v1472 = vmax.f32 %v1392, %v1408
        %v1473 = vmax.f32 %v1393, %v1409
        %v1474 = vmax.f32 %v1394, %v1410
        %v1475 = vmax.f32 %v1395, %v1411
        %v1476 = vmax.f32 %v1396, %v1412
        %v1477 = vmax.f32 %v1397, %v1413
        %v1478 = vmax.f32 %v1398, %v1414
        %v1479 = vmax.f32 %v1399, %v1415
        %v1480 = vmax.f32 %v1400, %v1416
        %v1481 = vmax.f32 %v1401, %v1417
        %v1482 = vmin.f32 %v1386, %v1402
        %v1483 = vmin.f32 %v1387, %v1403
        %v1484 = vmin.f32 %v1388, %v1404
        %v1485 = vmin.f32 %v1389, %v1405
        %v1486 = vmin.f32 %v1390, %v1406
        %v1487 = vmin.f32 %v1391, %v1407
        %v1488 = vmin.f32 %v1392, %v1408
        %v1489 = vmin.f32 %v1393, %v1409
        %v1490 = vmin.f32 %v1394, %v1410
        %v1491 = vmin.f32 %v1395, %v1411
        %v1492 = vmin.f32 %v1396, %v1412
        %v1493 = vmin.f32 %v1397, %v1413
        %v1494 = vmin.f32 %v1398, %v1414
        %v1495 = vmin.f32 %v1399, %v1415
        %v1496 = vmin.f32 %v1400, %v1416
        %v1497 = vmin.f32 %v1401, %v1417
        %v1498 = vmax.f32 %v1274, %v1338
        %v1499 = vmax.f32 %v1275, %v1339
        %v1500 = vmax.f32 %v1276, %v1340
        %v1501 = vmax.f32 %v1277, %v1341
        %v1502 = vmax.f32 %v1278, %v1342
        %v1503 = vmax.f32 %v1279, %v1343
        %v1504 = vmax.f32 %v1280, %v1344
        %v1505 = vmax.f32 %v1281, %v1345
        %v1506 = vmax.f32 %v1282, %v1346
        %v1507 = vmax.f32 %v1283, %v1347
        %v1508 = vmax.f32 %v1284, %v1348
        %v1509 = vmax.f32 %v1285, %v1349
        %v1510 = vmax.f32 %v1286, %v1350
        %v1511 = vmax.f32 %v1287, %v1351
        %v1512 = vmax.f32 %v1288, %v1352
        %v1513 = vmax.f32 %v1289, %v1353
        %v1514 = vmin.f32 %v1274, %v1338
        %v1515 = vmin.f32 %v1275, %v1339
        %v1516 = vmin.f32 %v1276, %v1340
        %v1517 = vmin.f32 %v1277, %v1341
        %v1518 = vmin.f32 %v1278, %v1342
        %v1519 = vmin.f32 %v1279, %v1343
        %v1520 = vmin.f32 %v1280, %v1344
        %v1521 = vmin.f32 %v1281, %v1345
        %v1522 = vmin.f32 %v1282, %v1346
        %v1523 = vmin.f32 %v1283, %v1347
        %v1524 = vmin.f32 %v1284, %v1348
        %v1525 = vmin.f32 %v1285, %v1349
        %v1526 = vmin.f32 %v1286, %v1350
        %v1527 = vmin.f32 %v1287, %v1351
        %v1528 = vmin.f32 %v1288, %v1352
        %v1529 = vmin.f32 %v1289, %v1353
        %v1530 = vmax.f32 %v1290, %v1354
        %v1531 = vmax.f32 %v1291, %v1355
        %v1532 = vmax.f32 %v1292, %v1356
        %v1533 = vmax.f32 %v1293, %v1357
        %v1534 = vmax.f32 %v1294, %v1358
        %v1535 = vmax.f32 %v1295, %v1359
        %v1536 = vmax.f32 %v1296, %v1360
        %v1537 = vmax.f32 %v1297, %v1361
        %v1538 = vmax.f32 %v1298, %v1362
        %v1539 = vmax.f32 %v1299, %v1363
        %v1540 = vmax.f32 %v1300, %v1364
        %v1541 = vmax.f32 %v1301, %v1365
        %v1542 = vmax.f32 %v1302, %v1366
        %v1543 = vmax.f32 %v1303, %v1367
        %v1544 = vmax.f32 %v1304, %v1368
        %v1545 = vmax.f32 %v1305, %v1369
        %v1546 = vmin.f32 %v1290, %v1354
        %v1547 = vmin.f32 %v1291, %v1355
        %v1548 = vmin.f32 %v1292, %v1356
        %v1549 = vmin.f32 %v1293, %v1357
        %v1550 = vmin.f32 %v1294, %v1358
        %v1551 = vmin.f32 %v1295, %v1359
        %v1552 = vmin.f32 %v1296, %v1360
        %v1553 = vmin.f32 %v1297, %v1361
        %v1554 = vmin.f32 %v1298, %v1362
        %v1555 = vmin.f32 %v1299, %v1363
        %v1556 = vmin.f32 %v1300, %v1364
        %v1557 = vmin.f32 %v1301, %v1365
        %v1558 = vmin.f32 %v1302, %v1366
        %v1559 = vmin.f32 %v1303, %v1367
        %v1560 = vmin.f32 %v1304, %v1368
        %v1561 = vmin.f32 %v1305, %v1369
        %v1562 = vmax.f32 %v1306, %v1434
        %v1563 = vmax.f32 %v1307, %v1435
        %v1564 = vmax.f32 %v1308, %v1436
        %v1565 = vmax.f32 %v1309, %v1437
        %v1566 = vmax.f32 %v1310, %v1438
        %v1567 = vmax.f32 %v1311, %v1439
        %v1568 = vmax.f32 %v1312, %v1440
        %v1569 = vmax.f32 %v1313, %v1441
        %v1570 = vmax.f32 %v1314, %v1442
        %v1571 = vmax.f32 %v1315, %v1443
        %v1572 = vmax.f32 %v1316, %v1444
        %v1573 = vmax.f32 %v1317, %v1445
        %v1574 = vmax.f32 %v1318, %v1446
        %v1575 = vmax.f32 %v1319, %v1447
        %v1576 = vmax.f32 %v1320, %v1448
        %v1577 = vmax.f32 %v1321, %v1449
        %v1578 = vmin.f32 %v1306, %v1434
        %v1579 = vmin.f32 %v1307, %v1435
        %v1580 = vmin.f32 %v1308, %v1436
        %v1581 = vmin.f32 %v1309, %v1437
        %v1582 = vmin.f32 %v1310, %v1438
        %v1583 = vmin.f32 %v1311, %v1439
        %v1584 = vmin.f32 %v1312, %v1440
        %v1585 = vmin.f32 %v1313, %v1441
        %v1586 = vmin.f32 %v1314, %v1442
        %v1587 = vmin.f32 %v1315, %v1443
        %v1588 = vmin.f32 %v1316, %v1444
        %v1589 = vmin.f32 %v1317, %v1445
        %v1590 = vmin.f32 %v1318, %v1446
        %v1591 = vmin.f32 %v1319, %v1447
        %v1592 = vmin.f32 %v1320, %v1448
        %v1593 = vmin.f32 %v1321, %v1449
        %v1594 = vmax.f32 %v1322, %v1466
        %v1595 = vmax.f32 %v1323, %v1467
        %v1596 = vmax.f32 %v1324, %v1468
        %v1597 = vmax.f32 %v1325, %v1469
        %v1598 = vmax.f32 %v1326, %v1470
        %v1599 = vmax.f32 %v1327, %v1471
        %v1600 = vmax.f32 %v1328, %v1472
        %v1601 = vmax.f32 %v1329, %v1473
        %v1602 = vmax.f32 %v1330, %v1474
        %v1603 = vmax.f32 %v1331, %v1475
        %v1604 = vmax.f32 %v1332, %v1476
        %v1605 = vmax.f32 %v1333, %v1477
        %v1606 = vmax.f32 %v1334, %v1478
        %v1607 = vmax.f32 %v1335, %v1479
        %v1608 = vmax.f32 %v1336, %v1480
        %v1609 = vmax.f32 %v1337, %v1481
        %v1610 = vmin.f32 %v1322, %v1466
        %v1611 = vmin.f32 %v1323, %v1467
        %v1612 = vmin.f32 %v1324, %v1468
        %v1613 = vmin.f32 %v1325, %v1469
        %v1614 = vmin.f32 %v1326, %v1470
        %v1615 = vmin.f32 %v1327, %v1471
        %v1616 = vmin.f32 %v1328, %v1472
        %v1617 = vmin.f32 %v1329, %v1473
        %v1618 = vmin.f32 %v1330, %v1474
        %v1619 = vmin.f32 %v1331, %v1475
        %v1620 = vmin.f32 %v1332, %v1476
        %v1621 = vmin.f32 %v1333, %v1477
        %v1622 = vmin.f32 %v1334, %v1478
        %v1623 = vmin.f32 %v1335, %v1479
        %v1624 = vmin.f32 %v1336, %v1480
        %v1625 = vmin.f32 %v1337, %v1481
        %v1626 = vmax.f32 %v1498, %v1562
        %v1627 = vmax.f32 %v1499, %v1563
        %v1628 = vmax.f32 %v1500, %v1564
        %v1629 = vmax.f32 %v1501, %v1565
        %v1630 = vmax.f32 %v1502, %v1566
        %v1631 = vmax.f32 %v1503, %v1567
        %v1632 = vmax.f32 %v1504, %v1568
        %v1633 = vmax.f32 %v1505, %v1569
        %v1634 = vmax.f32 %v1506, %v1570
        %v1635 = vmax.f32 %v1507, %v1571
        %v1636 = vmax.f32 %v1508, %v1572
        %v1637 = vmax.f32 %v1509, %v1573
        %v1638 = vmax.f32 %v1510, %v1574
        %v1639 = vmax.f32 %v1511, %v1575
        %v1640 = vmax.f32 %v1512, %v1576
        %v1641 = vmax.f32 %v1513, %v1577
        %v1642 = vmin.f32 %v1498, %v1562
        %v1643 = vmin.f32 %v1499, %v1563
        %v1644 = vmin.f32 %v1500, %v1564
        %v1645 = vmin.f32 %v1501, %v1565
        %v1646 = vmin.f32 %v1502, %v1566
        %v1647 = vmin.f32 %v1503, %v1567
        %v1648 = vmin.f32 %v1504, %v1568
        %v1649 = vmin.f32 %v1505, %v1569
        %v1650 = vmin.f32 %v1506, %v1570
        %v1651 = vmin.f32 %v1507, %v1571
        %v1652 = vmin.f32 %v1508, %v1572
        %v1653 = vmin.f32 %v1509, %v1573
        %v1654 = vmin.f32 %v1510, %v1574
        %v1655 = vmin.f32 %v1511, %v1575
        %v1656 = vmin.f32 %v1512, %v1576
        %v1657 = vmin.f32 %v1513, %v1577
        %v1658 = vmax.f32 %v1530, %v1594
        %v1659 = vmax.f32 %v1531, %v1595
        %v1660 = vmax.f32 %v1532, %v1596
        %v1661 = vmax.f32 %v1533, %v1597
        %v1662 = vmax.f32 %v1534, %v1598
        %v1663 = vmax.f32 %v1535, %v1599
        %v1664 = vmax.f32 %v1536, %v1600
        %v1665 = vmax.f32 %v1537, %v1601
        %v1666 = vmax.f32 %v1538, %v1602
        %v1667 = vmax.f32 %v1539, %v1603
        %v1668 = vmax.f32 %v1540, %v1604
        %v1669 = vmax.f32 %v1541, %v1605
        %v1670 = vmax.f32 %v1542, %v1606
        %v1671 = vmax.f32 %v1543, %v1607
        %v1672 = vmax.f32 %v1544, %v1608
        %v1673 = vmax.f32 %v1545, %v1609
        %v1674 = vmin.f32 %v1530, %v1594
        %v1675 = vmin.f32 %v1531, %v1595
        %v1676 = vmin.f32 %v1532, %v1596
        %v1677 = vmin.f32 %v1533, %v1597
        %v1678 = vmin.f32 %v1534, %v1598
        %v1679 = vmin.f32 %v1535, %v1599
        %v1680 = vmin.f32 %v1536, %v1600
        %v1681 = vmin.f32 %v1537, %v1601
        %v1682 = vmin.f32 %v1538, %v1602
        %v1683 = vmin.f32 %v1539, %v1603
        %v1684 = vmin.f32 %v1540, %v1604
        %v1685 = vmin.f32 %v1541, %v1605
        %v1686 = vmin.f32 %v1542, %v1606
        %v1687 = vmin.f32 %v1543, %v1607
        %v1688 = vmin.f32 %v1544, %v1608
        %v1689 = vmin.f32 %v1545, %v1609
        %v1690 = vmax.f32 %v1514, %v1578
        %v1691 = vmax.f32 %v1515, %v1579
        %v1692 = vmax.f32 %v1516, %v1580
        %v1693 = vmax.f32 %v1517, %v1581
        %v1694 = vmax.f32 %v1518, %v1582
        %v1695 = vmax.f32 %v1519, %v1583
        %v1696 = vmax.f32 %v1520, %v1584
        %v1697 = vmax.f32 %v1521, %v1585
        %v1698 = vmax.f32 %v1522, %v1586
        %v1699 = vmax.f32 %v1523, %v1587
        %v1700 = vmax.f32 %v1524, %v1588
        %v1701 = vmax.f32 %v1525, %v1589
        %v1702 = vmax.f32 %v1526, %v1590
        %v1703 = vmax.f32 %v1527, %v1591
        %v1704 = vmax.f32 %v1528, %v1592
        %v1705 = vmax.f32 %v1529, %v1593
        %v1706 = vmin.f32 %v1514, %v1578
        %v1707 = vmin.f32 %v1515, %v1579
        %v1708 = vmin.f32 %v1516, %v1580
        %v1709 = vmin.f32 %v1517, %v1581
        %v1710 = vmin.f32 %v1518, %v1582
        %v1711 = vmin.f32 %v1519, %v1583
        %v1712 = vmin.f32 %v1520, %v1584
        %v1713 = vmin.f32 %v1521, %v1585
        %v1714 = vmin.f32 %v1522, %v1586
        %v1715 = vmin.f32 %v1523, %v1587
        %v1716 = vmin.f32 %v1524, %v1588
        %v1717 = vmin.f32 %v1525, %v1589
        %v1718 = vmin.f32 %v1526, %v1590
        %v1719 = vmin.f32 %v1527, %v1591
        %v1720 = vmin.f32 %v1528, %v1592
        %v1721 = vmin.f32 %v1529, %v1593
        %v1722 = vmax.f32 %v1546, %v1610
        %v1723 = vmax.f32 %v1547, %v1611
        %v1724 = vmax.f32 %v1548, %v1612
        %v1725 = vmax.f32 %v1549, %v1613
        %v1726 = vmax.f32 %v1550, %v1614
        %v1727 = vmax.f32 %v1551, %v1615
        %v1728 = vmax.f32 %v1552, %v1616
        %v1729 = vmax.f32 %v1553, %v1617
        %v1730 = vmax.f32 %v1554, %v1618
        %v1731 = vmax.f32 %v1555, %v1619
        %v1732 = vmax.f32 %v1556, %v1620
        %v1733 = vmax.f32 %v1557, %v1621
        %v1734 = vmax.f32 %v1558, %v1622
        %v1735 = vmax.f32 %v1559, %v1623
        %v1736 = vmax.f32 %v1560, %v1624
        %v1737 = vmax.f32 %v1561, %v1625
        %v1738 = vmin.f32 %v1546, %v1610
        %v1739 = vmin.f32 %v1547, %v1611
        %v1740 = vmin.f32 %v1548, %v1612
        %v1741 = vmin.f32 %v1549, %v1613
        %v1742 = vmin.f32 %v1550, %v1614
        %v1743 = vmin.f32 %v1551, %v1615
        %v1744 = vmin.f32 %v1552, %v1616
        %v1745 = vmin.f32 %v1553, %v1617
        %v1746 = vmin.f32 %v1554, %v1618
        %v1747 = vmin.f32 %v1555, %v1619
        %v1748 = vmin.f32 %v1556, %v1620
        %v1749 = vmin.f32 %v1557, %v1621
        %v1750 = vmin.f32 %v1558, %v1622
        %v1751 = vmin.f32 %v1559, %v1623
        %v1752 = vmin.f32 %v1560, %v1624
        %v1753 = vmin.f32 %v1561, %v1625
        %v1754 = vmax.f32 %v1626, %v1658
        %v1755 = vmax.f32 %v1627, %v1659
        %v1756 = vmax.f32 %v1628, %v1660
        %v1757 = vmax.f32 %v1629, %v1661
        %v1758 = vmax.f32 %v1630, %v1662
        %v1759 = vmax.f32 %v1631, %v1663
        %v1760 = vmax.f32 %v1632, %v1664
        %v1761 = vmax.f32 %v1633, %v1665
        %v1762 = vmax.f32 %v1634, %v1666
        %v1763 = vmax.f32 %v1635, %v1667
        %v1764 = vmax.f32 %v1636, %v1668
        %v1765 = vmax.f32 %v1637, %v1669
        %v1766 = vmax.f32 %v1638, %v1670
        %v1767 = vmax.f32 %v1639, %v1671
        %v1768 = vmax.f32 %v1640, %v1672
        %v1769 = vmax.f32 %v1641, %v1673
        %v1770 = vmin.f32 %v1626, %v1658
        %v1771 = vmin.f32 %v1627, %v1659
        %v1772 = vmin.f32 %v1628, %v1660
        %v1773 = vmin.f32 %v1629, %v1661
        %v1774 = vmin.f32 %v1630, %v1662
        %v1775 = vmin.f32 %v1631, %v1663
        %v1776 = vmin.f32 %v1632, %v1664
        %v1777 = vmin.f32 %v1633, %v1665
        %v1778 = vmin.f32 %v1634, %v1666
        %v1779 = vmin.f32 %v1635, %v1667
        %v1780 = vmin.f32 %v1636, %v1668
        %v1781 = vmin.f32 %v1637, %v1669
        %v1782 = vmin.f32 %v1638, %v1670
        %v1783 = vmin.f32 %v1639, %v1671
        %v1784 = vmin.f32 %v1640, %v1672
        %v1785 = vmin.f32 %v1641, %v1673
        %v1786 = vmax.f32 %v1642, %v1674
        %v1787 = vmax.f32 %v1643, %v1675
        %v1788 = vmax.f32 %v1644, %v1676
        %v1789 = vmax.f32 %v1645, %v1677
        %v1790 = vmax.f32 %v1646, %v1678
        %v1791 = vmax.f32 %v1647, %v1679
        %v1792 = vmax.f32 %v1648, %v1680
        %v1793 = vmax.f32 %v1649, %v1681
        %v1794 = vmax.f32 %v1650, %v1682
        %v1795 = vmax.f32 %v1651, %v1683
        %v1796 = vmax.f32 %v1652, %v1684
        %v1797 = vmax.f32 %v1653, %v1685
        %v1798 = vmax.f32 %v1654, %v1686
        %v1799 = vmax.f32 %v1655, %v1687
        %v1800 = vmax.f32 %v1656, %v1688
        %v1801 = vmax.f32 %v1657, %v1689
        %v1802 = vmin.f32 %v1642, %v1674
        %v1803 = vmin.f32 %v1643, %v1675
        %v1804 = vmin.f32 %v1644, %v1676
        %v1805 = vmin.f32 %v1645, %v1677
        %v1806 = vmin.f32 %v1646, %v1678
        %v1807 = vmin.f32 %v1647, %v1679
        %v1808 = vmin.f32 %v1648, %v1680
        %v1809 = vmin.f32 %v1649, %v1681
        %v1810 = vmin.f32 %v1650, %v1682
        %v1811 = vmin.f32 %v1651, %v1683
        %v1812 = vmin.f32 %v1652, %v1684
        %v1813 = vmin.f32 %v1653, %v1685
        %v1814 = vmin.f32 %v1654, %v1686
        %v1815 = vmin.f32 %v1655, %v1687
        %v1816 = vmin.f32 %v1656, %v1688
        %v1817 = vmin.f32 %v1657, %v1689
        %v1818 = vmax.f32 %v1690, %v1722
        %v1819 = vmax.f32 %v1691, %v1723
        %v1820 = vmax.f32 %v1692, %v1724
        %v1821 = vmax.f32 %v1693, %v1725
        %v1822 = vmax.f32 %v1694, %v1726
        %v1823 = vmax.f32 %v1695, %v1727
        %v1824 = vmax.f32 %v1696, %v1728
        %v1825 = vmax.f32 %v1697, %v1729
        %v1826 = vmax.f32 %v1698, %v1730
        %v1827 = vmax.f32 %v1699, %v1731
        %v1828 = vmax.f32 %v1700, %v1732
        %v1829 = vmax.f32 %v1701, %v1733
        %v1830 = vmax.f32 %v1702, %v1734
        %v1831 = vmax.f32 %v1703, %v1735
        %v1832 = vmax.f32 %v1704, %v1736
        %v1833 = vmax.f32 %v1705, %v1737
        %v1834 = vmin.f32 %v1690, %v1722
        %v1835 = vmin.f32 %v1691, %v1723
        %v1836 = vmin.f32 %v1692, %v1724
        %v1837 = vmin.f32 %v1693, %v1725
        %v1838 = vmin.f32 %v1694, %v1726
        %v1839 = vmin.f32 %v1695, %v1727
        %v1840 = vmin.f32 %v1696, %v1728
        %v1841 = vmin.f32 %v1697, %v1729
        %v1842 = vmin.f32 %v1698, %v1730
        %v1843 = vmin.f32 %v1699, %v1731
        %v1844 = vmin.f32 %v1700, %v1732
        %v1845 = vmin.f32 %v1701, %v1733
        %v1846 = vmin.f32 %v1702, %v1734
        %v1847 = vmin.f32 %v1703, %v1735
        %v1848 = vmin.f32 %v1704, %v1736
        %v1849 = vmin.f32 %v1705, %v1737
        %v1850 = vmax.f32 %v1706, %v1738
        %v1851 = vmax.f32 %v1707, %v1739
        %v1852 = vmax.f32 %v1708, %v1740
        %v1853 = vmax.f32 %v1709, %v1741
        %v1854 = vmax.f32 %v1710, %v1742
        %v1855 = vmax.f32 %v1711, %v1743
        %v1856 = vmax.f32 %v1712, %v1744
        %v1857 = vmax.f32 %v1713, %v1745
        %v1858 = vmax.f32 %v1714, %v1746
        %v1859 = vmax.f32 %v1715, %v1747
        %v1860 = vmax.f32 %v1716, %v1748
        %v1861 = vmax.f32 %v1717, %v1749
        %v1862 = vmax.f32 %v1718, %v1750
        %v1863 = vmax.f32 %v1719, %v1751
        %v1864 = vmax.f32 %v1720, %v1752
        %v1865 = vmax.f32 %v1721, %v1753
        %v1866 = vmin.f32 %v1706, %v1738
        %v1867 = vmin.f32 %v1707, %v1739
        %v1868 = vmin.f32 %v1708, %v1740
        %v1869 = vmin.f32 %v1709, %v1741
        %v1870 = vmin.f32 %v1710, %v1742
        %v1871 = vmin.f32 %v1711, %v1743
        %v1872 = vmin.f32 %v1712, %v1744
        %v1873 = vmin.f32 %v1713, %v1745
        %v1874 = vmin.f32 %v1714, %v1746
        %v1875 = vmin.f32 %v1715, %v1747
        %v1876 = vmin.f32 %v1716, %v1748
        %v1877 = vmin.f32 %v1717, %v1749
        %v1878 = vmin.f32 %v1718, %v1750
        %v1879 = vmin.f32 %v1719, %v1751
        %v1880 = vmin.f32 %v1720, %v1752
        %v1881 = vmin.f32 %v1721, %v1753
        %v1882 = vmax.f32 %v1450, %v1482
        %v1883 = vmax.f32 %v1451, %v1483
        %v1884 = vmax.f32 %v1452, %v1484
        %v1885 = vmax.f32 %v1453, %v1485
        %v1886 = vmax.f32 %v1454, %v1486
        %v1887 = vmax.f32 %v1455, %v1487
        %v1888 = vmax.f32 %v1456, %v1488
        %v1889 = vmax.f32 %v1457, %v1489
        %v1890 = vmax.f32 %v1458, %v1490
        %v1891 = vmax.f32 %v1459, %v1491
        %v1892 = vmax.f32 %v1460, %v1492
        %v1893 = vmax.f32 %v1461, %v1493
        %v1894 = vmax.f32 %v1462, %v1494
        %v1895 = vmax.f32 %v1463, %v1495
        %v1896 = vmax.f32 %v1464, %v1496
        %v1897 = vmax.f32 %v1465, %v1497
        %v1898 = vmin.f32 %v1450, %v1482
        %v1899 = vmin.f32 %v1451, %v1483
        %v1900 = vmin.f32 %v1452, %v1484
        %v1901 = vmin.f32 %v1453, %v1485
        %v1902 = vmin.f32 %v1454, %v1486
        %v1903 = vmin.f32 %v1455, %v1487
        %v1904 = vmin.f32 %v1456, %v1488
        %v1905 = vmin.f32 %v1457, %v1489
        %v1906 = vmin.f32 %v1458, %v1490
        %v1907 = vmin.f32 %v1459, %v1491
        %v1908 = vmin.f32 %v1460, %v1492
        %v1909 = vmin.f32 %v1461, %v1493
        %v1910 = vmin.f32 %v1462, %v1494
        %v1911 = vmin.f32 %v1463, %v1495
        %v1912 = vmin.f32 %v1464, %v1496
        %v1913 = vmin.f32 %v1465, %v1497
        %1915 = vset.pattern.permute.xlu0 0
        %1916 = vperm.xlu0 %1915, %v208
        %v1917 = vpop.permute.xlu0 %1916
        %v1918 = vrot.slane %v1917, 1
        %v1919 = vrot.slane %v1917, 2
        %v1920 = vrot.slane %v1917, 3
        %v1921 = vrot.slane %v1917, 4
        %v1922 = vrot.slane %v1917, 5
        %v1923 = vrot.slane %v1917, 6
        %v1924 = vrot.slane %v1917, 7
        %v1933 = vmul.f32 %v1754, %v1917
        %v1934 = vmul.f32 %v1755, %v1917
        %v1935 = vmul.f32 %v1756, %v1918
        %v1936 = vmul.f32 %v1757, %v1918
        %v1937 = vmul.f32 %v1758, %v1919
        %v1938 = vmul.f32 %v1759, %v1919
        %v1939 = vmul.f32 %v1760, %v1920
        %v1940 = vmul.f32 %v1761, %v1920
        %v1941 = vmul.f32 %v1762, %v1921
        %v1942 = vmul.f32 %v1763, %v1921
        %v1943 = vmul.f32 %v1764, %v1922
        %v1944 = vmul.f32 %v1765, %v1922
        %v1945 = vmul.f32 %v1766, %v1923
        %v1946 = vmul.f32 %v1767, %v1923
        %v1947 = vmul.f32 %v1768, %v1924
        %v1948 = vmul.f32 %v1769, %v1924
        %1949 = vset.pattern.permute.xlu0 1
        %1950 = vperm.xlu0 %1949, %v208
        %v1951 = vpop.permute.xlu0 %1950
        %v1952 = vrot.slane %v1951, 1
        %v1953 = vrot.slane %v1951, 2
        %v1954 = vrot.slane %v1951, 3
        %v1955 = vrot.slane %v1951, 4
        %v1956 = vrot.slane %v1951, 5
        %v1957 = vrot.slane %v1951, 6
        %v1958 = vrot.slane %v1951, 7
        %v1967 = vmul.f32 %v1770, %v1951
        %v1968 = vmul.f32 %v1771, %v1951
        %v1969 = vmul.f32 %v1772, %v1952
        %v1970 = vmul.f32 %v1773, %v1952
        %v1971 = vmul.f32 %v1774, %v1953
        %v1972 = vmul.f32 %v1775, %v1953
        %v1973 = vmul.f32 %v1776, %v1954
        %v1974 = vmul.f32 %v1777, %v1954
        %v1975 = vmul.f32 %v1778, %v1955
        %v1976 = vmul.f32 %v1779, %v1955
        %v1977 = vmul.f32 %v1780, %v1956
        %v1978 = vmul.f32 %v1781, %v1956
        %v1979 = vmul.f32 %v1782, %v1957
        %v1980 = vmul.f32 %v1783, %v1957
        %v1981 = vmul.f32 %v1784, %v1958
        %v1982 = vmul.f32 %v1785, %v1958
        %1983 = vset.pattern.permute.xlu0 2
        %1984 = vperm.xlu0 %1983, %v208
        %v1985 = vpop.permute.xlu0 %1984
        %v1986 = vrot.slane %v1985, 1
        %v1987 = vrot.slane %v1985, 2
        %v1988 = vrot.slane %v1985, 3
        %v1989 = vrot.slane %v1985, 4
        %v1990 = vrot.slane %v1985, 5
        %v1991 = vrot.slane %v1985, 6
        %v1992 = vrot.slane %v1985, 7
        %v2001 = vmul.f32 %v1786, %v1985
        %v2002 = vmul.f32 %v1787, %v1985
        %v2003 = vmul.f32 %v1788, %v1986
        %v2004 = vmul.f32 %v1789, %v1986
        %v2005 = vmul.f32 %v1790, %v1987
        %v2006 = vmul.f32 %v1791, %v1987
        %v2007 = vmul.f32 %v1792, %v1988
        %v2008 = vmul.f32 %v1793, %v1988
        %v2009 = vmul.f32 %v1794, %v1989
        %v2010 = vmul.f32 %v1795, %v1989
        %v2011 = vmul.f32 %v1796, %v1990
        %v2012 = vmul.f32 %v1797, %v1990
        %v2013 = vmul.f32 %v1798, %v1991
        %v2014 = vmul.f32 %v1799, %v1991
        %v2015 = vmul.f32 %v1800, %v1992
        %v2016 = vmul.f32 %v1801, %v1992
        %2017 = vset.pattern.permute.xlu0 3
        %2018 = vperm.xlu0 %2017, %v208
        %v2019 = vpop.permute.xlu0 %2018
        %v2020 = vrot.slane %v2019, 1
        %v2021 = vrot.slane %v2019, 2
        %v2022 = vrot.slane %v2019, 3
        %v2023 = vrot.slane %v2019, 4
        %v2024 = vrot.slane %v2019, 5
        %v2025 = vrot.slane %v2019, 6
        %v2026 = vrot.slane %v2019, 7
        %v2035 = vmul.f32 %v1802, %v2019
        %v2036 = vmul.f32 %v1803, %v2019
        %v2037 = vmul.f32 %v1804, %v2020
        %v2038 = vmul.f32 %v1805, %v2020
        %v2039 = vmul.f32 %v1806, %v2021
        %v2040 = vmul.f32 %v1807, %v2021
        %v2041 = vmul.f32 %v1808, %v2022
        %v2042 = vmul.f32 %v1809, %v2022
        %v2043 = vmul.f32 %v1810, %v2023
        %v2044 = vmul.f32 %v1811, %v2023
        %v2045 = vmul.f32 %v1812, %v2024
        %v2046 = vmul.f32 %v1813, %v2024
        %v2047 = vmul.f32 %v1814, %v2025
        %v2048 = vmul.f32 %v1815, %v2025
        %v2049 = vmul.f32 %v1816, %v2026
        %v2050 = vmul.f32 %v1817, %v2026
        %2051 = vset.pattern.permute.xlu0 4
        %2052 = vperm.xlu0 %2051, %v208
        %v2053 = vpop.permute.xlu0 %2052
        %v2054 = vrot.slane %v2053, 1
        %v2055 = vrot.slane %v2053, 2
        %v2056 = vrot.slane %v2053, 3
        %v2057 = vrot.slane %v2053, 4
        %v2058 = vrot.slane %v2053, 5
        %v2059 = vrot.slane %v2053, 6
        %v2060 = vrot.slane %v2053, 7
        %v2069 = vmul.f32 %v1818, %v2053
        %v2070 = vmul.f32 %v1819, %v2053
        %v2071 = vmul.f32 %v1820, %v2054
        %v2072 = vmul.f32 %v1821, %v2054
        %v2073 = vmul.f32 %v1822, %v2055
        %v2074 = vmul.f32 %v1823, %v2055
        %v2075 = vmul.f32 %v1824, %v2056
        %v2076 = vmul.f32 %v1825, %v2056
        %v2077 = vmul.f32 %v1826, %v2057
        %v2078 = vmul.f32 %v1827, %v2057
        %v2079 = vmul.f32 %v1828, %v2058
        %v2080 = vmul.f32 %v1829, %v2058
        %v2081 = vmul.f32 %v1830, %v2059
        %v2082 = vmul.f32 %v1831, %v2059
        %v2083 = vmul.f32 %v1832, %v2060
        %v2084 = vmul.f32 %v1833, %v2060
        %2085 = vset.pattern.permute.xlu0 5
        %2086 = vperm.xlu0 %2085, %v208
        %v2087 = vpop.permute.xlu0 %2086
        %v2088 = vrot.slane %v2087, 1
        %v2089 = vrot.slane %v2087, 2
        %v2090 = vrot.slane %v2087, 3
        %v2091 = vrot.slane %v2087, 4
        %v2092 = vrot.slane %v2087, 5
        %v2093 = vrot.slane %v2087, 6
        %v2094 = vrot.slane %v2087, 7
        %v2103 = vmul.f32 %v1834, %v2087
        %v2104 = vmul.f32 %v1835, %v2087
        %v2105 = vmul.f32 %v1836, %v2088
        %v2106 = vmul.f32 %v1837, %v2088
        %v2107 = vmul.f32 %v1838, %v2089
        %v2108 = vmul.f32 %v1839, %v2089
        %v2109 = vmul.f32 %v1840, %v2090
        %v2110 = vmul.f32 %v1841, %v2090
        %v2111 = vmul.f32 %v1842, %v2091
        %v2112 = vmul.f32 %v1843, %v2091
        %v2113 = vmul.f32 %v1844, %v2092
        %v2114 = vmul.f32 %v1845, %v2092
        %v2115 = vmul.f32 %v1846, %v2093
        %v2116 = vmul.f32 %v1847, %v2093
        %v2117 = vmul.f32 %v1848, %v2094
        %v2118 = vmul.f32 %v1849, %v2094
        %2119 = vset.pattern.permute.xlu0 6
        %2120 = vperm.xlu0 %2119, %v208
        %v2121 = vpop.permute.xlu0 %2120
        %v2122 = vrot.slane %v2121, 1
        %v2123 = vrot.slane %v2121, 2
        %v2124 = vrot.slane %v2121, 3
        %v2125 = vrot.slane %v2121, 4
        %v2126 = vrot.slane %v2121, 5
        %v2127 = vrot.slane %v2121, 6
        %v2128 = vrot.slane %v2121, 7
        %v2137 = vmul.f32 %v1850, %v2121
        %v2138 = vmul.f32 %v1851, %v2121
        %v2139 = vmul.f32 %v1852, %v2122
        %v2140 = vmul.f32 %v1853, %v2122
        %v2141 = vmul.f32 %v1854, %v2123
        %v2142 = vmul.f32 %v1855, %v2123
        %v2143 = vmul.f32 %v1856, %v2124
        %v2144 = vmul.f32 %v1857, %v2124
        %v2145 = vmul.f32 %v1858, %v2125
        %v2146 = vmul.f32 %v1859, %v2125
        %v2147 = vmul.f32 %v1860, %v2126
        %v2148 = vmul.f32 %v1861, %v2126
        %v2149 = vmul.f32 %v1862, %v2127
        %v2150 = vmul.f32 %v1863, %v2127
        %v2151 = vmul.f32 %v1864, %v2128
        %v2152 = vmul.f32 %v1865, %v2128
        %2153 = vset.pattern.permute.xlu0 7
        %2154 = vperm.xlu0 %2153, %v208
        %v2155 = vpop.permute.xlu0 %2154
        %v2156 = vrot.slane %v2155, 1
        %v2157 = vrot.slane %v2155, 2
        %v2158 = vrot.slane %v2155, 3
        %v2159 = vrot.slane %v2155, 4
        %v2160 = vrot.slane %v2155, 5
        %v2161 = vrot.slane %v2155, 6
        %v2162 = vrot.slane %v2155, 7
        %v2171 = vmul.f32 %v1866, %v2155
        %v2172 = vmul.f32 %v1867, %v2155
        %v2173 = vmul.f32 %v1868, %v2156
        %v2174 = vmul.f32 %v1869, %v2156
        %v2175 = vmul.f32 %v1870, %v2157
        %v2176 = vmul.f32 %v1871, %v2157
        %v2177 = vmul.f32 %v1872, %v2158
        %v2178 = vmul.f32 %v1873, %v2158
        %v2179 = vmul.f32 %v1874, %v2159
        %v2180 = vmul.f32 %v1875, %v2159
        %v2181 = vmul.f32 %v1876, %v2160
        %v2182 = vmul.f32 %v1877, %v2160
        %v2183 = vmul.f32 %v1878, %v2161
        %v2184 = vmul.f32 %v1879, %v2161
        %v2185 = vmul.f32 %v1880, %v2162
        %v2186 = vmul.f32 %v1881, %v2162
        %2187 = vset.pattern.permute.xlu0 8
        %2188 = vperm.xlu0 %2187, %v208
        %v2189 = vpop.permute.xlu0 %2188
        %v2190 = vrot.slane %v2189, 1
        %v2191 = vrot.slane %v2189, 2
        %v2192 = vrot.slane %v2189, 3
        %v2193 = vrot.slane %v2189, 4
        %v2194 = vrot.slane %v2189, 5
        %v2195 = vrot.slane %v2189, 6
        %v2196 = vrot.slane %v2189, 7
        %v2205 = vmul.f32 %v1882, %v2189
        %v2206 = vmul.f32 %v1883, %v2189
        %v2207 = vmul.f32 %v1884, %v2190
        %v2208 = vmul.f32 %v1885, %v2190
        %v2209 = vmul.f32 %v1886, %v2191
        %v2210 = vmul.f32 %v1887, %v2191
        %v2211 = vmul.f32 %v1888, %v2192
        %v2212 = vmul.f32 %v1889, %v2192
        %v2213 = vmul.f32 %v1890, %v2193
        %v2214 = vmul.f32 %v1891, %v2193
        %v2215 = vmul.f32 %v1892, %v2194
        %v2216 = vmul.f32 %v1893, %v2194
        %v2217 = vmul.f32 %v1894, %v2195
        %v2218 = vmul.f32 %v1895, %v2195
        %v2219 = vmul.f32 %v1896, %v2196
        %v2220 = vmul.f32 %v1897, %v2196
        %2221 = vset.pattern.permute.xlu0 9
        %2222 = vperm.xlu0 %2221, %v208
        %v2223 = vpop.permute.xlu0 %2222
        %v2224 = vrot.slane %v2223, 1
        %v2225 = vrot.slane %v2223, 2
        %v2226 = vrot.slane %v2223, 3
        %v2227 = vrot.slane %v2223, 4
        %v2228 = vrot.slane %v2223, 5
        %v2229 = vrot.slane %v2223, 6
        %v2230 = vrot.slane %v2223, 7
        %v2239 = vmul.f32 %v1898, %v2223
        %v2240 = vmul.f32 %v1899, %v2223
        %v2241 = vmul.f32 %v1900, %v2224
        %v2242 = vmul.f32 %v1901, %v2224
        %v2243 = vmul.f32 %v1902, %v2225
        %v2244 = vmul.f32 %v1903, %v2225
        %v2245 = vmul.f32 %v1904, %v2226
        %v2246 = vmul.f32 %v1905, %v2226
        %v2247 = vmul.f32 %v1906, %v2227
        %v2248 = vmul.f32 %v1907, %v2227
        %v2249 = vmul.f32 %v1908, %v2228
        %v2250 = vmul.f32 %v1909, %v2228
        %v2251 = vmul.f32 %v1910, %v2229
        %v2252 = vmul.f32 %v1911, %v2229
        %v2253 = vmul.f32 %v1912, %v2230
        %v2254 = vmul.f32 %v1913, %v2230
        %v2255 = vadd.f32 %v1933, %v1967
        %v2256 = vadd.f32 %v1934, %v1968
        %v2257 = vadd.f32 %v1935, %v1969
        %v2258 = vadd.f32 %v1936, %v1970
        %v2259 = vadd.f32 %v1937, %v1971
        %v2260 = vadd.f32 %v1938, %v1972
        %v2261 = vadd.f32 %v1939, %v1973
        %v2262 = vadd.f32 %v1940, %v1974
        %v2263 = vadd.f32 %v1941, %v1975
        %v2264 = vadd.f32 %v1942, %v1976
        %v2265 = vadd.f32 %v1943, %v1977
        %v2266 = vadd.f32 %v1944, %v1978
        %v2267 = vadd.f32 %v1945, %v1979
        %v2268 = vadd.f32 %v1946, %v1980
        %v2269 = vadd.f32 %v1947, %v1981
        %v2270 = vadd.f32 %v1948, %v1982
        %v2271 = vadd.f32 %v2001, %v2035
        %v2272 = vadd.f32 %v2002, %v2036
        %v2273 = vadd.f32 %v2003, %v2037
        %v2274 = vadd.f32 %v2004, %v2038
        %v2275 = vadd.f32 %v2005, %v2039
        %v2276 = vadd.f32 %v2006, %v2040
        %v2277 = vadd.f32 %v2007, %v2041
        %v2278 = vadd.f32 %v2008, %v2042
        %v2279 = vadd.f32 %v2009, %v2043
        %v2280 = vadd.f32 %v2010, %v2044
        %v2281 = vadd.f32 %v2011, %v2045
        %v2282 = vadd.f32 %v2012, %v2046
        %v2283 = vadd.f32 %v2013, %v2047
        %v2284 = vadd.f32 %v2014, %v2048
        %v2285 = vadd.f32 %v2015, %v2049
        %v2286 = vadd.f32 %v2016, %v2050
        %v2287 = vadd.f32 %v2069, %v2103
        %v2288 = vadd.f32 %v2070, %v2104
        %v2289 = vadd.f32 %v2071, %v2105
        %v2290 = vadd.f32 %v2072, %v2106
        %v2291 = vadd.f32 %v2073, %v2107
        %v2292 = vadd.f32 %v2074, %v2108
        %v2293 = vadd.f32 %v2075, %v2109
        %v2294 = vadd.f32 %v2076, %v2110
        %v2295 = vadd.f32 %v2077, %v2111
        %v2296 = vadd.f32 %v2078, %v2112
        %v2297 = vadd.f32 %v2079, %v2113
        %v2298 = vadd.f32 %v2080, %v2114
        %v2299 = vadd.f32 %v2081, %v2115
        %v2300 = vadd.f32 %v2082, %v2116
        %v2301 = vadd.f32 %v2083, %v2117
        %v2302 = vadd.f32 %v2084, %v2118
        %v2303 = vadd.f32 %v2137, %v2171
        %v2304 = vadd.f32 %v2138, %v2172
        %v2305 = vadd.f32 %v2139, %v2173
        %v2306 = vadd.f32 %v2140, %v2174
        %v2307 = vadd.f32 %v2141, %v2175
        %v2308 = vadd.f32 %v2142, %v2176
        %v2309 = vadd.f32 %v2143, %v2177
        %v2310 = vadd.f32 %v2144, %v2178
        %v2311 = vadd.f32 %v2145, %v2179
        %v2312 = vadd.f32 %v2146, %v2180
        %v2313 = vadd.f32 %v2147, %v2181
        %v2314 = vadd.f32 %v2148, %v2182
        %v2315 = vadd.f32 %v2149, %v2183
        %v2316 = vadd.f32 %v2150, %v2184
        %v2317 = vadd.f32 %v2151, %v2185
        %v2318 = vadd.f32 %v2152, %v2186
        %v2319 = vadd.f32 %v2205, %v2239
        %v2320 = vadd.f32 %v2206, %v2240
        %v2321 = vadd.f32 %v2207, %v2241
        %v2322 = vadd.f32 %v2208, %v2242
        %v2323 = vadd.f32 %v2209, %v2243
        %v2324 = vadd.f32 %v2210, %v2244
        %v2325 = vadd.f32 %v2211, %v2245
        %v2326 = vadd.f32 %v2212, %v2246
        %v2327 = vadd.f32 %v2213, %v2247
        %v2328 = vadd.f32 %v2214, %v2248
        %v2329 = vadd.f32 %v2215, %v2249
        %v2330 = vadd.f32 %v2216, %v2250
        %v2331 = vadd.f32 %v2217, %v2251
        %v2332 = vadd.f32 %v2218, %v2252
        %v2333 = vadd.f32 %v2219, %v2253
        %v2334 = vadd.f32 %v2220, %v2254
        %v2335 = vadd.f32 %v2255, %v2271
        %v2336 = vadd.f32 %v2256, %v2272
        %v2337 = vadd.f32 %v2257, %v2273
        %v2338 = vadd.f32 %v2258, %v2274
        %v2339 = vadd.f32 %v2259, %v2275
        %v2340 = vadd.f32 %v2260, %v2276
        %v2341 = vadd.f32 %v2261, %v2277
        %v2342 = vadd.f32 %v2262, %v2278
        %v2343 = vadd.f32 %v2263, %v2279
        %v2344 = vadd.f32 %v2264, %v2280
        %v2345 = vadd.f32 %v2265, %v2281
        %v2346 = vadd.f32 %v2266, %v2282
        %v2347 = vadd.f32 %v2267, %v2283
        %v2348 = vadd.f32 %v2268, %v2284
        %v2349 = vadd.f32 %v2269, %v2285
        %v2350 = vadd.f32 %v2270, %v2286
        %v2351 = vadd.f32 %v2287, %v2303
        %v2352 = vadd.f32 %v2288, %v2304
        %v2353 = vadd.f32 %v2289, %v2305
        %v2354 = vadd.f32 %v2290, %v2306
        %v2355 = vadd.f32 %v2291, %v2307
        %v2356 = vadd.f32 %v2292, %v2308
        %v2357 = vadd.f32 %v2293, %v2309
        %v2358 = vadd.f32 %v2294, %v2310
        %v2359 = vadd.f32 %v2295, %v2311
        %v2360 = vadd.f32 %v2296, %v2312
        %v2361 = vadd.f32 %v2297, %v2313
        %v2362 = vadd.f32 %v2298, %v2314
        %v2363 = vadd.f32 %v2299, %v2315
        %v2364 = vadd.f32 %v2300, %v2316
        %v2365 = vadd.f32 %v2301, %v2317
        %v2366 = vadd.f32 %v2302, %v2318
        %v2367 = vadd.f32 %v2335, %v2351
        %v2368 = vadd.f32 %v2336, %v2352
        %v2369 = vadd.f32 %v2337, %v2353
        %v2370 = vadd.f32 %v2338, %v2354
        %v2371 = vadd.f32 %v2339, %v2355
        %v2372 = vadd.f32 %v2340, %v2356
        %v2373 = vadd.f32 %v2341, %v2357
        %v2374 = vadd.f32 %v2342, %v2358
        %v2375 = vadd.f32 %v2343, %v2359
        %v2376 = vadd.f32 %v2344, %v2360
        %v2377 = vadd.f32 %v2345, %v2361
        %v2378 = vadd.f32 %v2346, %v2362
        %v2379 = vadd.f32 %v2347, %v2363
        %v2380 = vadd.f32 %v2348, %v2364
        %v2381 = vadd.f32 %v2349, %v2365
        %v2382 = vadd.f32 %v2350, %v2366
        %v2383 = vadd.f32 %v2367, %v2319
        %v2384 = vadd.f32 %v2368, %v2320
        %v2385 = vadd.f32 %v2369, %v2321
        %v2386 = vadd.f32 %v2370, %v2322
        %v2387 = vadd.f32 %v2371, %v2323
        %v2388 = vadd.f32 %v2372, %v2324
        %v2389 = vadd.f32 %v2373, %v2325
        %v2390 = vadd.f32 %v2374, %v2326
        %v2391 = vadd.f32 %v2375, %v2327
        %v2392 = vadd.f32 %v2376, %v2328
        %v2393 = vadd.f32 %v2377, %v2329
        %v2394 = vadd.f32 %v2378, %v2330
        %v2395 = vadd.f32 %v2379, %v2331
        %v2396 = vadd.f32 %v2380, %v2332
        %v2397 = vadd.f32 %v2381, %v2333
        %v2398 = vadd.f32 %v2382, %v2334
        %v2399 = vmul.f32 %v2383, %v2383
        %v2400 = vmul.f32 %v2384, %v2384
        %v2401 = vmul.f32 %v2385, %v2385
        %v2402 = vmul.f32 %v2386, %v2386
        %v2403 = vmul.f32 %v2387, %v2387
        %v2404 = vmul.f32 %v2388, %v2388
        %v2405 = vmul.f32 %v2389, %v2389
        %v2406 = vmul.f32 %v2390, %v2390
        %v2407 = vmul.f32 %v2391, %v2391
        %v2408 = vmul.f32 %v2392, %v2392
        %v2409 = vmul.f32 %v2393, %v2393
        %v2410 = vmul.f32 %v2394, %v2394
        %v2411 = vmul.f32 %v2395, %v2395
        %v2412 = vmul.f32 %v2396, %v2396
        %v2413 = vmul.f32 %v2397, %v2397
        %v2414 = vmul.f32 %v2398, %v2398
        %v2431 = vrot.slane %v2401, 7
        %vm2432 = vcmask 1041409
        %v2433 = vsel %vm2432, %v2431, %v2399
        %v2434 = vrot.slane %v2403, 6
        %vm2435 = vcmask 1042434
        %v2436 = vsel %vm2435, %v2434, %v2433
        %v2437 = vrot.slane %v2405, 5
        %vm2438 = vcmask 1043459
        %v2439 = vsel %vm2438, %v2437, %v2436
        %v2440 = vrot.slane %v2407, 4
        %vm2441 = vcmask 1044484
        %v2442 = vsel %vm2441, %v2440, %v2439
        %v2443 = vrot.slane %v2409, 3
        %vm2444 = vcmask 1045509
        %v2445 = vsel %vm2444, %v2443, %v2442
        %v2446 = vrot.slane %v2411, 2
        %vm2447 = vcmask 1046534
        %v2448 = vsel %vm2447, %v2446, %v2445
        %v2449 = vrot.slane %v2413, 1
        %vm2450 = vcmask 1047559
        %v2451 = vsel %vm2450, %v2449, %v2448
        %v2452 = vrot.slane %v2402, 7
        %v2453 = vsel %vm2432, %v2452, %v2400
        %v2454 = vrot.slane %v2404, 6
        %v2455 = vsel %vm2435, %v2454, %v2453
        %v2456 = vrot.slane %v2406, 5
        %v2457 = vsel %vm2438, %v2456, %v2455
        %v2458 = vrot.slane %v2408, 4
        %v2459 = vsel %vm2441, %v2458, %v2457
        %v2460 = vrot.slane %v2410, 3
        %v2461 = vsel %vm2444, %v2460, %v2459
        %v2462 = vrot.slane %v2412, 2
        %v2463 = vsel %vm2447, %v2462, %v2461
        %v2464 = vrot.slane %v2414, 1
        %v2465 = vsel %vm2450, %v2464, %v2463
        %v2468 = vadd.f32 %v2451, %v2465
        %2469 = vadd.xlane.f32.xlu0 %v2468
        %v2470 = vpop.xlane.xlu0 %2469
        %v2471 = vadd.f32 %v2470, 0.0
        %v2488 = vrot.slane %v2385, 7
        %v2489 = vsel %vm2432, %v2488, %v2383
        %v2490 = vrot.slane %v2387, 6
        %v2491 = vsel %vm2435, %v2490, %v2489
        %v2492 = vrot.slane %v2389, 5
        %v2493 = vsel %vm2438, %v2492, %v2491
        %v2494 = vrot.slane %v2391, 4
        %v2495 = vsel %vm2441, %v2494, %v2493
        %v2496 = vrot.slane %v2393, 3
        %v2497 = vsel %vm2444, %v2496, %v2495
        %v2498 = vrot.slane %v2395, 2
        %v2499 = vsel %vm2447, %v2498, %v2497
        %v2500 = vrot.slane %v2397, 1
        %v2501 = vsel %vm2450, %v2500, %v2499
        %v2502 = vrot.slane %v2386, 7
        %v2503 = vsel %vm2432, %v2502, %v2384
        %v2504 = vrot.slane %v2388, 6
        %v2505 = vsel %vm2435, %v2504, %v2503
        %v2506 = vrot.slane %v2390, 5
        %v2507 = vsel %vm2438, %v2506, %v2505
        %v2508 = vrot.slane %v2392, 4
        %v2509 = vsel %vm2441, %v2508, %v2507
        %v2510 = vrot.slane %v2394, 3
        %v2511 = vsel %vm2444, %v2510, %v2509
        %v2512 = vrot.slane %v2396, 2
        %v2513 = vsel %vm2447, %v2512, %v2511
        %v2514 = vrot.slane %v2398, 1
        %v2515 = vsel %vm2450, %v2514, %v2513
        %2518 = vst [vmem:[%s192] sm:$0xff] %v2501
        %2519 = vst [vmem:[%s192 + $0x8] sm:$0xff] %v2515
        %v2520 = vld [vmem:[%s198 + $0x10] sm:$0xff]
        %v2521 = vld [vmem:[%s198 + $0x18] sm:$0xff]
        %v2522 = vld [vmem:[%s198 + $0x50] sm:$0x3]
        %v2523 = vld [vmem:[%s198 + $0x58] sm:$0x3]
        %v2524 = vld [vmem:[%s198 + $0x90] sm:$0xff]
        %v2525 = vld [vmem:[%s198 + $0x98] sm:$0xff]
        %v2526 = vld [vmem:[%s198 + $0xd0] sm:$0x3]
        %v2527 = vld [vmem:[%s198 + $0xd8] sm:$0x3]
        %v2528 = vld [vmem:[%s198 + $0x110] sm:$0xff]
        %v2529 = vld [vmem:[%s198 + $0x118] sm:$0xff]
        %v2530 = vld [vmem:[%s198 + $0x150] sm:$0x3]
        %v2531 = vld [vmem:[%s198 + $0x158] sm:$0x3]
        %v2532 = vld [vmem:[%s198 + $0x190] sm:$0xff]
        %v2533 = vld [vmem:[%s198 + $0x198] sm:$0xff]
        %v2534 = vld [vmem:[%s198 + $0x1d0] sm:$0x3]
        %v2535 = vld [vmem:[%s198 + $0x1d8] sm:$0x3]
        %v2536 = vld [vmem:[%s198 + $0x210] sm:$0xff]
        %v2537 = vld [vmem:[%s198 + $0x218] sm:$0xff]
        %v2538 = vld [vmem:[%s198 + $0x250] sm:$0x3]
        %v2539 = vld [vmem:[%s198 + $0x258] sm:$0x3]
        %v2540 = vld [vmem:[%s198 + $0x290] sm:$0xff]
        %v2541 = vld [vmem:[%s198 + $0x298] sm:$0xff]
        %v2542 = vld [vmem:[%s198 + $0x2d0] sm:$0x3]
        %v2543 = vld [vmem:[%s198 + $0x2d8] sm:$0x3]
        %v2544 = vld [vmem:[%s198 + $0x310] sm:$0xff]
        %v2545 = vld [vmem:[%s198 + $0x318] sm:$0xff]
        %v2546 = vld [vmem:[%s198 + $0x350] sm:$0x3]
        %v2547 = vld [vmem:[%s198 + $0x358] sm:$0x3]
        %v2548 = vld [vmem:[%s198 + $0x390] sm:$0xff]
        %v2549 = vld [vmem:[%s198 + $0x398] sm:$0xff]
        %v2550 = vld [vmem:[%s198 + $0x3d0] sm:$0x3]
        %v2551 = vld [vmem:[%s198 + $0x3d8] sm:$0x3]
        %v2552 = vsel %vm362, %v2520, -10000.0
        %v2553 = vsel %vm362, %v2521, -10000.0
        %v2554 = vsel %vm363, %v2522, -10000.0
        %v2555 = vsel %vm363, %v2523, -10000.0
        %v2556 = vsel %vm364, %v2524, -10000.0
        %v2557 = vsel %vm364, %v2525, -10000.0
        %v2558 = vsel %vm365, %v2526, -10000.0
        %v2559 = vsel %vm365, %v2527, -10000.0
        %v2560 = vsel %vm366, %v2528, -10000.0
        %v2561 = vsel %vm366, %v2529, -10000.0
        %v2562 = vsel %vm367, %v2530, -10000.0
        %v2563 = vsel %vm367, %v2531, -10000.0
        %v2564 = vsel %vm368, %v2532, -10000.0
        %v2565 = vsel %vm368, %v2533, -10000.0
        %v2566 = vsel %vm369, %v2534, -10000.0
        %v2567 = vsel %vm369, %v2535, -10000.0
        %v2568 = vsel %vm370, %v2536, -10000.0
        %v2569 = vsel %vm370, %v2537, -10000.0
        %v2570 = vsel %vm371, %v2538, -10000.0
        %v2571 = vsel %vm371, %v2539, -10000.0
        %v2572 = vsel %vm372, %v2540, -10000.0
        %v2573 = vsel %vm372, %v2541, -10000.0
        %v2574 = vsel %vm373, %v2542, -10000.0
        %v2575 = vsel %vm373, %v2543, -10000.0
        %v2576 = vsel %vm374, %v2544, -10000.0
        %v2577 = vsel %vm374, %v2545, -10000.0
        %v2578 = vsel %vm375, %v2546, -10000.0
        %v2579 = vsel %vm375, %v2547, -10000.0
        %v2580 = vsel %vm376, %v2548, -10000.0
        %v2581 = vsel %vm376, %v2549, -10000.0
        %v2582 = vsel %vm377, %v2550, -10000.0
        %v2583 = vsel %vm377, %v2551, -10000.0
        %v2600 = vrot.slane %v2552, 1
        %v2601 = vrot.slane %v2553, 1
        %v2602 = vrot.slane %v2556, 1
        %v2603 = vrot.slane %v2557, 1
        %v2604 = vrot.slane %v2560, 1
        %v2605 = vrot.slane %v2561, 1
        %v2606 = vrot.slane %v2564, 1
        %v2607 = vrot.slane %v2565, 1
        %v2608 = vrot.slane %v2568, 1
        %v2609 = vrot.slane %v2569, 1
        %v2610 = vrot.slane %v2572, 1
        %v2611 = vrot.slane %v2573, 1
        %v2612 = vrot.slane %v2576, 1
        %v2613 = vrot.slane %v2577, 1
        %v2614 = vrot.slane %v2580, 1
        %v2615 = vrot.slane %v2581, 1
        %v2632 = vmax.f32 %v2552, %v2600
        %v2633 = vmax.f32 %v2553, %v2601
        %v2634 = vmax.f32 %v2556, %v2602
        %v2635 = vmax.f32 %v2557, %v2603
        %v2636 = vmax.f32 %v2560, %v2604
        %v2637 = vmax.f32 %v2561, %v2605
        %v2638 = vmax.f32 %v2564, %v2606
        %v2639 = vmax.f32 %v2565, %v2607
        %v2640 = vmax.f32 %v2568, %v2608
        %v2641 = vmax.f32 %v2569, %v2609
        %v2642 = vmax.f32 %v2572, %v2610
        %v2643 = vmax.f32 %v2573, %v2611
        %v2644 = vmax.f32 %v2576, %v2612
        %v2645 = vmax.f32 %v2577, %v2613
        %v2646 = vmax.f32 %v2580, %v2614
        %v2647 = vmax.f32 %v2581, %v2615
        %v2648 = vmin.f32 %v2552, %v2600
        %v2649 = vmin.f32 %v2553, %v2601
        %v2650 = vmin.f32 %v2556, %v2602
        %v2651 = vmin.f32 %v2557, %v2603
        %v2652 = vmin.f32 %v2560, %v2604
        %v2653 = vmin.f32 %v2561, %v2605
        %v2654 = vmin.f32 %v2564, %v2606
        %v2655 = vmin.f32 %v2565, %v2607
        %v2656 = vmin.f32 %v2568, %v2608
        %v2657 = vmin.f32 %v2569, %v2609
        %v2658 = vmin.f32 %v2572, %v2610
        %v2659 = vmin.f32 %v2573, %v2611
        %v2660 = vmin.f32 %v2576, %v2612
        %v2661 = vmin.f32 %v2577, %v2613
        %v2662 = vmin.f32 %v2580, %v2614
        %v2663 = vmin.f32 %v2581, %v2615
        %v2680 = vrot.slane %v2554, 1
        %v2681 = vrot.slane %v2555, 1
        %v2682 = vrot.slane %v2558, 1
        %v2683 = vrot.slane %v2559, 1
        %v2684 = vrot.slane %v2562, 1
        %v2685 = vrot.slane %v2563, 1
        %v2686 = vrot.slane %v2566, 1
        %v2687 = vrot.slane %v2567, 1
        %v2688 = vrot.slane %v2570, 1
        %v2689 = vrot.slane %v2571, 1
        %v2690 = vrot.slane %v2574, 1
        %v2691 = vrot.slane %v2575, 1
        %v2692 = vrot.slane %v2578, 1
        %v2693 = vrot.slane %v2579, 1
        %v2694 = vrot.slane %v2582, 1
        %v2695 = vrot.slane %v2583, 1
        %v2712 = vmax.f32 %v2554, %v2680
        %v2713 = vmax.f32 %v2555, %v2681
        %v2714 = vmax.f32 %v2558, %v2682
        %v2715 = vmax.f32 %v2559, %v2683
        %v2716 = vmax.f32 %v2562, %v2684
        %v2717 = vmax.f32 %v2563, %v2685
        %v2718 = vmax.f32 %v2566, %v2686
        %v2719 = vmax.f32 %v2567, %v2687
        %v2720 = vmax.f32 %v2570, %v2688
        %v2721 = vmax.f32 %v2571, %v2689
        %v2722 = vmax.f32 %v2574, %v2690
        %v2723 = vmax.f32 %v2575, %v2691
        %v2724 = vmax.f32 %v2578, %v2692
        %v2725 = vmax.f32 %v2579, %v2693
        %v2726 = vmax.f32 %v2582, %v2694
        %v2727 = vmax.f32 %v2583, %v2695
        %v2728 = vmin.f32 %v2554, %v2680
        %v2729 = vmin.f32 %v2555, %v2681
        %v2730 = vmin.f32 %v2558, %v2682
        %v2731 = vmin.f32 %v2559, %v2683
        %v2732 = vmin.f32 %v2562, %v2684
        %v2733 = vmin.f32 %v2563, %v2685
        %v2734 = vmin.f32 %v2566, %v2686
        %v2735 = vmin.f32 %v2567, %v2687
        %v2736 = vmin.f32 %v2570, %v2688
        %v2737 = vmin.f32 %v2571, %v2689
        %v2738 = vmin.f32 %v2574, %v2690
        %v2739 = vmin.f32 %v2575, %v2691
        %v2740 = vmin.f32 %v2578, %v2692
        %v2741 = vmin.f32 %v2579, %v2693
        %v2742 = vmin.f32 %v2582, %v2694
        %v2743 = vmin.f32 %v2583, %v2695
        %v2760 = vrot.slane %v2648, 2
        %v2761 = vrot.slane %v2649, 2
        %v2762 = vrot.slane %v2650, 2
        %v2763 = vrot.slane %v2651, 2
        %v2764 = vrot.slane %v2652, 2
        %v2765 = vrot.slane %v2653, 2
        %v2766 = vrot.slane %v2654, 2
        %v2767 = vrot.slane %v2655, 2
        %v2768 = vrot.slane %v2656, 2
        %v2769 = vrot.slane %v2657, 2
        %v2770 = vrot.slane %v2658, 2
        %v2771 = vrot.slane %v2659, 2
        %v2772 = vrot.slane %v2660, 2
        %v2773 = vrot.slane %v2661, 2
        %v2774 = vrot.slane %v2662, 2
        %v2775 = vrot.slane %v2663, 2
        %v2792 = vmax.f32 %v2632, %v2760
        %v2793 = vmax.f32 %v2633, %v2761
        %v2794 = vmax.f32 %v2634, %v2762
        %v2795 = vmax.f32 %v2635, %v2763
        %v2796 = vmax.f32 %v2636, %v2764
        %v2797 = vmax.f32 %v2637, %v2765
        %v2798 = vmax.f32 %v2638, %v2766
        %v2799 = vmax.f32 %v2639, %v2767
        %v2800 = vmax.f32 %v2640, %v2768
        %v2801 = vmax.f32 %v2641, %v2769
        %v2802 = vmax.f32 %v2642, %v2770
        %v2803 = vmax.f32 %v2643, %v2771
        %v2804 = vmax.f32 %v2644, %v2772
        %v2805 = vmax.f32 %v2645, %v2773
        %v2806 = vmax.f32 %v2646, %v2774
        %v2807 = vmax.f32 %v2647, %v2775
        %v2808 = vmin.f32 %v2632, %v2760
        %v2809 = vmin.f32 %v2633, %v2761
        %v2810 = vmin.f32 %v2634, %v2762
        %v2811 = vmin.f32 %v2635, %v2763
        %v2812 = vmin.f32 %v2636, %v2764
        %v2813 = vmin.f32 %v2637, %v2765
        %v2814 = vmin.f32 %v2638, %v2766
        %v2815 = vmin.f32 %v2639, %v2767
        %v2816 = vmin.f32 %v2640, %v2768
        %v2817 = vmin.f32 %v2641, %v2769
        %v2818 = vmin.f32 %v2642, %v2770
        %v2819 = vmin.f32 %v2643, %v2771
        %v2820 = vmin.f32 %v2644, %v2772
        %v2821 = vmin.f32 %v2645, %v2773
        %v2822 = vmin.f32 %v2646, %v2774
        %v2823 = vmin.f32 %v2647, %v2775
        %v2840 = vrot.slane %v2632, 2
        %v2841 = vrot.slane %v2633, 2
        %v2842 = vrot.slane %v2634, 2
        %v2843 = vrot.slane %v2635, 2
        %v2844 = vrot.slane %v2636, 2
        %v2845 = vrot.slane %v2637, 2
        %v2846 = vrot.slane %v2638, 2
        %v2847 = vrot.slane %v2639, 2
        %v2848 = vrot.slane %v2640, 2
        %v2849 = vrot.slane %v2641, 2
        %v2850 = vrot.slane %v2642, 2
        %v2851 = vrot.slane %v2643, 2
        %v2852 = vrot.slane %v2644, 2
        %v2853 = vrot.slane %v2645, 2
        %v2854 = vrot.slane %v2646, 2
        %v2855 = vrot.slane %v2647, 2
        %v2872 = vmax.f32 %v2648, %v2840
        %v2873 = vmax.f32 %v2649, %v2841
        %v2874 = vmax.f32 %v2650, %v2842
        %v2875 = vmax.f32 %v2651, %v2843
        %v2876 = vmax.f32 %v2652, %v2844
        %v2877 = vmax.f32 %v2653, %v2845
        %v2878 = vmax.f32 %v2654, %v2846
        %v2879 = vmax.f32 %v2655, %v2847
        %v2880 = vmax.f32 %v2656, %v2848
        %v2881 = vmax.f32 %v2657, %v2849
        %v2882 = vmax.f32 %v2658, %v2850
        %v2883 = vmax.f32 %v2659, %v2851
        %v2884 = vmax.f32 %v2660, %v2852
        %v2885 = vmax.f32 %v2661, %v2853
        %v2886 = vmax.f32 %v2662, %v2854
        %v2887 = vmax.f32 %v2663, %v2855
        %v2888 = vmin.f32 %v2648, %v2840
        %v2889 = vmin.f32 %v2649, %v2841
        %v2890 = vmin.f32 %v2650, %v2842
        %v2891 = vmin.f32 %v2651, %v2843
        %v2892 = vmin.f32 %v2652, %v2844
        %v2893 = vmin.f32 %v2653, %v2845
        %v2894 = vmin.f32 %v2654, %v2846
        %v2895 = vmin.f32 %v2655, %v2847
        %v2896 = vmin.f32 %v2656, %v2848
        %v2897 = vmin.f32 %v2657, %v2849
        %v2898 = vmin.f32 %v2658, %v2850
        %v2899 = vmin.f32 %v2659, %v2851
        %v2900 = vmin.f32 %v2660, %v2852
        %v2901 = vmin.f32 %v2661, %v2853
        %v2902 = vmin.f32 %v2662, %v2854
        %v2903 = vmin.f32 %v2663, %v2855
        %v2904 = vmax.f32 %v2792, %v2872
        %v2905 = vmax.f32 %v2793, %v2873
        %v2906 = vmax.f32 %v2794, %v2874
        %v2907 = vmax.f32 %v2795, %v2875
        %v2908 = vmax.f32 %v2796, %v2876
        %v2909 = vmax.f32 %v2797, %v2877
        %v2910 = vmax.f32 %v2798, %v2878
        %v2911 = vmax.f32 %v2799, %v2879
        %v2912 = vmax.f32 %v2800, %v2880
        %v2913 = vmax.f32 %v2801, %v2881
        %v2914 = vmax.f32 %v2802, %v2882
        %v2915 = vmax.f32 %v2803, %v2883
        %v2916 = vmax.f32 %v2804, %v2884
        %v2917 = vmax.f32 %v2805, %v2885
        %v2918 = vmax.f32 %v2806, %v2886
        %v2919 = vmax.f32 %v2807, %v2887
        %v2920 = vmin.f32 %v2792, %v2872
        %v2921 = vmin.f32 %v2793, %v2873
        %v2922 = vmin.f32 %v2794, %v2874
        %v2923 = vmin.f32 %v2795, %v2875
        %v2924 = vmin.f32 %v2796, %v2876
        %v2925 = vmin.f32 %v2797, %v2877
        %v2926 = vmin.f32 %v2798, %v2878
        %v2927 = vmin.f32 %v2799, %v2879
        %v2928 = vmin.f32 %v2800, %v2880
        %v2929 = vmin.f32 %v2801, %v2881
        %v2930 = vmin.f32 %v2802, %v2882
        %v2931 = vmin.f32 %v2803, %v2883
        %v2932 = vmin.f32 %v2804, %v2884
        %v2933 = vmin.f32 %v2805, %v2885
        %v2934 = vmin.f32 %v2806, %v2886
        %v2935 = vmin.f32 %v2807, %v2887
        %v2936 = vmax.f32 %v2808, %v2888
        %v2937 = vmax.f32 %v2809, %v2889
        %v2938 = vmax.f32 %v2810, %v2890
        %v2939 = vmax.f32 %v2811, %v2891
        %v2940 = vmax.f32 %v2812, %v2892
        %v2941 = vmax.f32 %v2813, %v2893
        %v2942 = vmax.f32 %v2814, %v2894
        %v2943 = vmax.f32 %v2815, %v2895
        %v2944 = vmax.f32 %v2816, %v2896
        %v2945 = vmax.f32 %v2817, %v2897
        %v2946 = vmax.f32 %v2818, %v2898
        %v2947 = vmax.f32 %v2819, %v2899
        %v2948 = vmax.f32 %v2820, %v2900
        %v2949 = vmax.f32 %v2821, %v2901
        %v2950 = vmax.f32 %v2822, %v2902
        %v2951 = vmax.f32 %v2823, %v2903
        %v2952 = vmin.f32 %v2808, %v2888
        %v2953 = vmin.f32 %v2809, %v2889
        %v2954 = vmin.f32 %v2810, %v2890
        %v2955 = vmin.f32 %v2811, %v2891
        %v2956 = vmin.f32 %v2812, %v2892
        %v2957 = vmin.f32 %v2813, %v2893
        %v2958 = vmin.f32 %v2814, %v2894
        %v2959 = vmin.f32 %v2815, %v2895
        %v2960 = vmin.f32 %v2816, %v2896
        %v2961 = vmin.f32 %v2817, %v2897
        %v2962 = vmin.f32 %v2818, %v2898
        %v2963 = vmin.f32 %v2819, %v2899
        %v2964 = vmin.f32 %v2820, %v2900
        %v2965 = vmin.f32 %v2821, %v2901
        %v2966 = vmin.f32 %v2822, %v2902
        %v2967 = vmin.f32 %v2823, %v2903
        %v2968 = vmax.f32 %v2712, %v2728
        %v2969 = vmax.f32 %v2713, %v2729
        %v2970 = vmax.f32 %v2714, %v2730
        %v2971 = vmax.f32 %v2715, %v2731
        %v2972 = vmax.f32 %v2716, %v2732
        %v2973 = vmax.f32 %v2717, %v2733
        %v2974 = vmax.f32 %v2718, %v2734
        %v2975 = vmax.f32 %v2719, %v2735
        %v2976 = vmax.f32 %v2720, %v2736
        %v2977 = vmax.f32 %v2721, %v2737
        %v2978 = vmax.f32 %v2722, %v2738
        %v2979 = vmax.f32 %v2723, %v2739
        %v2980 = vmax.f32 %v2724, %v2740
        %v2981 = vmax.f32 %v2725, %v2741
        %v2982 = vmax.f32 %v2726, %v2742
        %v2983 = vmax.f32 %v2727, %v2743
        %v2984 = vmin.f32 %v2712, %v2728
        %v2985 = vmin.f32 %v2713, %v2729
        %v2986 = vmin.f32 %v2714, %v2730
        %v2987 = vmin.f32 %v2715, %v2731
        %v2988 = vmin.f32 %v2716, %v2732
        %v2989 = vmin.f32 %v2717, %v2733
        %v2990 = vmin.f32 %v2718, %v2734
        %v2991 = vmin.f32 %v2719, %v2735
        %v2992 = vmin.f32 %v2720, %v2736
        %v2993 = vmin.f32 %v2721, %v2737
        %v2994 = vmin.f32 %v2722, %v2738
        %v2995 = vmin.f32 %v2723, %v2739
        %v2996 = vmin.f32 %v2724, %v2740
        %v2997 = vmin.f32 %v2725, %v2741
        %v2998 = vmin.f32 %v2726, %v2742
        %v2999 = vmin.f32 %v2727, %v2743
        %v3016 = vrot.slane %v2952, 4
        %v3017 = vrot.slane %v2953, 4
        %v3018 = vrot.slane %v2954, 4
        %v3019 = vrot.slane %v2955, 4
        %v3020 = vrot.slane %v2956, 4
        %v3021 = vrot.slane %v2957, 4
        %v3022 = vrot.slane %v2958, 4
        %v3023 = vrot.slane %v2959, 4
        %v3024 = vrot.slane %v2960, 4
        %v3025 = vrot.slane %v2961, 4
        %v3026 = vrot.slane %v2962, 4
        %v3027 = vrot.slane %v2963, 4
        %v3028 = vrot.slane %v2964, 4
        %v3029 = vrot.slane %v2965, 4
        %v3030 = vrot.slane %v2966, 4
        %v3031 = vrot.slane %v2967, 4
        %v3048 = vmax.f32 %v2904, %v3016
        %v3049 = vmax.f32 %v2905, %v3017
        %v3050 = vmax.f32 %v2906, %v3018
        %v3051 = vmax.f32 %v2907, %v3019
        %v3052 = vmax.f32 %v2908, %v3020
        %v3053 = vmax.f32 %v2909, %v3021
        %v3054 = vmax.f32 %v2910, %v3022
        %v3055 = vmax.f32 %v2911, %v3023
        %v3056 = vmax.f32 %v2912, %v3024
        %v3057 = vmax.f32 %v2913, %v3025
        %v3058 = vmax.f32 %v2914, %v3026
        %v3059 = vmax.f32 %v2915, %v3027
        %v3060 = vmax.f32 %v2916, %v3028
        %v3061 = vmax.f32 %v2917, %v3029
        %v3062 = vmax.f32 %v2918, %v3030
        %v3063 = vmax.f32 %v2919, %v3031
        %v3064 = vmin.f32 %v2904, %v3016
        %v3065 = vmin.f32 %v2905, %v3017
        %v3066 = vmin.f32 %v2906, %v3018
        %v3067 = vmin.f32 %v2907, %v3019
        %v3068 = vmin.f32 %v2908, %v3020
        %v3069 = vmin.f32 %v2909, %v3021
        %v3070 = vmin.f32 %v2910, %v3022
        %v3071 = vmin.f32 %v2911, %v3023
        %v3072 = vmin.f32 %v2912, %v3024
        %v3073 = vmin.f32 %v2913, %v3025
        %v3074 = vmin.f32 %v2914, %v3026
        %v3075 = vmin.f32 %v2915, %v3027
        %v3076 = vmin.f32 %v2916, %v3028
        %v3077 = vmin.f32 %v2917, %v3029
        %v3078 = vmin.f32 %v2918, %v3030
        %v3079 = vmin.f32 %v2919, %v3031
        %v3096 = vrot.slane %v2936, 4
        %v3097 = vrot.slane %v2937, 4
        %v3098 = vrot.slane %v2938, 4
        %v3099 = vrot.slane %v2939, 4
        %v3100 = vrot.slane %v2940, 4
        %v3101 = vrot.slane %v2941, 4
        %v3102 = vrot.slane %v2942, 4
        %v3103 = vrot.slane %v2943, 4
        %v3104 = vrot.slane %v2944, 4
        %v3105 = vrot.slane %v2945, 4
        %v3106 = vrot.slane %v2946, 4
        %v3107 = vrot.slane %v2947, 4
        %v3108 = vrot.slane %v2948, 4
        %v3109 = vrot.slane %v2949, 4
        %v3110 = vrot.slane %v2950, 4
        %v3111 = vrot.slane %v2951, 4
        %v3128 = vmax.f32 %v2920, %v3096
        %v3129 = vmax.f32 %v2921, %v3097
        %v3130 = vmax.f32 %v2922, %v3098
        %v3131 = vmax.f32 %v2923, %v3099
        %v3132 = vmax.f32 %v2924, %v3100
        %v3133 = vmax.f32 %v2925, %v3101
        %v3134 = vmax.f32 %v2926, %v3102
        %v3135 = vmax.f32 %v2927, %v3103
        %v3136 = vmax.f32 %v2928, %v3104
        %v3137 = vmax.f32 %v2929, %v3105
        %v3138 = vmax.f32 %v2930, %v3106
        %v3139 = vmax.f32 %v2931, %v3107
        %v3140 = vmax.f32 %v2932, %v3108
        %v3141 = vmax.f32 %v2933, %v3109
        %v3142 = vmax.f32 %v2934, %v3110
        %v3143 = vmax.f32 %v2935, %v3111
        %v3144 = vmin.f32 %v2920, %v3096
        %v3145 = vmin.f32 %v2921, %v3097
        %v3146 = vmin.f32 %v2922, %v3098
        %v3147 = vmin.f32 %v2923, %v3099
        %v3148 = vmin.f32 %v2924, %v3100
        %v3149 = vmin.f32 %v2925, %v3101
        %v3150 = vmin.f32 %v2926, %v3102
        %v3151 = vmin.f32 %v2927, %v3103
        %v3152 = vmin.f32 %v2928, %v3104
        %v3153 = vmin.f32 %v2929, %v3105
        %v3154 = vmin.f32 %v2930, %v3106
        %v3155 = vmin.f32 %v2931, %v3107
        %v3156 = vmin.f32 %v2932, %v3108
        %v3157 = vmin.f32 %v2933, %v3109
        %v3158 = vmin.f32 %v2934, %v3110
        %v3159 = vmin.f32 %v2935, %v3111
        %v3176 = vrot.slane %v2920, 4
        %v3177 = vrot.slane %v2921, 4
        %v3178 = vrot.slane %v2922, 4
        %v3179 = vrot.slane %v2923, 4
        %v3180 = vrot.slane %v2924, 4
        %v3181 = vrot.slane %v2925, 4
        %v3182 = vrot.slane %v2926, 4
        %v3183 = vrot.slane %v2927, 4
        %v3184 = vrot.slane %v2928, 4
        %v3185 = vrot.slane %v2929, 4
        %v3186 = vrot.slane %v2930, 4
        %v3187 = vrot.slane %v2931, 4
        %v3188 = vrot.slane %v2932, 4
        %v3189 = vrot.slane %v2933, 4
        %v3190 = vrot.slane %v2934, 4
        %v3191 = vrot.slane %v2935, 4
        %v3208 = vmax.f32 %v2936, %v3176
        %v3209 = vmax.f32 %v2937, %v3177
        %v3210 = vmax.f32 %v2938, %v3178
        %v3211 = vmax.f32 %v2939, %v3179
        %v3212 = vmax.f32 %v2940, %v3180
        %v3213 = vmax.f32 %v2941, %v3181
        %v3214 = vmax.f32 %v2942, %v3182
        %v3215 = vmax.f32 %v2943, %v3183
        %v3216 = vmax.f32 %v2944, %v3184
        %v3217 = vmax.f32 %v2945, %v3185
        %v3218 = vmax.f32 %v2946, %v3186
        %v3219 = vmax.f32 %v2947, %v3187
        %v3220 = vmax.f32 %v2948, %v3188
        %v3221 = vmax.f32 %v2949, %v3189
        %v3222 = vmax.f32 %v2950, %v3190
        %v3223 = vmax.f32 %v2951, %v3191
        %v3224 = vmin.f32 %v2936, %v3176
        %v3225 = vmin.f32 %v2937, %v3177
        %v3226 = vmin.f32 %v2938, %v3178
        %v3227 = vmin.f32 %v2939, %v3179
        %v3228 = vmin.f32 %v2940, %v3180
        %v3229 = vmin.f32 %v2941, %v3181
        %v3230 = vmin.f32 %v2942, %v3182
        %v3231 = vmin.f32 %v2943, %v3183
        %v3232 = vmin.f32 %v2944, %v3184
        %v3233 = vmin.f32 %v2945, %v3185
        %v3234 = vmin.f32 %v2946, %v3186
        %v3235 = vmin.f32 %v2947, %v3187
        %v3236 = vmin.f32 %v2948, %v3188
        %v3237 = vmin.f32 %v2949, %v3189
        %v3238 = vmin.f32 %v2950, %v3190
        %v3239 = vmin.f32 %v2951, %v3191
        %v3256 = vrot.slane %v2904, 4
        %v3257 = vrot.slane %v2905, 4
        %v3258 = vrot.slane %v2906, 4
        %v3259 = vrot.slane %v2907, 4
        %v3260 = vrot.slane %v2908, 4
        %v3261 = vrot.slane %v2909, 4
        %v3262 = vrot.slane %v2910, 4
        %v3263 = vrot.slane %v2911, 4
        %v3264 = vrot.slane %v2912, 4
        %v3265 = vrot.slane %v2913, 4
        %v3266 = vrot.slane %v2914, 4
        %v3267 = vrot.slane %v2915, 4
        %v3268 = vrot.slane %v2916, 4
        %v3269 = vrot.slane %v2917, 4
        %v3270 = vrot.slane %v2918, 4
        %v3271 = vrot.slane %v2919, 4
        %v3288 = vmax.f32 %v2952, %v3256
        %v3289 = vmax.f32 %v2953, %v3257
        %v3290 = vmax.f32 %v2954, %v3258
        %v3291 = vmax.f32 %v2955, %v3259
        %v3292 = vmax.f32 %v2956, %v3260
        %v3293 = vmax.f32 %v2957, %v3261
        %v3294 = vmax.f32 %v2958, %v3262
        %v3295 = vmax.f32 %v2959, %v3263
        %v3296 = vmax.f32 %v2960, %v3264
        %v3297 = vmax.f32 %v2961, %v3265
        %v3298 = vmax.f32 %v2962, %v3266
        %v3299 = vmax.f32 %v2963, %v3267
        %v3300 = vmax.f32 %v2964, %v3268
        %v3301 = vmax.f32 %v2965, %v3269
        %v3302 = vmax.f32 %v2966, %v3270
        %v3303 = vmax.f32 %v2967, %v3271
        %v3304 = vmin.f32 %v2952, %v3256
        %v3305 = vmin.f32 %v2953, %v3257
        %v3306 = vmin.f32 %v2954, %v3258
        %v3307 = vmin.f32 %v2955, %v3259
        %v3308 = vmin.f32 %v2956, %v3260
        %v3309 = vmin.f32 %v2957, %v3261
        %v3310 = vmin.f32 %v2958, %v3262
        %v3311 = vmin.f32 %v2959, %v3263
        %v3312 = vmin.f32 %v2960, %v3264
        %v3313 = vmin.f32 %v2961, %v3265
        %v3314 = vmin.f32 %v2962, %v3266
        %v3315 = vmin.f32 %v2963, %v3267
        %v3316 = vmin.f32 %v2964, %v3268
        %v3317 = vmin.f32 %v2965, %v3269
        %v3318 = vmin.f32 %v2966, %v3270
        %v3319 = vmin.f32 %v2967, %v3271
        %v3320 = vmax.f32 %v3048, %v3208
        %v3321 = vmax.f32 %v3049, %v3209
        %v3322 = vmax.f32 %v3050, %v3210
        %v3323 = vmax.f32 %v3051, %v3211
        %v3324 = vmax.f32 %v3052, %v3212
        %v3325 = vmax.f32 %v3053, %v3213
        %v3326 = vmax.f32 %v3054, %v3214
        %v3327 = vmax.f32 %v3055, %v3215
        %v3328 = vmax.f32 %v3056, %v3216
        %v3329 = vmax.f32 %v3057, %v3217
        %v3330 = vmax.f32 %v3058, %v3218
        %v3331 = vmax.f32 %v3059, %v3219
        %v3332 = vmax.f32 %v3060, %v3220
        %v3333 = vmax.f32 %v3061, %v3221
        %v3334 = vmax.f32 %v3062, %v3222
        %v3335 = vmax.f32 %v3063, %v3223
        %v3336 = vmin.f32 %v3048, %v3208
        %v3337 = vmin.f32 %v3049, %v3209
        %v3338 = vmin.f32 %v3050, %v3210
        %v3339 = vmin.f32 %v3051, %v3211
        %v3340 = vmin.f32 %v3052, %v3212
        %v3341 = vmin.f32 %v3053, %v3213
        %v3342 = vmin.f32 %v3054, %v3214
        %v3343 = vmin.f32 %v3055, %v3215
        %v3344 = vmin.f32 %v3056, %v3216
        %v3345 = vmin.f32 %v3057, %v3217
        %v3346 = vmin.f32 %v3058, %v3218
        %v3347 = vmin.f32 %v3059, %v3219
        %v3348 = vmin.f32 %v3060, %v3220
        %v3349 = vmin.f32 %v3061, %v3221
        %v3350 = vmin.f32 %v3062, %v3222
        %v3351 = vmin.f32 %v3063, %v3223
        %v3352 = vmax.f32 %v3128, %v3288
        %v3353 = vmax.f32 %v3129, %v3289
        %v3354 = vmax.f32 %v3130, %v3290
        %v3355 = vmax.f32 %v3131, %v3291
        %v3356 = vmax.f32 %v3132, %v3292
        %v3357 = vmax.f32 %v3133, %v3293
        %v3358 = vmax.f32 %v3134, %v3294
        %v3359 = vmax.f32 %v3135, %v3295
        %v3360 = vmax.f32 %v3136, %v3296
        %v3361 = vmax.f32 %v3137, %v3297
        %v3362 = vmax.f32 %v3138, %v3298
        %v3363 = vmax.f32 %v3139, %v3299
        %v3364 = vmax.f32 %v3140, %v3300
        %v3365 = vmax.f32 %v3141, %v3301
        %v3366 = vmax.f32 %v3142, %v3302
        %v3367 = vmax.f32 %v3143, %v3303
        %v3368 = vmin.f32 %v3128, %v3288
        %v3369 = vmin.f32 %v3129, %v3289
        %v3370 = vmin.f32 %v3130, %v3290
        %v3371 = vmin.f32 %v3131, %v3291
        %v3372 = vmin.f32 %v3132, %v3292
        %v3373 = vmin.f32 %v3133, %v3293
        %v3374 = vmin.f32 %v3134, %v3294
        %v3375 = vmin.f32 %v3135, %v3295
        %v3376 = vmin.f32 %v3136, %v3296
        %v3377 = vmin.f32 %v3137, %v3297
        %v3378 = vmin.f32 %v3138, %v3298
        %v3379 = vmin.f32 %v3139, %v3299
        %v3380 = vmin.f32 %v3140, %v3300
        %v3381 = vmin.f32 %v3141, %v3301
        %v3382 = vmin.f32 %v3142, %v3302
        %v3383 = vmin.f32 %v3143, %v3303
        %v3384 = vmax.f32 %v3064, %v3224
        %v3385 = vmax.f32 %v3065, %v3225
        %v3386 = vmax.f32 %v3066, %v3226
        %v3387 = vmax.f32 %v3067, %v3227
        %v3388 = vmax.f32 %v3068, %v3228
        %v3389 = vmax.f32 %v3069, %v3229
        %v3390 = vmax.f32 %v3070, %v3230
        %v3391 = vmax.f32 %v3071, %v3231
        %v3392 = vmax.f32 %v3072, %v3232
        %v3393 = vmax.f32 %v3073, %v3233
        %v3394 = vmax.f32 %v3074, %v3234
        %v3395 = vmax.f32 %v3075, %v3235
        %v3396 = vmax.f32 %v3076, %v3236
        %v3397 = vmax.f32 %v3077, %v3237
        %v3398 = vmax.f32 %v3078, %v3238
        %v3399 = vmax.f32 %v3079, %v3239
        %v3400 = vmin.f32 %v3064, %v3224
        %v3401 = vmin.f32 %v3065, %v3225
        %v3402 = vmin.f32 %v3066, %v3226
        %v3403 = vmin.f32 %v3067, %v3227
        %v3404 = vmin.f32 %v3068, %v3228
        %v3405 = vmin.f32 %v3069, %v3229
        %v3406 = vmin.f32 %v3070, %v3230
        %v3407 = vmin.f32 %v3071, %v3231
        %v3408 = vmin.f32 %v3072, %v3232
        %v3409 = vmin.f32 %v3073, %v3233
        %v3410 = vmin.f32 %v3074, %v3234
        %v3411 = vmin.f32 %v3075, %v3235
        %v3412 = vmin.f32 %v3076, %v3236
        %v3413 = vmin.f32 %v3077, %v3237
        %v3414 = vmin.f32 %v3078, %v3238
        %v3415 = vmin.f32 %v3079, %v3239
        %v3416 = vmax.f32 %v3144, %v3304
        %v3417 = vmax.f32 %v3145, %v3305
        %v3418 = vmax.f32 %v3146, %v3306
        %v3419 = vmax.f32 %v3147, %v3307
        %v3420 = vmax.f32 %v3148, %v3308
        %v3421 = vmax.f32 %v3149, %v3309
        %v3422 = vmax.f32 %v3150, %v3310
        %v3423 = vmax.f32 %v3151, %v3311
        %v3424 = vmax.f32 %v3152, %v3312
        %v3425 = vmax.f32 %v3153, %v3313
        %v3426 = vmax.f32 %v3154, %v3314
        %v3427 = vmax.f32 %v3155, %v3315
        %v3428 = vmax.f32 %v3156, %v3316
        %v3429 = vmax.f32 %v3157, %v3317
        %v3430 = vmax.f32 %v3158, %v3318
        %v3431 = vmax.f32 %v3159, %v3319
        %v3432 = vmin.f32 %v3144, %v3304
        %v3433 = vmin.f32 %v3145, %v3305
        %v3434 = vmin.f32 %v3146, %v3306
        %v3435 = vmin.f32 %v3147, %v3307
        %v3436 = vmin.f32 %v3148, %v3308
        %v3437 = vmin.f32 %v3149, %v3309
        %v3438 = vmin.f32 %v3150, %v3310
        %v3439 = vmin.f32 %v3151, %v3311
        %v3440 = vmin.f32 %v3152, %v3312
        %v3441 = vmin.f32 %v3153, %v3313
        %v3442 = vmin.f32 %v3154, %v3314
        %v3443 = vmin.f32 %v3155, %v3315
        %v3444 = vmin.f32 %v3156, %v3316
        %v3445 = vmin.f32 %v3157, %v3317
        %v3446 = vmin.f32 %v3158, %v3318
        %v3447 = vmin.f32 %v3159, %v3319
        %v3448 = vmax.f32 %v3320, %v3352
        %v3449 = vmax.f32 %v3321, %v3353
        %v3450 = vmax.f32 %v3322, %v3354
        %v3451 = vmax.f32 %v3323, %v3355
        %v3452 = vmax.f32 %v3324, %v3356
        %v3453 = vmax.f32 %v3325, %v3357
        %v3454 = vmax.f32 %v3326, %v3358
        %v3455 = vmax.f32 %v3327, %v3359
        %v3456 = vmax.f32 %v3328, %v3360
        %v3457 = vmax.f32 %v3329, %v3361
        %v3458 = vmax.f32 %v3330, %v3362
        %v3459 = vmax.f32 %v3331, %v3363
        %v3460 = vmax.f32 %v3332, %v3364
        %v3461 = vmax.f32 %v3333, %v3365
        %v3462 = vmax.f32 %v3334, %v3366
        %v3463 = vmax.f32 %v3335, %v3367
        %v3464 = vmin.f32 %v3320, %v3352
        %v3465 = vmin.f32 %v3321, %v3353
        %v3466 = vmin.f32 %v3322, %v3354
        %v3467 = vmin.f32 %v3323, %v3355
        %v3468 = vmin.f32 %v3324, %v3356
        %v3469 = vmin.f32 %v3325, %v3357
        %v3470 = vmin.f32 %v3326, %v3358
        %v3471 = vmin.f32 %v3327, %v3359
        %v3472 = vmin.f32 %v3328, %v3360
        %v3473 = vmin.f32 %v3329, %v3361
        %v3474 = vmin.f32 %v3330, %v3362
        %v3475 = vmin.f32 %v3331, %v3363
        %v3476 = vmin.f32 %v3332, %v3364
        %v3477 = vmin.f32 %v3333, %v3365
        %v3478 = vmin.f32 %v3334, %v3366
        %v3479 = vmin.f32 %v3335, %v3367
        %v3480 = vmax.f32 %v3336, %v3368
        %v3481 = vmax.f32 %v3337, %v3369
        %v3482 = vmax.f32 %v3338, %v3370
        %v3483 = vmax.f32 %v3339, %v3371
        %v3484 = vmax.f32 %v3340, %v3372
        %v3485 = vmax.f32 %v3341, %v3373
        %v3486 = vmax.f32 %v3342, %v3374
        %v3487 = vmax.f32 %v3343, %v3375
        %v3488 = vmax.f32 %v3344, %v3376
        %v3489 = vmax.f32 %v3345, %v3377
        %v3490 = vmax.f32 %v3346, %v3378
        %v3491 = vmax.f32 %v3347, %v3379
        %v3492 = vmax.f32 %v3348, %v3380
        %v3493 = vmax.f32 %v3349, %v3381
        %v3494 = vmax.f32 %v3350, %v3382
        %v3495 = vmax.f32 %v3351, %v3383
        %v3496 = vmin.f32 %v3336, %v3368
        %v3497 = vmin.f32 %v3337, %v3369
        %v3498 = vmin.f32 %v3338, %v3370
        %v3499 = vmin.f32 %v3339, %v3371
        %v3500 = vmin.f32 %v3340, %v3372
        %v3501 = vmin.f32 %v3341, %v3373
        %v3502 = vmin.f32 %v3342, %v3374
        %v3503 = vmin.f32 %v3343, %v3375
        %v3504 = vmin.f32 %v3344, %v3376
        %v3505 = vmin.f32 %v3345, %v3377
        %v3506 = vmin.f32 %v3346, %v3378
        %v3507 = vmin.f32 %v3347, %v3379
        %v3508 = vmin.f32 %v3348, %v3380
        %v3509 = vmin.f32 %v3349, %v3381
        %v3510 = vmin.f32 %v3350, %v3382
        %v3511 = vmin.f32 %v3351, %v3383
        %v3512 = vmax.f32 %v3384, %v3416
        %v3513 = vmax.f32 %v3385, %v3417
        %v3514 = vmax.f32 %v3386, %v3418
        %v3515 = vmax.f32 %v3387, %v3419
        %v3516 = vmax.f32 %v3388, %v3420
        %v3517 = vmax.f32 %v3389, %v3421
        %v3518 = vmax.f32 %v3390, %v3422
        %v3519 = vmax.f32 %v3391, %v3423
        %v3520 = vmax.f32 %v3392, %v3424
        %v3521 = vmax.f32 %v3393, %v3425
        %v3522 = vmax.f32 %v3394, %v3426
        %v3523 = vmax.f32 %v3395, %v3427
        %v3524 = vmax.f32 %v3396, %v3428
        %v3525 = vmax.f32 %v3397, %v3429
        %v3526 = vmax.f32 %v3398, %v3430
        %v3527 = vmax.f32 %v3399, %v3431
        %v3528 = vmin.f32 %v3384, %v3416
        %v3529 = vmin.f32 %v3385, %v3417
        %v3530 = vmin.f32 %v3386, %v3418
        %v3531 = vmin.f32 %v3387, %v3419
        %v3532 = vmin.f32 %v3388, %v3420
        %v3533 = vmin.f32 %v3389, %v3421
        %v3534 = vmin.f32 %v3390, %v3422
        %v3535 = vmin.f32 %v3391, %v3423
        %v3536 = vmin.f32 %v3392, %v3424
        %v3537 = vmin.f32 %v3393, %v3425
        %v3538 = vmin.f32 %v3394, %v3426
        %v3539 = vmin.f32 %v3395, %v3427
        %v3540 = vmin.f32 %v3396, %v3428
        %v3541 = vmin.f32 %v3397, %v3429
        %v3542 = vmin.f32 %v3398, %v3430
        %v3543 = vmin.f32 %v3399, %v3431
        %v3544 = vmax.f32 %v3400, %v3432
        %v3545 = vmax.f32 %v3401, %v3433
        %v3546 = vmax.f32 %v3402, %v3434
        %v3547 = vmax.f32 %v3403, %v3435
        %v3548 = vmax.f32 %v3404, %v3436
        %v3549 = vmax.f32 %v3405, %v3437
        %v3550 = vmax.f32 %v3406, %v3438
        %v3551 = vmax.f32 %v3407, %v3439
        %v3552 = vmax.f32 %v3408, %v3440
        %v3553 = vmax.f32 %v3409, %v3441
        %v3554 = vmax.f32 %v3410, %v3442
        %v3555 = vmax.f32 %v3411, %v3443
        %v3556 = vmax.f32 %v3412, %v3444
        %v3557 = vmax.f32 %v3413, %v3445
        %v3558 = vmax.f32 %v3414, %v3446
        %v3559 = vmax.f32 %v3415, %v3447
        %v3560 = vmin.f32 %v3400, %v3432
        %v3561 = vmin.f32 %v3401, %v3433
        %v3562 = vmin.f32 %v3402, %v3434
        %v3563 = vmin.f32 %v3403, %v3435
        %v3564 = vmin.f32 %v3404, %v3436
        %v3565 = vmin.f32 %v3405, %v3437
        %v3566 = vmin.f32 %v3406, %v3438
        %v3567 = vmin.f32 %v3407, %v3439
        %v3568 = vmin.f32 %v3408, %v3440
        %v3569 = vmin.f32 %v3409, %v3441
        %v3570 = vmin.f32 %v3410, %v3442
        %v3571 = vmin.f32 %v3411, %v3443
        %v3572 = vmin.f32 %v3412, %v3444
        %v3573 = vmin.f32 %v3413, %v3445
        %v3574 = vmin.f32 %v3414, %v3446
        %v3575 = vmin.f32 %v3415, %v3447
        %v3576 = vmax.f32 %v2968, %v2984
        %v3577 = vmax.f32 %v2969, %v2985
        %v3578 = vmax.f32 %v2970, %v2986
        %v3579 = vmax.f32 %v2971, %v2987
        %v3580 = vmax.f32 %v2972, %v2988
        %v3581 = vmax.f32 %v2973, %v2989
        %v3582 = vmax.f32 %v2974, %v2990
        %v3583 = vmax.f32 %v2975, %v2991
        %v3584 = vmax.f32 %v2976, %v2992
        %v3585 = vmax.f32 %v2977, %v2993
        %v3586 = vmax.f32 %v2978, %v2994
        %v3587 = vmax.f32 %v2979, %v2995
        %v3588 = vmax.f32 %v2980, %v2996
        %v3589 = vmax.f32 %v2981, %v2997
        %v3590 = vmax.f32 %v2982, %v2998
        %v3591 = vmax.f32 %v2983, %v2999
        %v3592 = vmin.f32 %v2968, %v2984
        %v3593 = vmin.f32 %v2969, %v2985
        %v3594 = vmin.f32 %v2970, %v2986
        %v3595 = vmin.f32 %v2971, %v2987
        %v3596 = vmin.f32 %v2972, %v2988
        %v3597 = vmin.f32 %v2973, %v2989
        %v3598 = vmin.f32 %v2974, %v2990
        %v3599 = vmin.f32 %v2975, %v2991
        %v3600 = vmin.f32 %v2976, %v2992
        %v3601 = vmin.f32 %v2977, %v2993
        %v3602 = vmin.f32 %v2978, %v2994
        %v3603 = vmin.f32 %v2979, %v2995
        %v3604 = vmin.f32 %v2980, %v2996
        %v3605 = vmin.f32 %v2981, %v2997
        %v3606 = vmin.f32 %v2982, %v2998
        %v3607 = vmin.f32 %v2983, %v2999
        %v3608 = vmax.f32 %v3544, %v3592
        %v3609 = vmax.f32 %v3545, %v3593
        %v3610 = vmax.f32 %v3546, %v3594
        %v3611 = vmax.f32 %v3547, %v3595
        %v3612 = vmax.f32 %v3548, %v3596
        %v3613 = vmax.f32 %v3549, %v3597
        %v3614 = vmax.f32 %v3550, %v3598
        %v3615 = vmax.f32 %v3551, %v3599
        %v3616 = vmax.f32 %v3552, %v3600
        %v3617 = vmax.f32 %v3553, %v3601
        %v3618 = vmax.f32 %v3554, %v3602
        %v3619 = vmax.f32 %v3555, %v3603
        %v3620 = vmax.f32 %v3556, %v3604
        %v3621 = vmax.f32 %v3557, %v3605
        %v3622 = vmax.f32 %v3558, %v3606
        %v3623 = vmax.f32 %v3559, %v3607
        %v3624 = vmin.f32 %v3544, %v3592
        %v3625 = vmin.f32 %v3545, %v3593
        %v3626 = vmin.f32 %v3546, %v3594
        %v3627 = vmin.f32 %v3547, %v3595
        %v3628 = vmin.f32 %v3548, %v3596
        %v3629 = vmin.f32 %v3549, %v3597
        %v3630 = vmin.f32 %v3550, %v3598
        %v3631 = vmin.f32 %v3551, %v3599
        %v3632 = vmin.f32 %v3552, %v3600
        %v3633 = vmin.f32 %v3553, %v3601
        %v3634 = vmin.f32 %v3554, %v3602
        %v3635 = vmin.f32 %v3555, %v3603
        %v3636 = vmin.f32 %v3556, %v3604
        %v3637 = vmin.f32 %v3557, %v3605
        %v3638 = vmin.f32 %v3558, %v3606
        %v3639 = vmin.f32 %v3559, %v3607
        %v3640 = vmax.f32 %v3560, %v3576
        %v3641 = vmax.f32 %v3561, %v3577
        %v3642 = vmax.f32 %v3562, %v3578
        %v3643 = vmax.f32 %v3563, %v3579
        %v3644 = vmax.f32 %v3564, %v3580
        %v3645 = vmax.f32 %v3565, %v3581
        %v3646 = vmax.f32 %v3566, %v3582
        %v3647 = vmax.f32 %v3567, %v3583
        %v3648 = vmax.f32 %v3568, %v3584
        %v3649 = vmax.f32 %v3569, %v3585
        %v3650 = vmax.f32 %v3570, %v3586
        %v3651 = vmax.f32 %v3571, %v3587
        %v3652 = vmax.f32 %v3572, %v3588
        %v3653 = vmax.f32 %v3573, %v3589
        %v3654 = vmax.f32 %v3574, %v3590
        %v3655 = vmax.f32 %v3575, %v3591
        %v3656 = vmin.f32 %v3560, %v3576
        %v3657 = vmin.f32 %v3561, %v3577
        %v3658 = vmin.f32 %v3562, %v3578
        %v3659 = vmin.f32 %v3563, %v3579
        %v3660 = vmin.f32 %v3564, %v3580
        %v3661 = vmin.f32 %v3565, %v3581
        %v3662 = vmin.f32 %v3566, %v3582
        %v3663 = vmin.f32 %v3567, %v3583
        %v3664 = vmin.f32 %v3568, %v3584
        %v3665 = vmin.f32 %v3569, %v3585
        %v3666 = vmin.f32 %v3570, %v3586
        %v3667 = vmin.f32 %v3571, %v3587
        %v3668 = vmin.f32 %v3572, %v3588
        %v3669 = vmin.f32 %v3573, %v3589
        %v3670 = vmin.f32 %v3574, %v3590
        %v3671 = vmin.f32 %v3575, %v3591
        %v3672 = vmax.f32 %v3448, %v3512
        %v3673 = vmax.f32 %v3449, %v3513
        %v3674 = vmax.f32 %v3450, %v3514
        %v3675 = vmax.f32 %v3451, %v3515
        %v3676 = vmax.f32 %v3452, %v3516
        %v3677 = vmax.f32 %v3453, %v3517
        %v3678 = vmax.f32 %v3454, %v3518
        %v3679 = vmax.f32 %v3455, %v3519
        %v3680 = vmax.f32 %v3456, %v3520
        %v3681 = vmax.f32 %v3457, %v3521
        %v3682 = vmax.f32 %v3458, %v3522
        %v3683 = vmax.f32 %v3459, %v3523
        %v3684 = vmax.f32 %v3460, %v3524
        %v3685 = vmax.f32 %v3461, %v3525
        %v3686 = vmax.f32 %v3462, %v3526
        %v3687 = vmax.f32 %v3463, %v3527
        %v3688 = vmin.f32 %v3448, %v3512
        %v3689 = vmin.f32 %v3449, %v3513
        %v3690 = vmin.f32 %v3450, %v3514
        %v3691 = vmin.f32 %v3451, %v3515
        %v3692 = vmin.f32 %v3452, %v3516
        %v3693 = vmin.f32 %v3453, %v3517
        %v3694 = vmin.f32 %v3454, %v3518
        %v3695 = vmin.f32 %v3455, %v3519
        %v3696 = vmin.f32 %v3456, %v3520
        %v3697 = vmin.f32 %v3457, %v3521
        %v3698 = vmin.f32 %v3458, %v3522
        %v3699 = vmin.f32 %v3459, %v3523
        %v3700 = vmin.f32 %v3460, %v3524
        %v3701 = vmin.f32 %v3461, %v3525
        %v3702 = vmin.f32 %v3462, %v3526
        %v3703 = vmin.f32 %v3463, %v3527
        %v3704 = vmax.f32 %v3464, %v3528
        %v3705 = vmax.f32 %v3465, %v3529
        %v3706 = vmax.f32 %v3466, %v3530
        %v3707 = vmax.f32 %v3467, %v3531
        %v3708 = vmax.f32 %v3468, %v3532
        %v3709 = vmax.f32 %v3469, %v3533
        %v3710 = vmax.f32 %v3470, %v3534
        %v3711 = vmax.f32 %v3471, %v3535
        %v3712 = vmax.f32 %v3472, %v3536
        %v3713 = vmax.f32 %v3473, %v3537
        %v3714 = vmax.f32 %v3474, %v3538
        %v3715 = vmax.f32 %v3475, %v3539
        %v3716 = vmax.f32 %v3476, %v3540
        %v3717 = vmax.f32 %v3477, %v3541
        %v3718 = vmax.f32 %v3478, %v3542
        %v3719 = vmax.f32 %v3479, %v3543
        %v3720 = vmin.f32 %v3464, %v3528
        %v3721 = vmin.f32 %v3465, %v3529
        %v3722 = vmin.f32 %v3466, %v3530
        %v3723 = vmin.f32 %v3467, %v3531
        %v3724 = vmin.f32 %v3468, %v3532
        %v3725 = vmin.f32 %v3469, %v3533
        %v3726 = vmin.f32 %v3470, %v3534
        %v3727 = vmin.f32 %v3471, %v3535
        %v3728 = vmin.f32 %v3472, %v3536
        %v3729 = vmin.f32 %v3473, %v3537
        %v3730 = vmin.f32 %v3474, %v3538
        %v3731 = vmin.f32 %v3475, %v3539
        %v3732 = vmin.f32 %v3476, %v3540
        %v3733 = vmin.f32 %v3477, %v3541
        %v3734 = vmin.f32 %v3478, %v3542
        %v3735 = vmin.f32 %v3479, %v3543
        %v3736 = vmax.f32 %v3480, %v3608
        %v3737 = vmax.f32 %v3481, %v3609
        %v3738 = vmax.f32 %v3482, %v3610
        %v3739 = vmax.f32 %v3483, %v3611
        %v3740 = vmax.f32 %v3484, %v3612
        %v3741 = vmax.f32 %v3485, %v3613
        %v3742 = vmax.f32 %v3486, %v3614
        %v3743 = vmax.f32 %v3487, %v3615
        %v3744 = vmax.f32 %v3488, %v3616
        %v3745 = vmax.f32 %v3489, %v3617
        %v3746 = vmax.f32 %v3490, %v3618
        %v3747 = vmax.f32 %v3491, %v3619
        %v3748 = vmax.f32 %v3492, %v3620
        %v3749 = vmax.f32 %v3493, %v3621
        %v3750 = vmax.f32 %v3494, %v3622
        %v3751 = vmax.f32 %v3495, %v3623
        %v3752 = vmin.f32 %v3480, %v3608
        %v3753 = vmin.f32 %v3481, %v3609
        %v3754 = vmin.f32 %v3482, %v3610
        %v3755 = vmin.f32 %v3483, %v3611
        %v3756 = vmin.f32 %v3484, %v3612
        %v3757 = vmin.f32 %v3485, %v3613
        %v3758 = vmin.f32 %v3486, %v3614
        %v3759 = vmin.f32 %v3487, %v3615
        %v3760 = vmin.f32 %v3488, %v3616
        %v3761 = vmin.f32 %v3489, %v3617
        %v3762 = vmin.f32 %v3490, %v3618
        %v3763 = vmin.f32 %v3491, %v3619
        %v3764 = vmin.f32 %v3492, %v3620
        %v3765 = vmin.f32 %v3493, %v3621
        %v3766 = vmin.f32 %v3494, %v3622
        %v3767 = vmin.f32 %v3495, %v3623
        %v3768 = vmax.f32 %v3496, %v3640
        %v3769 = vmax.f32 %v3497, %v3641
        %v3770 = vmax.f32 %v3498, %v3642
        %v3771 = vmax.f32 %v3499, %v3643
        %v3772 = vmax.f32 %v3500, %v3644
        %v3773 = vmax.f32 %v3501, %v3645
        %v3774 = vmax.f32 %v3502, %v3646
        %v3775 = vmax.f32 %v3503, %v3647
        %v3776 = vmax.f32 %v3504, %v3648
        %v3777 = vmax.f32 %v3505, %v3649
        %v3778 = vmax.f32 %v3506, %v3650
        %v3779 = vmax.f32 %v3507, %v3651
        %v3780 = vmax.f32 %v3508, %v3652
        %v3781 = vmax.f32 %v3509, %v3653
        %v3782 = vmax.f32 %v3510, %v3654
        %v3783 = vmax.f32 %v3511, %v3655
        %v3784 = vmin.f32 %v3496, %v3640
        %v3785 = vmin.f32 %v3497, %v3641
        %v3786 = vmin.f32 %v3498, %v3642
        %v3787 = vmin.f32 %v3499, %v3643
        %v3788 = vmin.f32 %v3500, %v3644
        %v3789 = vmin.f32 %v3501, %v3645
        %v3790 = vmin.f32 %v3502, %v3646
        %v3791 = vmin.f32 %v3503, %v3647
        %v3792 = vmin.f32 %v3504, %v3648
        %v3793 = vmin.f32 %v3505, %v3649
        %v3794 = vmin.f32 %v3506, %v3650
        %v3795 = vmin.f32 %v3507, %v3651
        %v3796 = vmin.f32 %v3508, %v3652
        %v3797 = vmin.f32 %v3509, %v3653
        %v3798 = vmin.f32 %v3510, %v3654
        %v3799 = vmin.f32 %v3511, %v3655
        %v3800 = vmax.f32 %v3672, %v3736
        %v3801 = vmax.f32 %v3673, %v3737
        %v3802 = vmax.f32 %v3674, %v3738
        %v3803 = vmax.f32 %v3675, %v3739
        %v3804 = vmax.f32 %v3676, %v3740
        %v3805 = vmax.f32 %v3677, %v3741
        %v3806 = vmax.f32 %v3678, %v3742
        %v3807 = vmax.f32 %v3679, %v3743
        %v3808 = vmax.f32 %v3680, %v3744
        %v3809 = vmax.f32 %v3681, %v3745
        %v3810 = vmax.f32 %v3682, %v3746
        %v3811 = vmax.f32 %v3683, %v3747
        %v3812 = vmax.f32 %v3684, %v3748
        %v3813 = vmax.f32 %v3685, %v3749
        %v3814 = vmax.f32 %v3686, %v3750
        %v3815 = vmax.f32 %v3687, %v3751
        %v3816 = vmin.f32 %v3672, %v3736
        %v3817 = vmin.f32 %v3673, %v3737
        %v3818 = vmin.f32 %v3674, %v3738
        %v3819 = vmin.f32 %v3675, %v3739
        %v3820 = vmin.f32 %v3676, %v3740
        %v3821 = vmin.f32 %v3677, %v3741
        %v3822 = vmin.f32 %v3678, %v3742
        %v3823 = vmin.f32 %v3679, %v3743
        %v3824 = vmin.f32 %v3680, %v3744
        %v3825 = vmin.f32 %v3681, %v3745
        %v3826 = vmin.f32 %v3682, %v3746
        %v3827 = vmin.f32 %v3683, %v3747
        %v3828 = vmin.f32 %v3684, %v3748
        %v3829 = vmin.f32 %v3685, %v3749
        %v3830 = vmin.f32 %v3686, %v3750
        %v3831 = vmin.f32 %v3687, %v3751
        %v3832 = vmax.f32 %v3704, %v3768
        %v3833 = vmax.f32 %v3705, %v3769
        %v3834 = vmax.f32 %v3706, %v3770
        %v3835 = vmax.f32 %v3707, %v3771
        %v3836 = vmax.f32 %v3708, %v3772
        %v3837 = vmax.f32 %v3709, %v3773
        %v3838 = vmax.f32 %v3710, %v3774
        %v3839 = vmax.f32 %v3711, %v3775
        %v3840 = vmax.f32 %v3712, %v3776
        %v3841 = vmax.f32 %v3713, %v3777
        %v3842 = vmax.f32 %v3714, %v3778
        %v3843 = vmax.f32 %v3715, %v3779
        %v3844 = vmax.f32 %v3716, %v3780
        %v3845 = vmax.f32 %v3717, %v3781
        %v3846 = vmax.f32 %v3718, %v3782
        %v3847 = vmax.f32 %v3719, %v3783
        %v3848 = vmin.f32 %v3704, %v3768
        %v3849 = vmin.f32 %v3705, %v3769
        %v3850 = vmin.f32 %v3706, %v3770
        %v3851 = vmin.f32 %v3707, %v3771
        %v3852 = vmin.f32 %v3708, %v3772
        %v3853 = vmin.f32 %v3709, %v3773
        %v3854 = vmin.f32 %v3710, %v3774
        %v3855 = vmin.f32 %v3711, %v3775
        %v3856 = vmin.f32 %v3712, %v3776
        %v3857 = vmin.f32 %v3713, %v3777
        %v3858 = vmin.f32 %v3714, %v3778
        %v3859 = vmin.f32 %v3715, %v3779
        %v3860 = vmin.f32 %v3716, %v3780
        %v3861 = vmin.f32 %v3717, %v3781
        %v3862 = vmin.f32 %v3718, %v3782
        %v3863 = vmin.f32 %v3719, %v3783
        %v3864 = vmax.f32 %v3688, %v3752
        %v3865 = vmax.f32 %v3689, %v3753
        %v3866 = vmax.f32 %v3690, %v3754
        %v3867 = vmax.f32 %v3691, %v3755
        %v3868 = vmax.f32 %v3692, %v3756
        %v3869 = vmax.f32 %v3693, %v3757
        %v3870 = vmax.f32 %v3694, %v3758
        %v3871 = vmax.f32 %v3695, %v3759
        %v3872 = vmax.f32 %v3696, %v3760
        %v3873 = vmax.f32 %v3697, %v3761
        %v3874 = vmax.f32 %v3698, %v3762
        %v3875 = vmax.f32 %v3699, %v3763
        %v3876 = vmax.f32 %v3700, %v3764
        %v3877 = vmax.f32 %v3701, %v3765
        %v3878 = vmax.f32 %v3702, %v3766
        %v3879 = vmax.f32 %v3703, %v3767
        %v3880 = vmin.f32 %v3688, %v3752
        %v3881 = vmin.f32 %v3689, %v3753
        %v3882 = vmin.f32 %v3690, %v3754
        %v3883 = vmin.f32 %v3691, %v3755
        %v3884 = vmin.f32 %v3692, %v3756
        %v3885 = vmin.f32 %v3693, %v3757
        %v3886 = vmin.f32 %v3694, %v3758
        %v3887 = vmin.f32 %v3695, %v3759
        %v3888 = vmin.f32 %v3696, %v3760
        %v3889 = vmin.f32 %v3697, %v3761
        %v3890 = vmin.f32 %v3698, %v3762
        %v3891 = vmin.f32 %v3699, %v3763
        %v3892 = vmin.f32 %v3700, %v3764
        %v3893 = vmin.f32 %v3701, %v3765
        %v3894 = vmin.f32 %v3702, %v3766
        %v3895 = vmin.f32 %v3703, %v3767
        %v3896 = vmax.f32 %v3720, %v3784
        %v3897 = vmax.f32 %v3721, %v3785
        %v3898 = vmax.f32 %v3722, %v3786
        %v3899 = vmax.f32 %v3723, %v3787
        %v3900 = vmax.f32 %v3724, %v3788
        %v3901 = vmax.f32 %v3725, %v3789
        %v3902 = vmax.f32 %v3726, %v3790
        %v3903 = vmax.f32 %v3727, %v3791
        %v3904 = vmax.f32 %v3728, %v3792
        %v3905 = vmax.f32 %v3729, %v3793
        %v3906 = vmax.f32 %v3730, %v3794
        %v3907 = vmax.f32 %v3731, %v3795
        %v3908 = vmax.f32 %v3732, %v3796
        %v3909 = vmax.f32 %v3733, %v3797
        %v3910 = vmax.f32 %v3734, %v3798
        %v3911 = vmax.f32 %v3735, %v3799
        %v3912 = vmin.f32 %v3720, %v3784
        %v3913 = vmin.f32 %v3721, %v3785
        %v3914 = vmin.f32 %v3722, %v3786
        %v3915 = vmin.f32 %v3723, %v3787
        %v3916 = vmin.f32 %v3724, %v3788
        %v3917 = vmin.f32 %v3725, %v3789
        %v3918 = vmin.f32 %v3726, %v3790
        %v3919 = vmin.f32 %v3727, %v3791
        %v3920 = vmin.f32 %v3728, %v3792
        %v3921 = vmin.f32 %v3729, %v3793
        %v3922 = vmin.f32 %v3730, %v3794
        %v3923 = vmin.f32 %v3731, %v3795
        %v3924 = vmin.f32 %v3732, %v3796
        %v3925 = vmin.f32 %v3733, %v3797
        %v3926 = vmin.f32 %v3734, %v3798
        %v3927 = vmin.f32 %v3735, %v3799
        %v3928 = vmax.f32 %v3800, %v3832
        %v3929 = vmax.f32 %v3801, %v3833
        %v3930 = vmax.f32 %v3802, %v3834
        %v3931 = vmax.f32 %v3803, %v3835
        %v3932 = vmax.f32 %v3804, %v3836
        %v3933 = vmax.f32 %v3805, %v3837
        %v3934 = vmax.f32 %v3806, %v3838
        %v3935 = vmax.f32 %v3807, %v3839
        %v3936 = vmax.f32 %v3808, %v3840
        %v3937 = vmax.f32 %v3809, %v3841
        %v3938 = vmax.f32 %v3810, %v3842
        %v3939 = vmax.f32 %v3811, %v3843
        %v3940 = vmax.f32 %v3812, %v3844
        %v3941 = vmax.f32 %v3813, %v3845
        %v3942 = vmax.f32 %v3814, %v3846
        %v3943 = vmax.f32 %v3815, %v3847
        %v3944 = vmin.f32 %v3800, %v3832
        %v3945 = vmin.f32 %v3801, %v3833
        %v3946 = vmin.f32 %v3802, %v3834
        %v3947 = vmin.f32 %v3803, %v3835
        %v3948 = vmin.f32 %v3804, %v3836
        %v3949 = vmin.f32 %v3805, %v3837
        %v3950 = vmin.f32 %v3806, %v3838
        %v3951 = vmin.f32 %v3807, %v3839
        %v3952 = vmin.f32 %v3808, %v3840
        %v3953 = vmin.f32 %v3809, %v3841
        %v3954 = vmin.f32 %v3810, %v3842
        %v3955 = vmin.f32 %v3811, %v3843
        %v3956 = vmin.f32 %v3812, %v3844
        %v3957 = vmin.f32 %v3813, %v3845
        %v3958 = vmin.f32 %v3814, %v3846
        %v3959 = vmin.f32 %v3815, %v3847
        %v3960 = vmax.f32 %v3816, %v3848
        %v3961 = vmax.f32 %v3817, %v3849
        %v3962 = vmax.f32 %v3818, %v3850
        %v3963 = vmax.f32 %v3819, %v3851
        %v3964 = vmax.f32 %v3820, %v3852
        %v3965 = vmax.f32 %v3821, %v3853
        %v3966 = vmax.f32 %v3822, %v3854
        %v3967 = vmax.f32 %v3823, %v3855
        %v3968 = vmax.f32 %v3824, %v3856
        %v3969 = vmax.f32 %v3825, %v3857
        %v3970 = vmax.f32 %v3826, %v3858
        %v3971 = vmax.f32 %v3827, %v3859
        %v3972 = vmax.f32 %v3828, %v3860
        %v3973 = vmax.f32 %v3829, %v3861
        %v3974 = vmax.f32 %v3830, %v3862
        %v3975 = vmax.f32 %v3831, %v3863
        %v3976 = vmin.f32 %v3816, %v3848
        %v3977 = vmin.f32 %v3817, %v3849
        %v3978 = vmin.f32 %v3818, %v3850
        %v3979 = vmin.f32 %v3819, %v3851
        %v3980 = vmin.f32 %v3820, %v3852
        %v3981 = vmin.f32 %v3821, %v3853
        %v3982 = vmin.f32 %v3822, %v3854
        %v3983 = vmin.f32 %v3823, %v3855
        %v3984 = vmin.f32 %v3824, %v3856
        %v3985 = vmin.f32 %v3825, %v3857
        %v3986 = vmin.f32 %v3826, %v3858
        %v3987 = vmin.f32 %v3827, %v3859
        %v3988 = vmin.f32 %v3828, %v3860
        %v3989 = vmin.f32 %v3829, %v3861
        %v3990 = vmin.f32 %v3830, %v3862
        %v3991 = vmin.f32 %v3831, %v3863
        %v3992 = vmax.f32 %v3864, %v3896
        %v3993 = vmax.f32 %v3865, %v3897
        %v3994 = vmax.f32 %v3866, %v3898
        %v3995 = vmax.f32 %v3867, %v3899
        %v3996 = vmax.f32 %v3868, %v3900
        %v3997 = vmax.f32 %v3869, %v3901
        %v3998 = vmax.f32 %v3870, %v3902
        %v3999 = vmax.f32 %v3871, %v3903
        %v4000 = vmax.f32 %v3872, %v3904
        %v4001 = vmax.f32 %v3873, %v3905
        %v4002 = vmax.f32 %v3874, %v3906
        %v4003 = vmax.f32 %v3875, %v3907
        %v4004 = vmax.f32 %v3876, %v3908
        %v4005 = vmax.f32 %v3877, %v3909
        %v4006 = vmax.f32 %v3878, %v3910
        %v4007 = vmax.f32 %v3879, %v3911
        %v4008 = vmin.f32 %v3864, %v3896
        %v4009 = vmin.f32 %v3865, %v3897
        %v4010 = vmin.f32 %v3866, %v3898
        %v4011 = vmin.f32 %v3867, %v3899
        %v4012 = vmin.f32 %v3868, %v3900
        %v4013 = vmin.f32 %v3869, %v3901
        %v4014 = vmin.f32 %v3870, %v3902
        %v4015 = vmin.f32 %v3871, %v3903
        %v4016 = vmin.f32 %v3872, %v3904
        %v4017 = vmin.f32 %v3873, %v3905
        %v4018 = vmin.f32 %v3874, %v3906
        %v4019 = vmin.f32 %v3875, %v3907
        %v4020 = vmin.f32 %v3876, %v3908
        %v4021 = vmin.f32 %v3877, %v3909
        %v4022 = vmin.f32 %v3878, %v3910
        %v4023 = vmin.f32 %v3879, %v3911
        %v4024 = vmax.f32 %v3880, %v3912
        %v4025 = vmax.f32 %v3881, %v3913
        %v4026 = vmax.f32 %v3882, %v3914
        %v4027 = vmax.f32 %v3883, %v3915
        %v4028 = vmax.f32 %v3884, %v3916
        %v4029 = vmax.f32 %v3885, %v3917
        %v4030 = vmax.f32 %v3886, %v3918
        %v4031 = vmax.f32 %v3887, %v3919
        %v4032 = vmax.f32 %v3888, %v3920
        %v4033 = vmax.f32 %v3889, %v3921
        %v4034 = vmax.f32 %v3890, %v3922
        %v4035 = vmax.f32 %v3891, %v3923
        %v4036 = vmax.f32 %v3892, %v3924
        %v4037 = vmax.f32 %v3893, %v3925
        %v4038 = vmax.f32 %v3894, %v3926
        %v4039 = vmax.f32 %v3895, %v3927
        %v4040 = vmin.f32 %v3880, %v3912
        %v4041 = vmin.f32 %v3881, %v3913
        %v4042 = vmin.f32 %v3882, %v3914
        %v4043 = vmin.f32 %v3883, %v3915
        %v4044 = vmin.f32 %v3884, %v3916
        %v4045 = vmin.f32 %v3885, %v3917
        %v4046 = vmin.f32 %v3886, %v3918
        %v4047 = vmin.f32 %v3887, %v3919
        %v4048 = vmin.f32 %v3888, %v3920
        %v4049 = vmin.f32 %v3889, %v3921
        %v4050 = vmin.f32 %v3890, %v3922
        %v4051 = vmin.f32 %v3891, %v3923
        %v4052 = vmin.f32 %v3892, %v3924
        %v4053 = vmin.f32 %v3893, %v3925
        %v4054 = vmin.f32 %v3894, %v3926
        %v4055 = vmin.f32 %v3895, %v3927
        %v4056 = vmax.f32 %v3624, %v3656
        %v4057 = vmax.f32 %v3625, %v3657
        %v4058 = vmax.f32 %v3626, %v3658
        %v4059 = vmax.f32 %v3627, %v3659
        %v4060 = vmax.f32 %v3628, %v3660
        %v4061 = vmax.f32 %v3629, %v3661
        %v4062 = vmax.f32 %v3630, %v3662
        %v4063 = vmax.f32 %v3631, %v3663
        %v4064 = vmax.f32 %v3632, %v3664
        %v4065 = vmax.f32 %v3633, %v3665
        %v4066 = vmax.f32 %v3634, %v3666
        %v4067 = vmax.f32 %v3635, %v3667
        %v4068 = vmax.f32 %v3636, %v3668
        %v4069 = vmax.f32 %v3637, %v3669
        %v4070 = vmax.f32 %v3638, %v3670
        %v4071 = vmax.f32 %v3639, %v3671
        %v4072 = vmin.f32 %v3624, %v3656
        %v4073 = vmin.f32 %v3625, %v3657
        %v4074 = vmin.f32 %v3626, %v3658
        %v4075 = vmin.f32 %v3627, %v3659
        %v4076 = vmin.f32 %v3628, %v3660
        %v4077 = vmin.f32 %v3629, %v3661
        %v4078 = vmin.f32 %v3630, %v3662
        %v4079 = vmin.f32 %v3631, %v3663
        %v4080 = vmin.f32 %v3632, %v3664
        %v4081 = vmin.f32 %v3633, %v3665
        %v4082 = vmin.f32 %v3634, %v3666
        %v4083 = vmin.f32 %v3635, %v3667
        %v4084 = vmin.f32 %v3636, %v3668
        %v4085 = vmin.f32 %v3637, %v3669
        %v4086 = vmin.f32 %v3638, %v3670
        %v4087 = vmin.f32 %v3639, %v3671
        %v4088 = vmul.f32 %v3928, %v1917
        %v4089 = vmul.f32 %v3929, %v1917
        %v4090 = vmul.f32 %v3930, %v1918
        %v4091 = vmul.f32 %v3931, %v1918
        %v4092 = vmul.f32 %v3932, %v1919
        %v4093 = vmul.f32 %v3933, %v1919
        %v4094 = vmul.f32 %v3934, %v1920
        %v4095 = vmul.f32 %v3935, %v1920
        %v4096 = vmul.f32 %v3936, %v1921
        %v4097 = vmul.f32 %v3937, %v1921
        %v4098 = vmul.f32 %v3938, %v1922
        %v4099 = vmul.f32 %v3939, %v1922
        %v4100 = vmul.f32 %v3940, %v1923
        %v4101 = vmul.f32 %v3941, %v1923
        %v4102 = vmul.f32 %v3942, %v1924
        %v4103 = vmul.f32 %v3943, %v1924
        %v4104 = vmul.f32 %v3944, %v1951
        %v4105 = vmul.f32 %v3945, %v1951
        %v4106 = vmul.f32 %v3946, %v1952
        %v4107 = vmul.f32 %v3947, %v1952
        %v4108 = vmul.f32 %v3948, %v1953
        %v4109 = vmul.f32 %v3949, %v1953
        %v4110 = vmul.f32 %v3950, %v1954
        %v4111 = vmul.f32 %v3951, %v1954
        %v4112 = vmul.f32 %v3952, %v1955
        %v4113 = vmul.f32 %v3953, %v1955
        %v4114 = vmul.f32 %v3954, %v1956
        %v4115 = vmul.f32 %v3955, %v1956
        %v4116 = vmul.f32 %v3956, %v1957
        %v4117 = vmul.f32 %v3957, %v1957
        %v4118 = vmul.f32 %v3958, %v1958
        %v4119 = vmul.f32 %v3959, %v1958
        %v4120 = vmul.f32 %v3960, %v1985
        %v4121 = vmul.f32 %v3961, %v1985
        %v4122 = vmul.f32 %v3962, %v1986
        %v4123 = vmul.f32 %v3963, %v1986
        %v4124 = vmul.f32 %v3964, %v1987
        %v4125 = vmul.f32 %v3965, %v1987
        %v4126 = vmul.f32 %v3966, %v1988
        %v4127 = vmul.f32 %v3967, %v1988
        %v4128 = vmul.f32 %v3968, %v1989
        %v4129 = vmul.f32 %v3969, %v1989
        %v4130 = vmul.f32 %v3970, %v1990
        %v4131 = vmul.f32 %v3971, %v1990
        %v4132 = vmul.f32 %v3972, %v1991
        %v4133 = vmul.f32 %v3973, %v1991
        %v4134 = vmul.f32 %v3974, %v1992
        %v4135 = vmul.f32 %v3975, %v1992
        %v4136 = vmul.f32 %v3976, %v2019
        %v4137 = vmul.f32 %v3977, %v2019
        %v4138 = vmul.f32 %v3978, %v2020
        %v4139 = vmul.f32 %v3979, %v2020
        %v4140 = vmul.f32 %v3980, %v2021
        %v4141 = vmul.f32 %v3981, %v2021
        %v4142 = vmul.f32 %v3982, %v2022
        %v4143 = vmul.f32 %v3983, %v2022
        %v4144 = vmul.f32 %v3984, %v2023
        %v4145 = vmul.f32 %v3985, %v2023
        %v4146 = vmul.f32 %v3986, %v2024
        %v4147 = vmul.f32 %v3987, %v2024
        %v4148 = vmul.f32 %v3988, %v2025
        %v4149 = vmul.f32 %v3989, %v2025
        %v4150 = vmul.f32 %v3990, %v2026
        %v4151 = vmul.f32 %v3991, %v2026
        %v4152 = vmul.f32 %v3992, %v2053
        %v4153 = vmul.f32 %v3993, %v2053
        %v4154 = vmul.f32 %v3994, %v2054
        %v4155 = vmul.f32 %v3995, %v2054
        %v4156 = vmul.f32 %v3996, %v2055
        %v4157 = vmul.f32 %v3997, %v2055
        %v4158 = vmul.f32 %v3998, %v2056
        %v4159 = vmul.f32 %v3999, %v2056
        %v4160 = vmul.f32 %v4000, %v2057
        %v4161 = vmul.f32 %v4001, %v2057
        %v4162 = vmul.f32 %v4002, %v2058
        %v4163 = vmul.f32 %v4003, %v2058
        %v4164 = vmul.f32 %v4004, %v2059
        %v4165 = vmul.f32 %v4005, %v2059
        %v4166 = vmul.f32 %v4006, %v2060
        %v4167 = vmul.f32 %v4007, %v2060
        %v4168 = vmul.f32 %v4008, %v2087
        %v4169 = vmul.f32 %v4009, %v2087
        %v4170 = vmul.f32 %v4010, %v2088
        %v4171 = vmul.f32 %v4011, %v2088
        %v4172 = vmul.f32 %v4012, %v2089
        %v4173 = vmul.f32 %v4013, %v2089
        %v4174 = vmul.f32 %v4014, %v2090
        %v4175 = vmul.f32 %v4015, %v2090
        %v4176 = vmul.f32 %v4016, %v2091
        %v4177 = vmul.f32 %v4017, %v2091
        %v4178 = vmul.f32 %v4018, %v2092
        %v4179 = vmul.f32 %v4019, %v2092
        %v4180 = vmul.f32 %v4020, %v2093
        %v4181 = vmul.f32 %v4021, %v2093
        %v4182 = vmul.f32 %v4022, %v2094
        %v4183 = vmul.f32 %v4023, %v2094
        %v4184 = vmul.f32 %v4024, %v2121
        %v4185 = vmul.f32 %v4025, %v2121
        %v4186 = vmul.f32 %v4026, %v2122
        %v4187 = vmul.f32 %v4027, %v2122
        %v4188 = vmul.f32 %v4028, %v2123
        %v4189 = vmul.f32 %v4029, %v2123
        %v4190 = vmul.f32 %v4030, %v2124
        %v4191 = vmul.f32 %v4031, %v2124
        %v4192 = vmul.f32 %v4032, %v2125
        %v4193 = vmul.f32 %v4033, %v2125
        %v4194 = vmul.f32 %v4034, %v2126
        %v4195 = vmul.f32 %v4035, %v2126
        %v4196 = vmul.f32 %v4036, %v2127
        %v4197 = vmul.f32 %v4037, %v2127
        %v4198 = vmul.f32 %v4038, %v2128
        %v4199 = vmul.f32 %v4039, %v2128
        %v4200 = vmul.f32 %v4040, %v2155
        %v4201 = vmul.f32 %v4041, %v2155
        %v4202 = vmul.f32 %v4042, %v2156
        %v4203 = vmul.f32 %v4043, %v2156
        %v4204 = vmul.f32 %v4044, %v2157
        %v4205 = vmul.f32 %v4045, %v2157
        %v4206 = vmul.f32 %v4046, %v2158
        %v4207 = vmul.f32 %v4047, %v2158
        %v4208 = vmul.f32 %v4048, %v2159
        %v4209 = vmul.f32 %v4049, %v2159
        %v4210 = vmul.f32 %v4050, %v2160
        %v4211 = vmul.f32 %v4051, %v2160
        %v4212 = vmul.f32 %v4052, %v2161
        %v4213 = vmul.f32 %v4053, %v2161
        %v4214 = vmul.f32 %v4054, %v2162
        %v4215 = vmul.f32 %v4055, %v2162
        %v4216 = vmul.f32 %v4056, %v2189
        %v4217 = vmul.f32 %v4057, %v2189
        %v4218 = vmul.f32 %v4058, %v2190
        %v4219 = vmul.f32 %v4059, %v2190
        %v4220 = vmul.f32 %v4060, %v2191
        %v4221 = vmul.f32 %v4061, %v2191
        %v4222 = vmul.f32 %v4062, %v2192
        %v4223 = vmul.f32 %v4063, %v2192
        %v4224 = vmul.f32 %v4064, %v2193
        %v4225 = vmul.f32 %v4065, %v2193
        %v4226 = vmul.f32 %v4066, %v2194
        %v4227 = vmul.f32 %v4067, %v2194
        %v4228 = vmul.f32 %v4068, %v2195
        %v4229 = vmul.f32 %v4069, %v2195
        %v4230 = vmul.f32 %v4070, %v2196
        %v4231 = vmul.f32 %v4071, %v2196
        %v4232 = vmul.f32 %v4072, %v2223
        %v4233 = vmul.f32 %v4073, %v2223
        %v4234 = vmul.f32 %v4074, %v2224
        %v4235 = vmul.f32 %v4075, %v2224
        %v4236 = vmul.f32 %v4076, %v2225
        %v4237 = vmul.f32 %v4077, %v2225
        %v4238 = vmul.f32 %v4078, %v2226
        %v4239 = vmul.f32 %v4079, %v2226
        %v4240 = vmul.f32 %v4080, %v2227
        %v4241 = vmul.f32 %v4081, %v2227
        %v4242 = vmul.f32 %v4082, %v2228
        %v4243 = vmul.f32 %v4083, %v2228
        %v4244 = vmul.f32 %v4084, %v2229
        %v4245 = vmul.f32 %v4085, %v2229
        %v4246 = vmul.f32 %v4086, %v2230
        %v4247 = vmul.f32 %v4087, %v2230
        %v4248 = vadd.f32 %v4088, %v4104
        %v4249 = vadd.f32 %v4089, %v4105
        %v4250 = vadd.f32 %v4090, %v4106
        %v4251 = vadd.f32 %v4091, %v4107
        %v4252 = vadd.f32 %v4092, %v4108
        %v4253 = vadd.f32 %v4093, %v4109
        %v4254 = vadd.f32 %v4094, %v4110
        %v4255 = vadd.f32 %v4095, %v4111
        %v4256 = vadd.f32 %v4096, %v4112
        %v4257 = vadd.f32 %v4097, %v4113
        %v4258 = vadd.f32 %v4098, %v4114
        %v4259 = vadd.f32 %v4099, %v4115
        %v4260 = vadd.f32 %v4100, %v4116
        %v4261 = vadd.f32 %v4101, %v4117
        %v4262 = vadd.f32 %v4102, %v4118
        %v4263 = vadd.f32 %v4103, %v4119
        %v4264 = vadd.f32 %v4120, %v4136
        %v4265 = vadd.f32 %v4121, %v4137
        %v4266 = vadd.f32 %v4122, %v4138
        %v4267 = vadd.f32 %v4123, %v4139
        %v4268 = vadd.f32 %v4124, %v4140
        %v4269 = vadd.f32 %v4125, %v4141
        %v4270 = vadd.f32 %v4126, %v4142
        %v4271 = vadd.f32 %v4127, %v4143
        %v4272 = vadd.f32 %v4128, %v4144
        %v4273 = vadd.f32 %v4129, %v4145
        %v4274 = vadd.f32 %v4130, %v4146
        %v4275 = vadd.f32 %v4131, %v4147
        %v4276 = vadd.f32 %v4132, %v4148
        %v4277 = vadd.f32 %v4133, %v4149
        %v4278 = vadd.f32 %v4134, %v4150
        %v4279 = vadd.f32 %v4135, %v4151
        %v4280 = vadd.f32 %v4152, %v4168
        %v4281 = vadd.f32 %v4153, %v4169
        %v4282 = vadd.f32 %v4154, %v4170
        %v4283 = vadd.f32 %v4155, %v4171
        %v4284 = vadd.f32 %v4156, %v4172
        %v4285 = vadd.f32 %v4157, %v4173
        %v4286 = vadd.f32 %v4158, %v4174
        %v4287 = vadd.f32 %v4159, %v4175
        %v4288 = vadd.f32 %v4160, %v4176
        %v4289 = vadd.f32 %v4161, %v4177
        %v4290 = vadd.f32 %v4162, %v4178
        %v4291 = vadd.f32 %v4163, %v4179
        %v4292 = vadd.f32 %v4164, %v4180
        %v4293 = vadd.f32 %v4165, %v4181
        %v4294 = vadd.f32 %v4166, %v4182
        %v4295 = vadd.f32 %v4167, %v4183
        %v4296 = vadd.f32 %v4184, %v4200
        %v4297 = vadd.f32 %v4185, %v4201
        %v4298 = vadd.f32 %v4186, %v4202
        %v4299 = vadd.f32 %v4187, %v4203
        %v4300 = vadd.f32 %v4188, %v4204
        %v4301 = vadd.f32 %v4189, %v4205
        %v4302 = vadd.f32 %v4190, %v4206
        %v4303 = vadd.f32 %v4191, %v4207
        %v4304 = vadd.f32 %v4192, %v4208
        %v4305 = vadd.f32 %v4193, %v4209
        %v4306 = vadd.f32 %v4194, %v4210
        %v4307 = vadd.f32 %v4195, %v4211
        %v4308 = vadd.f32 %v4196, %v4212
        %v4309 = vadd.f32 %v4197, %v4213
        %v4310 = vadd.f32 %v4198, %v4214
        %v4311 = vadd.f32 %v4199, %v4215
        %v4312 = vadd.f32 %v4216, %v4232
        %v4313 = vadd.f32 %v4217, %v4233
        %v4314 = vadd.f32 %v4218, %v4234
        %v4315 = vadd.f32 %v4219, %v4235
        %v4316 = vadd.f32 %v4220, %v4236
        %v4317 = vadd.f32 %v4221, %v4237
        %v4318 = vadd.f32 %v4222, %v4238
        %v4319 = vadd.f32 %v4223, %v4239
        %v4320 = vadd.f32 %v4224, %v4240
        %v4321 = vadd.f32 %v4225, %v4241
        %v4322 = vadd.f32 %v4226, %v4242
        %v4323 = vadd.f32 %v4227, %v4243
        %v4324 = vadd.f32 %v4228, %v4244
        %v4325 = vadd.f32 %v4229, %v4245
        %v4326 = vadd.f32 %v4230, %v4246
        %v4327 = vadd.f32 %v4231, %v4247
        %v4328 = vadd.f32 %v4248, %v4264
        %v4329 = vadd.f32 %v4249, %v4265
        %v4330 = vadd.f32 %v4250, %v4266
        %v4331 = vadd.f32 %v4251, %v4267
        %v4332 = vadd.f32 %v4252, %v4268
        %v4333 = vadd.f32 %v4253, %v4269
        %v4334 = vadd.f32 %v4254, %v4270
        %v4335 = vadd.f32 %v4255, %v4271
        %v4336 = vadd.f32 %v4256, %v4272
        %v4337 = vadd.f32 %v4257, %v4273
        %v4338 = vadd.f32 %v4258, %v4274
        %v4339 = vadd.f32 %v4259, %v4275
        %v4340 = vadd.f32 %v4260, %v4276
        %v4341 = vadd.f32 %v4261, %v4277
        %v4342 = vadd.f32 %v4262, %v4278
        %v4343 = vadd.f32 %v4263, %v4279
        %v4344 = vadd.f32 %v4280, %v4296
        %v4345 = vadd.f32 %v4281, %v4297
        %v4346 = vadd.f32 %v4282, %v4298
        %v4347 = vadd.f32 %v4283, %v4299
        %v4348 = vadd.f32 %v4284, %v4300
        %v4349 = vadd.f32 %v4285, %v4301
        %v4350 = vadd.f32 %v4286, %v4302
        %v4351 = vadd.f32 %v4287, %v4303
        %v4352 = vadd.f32 %v4288, %v4304
        %v4353 = vadd.f32 %v4289, %v4305
        %v4354 = vadd.f32 %v4290, %v4306
        %v4355 = vadd.f32 %v4291, %v4307
        %v4356 = vadd.f32 %v4292, %v4308
        %v4357 = vadd.f32 %v4293, %v4309
        %v4358 = vadd.f32 %v4294, %v4310
        %v4359 = vadd.f32 %v4295, %v4311
        %v4360 = vadd.f32 %v4328, %v4344
        %v4361 = vadd.f32 %v4329, %v4345
        %v4362 = vadd.f32 %v4330, %v4346
        %v4363 = vadd.f32 %v4331, %v4347
        %v4364 = vadd.f32 %v4332, %v4348
        %v4365 = vadd.f32 %v4333, %v4349
        %v4366 = vadd.f32 %v4334, %v4350
        %v4367 = vadd.f32 %v4335, %v4351
        %v4368 = vadd.f32 %v4336, %v4352
        %v4369 = vadd.f32 %v4337, %v4353
        %v4370 = vadd.f32 %v4338, %v4354
        %v4371 = vadd.f32 %v4339, %v4355
        %v4372 = vadd.f32 %v4340, %v4356
        %v4373 = vadd.f32 %v4341, %v4357
        %v4374 = vadd.f32 %v4342, %v4358
        %v4375 = vadd.f32 %v4343, %v4359
        %v4376 = vadd.f32 %v4360, %v4312
        %v4377 = vadd.f32 %v4361, %v4313
        %v4378 = vadd.f32 %v4362, %v4314
        %v4379 = vadd.f32 %v4363, %v4315
        %v4380 = vadd.f32 %v4364, %v4316
        %v4381 = vadd.f32 %v4365, %v4317
        %v4382 = vadd.f32 %v4366, %v4318
        %v4383 = vadd.f32 %v4367, %v4319
        %v4384 = vadd.f32 %v4368, %v4320
        %v4385 = vadd.f32 %v4369, %v4321
        %v4386 = vadd.f32 %v4370, %v4322
        %v4387 = vadd.f32 %v4371, %v4323
        %v4388 = vadd.f32 %v4372, %v4324
        %v4389 = vadd.f32 %v4373, %v4325
        %v4390 = vadd.f32 %v4374, %v4326
        %v4391 = vadd.f32 %v4375, %v4327
        %v4392 = vmul.f32 %v4376, %v4376
        %v4393 = vmul.f32 %v4377, %v4377
        %v4394 = vmul.f32 %v4378, %v4378
        %v4395 = vmul.f32 %v4379, %v4379
        %v4396 = vmul.f32 %v4380, %v4380
        %v4397 = vmul.f32 %v4381, %v4381
        %v4398 = vmul.f32 %v4382, %v4382
        %v4399 = vmul.f32 %v4383, %v4383
        %v4400 = vmul.f32 %v4384, %v4384
        %v4401 = vmul.f32 %v4385, %v4385
        %v4402 = vmul.f32 %v4386, %v4386
        %v4403 = vmul.f32 %v4387, %v4387
        %v4404 = vmul.f32 %v4388, %v4388
        %v4405 = vmul.f32 %v4389, %v4389
        %v4406 = vmul.f32 %v4390, %v4390
        %v4407 = vmul.f32 %v4391, %v4391
        %v4424 = vrot.slane %v4394, 7
        %v4425 = vsel %vm2432, %v4424, %v4392
        %v4426 = vrot.slane %v4396, 6
        %v4427 = vsel %vm2435, %v4426, %v4425
        %v4428 = vrot.slane %v4398, 5
        %v4429 = vsel %vm2438, %v4428, %v4427
        %v4430 = vrot.slane %v4400, 4
        %v4431 = vsel %vm2441, %v4430, %v4429
        %v4432 = vrot.slane %v4402, 3
        %v4433 = vsel %vm2444, %v4432, %v4431
        %v4434 = vrot.slane %v4404, 2
        %v4435 = vsel %vm2447, %v4434, %v4433
        %v4436 = vrot.slane %v4406, 1
        %v4437 = vsel %vm2450, %v4436, %v4435
        %v4438 = vrot.slane %v4395, 7
        %v4439 = vsel %vm2432, %v4438, %v4393
        %v4440 = vrot.slane %v4397, 6
        %v4441 = vsel %vm2435, %v4440, %v4439
        %v4442 = vrot.slane %v4399, 5
        %v4443 = vsel %vm2438, %v4442, %v4441
        %v4444 = vrot.slane %v4401, 4
        %v4445 = vsel %vm2441, %v4444, %v4443
        %v4446 = vrot.slane %v4403, 3
        %v4447 = vsel %vm2444, %v4446, %v4445
        %v4448 = vrot.slane %v4405, 2
        %v4449 = vsel %vm2447, %v4448, %v4447
        %v4450 = vrot.slane %v4407, 1
        %v4451 = vsel %vm2450, %v4450, %v4449
        %v4454 = vadd.f32 %v4437, %v4451
        %4455 = vadd.xlane.f32.xlu0 %v4454
        %v4456 = vpop.xlane.xlu0 %4455
        %v4457 = vadd.f32 %v2471, %v4456
        %v4474 = vrot.slane %v4378, 7
        %v4475 = vsel %vm2432, %v4474, %v4376
        %v4476 = vrot.slane %v4380, 6
        %v4477 = vsel %vm2435, %v4476, %v4475
        %v4478 = vrot.slane %v4382, 5
        %v4479 = vsel %vm2438, %v4478, %v4477
        %v4480 = vrot.slane %v4384, 4
        %v4481 = vsel %vm2441, %v4480, %v4479
        %v4482 = vrot.slane %v4386, 3
        %v4483 = vsel %vm2444, %v4482, %v4481
        %v4484 = vrot.slane %v4388, 2
        %v4485 = vsel %vm2447, %v4484, %v4483
        %v4486 = vrot.slane %v4390, 1
        %v4487 = vsel %vm2450, %v4486, %v4485
        %v4488 = vrot.slane %v4379, 7
        %v4489 = vsel %vm2432, %v4488, %v4377
        %v4490 = vrot.slane %v4381, 6
        %v4491 = vsel %vm2435, %v4490, %v4489
        %v4492 = vrot.slane %v4383, 5
        %v4493 = vsel %vm2438, %v4492, %v4491
        %v4494 = vrot.slane %v4385, 4
        %v4495 = vsel %vm2441, %v4494, %v4493
        %v4496 = vrot.slane %v4387, 3
        %v4497 = vsel %vm2444, %v4496, %v4495
        %v4498 = vrot.slane %v4389, 2
        %v4499 = vsel %vm2447, %v4498, %v4497
        %v4500 = vrot.slane %v4391, 1
        %v4501 = vsel %vm2450, %v4500, %v4499
        %4504 = vst [vmem:[%s192 + $0x10] sm:$0xff] %v4487
        %4505 = vst [vmem:[%s192 + $0x18] sm:$0xff] %v4501
        %v4506 = vld [vmem:[%s198 + $0x20] sm:$0xff]
        %v4507 = vld [vmem:[%s198 + $0x28] sm:$0xff]
        %v4508 = vld [vmem:[%s198 + $0x60] sm:$0x3]
        %v4509 = vld [vmem:[%s198 + $0x68] sm:$0x3]
        %v4510 = vld [vmem:[%s198 + $0xa0] sm:$0xff]
        %v4511 = vld [vmem:[%s198 + $0xa8] sm:$0xff]
        %v4512 = vld [vmem:[%s198 + $0xe0] sm:$0x3]
        %v4513 = vld [vmem:[%s198 + $0xe8] sm:$0x3]
        %v4514 = vld [vmem:[%s198 + $0x120] sm:$0xff]
        %v4515 = vld [vmem:[%s198 + $0x128] sm:$0xff]
        %v4516 = vld [vmem:[%s198 + $0x160] sm:$0x3]
        %v4517 = vld [vmem:[%s198 + $0x168] sm:$0x3]
        %v4518 = vld [vmem:[%s198 + $0x1a0] sm:$0xff]
        %v4519 = vld [vmem:[%s198 + $0x1a8] sm:$0xff]
        %v4520 = vld [vmem:[%s198 + $0x1e0] sm:$0x3]
        %v4521 = vld [vmem:[%s198 + $0x1e8] sm:$0x3]
        %v4522 = vld [vmem:[%s198 + $0x220] sm:$0xff]
        %v4523 = vld [vmem:[%s198 + $0x228] sm:$0xff]
        %v4524 = vld [vmem:[%s198 + $0x260] sm:$0x3]
        %v4525 = vld [vmem:[%s198 + $0x268] sm:$0x3]
        %v4526 = vld [vmem:[%s198 + $0x2a0] sm:$0xff]
        %v4527 = vld [vmem:[%s198 + $0x2a8] sm:$0xff]
        %v4528 = vld [vmem:[%s198 + $0x2e0] sm:$0x3]
        %v4529 = vld [vmem:[%s198 + $0x2e8] sm:$0x3]
        %v4530 = vld [vmem:[%s198 + $0x320] sm:$0xff]
        %v4531 = vld [vmem:[%s198 + $0x328] sm:$0xff]
        %v4532 = vld [vmem:[%s198 + $0x360] sm:$0x3]
        %v4533 = vld [vmem:[%s198 + $0x368] sm:$0x3]
        %v4534 = vld [vmem:[%s198 + $0x3a0] sm:$0xff]
        %v4535 = vld [vmem:[%s198 + $0x3a8] sm:$0xff]
        %v4536 = vld [vmem:[%s198 + $0x3e0] sm:$0x3]
        %v4537 = vld [vmem:[%s198 + $0x3e8] sm:$0x3]
        %v4538 = vsel %vm362, %v4506, -10000.0
        %v4539 = vsel %vm362, %v4507, -10000.0
        %v4540 = vsel %vm363, %v4508, -10000.0
        %v4541 = vsel %vm363, %v4509, -10000.0
        %v4542 = vsel %vm364, %v4510, -10000.0
        %v4543 = vsel %vm364, %v4511, -10000.0
        %v4544 = vsel %vm365, %v4512, -10000.0
        %v4545 = vsel %vm365, %v4513, -10000.0
        %v4546 = vsel %vm366, %v4514, -10000.0
        %v4547 = vsel %vm366, %v4515, -10000.0
        %v4548 = vsel %vm367, %v4516, -10000.0
        %v4549 = vsel %vm367, %v4517, -10000.0
        %v4550 = vsel %vm368, %v4518, -10000.0
        %v4551 = vsel %vm368, %v4519, -10000.0
        %v4552 = vsel %vm369, %v4520, -10000.0
        %v4553 = vsel %vm369, %v4521, -10000.0
        %v4554 = vsel %vm370, %v4522, -10000.0
        %v4555 = vsel %vm370, %v4523, -10000.0
        %v4556 = vsel %vm371, %v4524, -10000.0
        %v4557 = vsel %vm371, %v4525, -10000.0
        %v4558 = vsel %vm372, %v4526, -10000.0
        %v4559 = vsel %vm372, %v4527, -10000.0
        %v4560 = vsel %vm373, %v4528, -10000.0
        %v4561 = vsel %vm373, %v4529, -10000.0
        %v4562 = vsel %vm374, %v4530, -10000.0
        %v4563 = vsel %vm374, %v4531, -10000.0
        %v4564 = vsel %vm375, %v4532, -10000.0
        %v4565 = vsel %vm375, %v4533, -10000.0
        %v4566 = vsel %vm376, %v4534, -10000.0
        %v4567 = vsel %vm376, %v4535, -10000.0
        %v4568 = vsel %vm377, %v4536, -10000.0
        %v4569 = vsel %vm377, %v4537, -10000.0
        %v4586 = vrot.slane %v4538, 1
        %v4587 = vrot.slane %v4539, 1
        %v4588 = vrot.slane %v4542, 1
        %v4589 = vrot.slane %v4543, 1
        %v4590 = vrot.slane %v4546, 1
        %v4591 = vrot.slane %v4547, 1
        %v4592 = vrot.slane %v4550, 1
        %v4593 = vrot.slane %v4551, 1
        %v4594 = vrot.slane %v4554, 1
        %v4595 = vrot.slane %v4555, 1
        %v4596 = vrot.slane %v4558, 1
        %v4597 = vrot.slane %v4559, 1
        %v4598 = vrot.slane %v4562, 1
        %v4599 = vrot.slane %v4563, 1
        %v4600 = vrot.slane %v4566, 1
        %v4601 = vrot.slane %v4567, 1
        %v4618 = vmax.f32 %v4538, %v4586
        %v4619 = vmax.f32 %v4539, %v4587
        %v4620 = vmax.f32 %v4542, %v4588
        %v4621 = vmax.f32 %v4543, %v4589
        %v4622 = vmax.f32 %v4546, %v4590
        %v4623 = vmax.f32 %v4547, %v4591
        %v4624 = vmax.f32 %v4550, %v4592
        %v4625 = vmax.f32 %v4551, %v4593
        %v4626 = vmax.f32 %v4554, %v4594
        %v4627 = vmax.f32 %v4555, %v4595
        %v4628 = vmax.f32 %v4558, %v4596
        %v4629 = vmax.f32 %v4559, %v4597
        %v4630 = vmax.f32 %v4562, %v4598
        %v4631 = vmax.f32 %v4563, %v4599
        %v4632 = vmax.f32 %v4566, %v4600
        %v4633 = vmax.f32 %v4567, %v4601
        %v4634 = vmin.f32 %v4538, %v4586
        %v4635 = vmin.f32 %v4539, %v4587
        %v4636 = vmin.f32 %v4542, %v4588
        %v4637 = vmin.f32 %v4543, %v4589
        %v4638 = vmin.f32 %v4546, %v4590
        %v4639 = vmin.f32 %v4547, %v4591
        %v4640 = vmin.f32 %v4550, %v4592
        %v4641 = vmin.f32 %v4551, %v4593
        %v4642 = vmin.f32 %v4554, %v4594
        %v4643 = vmin.f32 %v4555, %v4595
        %v4644 = vmin.f32 %v4558, %v4596
        %v4645 = vmin.f32 %v4559, %v4597
        %v4646 = vmin.f32 %v4562, %v4598
        %v4647 = vmin.f32 %v4563, %v4599
        %v4648 = vmin.f32 %v4566, %v4600
        %v4649 = vmin.f32 %v4567, %v4601
        %v4666 = vrot.slane %v4540, 1
        %v4667 = vrot.slane %v4541, 1
        %v4668 = vrot.slane %v4544, 1
        %v4669 = vrot.slane %v4545, 1
        %v4670 = vrot.slane %v4548, 1
        %v4671 = vrot.slane %v4549, 1
        %v4672 = vrot.slane %v4552, 1
        %v4673 = vrot.slane %v4553, 1
        %v4674 = vrot.slane %v4556, 1
        %v4675 = vrot.slane %v4557, 1
        %v4676 = vrot.slane %v4560, 1
        %v4677 = vrot.slane %v4561, 1
        %v4678 = vrot.slane %v4564, 1
        %v4679 = vrot.slane %v4565, 1
        %v4680 = vrot.slane %v4568, 1
        %v4681 = vrot.slane %v4569, 1
        %v4698 = vmax.f32 %v4540, %v4666
        %v4699 = vmax.f32 %v4541, %v4667
        %v4700 = vmax.f32 %v4544, %v4668
        %v4701 = vmax.f32 %v4545, %v4669
        %v4702 = vmax.f32 %v4548, %v4670
        %v4703 = vmax.f32 %v4549, %v4671
        %v4704 = vmax.f32 %v4552, %v4672
        %v4705 = vmax.f32 %v4553, %v4673
        %v4706 = vmax.f32 %v4556, %v4674
        %v4707 = vmax.f32 %v4557, %v4675
        %v4708 = vmax.f32 %v4560, %v4676
        %v4709 = vmax.f32 %v4561, %v4677
        %v4710 = vmax.f32 %v4564, %v4678
        %v4711 = vmax.f32 %v4565, %v4679
        %v4712 = vmax.f32 %v4568, %v4680
        %v4713 = vmax.f32 %v4569, %v4681
        %v4714 = vmin.f32 %v4540, %v4666
        %v4715 = vmin.f32 %v4541, %v4667
        %v4716 = vmin.f32 %v4544, %v4668
        %v4717 = vmin.f32 %v4545, %v4669
        %v4718 = vmin.f32 %v4548, %v4670
        %v4719 = vmin.f32 %v4549, %v4671
        %v4720 = vmin.f32 %v4552, %v4672
        %v4721 = vmin.f32 %v4553, %v4673
        %v4722 = vmin.f32 %v4556, %v4674
        %v4723 = vmin.f32 %v4557, %v4675
        %v4724 = vmin.f32 %v4560, %v4676
        %v4725 = vmin.f32 %v4561, %v4677
        %v4726 = vmin.f32 %v4564, %v4678
        %v4727 = vmin.f32 %v4565, %v4679
        %v4728 = vmin.f32 %v4568, %v4680
        %v4729 = vmin.f32 %v4569, %v4681
        %v4746 = vrot.slane %v4634, 2
        %v4747 = vrot.slane %v4635, 2
        %v4748 = vrot.slane %v4636, 2
        %v4749 = vrot.slane %v4637, 2
        %v4750 = vrot.slane %v4638, 2
        %v4751 = vrot.slane %v4639, 2
        %v4752 = vrot.slane %v4640, 2
        %v4753 = vrot.slane %v4641, 2
        %v4754 = vrot.slane %v4642, 2
        %v4755 = vrot.slane %v4643, 2
        %v4756 = vrot.slane %v4644, 2
        %v4757 = vrot.slane %v4645, 2
        %v4758 = vrot.slane %v4646, 2
        %v4759 = vrot.slane %v4647, 2
        %v4760 = vrot.slane %v4648, 2
        %v4761 = vrot.slane %v4649, 2
        %v4778 = vmax.f32 %v4618, %v4746
        %v4779 = vmax.f32 %v4619, %v4747
        %v4780 = vmax.f32 %v4620, %v4748
        %v4781 = vmax.f32 %v4621, %v4749
        %v4782 = vmax.f32 %v4622, %v4750
        %v4783 = vmax.f32 %v4623, %v4751
        %v4784 = vmax.f32 %v4624, %v4752
        %v4785 = vmax.f32 %v4625, %v4753
        %v4786 = vmax.f32 %v4626, %v4754
        %v4787 = vmax.f32 %v4627, %v4755
        %v4788 = vmax.f32 %v4628, %v4756
        %v4789 = vmax.f32 %v4629, %v4757
        %v4790 = vmax.f32 %v4630, %v4758
        %v4791 = vmax.f32 %v4631, %v4759
        %v4792 = vmax.f32 %v4632, %v4760
        %v4793 = vmax.f32 %v4633, %v4761
        %v4794 = vmin.f32 %v4618, %v4746
        %v4795 = vmin.f32 %v4619, %v4747
        %v4796 = vmin.f32 %v4620, %v4748
        %v4797 = vmin.f32 %v4621, %v4749
        %v4798 = vmin.f32 %v4622, %v4750
        %v4799 = vmin.f32 %v4623, %v4751
        %v4800 = vmin.f32 %v4624, %v4752
        %v4801 = vmin.f32 %v4625, %v4753
        %v4802 = vmin.f32 %v4626, %v4754
        %v4803 = vmin.f32 %v4627, %v4755
        %v4804 = vmin.f32 %v4628, %v4756
        %v4805 = vmin.f32 %v4629, %v4757
        %v4806 = vmin.f32 %v4630, %v4758
        %v4807 = vmin.f32 %v4631, %v4759
        %v4808 = vmin.f32 %v4632, %v4760
        %v4809 = vmin.f32 %v4633, %v4761
        %v4826 = vrot.slane %v4618, 2
        %v4827 = vrot.slane %v4619, 2
        %v4828 = vrot.slane %v4620, 2
        %v4829 = vrot.slane %v4621, 2
        %v4830 = vrot.slane %v4622, 2
        %v4831 = vrot.slane %v4623, 2
        %v4832 = vrot.slane %v4624, 2
        %v4833 = vrot.slane %v4625, 2
        %v4834 = vrot.slane %v4626, 2
        %v4835 = vrot.slane %v4627, 2
        %v4836 = vrot.slane %v4628, 2
        %v4837 = vrot.slane %v4629, 2
        %v4838 = vrot.slane %v4630, 2
        %v4839 = vrot.slane %v4631, 2
        %v4840 = vrot.slane %v4632, 2
        %v4841 = vrot.slane %v4633, 2
        %v4858 = vmax.f32 %v4634, %v4826
        %v4859 = vmax.f32 %v4635, %v4827
        %v4860 = vmax.f32 %v4636, %v4828
        %v4861 = vmax.f32 %v4637, %v4829
        %v4862 = vmax.f32 %v4638, %v4830
        %v4863 = vmax.f32 %v4639, %v4831
        %v4864 = vmax.f32 %v4640, %v4832
        %v4865 = vmax.f32 %v4641, %v4833
        %v4866 = vmax.f32 %v4642, %v4834
        %v4867 = vmax.f32 %v4643, %v4835
        %v4868 = vmax.f32 %v4644, %v4836
        %v4869 = vmax.f32 %v4645, %v4837
        %v4870 = vmax.f32 %v4646, %v4838
        %v4871 = vmax.f32 %v4647, %v4839
        %v4872 = vmax.f32 %v4648, %v4840
        %v4873 = vmax.f32 %v4649, %v4841
        %v4874 = vmin.f32 %v4634, %v4826
        %v4875 = vmin.f32 %v4635, %v4827
        %v4876 = vmin.f32 %v4636, %v4828
        %v4877 = vmin.f32 %v4637, %v4829
        %v4878 = vmin.f32 %v4638, %v4830
        %v4879 = vmin.f32 %v4639, %v4831
        %v4880 = vmin.f32 %v4640, %v4832
        %v4881 = vmin.f32 %v4641, %v4833
        %v4882 = vmin.f32 %v4642, %v4834
        %v4883 = vmin.f32 %v4643, %v4835
        %v4884 = vmin.f32 %v4644, %v4836
        %v4885 = vmin.f32 %v4645, %v4837
        %v4886 = vmin.f32 %v4646, %v4838
        %v4887 = vmin.f32 %v4647, %v4839
        %v4888 = vmin.f32 %v4648, %v4840
        %v4889 = vmin.f32 %v4649, %v4841
        %v4890 = vmax.f32 %v4778, %v4858
        %v4891 = vmax.f32 %v4779, %v4859
        %v4892 = vmax.f32 %v4780, %v4860
        %v4893 = vmax.f32 %v4781, %v4861
        %v4894 = vmax.f32 %v4782, %v4862
        %v4895 = vmax.f32 %v4783, %v4863
        %v4896 = vmax.f32 %v4784, %v4864
        %v4897 = vmax.f32 %v4785, %v4865
        %v4898 = vmax.f32 %v4786, %v4866
        %v4899 = vmax.f32 %v4787, %v4867
        %v4900 = vmax.f32 %v4788, %v4868
        %v4901 = vmax.f32 %v4789, %v4869
        %v4902 = vmax.f32 %v4790, %v4870
        %v4903 = vmax.f32 %v4791, %v4871
        %v4904 = vmax.f32 %v4792, %v4872
        %v4905 = vmax.f32 %v4793, %v4873
        %v4906 = vmin.f32 %v4778, %v4858
        %v4907 = vmin.f32 %v4779, %v4859
        %v4908 = vmin.f32 %v4780, %v4860
        %v4909 = vmin.f32 %v4781, %v4861
        %v4910 = vmin.f32 %v4782, %v4862
        %v4911 = vmin.f32 %v4783, %v4863
        %v4912 = vmin.f32 %v4784, %v4864
        %v4913 = vmin.f32 %v4785, %v4865
        %v4914 = vmin.f32 %v4786, %v4866
        %v4915 = vmin.f32 %v4787, %v4867
        %v4916 = vmin.f32 %v4788, %v4868
        %v4917 = vmin.f32 %v4789, %v4869
        %v4918 = vmin.f32 %v4790, %v4870
        %v4919 = vmin.f32 %v4791, %v4871
        %v4920 = vmin.f32 %v4792, %v4872
        %v4921 = vmin.f32 %v4793, %v4873
        %v4922 = vmax.f32 %v4794, %v4874
        %v4923 = vmax.f32 %v4795, %v4875
        %v4924 = vmax.f32 %v4796, %v4876
        %v4925 = vmax.f32 %v4797, %v4877
        %v4926 = vmax.f32 %v4798, %v4878
        %v4927 = vmax.f32 %v4799, %v4879
        %v4928 = vmax.f32 %v4800, %v4880
        %v4929 = vmax.f32 %v4801, %v4881
        %v4930 = vmax.f32 %v4802, %v4882
        %v4931 = vmax.f32 %v4803, %v4883
        %v4932 = vmax.f32 %v4804, %v4884
        %v4933 = vmax.f32 %v4805, %v4885
        %v4934 = vmax.f32 %v4806, %v4886
        %v4935 = vmax.f32 %v4807, %v4887
        %v4936 = vmax.f32 %v4808, %v4888
        %v4937 = vmax.f32 %v4809, %v4889
        %v4938 = vmin.f32 %v4794, %v4874
        %v4939 = vmin.f32 %v4795, %v4875
        %v4940 = vmin.f32 %v4796, %v4876
        %v4941 = vmin.f32 %v4797, %v4877
        %v4942 = vmin.f32 %v4798, %v4878
        %v4943 = vmin.f32 %v4799, %v4879
        %v4944 = vmin.f32 %v4800, %v4880
        %v4945 = vmin.f32 %v4801, %v4881
        %v4946 = vmin.f32 %v4802, %v4882
        %v4947 = vmin.f32 %v4803, %v4883
        %v4948 = vmin.f32 %v4804, %v4884
        %v4949 = vmin.f32 %v4805, %v4885
        %v4950 = vmin.f32 %v4806, %v4886
        %v4951 = vmin.f32 %v4807, %v4887
        %v4952 = vmin.f32 %v4808, %v4888
        %v4953 = vmin.f32 %v4809, %v4889
        %v4954 = vmax.f32 %v4698, %v4714
        %v4955 = vmax.f32 %v4699, %v4715
        %v4956 = vmax.f32 %v4700, %v4716
        %v4957 = vmax.f32 %v4701, %v4717
        %v4958 = vmax.f32 %v4702, %v4718
        %v4959 = vmax.f32 %v4703, %v4719
        %v4960 = vmax.f32 %v4704, %v4720
        %v4961 = vmax.f32 %v4705, %v4721
        %v4962 = vmax.f32 %v4706, %v4722
        %v4963 = vmax.f32 %v4707, %v4723
        %v4964 = vmax.f32 %v4708, %v4724
        %v4965 = vmax.f32 %v4709, %v4725
        %v4966 = vmax.f32 %v4710, %v4726
        %v4967 = vmax.f32 %v4711, %v4727
        %v4968 = vmax.f32 %v4712, %v4728
        %v4969 = vmax.f32 %v4713, %v4729
        %v4970 = vmin.f32 %v4698, %v4714
        %v4971 = vmin.f32 %v4699, %v4715
        %v4972 = vmin.f32 %v4700, %v4716
        %v4973 = vmin.f32 %v4701, %v4717
        %v4974 = vmin.f32 %v4702, %v4718
        %v4975 = vmin.f32 %v4703, %v4719
        %v4976 = vmin.f32 %v4704, %v4720
        %v4977 = vmin.f32 %v4705, %v4721
        %v4978 = vmin.f32 %v4706, %v4722
        %v4979 = vmin.f32 %v4707, %v4723
        %v4980 = vmin.f32 %v4708, %v4724
        %v4981 = vmin.f32 %v4709, %v4725
        %v4982 = vmin.f32 %v4710, %v4726
        %v4983 = vmin.f32 %v4711, %v4727
        %v4984 = vmin.f32 %v4712, %v4728
        %v4985 = vmin.f32 %v4713, %v4729
        %v5002 = vrot.slane %v4938, 4
        %v5003 = vrot.slane %v4939, 4
        %v5004 = vrot.slane %v4940, 4
        %v5005 = vrot.slane %v4941, 4
        %v5006 = vrot.slane %v4942, 4
        %v5007 = vrot.slane %v4943, 4
        %v5008 = vrot.slane %v4944, 4
        %v5009 = vrot.slane %v4945, 4
        %v5010 = vrot.slane %v4946, 4
        %v5011 = vrot.slane %v4947, 4
        %v5012 = vrot.slane %v4948, 4
        %v5013 = vrot.slane %v4949, 4
        %v5014 = vrot.slane %v4950, 4
        %v5015 = vrot.slane %v4951, 4
        %v5016 = vrot.slane %v4952, 4
        %v5017 = vrot.slane %v4953, 4
        %v5034 = vmax.f32 %v4890, %v5002
        %v5035 = vmax.f32 %v4891, %v5003
        %v5036 = vmax.f32 %v4892, %v5004
        %v5037 = vmax.f32 %v4893, %v5005
        %v5038 = vmax.f32 %v4894, %v5006
        %v5039 = vmax.f32 %v4895, %v5007
        %v5040 = vmax.f32 %v4896, %v5008
        %v5041 = vmax.f32 %v4897, %v5009
        %v5042 = vmax.f32 %v4898, %v5010
        %v5043 = vmax.f32 %v4899, %v5011
        %v5044 = vmax.f32 %v4900, %v5012
        %v5045 = vmax.f32 %v4901, %v5013
        %v5046 = vmax.f32 %v4902, %v5014
        %v5047 = vmax.f32 %v4903, %v5015
        %v5048 = vmax.f32 %v4904, %v5016
        %v5049 = vmax.f32 %v4905, %v5017
        %v5050 = vmin.f32 %v4890, %v5002
        %v5051 = vmin.f32 %v4891, %v5003
        %v5052 = vmin.f32 %v4892, %v5004
        %v5053 = vmin.f32 %v4893, %v5005
        %v5054 = vmin.f32 %v4894, %v5006
        %v5055 = vmin.f32 %v4895, %v5007
        %v5056 = vmin.f32 %v4896, %v5008
        %v5057 = vmin.f32 %v4897, %v5009
        %v5058 = vmin.f32 %v4898, %v5010
        %v5059 = vmin.f32 %v4899, %v5011
        %v5060 = vmin.f32 %v4900, %v5012
        %v5061 = vmin.f32 %v4901, %v5013
        %v5062 = vmin.f32 %v4902, %v5014
        %v5063 = vmin.f32 %v4903, %v5015
        %v5064 = vmin.f32 %v4904, %v5016
        %v5065 = vmin.f32 %v4905, %v5017
        %v5082 = vrot.slane %v4922, 4
        %v5083 = vrot.slane %v4923, 4
        %v5084 = vrot.slane %v4924, 4
        %v5085 = vrot.slane %v4925, 4
        %v5086 = vrot.slane %v4926, 4
        %v5087 = vrot.slane %v4927, 4
        %v5088 = vrot.slane %v4928, 4
        %v5089 = vrot.slane %v4929, 4
        %v5090 = vrot.slane %v4930, 4
        %v5091 = vrot.slane %v4931, 4
        %v5092 = vrot.slane %v4932, 4
        %v5093 = vrot.slane %v4933, 4
        %v5094 = vrot.slane %v4934, 4
        %v5095 = vrot.slane %v4935, 4
        %v5096 = vrot.slane %v4936, 4
        %v5097 = vrot.slane %v4937, 4
        %v5114 = vmax.f32 %v4906, %v5082
        %v5115 = vmax.f32 %v4907, %v5083
        %v5116 = vmax.f32 %v4908, %v5084
        %v5117 = vmax.f32 %v4909, %v5085
        %v5118 = vmax.f32 %v4910, %v5086
        %v5119 = vmax.f32 %v4911, %v5087
        %v5120 = vmax.f32 %v4912, %v5088
        %v5121 = vmax.f32 %v4913, %v5089
        %v5122 = vmax.f32 %v4914, %v5090
        %v5123 = vmax.f32 %v4915, %v5091
        %v5124 = vmax.f32 %v4916, %v5092
        %v5125 = vmax.f32 %v4917, %v5093
        %v5126 = vmax.f32 %v4918, %v5094
        %v5127 = vmax.f32 %v4919, %v5095
        %v5128 = vmax.f32 %v4920, %v5096
        %v5129 = vmax.f32 %v4921, %v5097
        %v5130 = vmin.f32 %v4906, %v5082
        %v5131 = vmin.f32 %v4907, %v5083
        %v5132 = vmin.f32 %v4908, %v5084
        %v5133 = vmin.f32 %v4909, %v5085
        %v5134 = vmin.f32 %v4910, %v5086
        %v5135 = vmin.f32 %v4911, %v5087
        %v5136 = vmin.f32 %v4912, %v5088
        %v5137 = vmin.f32 %v4913, %v5089
        %v5138 = vmin.f32 %v4914, %v5090
        %v5139 = vmin.f32 %v4915, %v5091
        %v5140 = vmin.f32 %v4916, %v5092
        %v5141 = vmin.f32 %v4917, %v5093
        %v5142 = vmin.f32 %v4918, %v5094
        %v5143 = vmin.f32 %v4919, %v5095
        %v5144 = vmin.f32 %v4920, %v5096
        %v5145 = vmin.f32 %v4921, %v5097
        %v5162 = vrot.slane %v4906, 4
        %v5163 = vrot.slane %v4907, 4
        %v5164 = vrot.slane %v4908, 4
        %v5165 = vrot.slane %v4909, 4
        %v5166 = vrot.slane %v4910, 4
        %v5167 = vrot.slane %v4911, 4
        %v5168 = vrot.slane %v4912, 4
        %v5169 = vrot.slane %v4913, 4
        %v5170 = vrot.slane %v4914, 4
        %v5171 = vrot.slane %v4915, 4
        %v5172 = vrot.slane %v4916, 4
        %v5173 = vrot.slane %v4917, 4
        %v5174 = vrot.slane %v4918, 4
        %v5175 = vrot.slane %v4919, 4
        %v5176 = vrot.slane %v4920, 4
        %v5177 = vrot.slane %v4921, 4
        %v5194 = vmax.f32 %v4922, %v5162
        %v5195 = vmax.f32 %v4923, %v5163
        %v5196 = vmax.f32 %v4924, %v5164
        %v5197 = vmax.f32 %v4925, %v5165
        %v5198 = vmax.f32 %v4926, %v5166
        %v5199 = vmax.f32 %v4927, %v5167
        %v5200 = vmax.f32 %v4928, %v5168
        %v5201 = vmax.f32 %v4929, %v5169
        %v5202 = vmax.f32 %v4930, %v5170
        %v5203 = vmax.f32 %v4931, %v5171
        %v5204 = vmax.f32 %v4932, %v5172
        %v5205 = vmax.f32 %v4933, %v5173
        %v5206 = vmax.f32 %v4934, %v5174
        %v5207 = vmax.f32 %v4935, %v5175
        %v5208 = vmax.f32 %v4936, %v5176
        %v5209 = vmax.f32 %v4937, %v5177
        %v5210 = vmin.f32 %v4922, %v5162
        %v5211 = vmin.f32 %v4923, %v5163
        %v5212 = vmin.f32 %v4924, %v5164
        %v5213 = vmin.f32 %v4925, %v5165
        %v5214 = vmin.f32 %v4926, %v5166
        %v5215 = vmin.f32 %v4927, %v5167
        %v5216 = vmin.f32 %v4928, %v5168
        %v5217 = vmin.f32 %v4929, %v5169
        %v5218 = vmin.f32 %v4930, %v5170
        %v5219 = vmin.f32 %v4931, %v5171
        %v5220 = vmin.f32 %v4932, %v5172
        %v5221 = vmin.f32 %v4933, %v5173
        %v5222 = vmin.f32 %v4934, %v5174
        %v5223 = vmin.f32 %v4935, %v5175
        %v5224 = vmin.f32 %v4936, %v5176
        %v5225 = vmin.f32 %v4937, %v5177
        %v5242 = vrot.slane %v4890, 4
        %v5243 = vrot.slane %v4891, 4
        %v5244 = vrot.slane %v4892, 4
        %v5245 = vrot.slane %v4893, 4
        %v5246 = vrot.slane %v4894, 4
        %v5247 = vrot.slane %v4895, 4
        %v5248 = vrot.slane %v4896, 4
        %v5249 = vrot.slane %v4897, 4
        %v5250 = vrot.slane %v4898, 4
        %v5251 = vrot.slane %v4899, 4
        %v5252 = vrot.slane %v4900, 4
        %v5253 = vrot.slane %v4901, 4
        %v5254 = vrot.slane %v4902, 4
        %v5255 = vrot.slane %v4903, 4
        %v5256 = vrot.slane %v4904, 4
        %v5257 = vrot.slane %v4905, 4
        %v5274 = vmax.f32 %v4938, %v5242
        %v5275 = vmax.f32 %v4939, %v5243
        %v5276 = vmax.f32 %v4940, %v5244
        %v5277 = vmax.f32 %v4941, %v5245
        %v5278 = vmax.f32 %v4942, %v5246
        %v5279 = vmax.f32 %v4943, %v5247
        %v5280 = vmax.f32 %v4944, %v5248
        %v5281 = vmax.f32 %v4945, %v5249
        %v5282 = vmax.f32 %v4946, %v5250
        %v5283 = vmax.f32 %v4947, %v5251
        %v5284 = vmax.f32 %v4948, %v5252
        %v5285 = vmax.f32 %v4949, %v5253
        %v5286 = vmax.f32 %v4950, %v5254
        %v5287 = vmax.f32 %v4951, %v5255
        %v5288 = vmax.f32 %v4952, %v5256
        %v5289 = vmax.f32 %v4953, %v5257
        %v5290 = vmin.f32 %v4938, %v5242
        %v5291 = vmin.f32 %v4939, %v5243
        %v5292 = vmin.f32 %v4940, %v5244
        %v5293 = vmin.f32 %v4941, %v5245
        %v5294 = vmin.f32 %v4942, %v5246
        %v5295 = vmin.f32 %v4943, %v5247
        %v5296 = vmin.f32 %v4944, %v5248
        %v5297 = vmin.f32 %v4945, %v5249
        %v5298 = vmin.f32 %v4946, %v5250
        %v5299 = vmin.f32 %v4947, %v5251
        %v5300 = vmin.f32 %v4948, %v5252
        %v5301 = vmin.f32 %v4949, %v5253
        %v5302 = vmin.f32 %v4950, %v5254
        %v5303 = vmin.f32 %v4951, %v5255
        %v5304 = vmin.f32 %v4952, %v5256
        %v5305 = vmin.f32 %v4953, %v5257
        %v5306 = vmax.f32 %v5034, %v5194
        %v5307 = vmax.f32 %v5035, %v5195
        %v5308 = vmax.f32 %v5036, %v5196
        %v5309 = vmax.f32 %v5037, %v5197
        %v5310 = vmax.f32 %v5038, %v5198
        %v5311 = vmax.f32 %v5039, %v5199
        %v5312 = vmax.f32 %v5040, %v5200
        %v5313 = vmax.f32 %v5041, %v5201
        %v5314 = vmax.f32 %v5042, %v5202
        %v5315 = vmax.f32 %v5043, %v5203
        %v5316 = vmax.f32 %v5044, %v5204
        %v5317 = vmax.f32 %v5045, %v5205
        %v5318 = vmax.f32 %v5046, %v5206
        %v5319 = vmax.f32 %v5047, %v5207
        %v5320 = vmax.f32 %v5048, %v5208
        %v5321 = vmax.f32 %v5049, %v5209
        %v5322 = vmin.f32 %v5034, %v5194
        %v5323 = vmin.f32 %v5035, %v5195
        %v5324 = vmin.f32 %v5036, %v5196
        %v5325 = vmin.f32 %v5037, %v5197
        %v5326 = vmin.f32 %v5038, %v5198
        %v5327 = vmin.f32 %v5039, %v5199
        %v5328 = vmin.f32 %v5040, %v5200
        %v5329 = vmin.f32 %v5041, %v5201
        %v5330 = vmin.f32 %v5042, %v5202
        %v5331 = vmin.f32 %v5043, %v5203
        %v5332 = vmin.f32 %v5044, %v5204
        %v5333 = vmin.f32 %v5045, %v5205
        %v5334 = vmin.f32 %v5046, %v5206
        %v5335 = vmin.f32 %v5047, %v5207
        %v5336 = vmin.f32 %v5048, %v5208
        %v5337 = vmin.f32 %v5049, %v5209
        %v5338 = vmax.f32 %v5114, %v5274
        %v5339 = vmax.f32 %v5115, %v5275
        %v5340 = vmax.f32 %v5116, %v5276
        %v5341 = vmax.f32 %v5117, %v5277
        %v5342 = vmax.f32 %v5118, %v5278
        %v5343 = vmax.f32 %v5119, %v5279
        %v5344 = vmax.f32 %v5120, %v5280
        %v5345 = vmax.f32 %v5121, %v5281
        %v5346 = vmax.f32 %v5122, %v5282
        %v5347 = vmax.f32 %v5123, %v5283
        %v5348 = vmax.f32 %v5124, %v5284
        %v5349 = vmax.f32 %v5125, %v5285
        %v5350 = vmax.f32 %v5126, %v5286
        %v5351 = vmax.f32 %v5127, %v5287
        %v5352 = vmax.f32 %v5128, %v5288
        %v5353 = vmax.f32 %v5129, %v5289
        %v5354 = vmin.f32 %v5114, %v5274
        %v5355 = vmin.f32 %v5115, %v5275
        %v5356 = vmin.f32 %v5116, %v5276
        %v5357 = vmin.f32 %v5117, %v5277
        %v5358 = vmin.f32 %v5118, %v5278
        %v5359 = vmin.f32 %v5119, %v5279
        %v5360 = vmin.f32 %v5120, %v5280
        %v5361 = vmin.f32 %v5121, %v5281
        %v5362 = vmin.f32 %v5122, %v5282
        %v5363 = vmin.f32 %v5123, %v5283
        %v5364 = vmin.f32 %v5124, %v5284
        %v5365 = vmin.f32 %v5125, %v5285
        %v5366 = vmin.f32 %v5126, %v5286
        %v5367 = vmin.f32 %v5127, %v5287
        %v5368 = vmin.f32 %v5128, %v5288
        %v5369 = vmin.f32 %v5129, %v5289
        %v5370 = vmax.f32 %v5050, %v5210
        %v5371 = vmax.f32 %v5051, %v5211
        %v5372 = vmax.f32 %v5052, %v5212
        %v5373 = vmax.f32 %v5053, %v5213
        %v5374 = vmax.f32 %v5054, %v5214
        %v5375 = vmax.f32 %v5055, %v5215
        %v5376 = vmax.f32 %v5056, %v5216
        %v5377 = vmax.f32 %v5057, %v5217
        %v5378 = vmax.f32 %v5058, %v5218
        %v5379 = vmax.f32 %v5059, %v5219
        %v5380 = vmax.f32 %v5060, %v5220
        %v5381 = vmax.f32 %v5061, %v5221
        %v5382 = vmax.f32 %v5062, %v5222
        %v5383 = vmax.f32 %v5063, %v5223
        %v5384 = vmax.f32 %v5064, %v5224
        %v5385 = vmax.f32 %v5065, %v5225
        %v5386 = vmin.f32 %v5050, %v5210
        %v5387 = vmin.f32 %v5051, %v5211
        %v5388 = vmin.f32 %v5052, %v5212
        %v5389 = vmin.f32 %v5053, %v5213
        %v5390 = vmin.f32 %v5054, %v5214
        %v5391 = vmin.f32 %v5055, %v5215
        %v5392 = vmin.f32 %v5056, %v5216
        %v5393 = vmin.f32 %v5057, %v5217
        %v5394 = vmin.f32 %v5058, %v5218
        %v5395 = vmin.f32 %v5059, %v5219
        %v5396 = vmin.f32 %v5060, %v5220
        %v5397 = vmin.f32 %v5061, %v5221
        %v5398 = vmin.f32 %v5062, %v5222
        %v5399 = vmin.f32 %v5063, %v5223
        %v5400 = vmin.f32 %v5064, %v5224
        %v5401 = vmin.f32 %v5065, %v5225
        %v5402 = vmax.f32 %v5130, %v5290
        %v5403 = vmax.f32 %v5131, %v5291
        %v5404 = vmax.f32 %v5132, %v5292
        %v5405 = vmax.f32 %v5133, %v5293
        %v5406 = vmax.f32 %v5134, %v5294
        %v5407 = vmax.f32 %v5135, %v5295
        %v5408 = vmax.f32 %v5136, %v5296
        %v5409 = vmax.f32 %v5137, %v5297
        %v5410 = vmax.f32 %v5138, %v5298
        %v5411 = vmax.f32 %v5139, %v5299
        %v5412 = vmax.f32 %v5140, %v5300
        %v5413 = vmax.f32 %v5141, %v5301
        %v5414 = vmax.f32 %v5142, %v5302
        %v5415 = vmax.f32 %v5143, %v5303
        %v5416 = vmax.f32 %v5144, %v5304
        %v5417 = vmax.f32 %v5145, %v5305
        %v5418 = vmin.f32 %v5130, %v5290
        %v5419 = vmin.f32 %v5131, %v5291
        %v5420 = vmin.f32 %v5132, %v5292
        %v5421 = vmin.f32 %v5133, %v5293
        %v5422 = vmin.f32 %v5134, %v5294
        %v5423 = vmin.f32 %v5135, %v5295
        %v5424 = vmin.f32 %v5136, %v5296
        %v5425 = vmin.f32 %v5137, %v5297
        %v5426 = vmin.f32 %v5138, %v5298
        %v5427 = vmin.f32 %v5139, %v5299
        %v5428 = vmin.f32 %v5140, %v5300
        %v5429 = vmin.f32 %v5141, %v5301
        %v5430 = vmin.f32 %v5142, %v5302
        %v5431 = vmin.f32 %v5143, %v5303
        %v5432 = vmin.f32 %v5144, %v5304
        %v5433 = vmin.f32 %v5145, %v5305
        %v5434 = vmax.f32 %v5306, %v5338
        %v5435 = vmax.f32 %v5307, %v5339
        %v5436 = vmax.f32 %v5308, %v5340
        %v5437 = vmax.f32 %v5309, %v5341
        %v5438 = vmax.f32 %v5310, %v5342
        %v5439 = vmax.f32 %v5311, %v5343
        %v5440 = vmax.f32 %v5312, %v5344
        %v5441 = vmax.f32 %v5313, %v5345
        %v5442 = vmax.f32 %v5314, %v5346
        %v5443 = vmax.f32 %v5315, %v5347
        %v5444 = vmax.f32 %v5316, %v5348
        %v5445 = vmax.f32 %v5317, %v5349
        %v5446 = vmax.f32 %v5318, %v5350
        %v5447 = vmax.f32 %v5319, %v5351
        %v5448 = vmax.f32 %v5320, %v5352
        %v5449 = vmax.f32 %v5321, %v5353
        %v5450 = vmin.f32 %v5306, %v5338
        %v5451 = vmin.f32 %v5307, %v5339
        %v5452 = vmin.f32 %v5308, %v5340
        %v5453 = vmin.f32 %v5309, %v5341
        %v5454 = vmin.f32 %v5310, %v5342
        %v5455 = vmin.f32 %v5311, %v5343
        %v5456 = vmin.f32 %v5312, %v5344
        %v5457 = vmin.f32 %v5313, %v5345
        %v5458 = vmin.f32 %v5314, %v5346
        %v5459 = vmin.f32 %v5315, %v5347
        %v5460 = vmin.f32 %v5316, %v5348
        %v5461 = vmin.f32 %v5317, %v5349
        %v5462 = vmin.f32 %v5318, %v5350
        %v5463 = vmin.f32 %v5319, %v5351
        %v5464 = vmin.f32 %v5320, %v5352
        %v5465 = vmin.f32 %v5321, %v5353
        %v5466 = vmax.f32 %v5322, %v5354
        %v5467 = vmax.f32 %v5323, %v5355
        %v5468 = vmax.f32 %v5324, %v5356
        %v5469 = vmax.f32 %v5325, %v5357
        %v5470 = vmax.f32 %v5326, %v5358
        %v5471 = vmax.f32 %v5327, %v5359
        %v5472 = vmax.f32 %v5328, %v5360
        %v5473 = vmax.f32 %v5329, %v5361
        %v5474 = vmax.f32 %v5330, %v5362
        %v5475 = vmax.f32 %v5331, %v5363
        %v5476 = vmax.f32 %v5332, %v5364
        %v5477 = vmax.f32 %v5333, %v5365
        %v5478 = vmax.f32 %v5334, %v5366
        %v5479 = vmax.f32 %v5335, %v5367
        %v5480 = vmax.f32 %v5336, %v5368
        %v5481 = vmax.f32 %v5337, %v5369
        %v5482 = vmin.f32 %v5322, %v5354
        %v5483 = vmin.f32 %v5323, %v5355
        %v5484 = vmin.f32 %v5324, %v5356
        %v5485 = vmin.f32 %v5325, %v5357
        %v5486 = vmin.f32 %v5326, %v5358
        %v5487 = vmin.f32 %v5327, %v5359
        %v5488 = vmin.f32 %v5328, %v5360
        %v5489 = vmin.f32 %v5329, %v5361
        %v5490 = vmin.f32 %v5330, %v5362
        %v5491 = vmin.f32 %v5331, %v5363
        %v5492 = vmin.f32 %v5332, %v5364
        %v5493 = vmin.f32 %v5333, %v5365
        %v5494 = vmin.f32 %v5334, %v5366
        %v5495 = vmin.f32 %v5335, %v5367
        %v5496 = vmin.f32 %v5336, %v5368
        %v5497 = vmin.f32 %v5337, %v5369
        %v5498 = vmax.f32 %v5370, %v5402
        %v5499 = vmax.f32 %v5371, %v5403
        %v5500 = vmax.f32 %v5372, %v5404
        %v5501 = vmax.f32 %v5373, %v5405
        %v5502 = vmax.f32 %v5374, %v5406
        %v5503 = vmax.f32 %v5375, %v5407
        %v5504 = vmax.f32 %v5376, %v5408
        %v5505 = vmax.f32 %v5377, %v5409
        %v5506 = vmax.f32 %v5378, %v5410
        %v5507 = vmax.f32 %v5379, %v5411
        %v5508 = vmax.f32 %v5380, %v5412
        %v5509 = vmax.f32 %v5381, %v5413
        %v5510 = vmax.f32 %v5382, %v5414
        %v5511 = vmax.f32 %v5383, %v5415
        %v5512 = vmax.f32 %v5384, %v5416
        %v5513 = vmax.f32 %v5385, %v5417
        %v5514 = vmin.f32 %v5370, %v5402
        %v5515 = vmin.f32 %v5371, %v5403
        %v5516 = vmin.f32 %v5372, %v5404
        %v5517 = vmin.f32 %v5373, %v5405
        %v5518 = vmin.f32 %v5374, %v5406
        %v5519 = vmin.f32 %v5375, %v5407
        %v5520 = vmin.f32 %v5376, %v5408
        %v5521 = vmin.f32 %v5377, %v5409
        %v5522 = vmin.f32 %v5378, %v5410
        %v5523 = vmin.f32 %v5379, %v5411
        %v5524 = vmin.f32 %v5380, %v5412
        %v5525 = vmin.f32 %v5381, %v5413
        %v5526 = vmin.f32 %v5382, %v5414
        %v5527 = vmin.f32 %v5383, %v5415
        %v5528 = vmin.f32 %v5384, %v5416
        %v5529 = vmin.f32 %v5385, %v5417
        %v5530 = vmax.f32 %v5386, %v5418
        %v5531 = vmax.f32 %v5387, %v5419
        %v5532 = vmax.f32 %v5388, %v5420
        %v5533 = vmax.f32 %v5389, %v5421
        %v5534 = vmax.f32 %v5390, %v5422
        %v5535 = vmax.f32 %v5391, %v5423
        %v5536 = vmax.f32 %v5392, %v5424
        %v5537 = vmax.f32 %v5393, %v5425
        %v5538 = vmax.f32 %v5394, %v5426
        %v5539 = vmax.f32 %v5395, %v5427
        %v5540 = vmax.f32 %v5396, %v5428
        %v5541 = vmax.f32 %v5397, %v5429
        %v5542 = vmax.f32 %v5398, %v5430
        %v5543 = vmax.f32 %v5399, %v5431
        %v5544 = vmax.f32 %v5400, %v5432
        %v5545 = vmax.f32 %v5401, %v5433
        %v5546 = vmin.f32 %v5386, %v5418
        %v5547 = vmin.f32 %v5387, %v5419
        %v5548 = vmin.f32 %v5388, %v5420
        %v5549 = vmin.f32 %v5389, %v5421
        %v5550 = vmin.f32 %v5390, %v5422
        %v5551 = vmin.f32 %v5391, %v5423
        %v5552 = vmin.f32 %v5392, %v5424
        %v5553 = vmin.f32 %v5393, %v5425
        %v5554 = vmin.f32 %v5394, %v5426
        %v5555 = vmin.f32 %v5395, %v5427
        %v5556 = vmin.f32 %v5396, %v5428
        %v5557 = vmin.f32 %v5397, %v5429
        %v5558 = vmin.f32 %v5398, %v5430
        %v5559 = vmin.f32 %v5399, %v5431
        %v5560 = vmin.f32 %v5400, %v5432
        %v5561 = vmin.f32 %v5401, %v5433
        %v5562 = vmax.f32 %v4954, %v4970
        %v5563 = vmax.f32 %v4955, %v4971
        %v5564 = vmax.f32 %v4956, %v4972
        %v5565 = vmax.f32 %v4957, %v4973
        %v5566 = vmax.f32 %v4958, %v4974
        %v5567 = vmax.f32 %v4959, %v4975
        %v5568 = vmax.f32 %v4960, %v4976
        %v5569 = vmax.f32 %v4961, %v4977
        %v5570 = vmax.f32 %v4962, %v4978
        %v5571 = vmax.f32 %v4963, %v4979
        %v5572 = vmax.f32 %v4964, %v4980
        %v5573 = vmax.f32 %v4965, %v4981
        %v5574 = vmax.f32 %v4966, %v4982
        %v5575 = vmax.f32 %v4967, %v4983
        %v5576 = vmax.f32 %v4968, %v4984
        %v5577 = vmax.f32 %v4969, %v4985
        %v5578 = vmin.f32 %v4954, %v4970
        %v5579 = vmin.f32 %v4955, %v4971
        %v5580 = vmin.f32 %v4956, %v4972
        %v5581 = vmin.f32 %v4957, %v4973
        %v5582 = vmin.f32 %v4958, %v4974
        %v5583 = vmin.f32 %v4959, %v4975
        %v5584 = vmin.f32 %v4960, %v4976
        %v5585 = vmin.f32 %v4961, %v4977
        %v5586 = vmin.f32 %v4962, %v4978
        %v5587 = vmin.f32 %v4963, %v4979
        %v5588 = vmin.f32 %v4964, %v4980
        %v5589 = vmin.f32 %v4965, %v4981
        %v5590 = vmin.f32 %v4966, %v4982
        %v5591 = vmin.f32 %v4967, %v4983
        %v5592 = vmin.f32 %v4968, %v4984
        %v5593 = vmin.f32 %v4969, %v4985
        %v5594 = vmax.f32 %v5530, %v5578
        %v5595 = vmax.f32 %v5531, %v5579
        %v5596 = vmax.f32 %v5532, %v5580
        %v5597 = vmax.f32 %v5533, %v5581
        %v5598 = vmax.f32 %v5534, %v5582
        %v5599 = vmax.f32 %v5535, %v5583
        %v5600 = vmax.f32 %v5536, %v5584
        %v5601 = vmax.f32 %v5537, %v5585
        %v5602 = vmax.f32 %v5538, %v5586
        %v5603 = vmax.f32 %v5539, %v5587
        %v5604 = vmax.f32 %v5540, %v5588
        %v5605 = vmax.f32 %v5541, %v5589
        %v5606 = vmax.f32 %v5542, %v5590
        %v5607 = vmax.f32 %v5543, %v5591
        %v5608 = vmax.f32 %v5544, %v5592
        %v5609 = vmax.f32 %v5545, %v5593
        %v5610 = vmin.f32 %v5530, %v5578
        %v5611 = vmin.f32 %v5531, %v5579
        %v5612 = vmin.f32 %v5532, %v5580
        %v5613 = vmin.f32 %v5533, %v5581
        %v5614 = vmin.f32 %v5534, %v5582
        %v5615 = vmin.f32 %v5535, %v5583
        %v5616 = vmin.f32 %v5536, %v5584
        %v5617 = vmin.f32 %v5537, %v5585
        %v5618 = vmin.f32 %v5538, %v5586
        %v5619 = vmin.f32 %v5539, %v5587
        %v5620 = vmin.f32 %v5540, %v5588
        %v5621 = vmin.f32 %v5541, %v5589
        %v5622 = vmin.f32 %v5542, %v5590
        %v5623 = vmin.f32 %v5543, %v5591
        %v5624 = vmin.f32 %v5544, %v5592
        %v5625 = vmin.f32 %v5545, %v5593
        %v5626 = vmax.f32 %v5546, %v5562
        %v5627 = vmax.f32 %v5547, %v5563
        %v5628 = vmax.f32 %v5548, %v5564
        %v5629 = vmax.f32 %v5549, %v5565
        %v5630 = vmax.f32 %v5550, %v5566
        %v5631 = vmax.f32 %v5551, %v5567
        %v5632 = vmax.f32 %v5552, %v5568
        %v5633 = vmax.f32 %v5553, %v5569
        %v5634 = vmax.f32 %v5554, %v5570
        %v5635 = vmax.f32 %v5555, %v5571
        %v5636 = vmax.f32 %v5556, %v5572
        %v5637 = vmax.f32 %v5557, %v5573
        %v5638 = vmax.f32 %v5558, %v5574
        %v5639 = vmax.f32 %v5559, %v5575
        %v5640 = vmax.f32 %v5560, %v5576
        %v5641 = vmax.f32 %v5561, %v5577
        %v5642 = vmin.f32 %v5546, %v5562
        %v5643 = vmin.f32 %v5547, %v5563
        %v5644 = vmin.f32 %v5548, %v5564
        %v5645 = vmin.f32 %v5549, %v5565
        %v5646 = vmin.f32 %v5550, %v5566
        %v5647 = vmin.f32 %v5551, %v5567
        %v5648 = vmin.f32 %v5552, %v5568
        %v5649 = vmin.f32 %v5553, %v5569
        %v5650 = vmin.f32 %v5554, %v5570
        %v5651 = vmin.f32 %v5555, %v5571
        %v5652 = vmin.f32 %v5556, %v5572
        %v5653 = vmin.f32 %v5557, %v5573
        %v5654 = vmin.f32 %v5558, %v5574
        %v5655 = vmin.f32 %v5559, %v5575
        %v5656 = vmin.f32 %v5560, %v5576
        %v5657 = vmin.f32 %v5561, %v5577
        %v5658 = vmax.f32 %v5434, %v5498
        %v5659 = vmax.f32 %v5435, %v5499
        %v5660 = vmax.f32 %v5436, %v5500
        %v5661 = vmax.f32 %v5437, %v5501
        %v5662 = vmax.f32 %v5438, %v5502
        %v5663 = vmax.f32 %v5439, %v5503
        %v5664 = vmax.f32 %v5440, %v5504
        %v5665 = vmax.f32 %v5441, %v5505
        %v5666 = vmax.f32 %v5442, %v5506
        %v5667 = vmax.f32 %v5443, %v5507
        %v5668 = vmax.f32 %v5444, %v5508
        %v5669 = vmax.f32 %v5445, %v5509
        %v5670 = vmax.f32 %v5446, %v5510
        %v5671 = vmax.f32 %v5447, %v5511
        %v5672 = vmax.f32 %v5448, %v5512
        %v5673 = vmax.f32 %v5449, %v5513
        %v5674 = vmin.f32 %v5434, %v5498
        %v5675 = vmin.f32 %v5435, %v5499
        %v5676 = vmin.f32 %v5436, %v5500
        %v5677 = vmin.f32 %v5437, %v5501
        %v5678 = vmin.f32 %v5438, %v5502
        %v5679 = vmin.f32 %v5439, %v5503
        %v5680 = vmin.f32 %v5440, %v5504
        %v5681 = vmin.f32 %v5441, %v5505
        %v5682 = vmin.f32 %v5442, %v5506
        %v5683 = vmin.f32 %v5443, %v5507
        %v5684 = vmin.f32 %v5444, %v5508
        %v5685 = vmin.f32 %v5445, %v5509
        %v5686 = vmin.f32 %v5446, %v5510
        %v5687 = vmin.f32 %v5447, %v5511
        %v5688 = vmin.f32 %v5448, %v5512
        %v5689 = vmin.f32 %v5449, %v5513
        %v5690 = vmax.f32 %v5450, %v5514
        %v5691 = vmax.f32 %v5451, %v5515
        %v5692 = vmax.f32 %v5452, %v5516
        %v5693 = vmax.f32 %v5453, %v5517
        %v5694 = vmax.f32 %v5454, %v5518
        %v5695 = vmax.f32 %v5455, %v5519
        %v5696 = vmax.f32 %v5456, %v5520
        %v5697 = vmax.f32 %v5457, %v5521
        %v5698 = vmax.f32 %v5458, %v5522
        %v5699 = vmax.f32 %v5459, %v5523
        %v5700 = vmax.f32 %v5460, %v5524
        %v5701 = vmax.f32 %v5461, %v5525
        %v5702 = vmax.f32 %v5462, %v5526
        %v5703 = vmax.f32 %v5463, %v5527
        %v5704 = vmax.f32 %v5464, %v5528
        %v5705 = vmax.f32 %v5465, %v5529
        %v5706 = vmin.f32 %v5450, %v5514
        %v5707 = vmin.f32 %v5451, %v5515
        %v5708 = vmin.f32 %v5452, %v5516
        %v5709 = vmin.f32 %v5453, %v5517
        %v5710 = vmin.f32 %v5454, %v5518
        %v5711 = vmin.f32 %v5455, %v5519
        %v5712 = vmin.f32 %v5456, %v5520
        %v5713 = vmin.f32 %v5457, %v5521
        %v5714 = vmin.f32 %v5458, %v5522
        %v5715 = vmin.f32 %v5459, %v5523
        %v5716 = vmin.f32 %v5460, %v5524
        %v5717 = vmin.f32 %v5461, %v5525
        %v5718 = vmin.f32 %v5462, %v5526
        %v5719 = vmin.f32 %v5463, %v5527
        %v5720 = vmin.f32 %v5464, %v5528
        %v5721 = vmin.f32 %v5465, %v5529
        %v5722 = vmax.f32 %v5466, %v5594
        %v5723 = vmax.f32 %v5467, %v5595
        %v5724 = vmax.f32 %v5468, %v5596
        %v5725 = vmax.f32 %v5469, %v5597
        %v5726 = vmax.f32 %v5470, %v5598
        %v5727 = vmax.f32 %v5471, %v5599
        %v5728 = vmax.f32 %v5472, %v5600
        %v5729 = vmax.f32 %v5473, %v5601
        %v5730 = vmax.f32 %v5474, %v5602
        %v5731 = vmax.f32 %v5475, %v5603
        %v5732 = vmax.f32 %v5476, %v5604
        %v5733 = vmax.f32 %v5477, %v5605
        %v5734 = vmax.f32 %v5478, %v5606
        %v5735 = vmax.f32 %v5479, %v5607
        %v5736 = vmax.f32 %v5480, %v5608
        %v5737 = vmax.f32 %v5481, %v5609
        %v5738 = vmin.f32 %v5466, %v5594
        %v5739 = vmin.f32 %v5467, %v5595
        %v5740 = vmin.f32 %v5468, %v5596
        %v5741 = vmin.f32 %v5469, %v5597
        %v5742 = vmin.f32 %v5470, %v5598
        %v5743 = vmin.f32 %v5471, %v5599
        %v5744 = vmin.f32 %v5472, %v5600
        %v5745 = vmin.f32 %v5473, %v5601
        %v5746 = vmin.f32 %v5474, %v5602
        %v5747 = vmin.f32 %v5475, %v5603
        %v5748 = vmin.f32 %v5476, %v5604
        %v5749 = vmin.f32 %v5477, %v5605
        %v5750 = vmin.f32 %v5478, %v5606
        %v5751 = vmin.f32 %v5479, %v5607
        %v5752 = vmin.f32 %v5480, %v5608
        %v5753 = vmin.f32 %v5481, %v5609
        %v5754 = vmax.f32 %v5482, %v5626
        %v5755 = vmax.f32 %v5483, %v5627
        %v5756 = vmax.f32 %v5484, %v5628
        %v5757 = vmax.f32 %v5485, %v5629
        %v5758 = vmax.f32 %v5486, %v5630
        %v5759 = vmax.f32 %v5487, %v5631
        %v5760 = vmax.f32 %v5488, %v5632
        %v5761 = vmax.f32 %v5489, %v5633
        %v5762 = vmax.f32 %v5490, %v5634
        %v5763 = vmax.f32 %v5491, %v5635
        %v5764 = vmax.f32 %v5492, %v5636
        %v5765 = vmax.f32 %v5493, %v5637
        %v5766 = vmax.f32 %v5494, %v5638
        %v5767 = vmax.f32 %v5495, %v5639
        %v5768 = vmax.f32 %v5496, %v5640
        %v5769 = vmax.f32 %v5497, %v5641
        %v5770 = vmin.f32 %v5482, %v5626
        %v5771 = vmin.f32 %v5483, %v5627
        %v5772 = vmin.f32 %v5484, %v5628
        %v5773 = vmin.f32 %v5485, %v5629
        %v5774 = vmin.f32 %v5486, %v5630
        %v5775 = vmin.f32 %v5487, %v5631
        %v5776 = vmin.f32 %v5488, %v5632
        %v5777 = vmin.f32 %v5489, %v5633
        %v5778 = vmin.f32 %v5490, %v5634
        %v5779 = vmin.f32 %v5491, %v5635
        %v5780 = vmin.f32 %v5492, %v5636
        %v5781 = vmin.f32 %v5493, %v5637
        %v5782 = vmin.f32 %v5494, %v5638
        %v5783 = vmin.f32 %v5495, %v5639
        %v5784 = vmin.f32 %v5496, %v5640
        %v5785 = vmin.f32 %v5497, %v5641
        %v5786 = vmax.f32 %v5658, %v5722
        %v5787 = vmax.f32 %v5659, %v5723
        %v5788 = vmax.f32 %v5660, %v5724
        %v5789 = vmax.f32 %v5661, %v5725
        %v5790 = vmax.f32 %v5662, %v5726
        %v5791 = vmax.f32 %v5663, %v5727
        %v5792 = vmax.f32 %v5664, %v5728
        %v5793 = vmax.f32 %v5665, %v5729
        %v5794 = vmax.f32 %v5666, %v5730
        %v5795 = vmax.f32 %v5667, %v5731
        %v5796 = vmax.f32 %v5668, %v5732
        %v5797 = vmax.f32 %v5669, %v5733
        %v5798 = vmax.f32 %v5670, %v5734
        %v5799 = vmax.f32 %v5671, %v5735
        %v5800 = vmax.f32 %v5672, %v5736
        %v5801 = vmax.f32 %v5673, %v5737
        %v5802 = vmin.f32 %v5658, %v5722
        %v5803 = vmin.f32 %v5659, %v5723
        %v5804 = vmin.f32 %v5660, %v5724
        %v5805 = vmin.f32 %v5661, %v5725
        %v5806 = vmin.f32 %v5662, %v5726
        %v5807 = vmin.f32 %v5663, %v5727
        %v5808 = vmin.f32 %v5664, %v5728
        %v5809 = vmin.f32 %v5665, %v5729
        %v5810 = vmin.f32 %v5666, %v5730
        %v5811 = vmin.f32 %v5667, %v5731
        %v5812 = vmin.f32 %v5668, %v5732
        %v5813 = vmin.f32 %v5669, %v5733
        %v5814 = vmin.f32 %v5670, %v5734
        %v5815 = vmin.f32 %v5671, %v5735
        %v5816 = vmin.f32 %v5672, %v5736
        %v5817 = vmin.f32 %v5673, %v5737
        %v5818 = vmax.f32 %v5690, %v5754
        %v5819 = vmax.f32 %v5691, %v5755
        %v5820 = vmax.f32 %v5692, %v5756
        %v5821 = vmax.f32 %v5693, %v5757
        %v5822 = vmax.f32 %v5694, %v5758
        %v5823 = vmax.f32 %v5695, %v5759
        %v5824 = vmax.f32 %v5696, %v5760
        %v5825 = vmax.f32 %v5697, %v5761
        %v5826 = vmax.f32 %v5698, %v5762
        %v5827 = vmax.f32 %v5699, %v5763
        %v5828 = vmax.f32 %v5700, %v5764
        %v5829 = vmax.f32 %v5701, %v5765
        %v5830 = vmax.f32 %v5702, %v5766
        %v5831 = vmax.f32 %v5703, %v5767
        %v5832 = vmax.f32 %v5704, %v5768
        %v5833 = vmax.f32 %v5705, %v5769
        %v5834 = vmin.f32 %v5690, %v5754
        %v5835 = vmin.f32 %v5691, %v5755
        %v5836 = vmin.f32 %v5692, %v5756
        %v5837 = vmin.f32 %v5693, %v5757
        %v5838 = vmin.f32 %v5694, %v5758
        %v5839 = vmin.f32 %v5695, %v5759
        %v5840 = vmin.f32 %v5696, %v5760
        %v5841 = vmin.f32 %v5697, %v5761
        %v5842 = vmin.f32 %v5698, %v5762
        %v5843 = vmin.f32 %v5699, %v5763
        %v5844 = vmin.f32 %v5700, %v5764
        %v5845 = vmin.f32 %v5701, %v5765
        %v5846 = vmin.f32 %v5702, %v5766
        %v5847 = vmin.f32 %v5703, %v5767
        %v5848 = vmin.f32 %v5704, %v5768
        %v5849 = vmin.f32 %v5705, %v5769
        %v5850 = vmax.f32 %v5674, %v5738
        %v5851 = vmax.f32 %v5675, %v5739
        %v5852 = vmax.f32 %v5676, %v5740
        %v5853 = vmax.f32 %v5677, %v5741
        %v5854 = vmax.f32 %v5678, %v5742
        %v5855 = vmax.f32 %v5679, %v5743
        %v5856 = vmax.f32 %v5680, %v5744
        %v5857 = vmax.f32 %v5681, %v5745
        %v5858 = vmax.f32 %v5682, %v5746
        %v5859 = vmax.f32 %v5683, %v5747
        %v5860 = vmax.f32 %v5684, %v5748
        %v5861 = vmax.f32 %v5685, %v5749
        %v5862 = vmax.f32 %v5686, %v5750
        %v5863 = vmax.f32 %v5687, %v5751
        %v5864 = vmax.f32 %v5688, %v5752
        %v5865 = vmax.f32 %v5689, %v5753
        %v5866 = vmin.f32 %v5674, %v5738
        %v5867 = vmin.f32 %v5675, %v5739
        %v5868 = vmin.f32 %v5676, %v5740
        %v5869 = vmin.f32 %v5677, %v5741
        %v5870 = vmin.f32 %v5678, %v5742
        %v5871 = vmin.f32 %v5679, %v5743
        %v5872 = vmin.f32 %v5680, %v5744
        %v5873 = vmin.f32 %v5681, %v5745
        %v5874 = vmin.f32 %v5682, %v5746
        %v5875 = vmin.f32 %v5683, %v5747
        %v5876 = vmin.f32 %v5684, %v5748
        %v5877 = vmin.f32 %v5685, %v5749
        %v5878 = vmin.f32 %v5686, %v5750
        %v5879 = vmin.f32 %v5687, %v5751
        %v5880 = vmin.f32 %v5688, %v5752
        %v5881 = vmin.f32 %v5689, %v5753
        %v5882 = vmax.f32 %v5706, %v5770
        %v5883 = vmax.f32 %v5707, %v5771
        %v5884 = vmax.f32 %v5708, %v5772
        %v5885 = vmax.f32 %v5709, %v5773
        %v5886 = vmax.f32 %v5710, %v5774
        %v5887 = vmax.f32 %v5711, %v5775
        %v5888 = vmax.f32 %v5712, %v5776
        %v5889 = vmax.f32 %v5713, %v5777
        %v5890 = vmax.f32 %v5714, %v5778
        %v5891 = vmax.f32 %v5715, %v5779
        %v5892 = vmax.f32 %v5716, %v5780
        %v5893 = vmax.f32 %v5717, %v5781
        %v5894 = vmax.f32 %v5718, %v5782
        %v5895 = vmax.f32 %v5719, %v5783
        %v5896 = vmax.f32 %v5720, %v5784
        %v5897 = vmax.f32 %v5721, %v5785
        %v5898 = vmin.f32 %v5706, %v5770
        %v5899 = vmin.f32 %v5707, %v5771
        %v5900 = vmin.f32 %v5708, %v5772
        %v5901 = vmin.f32 %v5709, %v5773
        %v5902 = vmin.f32 %v5710, %v5774
        %v5903 = vmin.f32 %v5711, %v5775
        %v5904 = vmin.f32 %v5712, %v5776
        %v5905 = vmin.f32 %v5713, %v5777
        %v5906 = vmin.f32 %v5714, %v5778
        %v5907 = vmin.f32 %v5715, %v5779
        %v5908 = vmin.f32 %v5716, %v5780
        %v5909 = vmin.f32 %v5717, %v5781
        %v5910 = vmin.f32 %v5718, %v5782
        %v5911 = vmin.f32 %v5719, %v5783
        %v5912 = vmin.f32 %v5720, %v5784
        %v5913 = vmin.f32 %v5721, %v5785
        %v5914 = vmax.f32 %v5786, %v5818
        %v5915 = vmax.f32 %v5787, %v5819
        %v5916 = vmax.f32 %v5788, %v5820
        %v5917 = vmax.f32 %v5789, %v5821
        %v5918 = vmax.f32 %v5790, %v5822
        %v5919 = vmax.f32 %v5791, %v5823
        %v5920 = vmax.f32 %v5792, %v5824
        %v5921 = vmax.f32 %v5793, %v5825
        %v5922 = vmax.f32 %v5794, %v5826
        %v5923 = vmax.f32 %v5795, %v5827
        %v5924 = vmax.f32 %v5796, %v5828
        %v5925 = vmax.f32 %v5797, %v5829
        %v5926 = vmax.f32 %v5798, %v5830
        %v5927 = vmax.f32 %v5799, %v5831
        %v5928 = vmax.f32 %v5800, %v5832
        %v5929 = vmax.f32 %v5801, %v5833
        %v5930 = vmin.f32 %v5786, %v5818
        %v5931 = vmin.f32 %v5787, %v5819
        %v5932 = vmin.f32 %v5788, %v5820
        %v5933 = vmin.f32 %v5789, %v5821
        %v5934 = vmin.f32 %v5790, %v5822
        %v5935 = vmin.f32 %v5791, %v5823
        %v5936 = vmin.f32 %v5792, %v5824
        %v5937 = vmin.f32 %v5793, %v5825
        %v5938 = vmin.f32 %v5794, %v5826
        %v5939 = vmin.f32 %v5795, %v5827
        %v5940 = vmin.f32 %v5796, %v5828
        %v5941 = vmin.f32 %v5797, %v5829
        %v5942 = vmin.f32 %v5798, %v5830
        %v5943 = vmin.f32 %v5799, %v5831
        %v5944 = vmin.f32 %v5800, %v5832
        %v5945 = vmin.f32 %v5801, %v5833
        %v5946 = vmax.f32 %v5802, %v5834
        %v5947 = vmax.f32 %v5803, %v5835
        %v5948 = vmax.f32 %v5804, %v5836
        %v5949 = vmax.f32 %v5805, %v5837
        %v5950 = vmax.f32 %v5806, %v5838
        %v5951 = vmax.f32 %v5807, %v5839
        %v5952 = vmax.f32 %v5808, %v5840
        %v5953 = vmax.f32 %v5809, %v5841
        %v5954 = vmax.f32 %v5810, %v5842
        %v5955 = vmax.f32 %v5811, %v5843
        %v5956 = vmax.f32 %v5812, %v5844
        %v5957 = vmax.f32 %v5813, %v5845
        %v5958 = vmax.f32 %v5814, %v5846
        %v5959 = vmax.f32 %v5815, %v5847
        %v5960 = vmax.f32 %v5816, %v5848
        %v5961 = vmax.f32 %v5817, %v5849
        %v5962 = vmin.f32 %v5802, %v5834
        %v5963 = vmin.f32 %v5803, %v5835
        %v5964 = vmin.f32 %v5804, %v5836
        %v5965 = vmin.f32 %v5805, %v5837
        %v5966 = vmin.f32 %v5806, %v5838
        %v5967 = vmin.f32 %v5807, %v5839
        %v5968 = vmin.f32 %v5808, %v5840
        %v5969 = vmin.f32 %v5809, %v5841
        %v5970 = vmin.f32 %v5810, %v5842
        %v5971 = vmin.f32 %v5811, %v5843
        %v5972 = vmin.f32 %v5812, %v5844
        %v5973 = vmin.f32 %v5813, %v5845
        %v5974 = vmin.f32 %v5814, %v5846
        %v5975 = vmin.f32 %v5815, %v5847
        %v5976 = vmin.f32 %v5816, %v5848
        %v5977 = vmin.f32 %v5817, %v5849
        %v5978 = vmax.f32 %v5850, %v5882
        %v5979 = vmax.f32 %v5851, %v5883
        %v5980 = vmax.f32 %v5852, %v5884
        %v5981 = vmax.f32 %v5853, %v5885
        %v5982 = vmax.f32 %v5854, %v5886
        %v5983 = vmax.f32 %v5855, %v5887
        %v5984 = vmax.f32 %v5856, %v5888
        %v5985 = vmax.f32 %v5857, %v5889
        %v5986 = vmax.f32 %v5858, %v5890
        %v5987 = vmax.f32 %v5859, %v5891
        %v5988 = vmax.f32 %v5860, %v5892
        %v5989 = vmax.f32 %v5861, %v5893
        %v5990 = vmax.f32 %v5862, %v5894
        %v5991 = vmax.f32 %v5863, %v5895
        %v5992 = vmax.f32 %v5864, %v5896
        %v5993 = vmax.f32 %v5865, %v5897
        %v5994 = vmin.f32 %v5850, %v5882
        %v5995 = vmin.f32 %v5851, %v5883
        %v5996 = vmin.f32 %v5852, %v5884
        %v5997 = vmin.f32 %v5853, %v5885
        %v5998 = vmin.f32 %v5854, %v5886
        %v5999 = vmin.f32 %v5855, %v5887
        %v6000 = vmin.f32 %v5856, %v5888
        %v6001 = vmin.f32 %v5857, %v5889
        %v6002 = vmin.f32 %v5858, %v5890
        %v6003 = vmin.f32 %v5859, %v5891
        %v6004 = vmin.f32 %v5860, %v5892
        %v6005 = vmin.f32 %v5861, %v5893
        %v6006 = vmin.f32 %v5862, %v5894
        %v6007 = vmin.f32 %v5863, %v5895
        %v6008 = vmin.f32 %v5864, %v5896
        %v6009 = vmin.f32 %v5865, %v5897
        %v6010 = vmax.f32 %v5866, %v5898
        %v6011 = vmax.f32 %v5867, %v5899
        %v6012 = vmax.f32 %v5868, %v5900
        %v6013 = vmax.f32 %v5869, %v5901
        %v6014 = vmax.f32 %v5870, %v5902
        %v6015 = vmax.f32 %v5871, %v5903
        %v6016 = vmax.f32 %v5872, %v5904
        %v6017 = vmax.f32 %v5873, %v5905
        %v6018 = vmax.f32 %v5874, %v5906
        %v6019 = vmax.f32 %v5875, %v5907
        %v6020 = vmax.f32 %v5876, %v5908
        %v6021 = vmax.f32 %v5877, %v5909
        %v6022 = vmax.f32 %v5878, %v5910
        %v6023 = vmax.f32 %v5879, %v5911
        %v6024 = vmax.f32 %v5880, %v5912
        %v6025 = vmax.f32 %v5881, %v5913
        %v6026 = vmin.f32 %v5866, %v5898
        %v6027 = vmin.f32 %v5867, %v5899
        %v6028 = vmin.f32 %v5868, %v5900
        %v6029 = vmin.f32 %v5869, %v5901
        %v6030 = vmin.f32 %v5870, %v5902
        %v6031 = vmin.f32 %v5871, %v5903
        %v6032 = vmin.f32 %v5872, %v5904
        %v6033 = vmin.f32 %v5873, %v5905
        %v6034 = vmin.f32 %v5874, %v5906
        %v6035 = vmin.f32 %v5875, %v5907
        %v6036 = vmin.f32 %v5876, %v5908
        %v6037 = vmin.f32 %v5877, %v5909
        %v6038 = vmin.f32 %v5878, %v5910
        %v6039 = vmin.f32 %v5879, %v5911
        %v6040 = vmin.f32 %v5880, %v5912
        %v6041 = vmin.f32 %v5881, %v5913
        %v6042 = vmax.f32 %v5610, %v5642
        %v6043 = vmax.f32 %v5611, %v5643
        %v6044 = vmax.f32 %v5612, %v5644
        %v6045 = vmax.f32 %v5613, %v5645
        %v6046 = vmax.f32 %v5614, %v5646
        %v6047 = vmax.f32 %v5615, %v5647
        %v6048 = vmax.f32 %v5616, %v5648
        %v6049 = vmax.f32 %v5617, %v5649
        %v6050 = vmax.f32 %v5618, %v5650
        %v6051 = vmax.f32 %v5619, %v5651
        %v6052 = vmax.f32 %v5620, %v5652
        %v6053 = vmax.f32 %v5621, %v5653
        %v6054 = vmax.f32 %v5622, %v5654
        %v6055 = vmax.f32 %v5623, %v5655
        %v6056 = vmax.f32 %v5624, %v5656
        %v6057 = vmax.f32 %v5625, %v5657
        %v6058 = vmin.f32 %v5610, %v5642
        %v6059 = vmin.f32 %v5611, %v5643
        %v6060 = vmin.f32 %v5612, %v5644
        %v6061 = vmin.f32 %v5613, %v5645
        %v6062 = vmin.f32 %v5614, %v5646
        %v6063 = vmin.f32 %v5615, %v5647
        %v6064 = vmin.f32 %v5616, %v5648
        %v6065 = vmin.f32 %v5617, %v5649
        %v6066 = vmin.f32 %v5618, %v5650
        %v6067 = vmin.f32 %v5619, %v5651
        %v6068 = vmin.f32 %v5620, %v5652
        %v6069 = vmin.f32 %v5621, %v5653
        %v6070 = vmin.f32 %v5622, %v5654
        %v6071 = vmin.f32 %v5623, %v5655
        %v6072 = vmin.f32 %v5624, %v5656
        %v6073 = vmin.f32 %v5625, %v5657
        %v6074 = vmul.f32 %v5914, %v1917
        %v6075 = vmul.f32 %v5915, %v1917
        %v6076 = vmul.f32 %v5916, %v1918
        %v6077 = vmul.f32 %v5917, %v1918
        %v6078 = vmul.f32 %v5918, %v1919
        %v6079 = vmul.f32 %v5919, %v1919
        %v6080 = vmul.f32 %v5920, %v1920
        %v6081 = vmul.f32 %v5921, %v1920
        %v6082 = vmul.f32 %v5922, %v1921
        %v6083 = vmul.f32 %v5923, %v1921
        %v6084 = vmul.f32 %v5924, %v1922
        %v6085 = vmul.f32 %v5925, %v1922
        %v6086 = vmul.f32 %v5926, %v1923
        %v6087 = vmul.f32 %v5927, %v1923
        %v6088 = vmul.f32 %v5928, %v1924
        %v6089 = vmul.f32 %v5929, %v1924
        %v6090 = vmul.f32 %v5930, %v1951
        %v6091 = vmul.f32 %v5931, %v1951
        %v6092 = vmul.f32 %v5932, %v1952
        %v6093 = vmul.f32 %v5933, %v1952
        %v6094 = vmul.f32 %v5934, %v1953
        %v6095 = vmul.f32 %v5935, %v1953
        %v6096 = vmul.f32 %v5936, %v1954
        %v6097 = vmul.f32 %v5937, %v1954
        %v6098 = vmul.f32 %v5938, %v1955
        %v6099 = vmul.f32 %v5939, %v1955
        %v6100 = vmul.f32 %v5940, %v1956
        %v6101 = vmul.f32 %v5941, %v1956
        %v6102 = vmul.f32 %v5942, %v1957
        %v6103 = vmul.f32 %v5943, %v1957
        %v6104 = vmul.f32 %v5944, %v1958
        %v6105 = vmul.f32 %v5945, %v1958
        %v6106 = vmul.f32 %v5946, %v1985
        %v6107 = vmul.f32 %v5947, %v1985
        %v6108 = vmul.f32 %v5948, %v1986
        %v6109 = vmul.f32 %v5949, %v1986
        %v6110 = vmul.f32 %v5950, %v1987
        %v6111 = vmul.f32 %v5951, %v1987
        %v6112 = vmul.f32 %v5952, %v1988
        %v6113 = vmul.f32 %v5953, %v1988
        %v6114 = vmul.f32 %v5954, %v1989
        %v6115 = vmul.f32 %v5955, %v1989
        %v6116 = vmul.f32 %v5956, %v1990
        %v6117 = vmul.f32 %v5957, %v1990
        %v6118 = vmul.f32 %v5958, %v1991
        %v6119 = vmul.f32 %v5959, %v1991
        %v6120 = vmul.f32 %v5960, %v1992
        %v6121 = vmul.f32 %v5961, %v1992
        %v6122 = vmul.f32 %v5962, %v2019
        %v6123 = vmul.f32 %v5963, %v2019
        %v6124 = vmul.f32 %v5964, %v2020
        %v6125 = vmul.f32 %v5965, %v2020
        %v6126 = vmul.f32 %v5966, %v2021
        %v6127 = vmul.f32 %v5967, %v2021
        %v6128 = vmul.f32 %v5968, %v2022
        %v6129 = vmul.f32 %v5969, %v2022
        %v6130 = vmul.f32 %v5970, %v2023
        %v6131 = vmul.f32 %v5971, %v2023
        %v6132 = vmul.f32 %v5972, %v2024
        %v6133 = vmul.f32 %v5973, %v2024
        %v6134 = vmul.f32 %v5974, %v2025
        %v6135 = vmul.f32 %v5975, %v2025
        %v6136 = vmul.f32 %v5976, %v2026
        %v6137 = vmul.f32 %v5977, %v2026
        %v6138 = vmul.f32 %v5978, %v2053
        %v6139 = vmul.f32 %v5979, %v2053
        %v6140 = vmul.f32 %v5980, %v2054
        %v6141 = vmul.f32 %v5981, %v2054
        %v6142 = vmul.f32 %v5982, %v2055
        %v6143 = vmul.f32 %v5983, %v2055
        %v6144 = vmul.f32 %v5984, %v2056
        %v6145 = vmul.f32 %v5985, %v2056
        %v6146 = vmul.f32 %v5986, %v2057
        %v6147 = vmul.f32 %v5987, %v2057
        %v6148 = vmul.f32 %v5988, %v2058
        %v6149 = vmul.f32 %v5989, %v2058
        %v6150 = vmul.f32 %v5990, %v2059
        %v6151 = vmul.f32 %v5991, %v2059
        %v6152 = vmul.f32 %v5992, %v2060
        %v6153 = vmul.f32 %v5993, %v2060
        %v6154 = vmul.f32 %v5994, %v2087
        %v6155 = vmul.f32 %v5995, %v2087
        %v6156 = vmul.f32 %v5996, %v2088
        %v6157 = vmul.f32 %v5997, %v2088
        %v6158 = vmul.f32 %v5998, %v2089
        %v6159 = vmul.f32 %v5999, %v2089
        %v6160 = vmul.f32 %v6000, %v2090
        %v6161 = vmul.f32 %v6001, %v2090
        %v6162 = vmul.f32 %v6002, %v2091
        %v6163 = vmul.f32 %v6003, %v2091
        %v6164 = vmul.f32 %v6004, %v2092
        %v6165 = vmul.f32 %v6005, %v2092
        %v6166 = vmul.f32 %v6006, %v2093
        %v6167 = vmul.f32 %v6007, %v2093
        %v6168 = vmul.f32 %v6008, %v2094
        %v6169 = vmul.f32 %v6009, %v2094
        %v6170 = vmul.f32 %v6010, %v2121
        %v6171 = vmul.f32 %v6011, %v2121
        %v6172 = vmul.f32 %v6012, %v2122
        %v6173 = vmul.f32 %v6013, %v2122
        %v6174 = vmul.f32 %v6014, %v2123
        %v6175 = vmul.f32 %v6015, %v2123
        %v6176 = vmul.f32 %v6016, %v2124
        %v6177 = vmul.f32 %v6017, %v2124
        %v6178 = vmul.f32 %v6018, %v2125
        %v6179 = vmul.f32 %v6019, %v2125
        %v6180 = vmul.f32 %v6020, %v2126
        %v6181 = vmul.f32 %v6021, %v2126
        %v6182 = vmul.f32 %v6022, %v2127
        %v6183 = vmul.f32 %v6023, %v2127
        %v6184 = vmul.f32 %v6024, %v2128
        %v6185 = vmul.f32 %v6025, %v2128
        %v6186 = vmul.f32 %v6026, %v2155
        %v6187 = vmul.f32 %v6027, %v2155
        %v6188 = vmul.f32 %v6028, %v2156
        %v6189 = vmul.f32 %v6029, %v2156
        %v6190 = vmul.f32 %v6030, %v2157
        %v6191 = vmul.f32 %v6031, %v2157
        %v6192 = vmul.f32 %v6032, %v2158
        %v6193 = vmul.f32 %v6033, %v2158
        %v6194 = vmul.f32 %v6034, %v2159
        %v6195 = vmul.f32 %v6035, %v2159
        %v6196 = vmul.f32 %v6036, %v2160
        %v6197 = vmul.f32 %v6037, %v2160
        %v6198 = vmul.f32 %v6038, %v2161
        %v6199 = vmul.f32 %v6039, %v2161
        %v6200 = vmul.f32 %v6040, %v2162
        %v6201 = vmul.f32 %v6041, %v2162
        %v6202 = vmul.f32 %v6042, %v2189
        %v6203 = vmul.f32 %v6043, %v2189
        %v6204 = vmul.f32 %v6044, %v2190
        %v6205 = vmul.f32 %v6045, %v2190
        %v6206 = vmul.f32 %v6046, %v2191
        %v6207 = vmul.f32 %v6047, %v2191
        %v6208 = vmul.f32 %v6048, %v2192
        %v6209 = vmul.f32 %v6049, %v2192
        %v6210 = vmul.f32 %v6050, %v2193
        %v6211 = vmul.f32 %v6051, %v2193
        %v6212 = vmul.f32 %v6052, %v2194
        %v6213 = vmul.f32 %v6053, %v2194
        %v6214 = vmul.f32 %v6054, %v2195
        %v6215 = vmul.f32 %v6055, %v2195
        %v6216 = vmul.f32 %v6056, %v2196
        %v6217 = vmul.f32 %v6057, %v2196
        %v6218 = vmul.f32 %v6058, %v2223
        %v6219 = vmul.f32 %v6059, %v2223
        %v6220 = vmul.f32 %v6060, %v2224
        %v6221 = vmul.f32 %v6061, %v2224
        %v6222 = vmul.f32 %v6062, %v2225
        %v6223 = vmul.f32 %v6063, %v2225
        %v6224 = vmul.f32 %v6064, %v2226
        %v6225 = vmul.f32 %v6065, %v2226
        %v6226 = vmul.f32 %v6066, %v2227
        %v6227 = vmul.f32 %v6067, %v2227
        %v6228 = vmul.f32 %v6068, %v2228
        %v6229 = vmul.f32 %v6069, %v2228
        %v6230 = vmul.f32 %v6070, %v2229
        %v6231 = vmul.f32 %v6071, %v2229
        %v6232 = vmul.f32 %v6072, %v2230
        %v6233 = vmul.f32 %v6073, %v2230
        %v6234 = vadd.f32 %v6074, %v6090
        %v6235 = vadd.f32 %v6075, %v6091
        %v6236 = vadd.f32 %v6076, %v6092
        %v6237 = vadd.f32 %v6077, %v6093
        %v6238 = vadd.f32 %v6078, %v6094
        %v6239 = vadd.f32 %v6079, %v6095
        %v6240 = vadd.f32 %v6080, %v6096
        %v6241 = vadd.f32 %v6081, %v6097
        %v6242 = vadd.f32 %v6082, %v6098
        %v6243 = vadd.f32 %v6083, %v6099
        %v6244 = vadd.f32 %v6084, %v6100
        %v6245 = vadd.f32 %v6085, %v6101
        %v6246 = vadd.f32 %v6086, %v6102
        %v6247 = vadd.f32 %v6087, %v6103
        %v6248 = vadd.f32 %v6088, %v6104
        %v6249 = vadd.f32 %v6089, %v6105
        %v6250 = vadd.f32 %v6106, %v6122
        %v6251 = vadd.f32 %v6107, %v6123
        %v6252 = vadd.f32 %v6108, %v6124
        %v6253 = vadd.f32 %v6109, %v6125
        %v6254 = vadd.f32 %v6110, %v6126
        %v6255 = vadd.f32 %v6111, %v6127
        %v6256 = vadd.f32 %v6112, %v6128
        %v6257 = vadd.f32 %v6113, %v6129
        %v6258 = vadd.f32 %v6114, %v6130
        %v6259 = vadd.f32 %v6115, %v6131
        %v6260 = vadd.f32 %v6116, %v6132
        %v6261 = vadd.f32 %v6117, %v6133
        %v6262 = vadd.f32 %v6118, %v6134
        %v6263 = vadd.f32 %v6119, %v6135
        %v6264 = vadd.f32 %v6120, %v6136
        %v6265 = vadd.f32 %v6121, %v6137
        %v6266 = vadd.f32 %v6138, %v6154
        %v6267 = vadd.f32 %v6139, %v6155
        %v6268 = vadd.f32 %v6140, %v6156
        %v6269 = vadd.f32 %v6141, %v6157
        %v6270 = vadd.f32 %v6142, %v6158
        %v6271 = vadd.f32 %v6143, %v6159
        %v6272 = vadd.f32 %v6144, %v6160
        %v6273 = vadd.f32 %v6145, %v6161
        %v6274 = vadd.f32 %v6146, %v6162
        %v6275 = vadd.f32 %v6147, %v6163
        %v6276 = vadd.f32 %v6148, %v6164
        %v6277 = vadd.f32 %v6149, %v6165
        %v6278 = vadd.f32 %v6150, %v6166
        %v6279 = vadd.f32 %v6151, %v6167
        %v6280 = vadd.f32 %v6152, %v6168
        %v6281 = vadd.f32 %v6153, %v6169
        %v6282 = vadd.f32 %v6170, %v6186
        %v6283 = vadd.f32 %v6171, %v6187
        %v6284 = vadd.f32 %v6172, %v6188
        %v6285 = vadd.f32 %v6173, %v6189
        %v6286 = vadd.f32 %v6174, %v6190
        %v6287 = vadd.f32 %v6175, %v6191
        %v6288 = vadd.f32 %v6176, %v6192
        %v6289 = vadd.f32 %v6177, %v6193
        %v6290 = vadd.f32 %v6178, %v6194
        %v6291 = vadd.f32 %v6179, %v6195
        %v6292 = vadd.f32 %v6180, %v6196
        %v6293 = vadd.f32 %v6181, %v6197
        %v6294 = vadd.f32 %v6182, %v6198
        %v6295 = vadd.f32 %v6183, %v6199
        %v6296 = vadd.f32 %v6184, %v6200
        %v6297 = vadd.f32 %v6185, %v6201
        %v6298 = vadd.f32 %v6202, %v6218
        %v6299 = vadd.f32 %v6203, %v6219
        %v6300 = vadd.f32 %v6204, %v6220
        %v6301 = vadd.f32 %v6205, %v6221
        %v6302 = vadd.f32 %v6206, %v6222
        %v6303 = vadd.f32 %v6207, %v6223
        %v6304 = vadd.f32 %v6208, %v6224
        %v6305 = vadd.f32 %v6209, %v6225
        %v6306 = vadd.f32 %v6210, %v6226
        %v6307 = vadd.f32 %v6211, %v6227
        %v6308 = vadd.f32 %v6212, %v6228
        %v6309 = vadd.f32 %v6213, %v6229
        %v6310 = vadd.f32 %v6214, %v6230
        %v6311 = vadd.f32 %v6215, %v6231
        %v6312 = vadd.f32 %v6216, %v6232
        %v6313 = vadd.f32 %v6217, %v6233
        %v6314 = vadd.f32 %v6234, %v6250
        %v6315 = vadd.f32 %v6235, %v6251
        %v6316 = vadd.f32 %v6236, %v6252
        %v6317 = vadd.f32 %v6237, %v6253
        %v6318 = vadd.f32 %v6238, %v6254
        %v6319 = vadd.f32 %v6239, %v6255
        %v6320 = vadd.f32 %v6240, %v6256
        %v6321 = vadd.f32 %v6241, %v6257
        %v6322 = vadd.f32 %v6242, %v6258
        %v6323 = vadd.f32 %v6243, %v6259
        %v6324 = vadd.f32 %v6244, %v6260
        %v6325 = vadd.f32 %v6245, %v6261
        %v6326 = vadd.f32 %v6246, %v6262
        %v6327 = vadd.f32 %v6247, %v6263
        %v6328 = vadd.f32 %v6248, %v6264
        %v6329 = vadd.f32 %v6249, %v6265
        %v6330 = vadd.f32 %v6266, %v6282
        %v6331 = vadd.f32 %v6267, %v6283
        %v6332 = vadd.f32 %v6268, %v6284
        %v6333 = vadd.f32 %v6269, %v6285
        %v6334 = vadd.f32 %v6270, %v6286
        %v6335 = vadd.f32 %v6271, %v6287
        %v6336 = vadd.f32 %v6272, %v6288
        %v6337 = vadd.f32 %v6273, %v6289
        %v6338 = vadd.f32 %v6274, %v6290
        %v6339 = vadd.f32 %v6275, %v6291
        %v6340 = vadd.f32 %v6276, %v6292
        %v6341 = vadd.f32 %v6277, %v6293
        %v6342 = vadd.f32 %v6278, %v6294
        %v6343 = vadd.f32 %v6279, %v6295
        %v6344 = vadd.f32 %v6280, %v6296
        %v6345 = vadd.f32 %v6281, %v6297
        %v6346 = vadd.f32 %v6314, %v6330
        %v6347 = vadd.f32 %v6315, %v6331
        %v6348 = vadd.f32 %v6316, %v6332
        %v6349 = vadd.f32 %v6317, %v6333
        %v6350 = vadd.f32 %v6318, %v6334
        %v6351 = vadd.f32 %v6319, %v6335
        %v6352 = vadd.f32 %v6320, %v6336
        %v6353 = vadd.f32 %v6321, %v6337
        %v6354 = vadd.f32 %v6322, %v6338
        %v6355 = vadd.f32 %v6323, %v6339
        %v6356 = vadd.f32 %v6324, %v6340
        %v6357 = vadd.f32 %v6325, %v6341
        %v6358 = vadd.f32 %v6326, %v6342
        %v6359 = vadd.f32 %v6327, %v6343
        %v6360 = vadd.f32 %v6328, %v6344
        %v6361 = vadd.f32 %v6329, %v6345
        %v6362 = vadd.f32 %v6346, %v6298
        %v6363 = vadd.f32 %v6347, %v6299
        %v6364 = vadd.f32 %v6348, %v6300
        %v6365 = vadd.f32 %v6349, %v6301
        %v6366 = vadd.f32 %v6350, %v6302
        %v6367 = vadd.f32 %v6351, %v6303
        %v6368 = vadd.f32 %v6352, %v6304
        %v6369 = vadd.f32 %v6353, %v6305
        %v6370 = vadd.f32 %v6354, %v6306
        %v6371 = vadd.f32 %v6355, %v6307
        %v6372 = vadd.f32 %v6356, %v6308
        %v6373 = vadd.f32 %v6357, %v6309
        %v6374 = vadd.f32 %v6358, %v6310
        %v6375 = vadd.f32 %v6359, %v6311
        %v6376 = vadd.f32 %v6360, %v6312
        %v6377 = vadd.f32 %v6361, %v6313
        %v6378 = vmul.f32 %v6362, %v6362
        %v6379 = vmul.f32 %v6363, %v6363
        %v6380 = vmul.f32 %v6364, %v6364
        %v6381 = vmul.f32 %v6365, %v6365
        %v6382 = vmul.f32 %v6366, %v6366
        %v6383 = vmul.f32 %v6367, %v6367
        %v6384 = vmul.f32 %v6368, %v6368
        %v6385 = vmul.f32 %v6369, %v6369
        %v6386 = vmul.f32 %v6370, %v6370
        %v6387 = vmul.f32 %v6371, %v6371
        %v6388 = vmul.f32 %v6372, %v6372
        %v6389 = vmul.f32 %v6373, %v6373
        %v6390 = vmul.f32 %v6374, %v6374
        %v6391 = vmul.f32 %v6375, %v6375
        %v6392 = vmul.f32 %v6376, %v6376
        %v6393 = vmul.f32 %v6377, %v6377
        %v6410 = vrot.slane %v6380, 7
        %v6411 = vsel %vm2432, %v6410, %v6378
        %v6412 = vrot.slane %v6382, 6
        %v6413 = vsel %vm2435, %v6412, %v6411
        %v6414 = vrot.slane %v6384, 5
        %v6415 = vsel %vm2438, %v6414, %v6413
        %v6416 = vrot.slane %v6386, 4
        %v6417 = vsel %vm2441, %v6416, %v6415
        %v6418 = vrot.slane %v6388, 3
        %v6419 = vsel %vm2444, %v6418, %v6417
        %v6420 = vrot.slane %v6390, 2
        %v6421 = vsel %vm2447, %v6420, %v6419
        %v6422 = vrot.slane %v6392, 1
        %v6423 = vsel %vm2450, %v6422, %v6421
        %v6424 = vrot.slane %v6381, 7
        %v6425 = vsel %vm2432, %v6424, %v6379
        %v6426 = vrot.slane %v6383, 6
        %v6427 = vsel %vm2435, %v6426, %v6425
        %v6428 = vrot.slane %v6385, 5
        %v6429 = vsel %vm2438, %v6428, %v6427
        %v6430 = vrot.slane %v6387, 4
        %v6431 = vsel %vm2441, %v6430, %v6429
        %v6432 = vrot.slane %v6389, 3
        %v6433 = vsel %vm2444, %v6432, %v6431
        %v6434 = vrot.slane %v6391, 2
        %v6435 = vsel %vm2447, %v6434, %v6433
        %v6436 = vrot.slane %v6393, 1
        %v6437 = vsel %vm2450, %v6436, %v6435
        %v6440 = vadd.f32 %v6423, %v6437
        %6441 = vadd.xlane.f32.xlu0 %v6440
        %v6442 = vpop.xlane.xlu0 %6441
        %v6443 = vadd.f32 %v4457, %v6442
        %v6460 = vrot.slane %v6364, 7
        %v6461 = vsel %vm2432, %v6460, %v6362
        %v6462 = vrot.slane %v6366, 6
        %v6463 = vsel %vm2435, %v6462, %v6461
        %v6464 = vrot.slane %v6368, 5
        %v6465 = vsel %vm2438, %v6464, %v6463
        %v6466 = vrot.slane %v6370, 4
        %v6467 = vsel %vm2441, %v6466, %v6465
        %v6468 = vrot.slane %v6372, 3
        %v6469 = vsel %vm2444, %v6468, %v6467
        %v6470 = vrot.slane %v6374, 2
        %v6471 = vsel %vm2447, %v6470, %v6469
        %v6472 = vrot.slane %v6376, 1
        %v6473 = vsel %vm2450, %v6472, %v6471
        %v6474 = vrot.slane %v6365, 7
        %v6475 = vsel %vm2432, %v6474, %v6363
        %v6476 = vrot.slane %v6367, 6
        %v6477 = vsel %vm2435, %v6476, %v6475
        %v6478 = vrot.slane %v6369, 5
        %v6479 = vsel %vm2438, %v6478, %v6477
        %v6480 = vrot.slane %v6371, 4
        %v6481 = vsel %vm2441, %v6480, %v6479
        %v6482 = vrot.slane %v6373, 3
        %v6483 = vsel %vm2444, %v6482, %v6481
        %v6484 = vrot.slane %v6375, 2
        %v6485 = vsel %vm2447, %v6484, %v6483
        %v6486 = vrot.slane %v6377, 1
        %v6487 = vsel %vm2450, %v6486, %v6485
        %6490 = vst [vmem:[%s192 + $0x20] sm:$0xff] %v6473
        %6491 = vst [vmem:[%s192 + $0x28] sm:$0xff] %v6487
        %v6492 = vld [vmem:[%s198 + $0x30] sm:$0xff]
        %v6493 = vld [vmem:[%s198 + $0x38] sm:$0xff]
        %v6494 = vld [vmem:[%s198 + $0x70] sm:$0x3]
        %v6495 = vld [vmem:[%s198 + $0x78] sm:$0x3]
        %v6496 = vld [vmem:[%s198 + $0xb0] sm:$0xff]
        %v6497 = vld [vmem:[%s198 + $0xb8] sm:$0xff]
        %v6498 = vld [vmem:[%s198 + $0xf0] sm:$0x3]
        %v6499 = vld [vmem:[%s198 + $0xf8] sm:$0x3]
        %v6500 = vld [vmem:[%s198 + $0x130] sm:$0xff]
        %v6501 = vld [vmem:[%s198 + $0x138] sm:$0xff]
        %v6502 = vld [vmem:[%s198 + $0x170] sm:$0x3]
        %v6503 = vld [vmem:[%s198 + $0x178] sm:$0x3]
        %v6504 = vld [vmem:[%s198 + $0x1b0] sm:$0xff]
        %v6505 = vld [vmem:[%s198 + $0x1b8] sm:$0xff]
        %v6506 = vld [vmem:[%s198 + $0x1f0] sm:$0x3]
        %v6507 = vld [vmem:[%s198 + $0x1f8] sm:$0x3]
        %v6508 = vld [vmem:[%s198 + $0x230] sm:$0xff]
        %v6509 = vld [vmem:[%s198 + $0x238] sm:$0xff]
        %v6510 = vld [vmem:[%s198 + $0x270] sm:$0x3]
        %v6511 = vld [vmem:[%s198 + $0x278] sm:$0x3]
        %v6512 = vld [vmem:[%s198 + $0x2b0] sm:$0xff]
        %v6513 = vld [vmem:[%s198 + $0x2b8] sm:$0xff]
        %v6514 = vld [vmem:[%s198 + $0x2f0] sm:$0x3]
        %v6515 = vld [vmem:[%s198 + $0x2f8] sm:$0x3]
        %v6516 = vld [vmem:[%s198 + $0x330] sm:$0xff]
        %v6517 = vld [vmem:[%s198 + $0x338] sm:$0xff]
        %v6518 = vld [vmem:[%s198 + $0x370] sm:$0x3]
        %v6519 = vld [vmem:[%s198 + $0x378] sm:$0x3]
        %v6520 = vld [vmem:[%s198 + $0x3b0] sm:$0xff]
        %v6521 = vld [vmem:[%s198 + $0x3b8] sm:$0xff]
        %v6522 = vld [vmem:[%s198 + $0x3f0] sm:$0x3]
        %v6523 = vld [vmem:[%s198 + $0x3f8] sm:$0x3]
        %v6524 = vsel %vm362, %v6492, -10000.0
        %v6525 = vsel %vm362, %v6493, -10000.0
        %v6526 = vsel %vm363, %v6494, -10000.0
        %v6527 = vsel %vm363, %v6495, -10000.0
        %v6528 = vsel %vm364, %v6496, -10000.0
        %v6529 = vsel %vm364, %v6497, -10000.0
        %v6530 = vsel %vm365, %v6498, -10000.0
        %v6531 = vsel %vm365, %v6499, -10000.0
        %v6532 = vsel %vm366, %v6500, -10000.0
        %v6533 = vsel %vm366, %v6501, -10000.0
        %v6534 = vsel %vm367, %v6502, -10000.0
        %v6535 = vsel %vm367, %v6503, -10000.0
        %v6536 = vsel %vm368, %v6504, -10000.0
        %v6537 = vsel %vm368, %v6505, -10000.0
        %v6538 = vsel %vm369, %v6506, -10000.0
        %v6539 = vsel %vm369, %v6507, -10000.0
        %v6540 = vsel %vm370, %v6508, -10000.0
        %v6541 = vsel %vm370, %v6509, -10000.0
        %v6542 = vsel %vm371, %v6510, -10000.0
        %v6543 = vsel %vm371, %v6511, -10000.0
        %v6544 = vsel %vm372, %v6512, -10000.0
        %v6545 = vsel %vm372, %v6513, -10000.0
        %v6546 = vsel %vm373, %v6514, -10000.0
        %v6547 = vsel %vm373, %v6515, -10000.0
        %v6548 = vsel %vm374, %v6516, -10000.0
        %v6549 = vsel %vm374, %v6517, -10000.0
        %v6550 = vsel %vm375, %v6518, -10000.0
        %v6551 = vsel %vm375, %v6519, -10000.0
        %v6552 = vsel %vm376, %v6520, -10000.0
        %v6553 = vsel %vm376, %v6521, -10000.0
        %v6554 = vsel %vm377, %v6522, -10000.0
        %v6555 = vsel %vm377, %v6523, -10000.0
        %v6572 = vrot.slane %v6524, 1
        %v6573 = vrot.slane %v6525, 1
        %v6574 = vrot.slane %v6528, 1
        %v6575 = vrot.slane %v6529, 1
        %v6576 = vrot.slane %v6532, 1
        %v6577 = vrot.slane %v6533, 1
        %v6578 = vrot.slane %v6536, 1
        %v6579 = vrot.slane %v6537, 1
        %v6580 = vrot.slane %v6540, 1
        %v6581 = vrot.slane %v6541, 1
        %v6582 = vrot.slane %v6544, 1
        %v6583 = vrot.slane %v6545, 1
        %v6584 = vrot.slane %v6548, 1
        %v6585 = vrot.slane %v6549, 1
        %v6586 = vrot.slane %v6552, 1
        %v6587 = vrot.slane %v6553, 1
        %v6604 = vmax.f32 %v6524, %v6572
        %v6605 = vmax.f32 %v6525, %v6573
        %v6606 = vmax.f32 %v6528, %v6574
        %v6607 = vmax.f32 %v6529, %v6575
        %v6608 = vmax.f32 %v6532, %v6576
        %v6609 = vmax.f32 %v6533, %v6577
        %v6610 = vmax.f32 %v6536, %v6578
        %v6611 = vmax.f32 %v6537, %v6579
        %v6612 = vmax.f32 %v6540, %v6580
        %v6613 = vmax.f32 %v6541, %v6581
        %v6614 = vmax.f32 %v6544, %v6582
        %v6615 = vmax.f32 %v6545, %v6583
        %v6616 = vmax.f32 %v6548, %v6584
        %v6617 = vmax.f32 %v6549, %v6585
        %v6618 = vmax.f32 %v6552, %v6586
        %v6619 = vmax.f32 %v6553, %v6587
        %v6620 = vmin.f32 %v6524, %v6572
        %v6621 = vmin.f32 %v6525, %v6573
        %v6622 = vmin.f32 %v6528, %v6574
        %v6623 = vmin.f32 %v6529, %v6575
        %v6624 = vmin.f32 %v6532, %v6576
        %v6625 = vmin.f32 %v6533, %v6577
        %v6626 = vmin.f32 %v6536, %v6578
        %v6627 = vmin.f32 %v6537, %v6579
        %v6628 = vmin.f32 %v6540, %v6580
        %v6629 = vmin.f32 %v6541, %v6581
        %v6630 = vmin.f32 %v6544, %v6582
        %v6631 = vmin.f32 %v6545, %v6583
        %v6632 = vmin.f32 %v6548, %v6584
        %v6633 = vmin.f32 %v6549, %v6585
        %v6634 = vmin.f32 %v6552, %v6586
        %v6635 = vmin.f32 %v6553, %v6587
        %v6652 = vrot.slane %v6526, 1
        %v6653 = vrot.slane %v6527, 1
        %v6654 = vrot.slane %v6530, 1
        %v6655 = vrot.slane %v6531, 1
        %v6656 = vrot.slane %v6534, 1
        %v6657 = vrot.slane %v6535, 1
        %v6658 = vrot.slane %v6538, 1
        %v6659 = vrot.slane %v6539, 1
        %v6660 = vrot.slane %v6542, 1
        %v6661 = vrot.slane %v6543, 1
        %v6662 = vrot.slane %v6546, 1
        %v6663 = vrot.slane %v6547, 1
        %v6664 = vrot.slane %v6550, 1
        %v6665 = vrot.slane %v6551, 1
        %v6666 = vrot.slane %v6554, 1
        %v6667 = vrot.slane %v6555, 1
        %v6684 = vmax.f32 %v6526, %v6652
        %v6685 = vmax.f32 %v6527, %v6653
        %v6686 = vmax.f32 %v6530, %v6654
        %v6687 = vmax.f32 %v6531, %v6655
        %v6688 = vmax.f32 %v6534, %v6656
        %v6689 = vmax.f32 %v6535, %v6657
        %v6690 = vmax.f32 %v6538, %v6658
        %v6691 = vmax.f32 %v6539, %v6659
        %v6692 = vmax.f32 %v6542, %v6660
        %v6693 = vmax.f32 %v6543, %v6661
        %v6694 = vmax.f32 %v6546, %v6662
        %v6695 = vmax.f32 %v6547, %v6663
        %v6696 = vmax.f32 %v6550, %v6664
        %v6697 = vmax.f32 %v6551, %v6665
        %v6698 = vmax.f32 %v6554, %v6666
        %v6699 = vmax.f32 %v6555, %v6667
        %v6700 = vmin.f32 %v6526, %v6652
        %v6701 = vmin.f32 %v6527, %v6653
        %v6702 = vmin.f32 %v6530, %v6654
        %v6703 = vmin.f32 %v6531, %v6655
        %v6704 = vmin.f32 %v6534, %v6656
        %v6705 = vmin.f32 %v6535, %v6657
        %v6706 = vmin.f32 %v6538, %v6658
        %v6707 = vmin.f32 %v6539, %v6659
        %v6708 = vmin.f32 %v6542, %v6660
        %v6709 = vmin.f32 %v6543, %v6661
        %v6710 = vmin.f32 %v6546, %v6662
        %v6711 = vmin.f32 %v6547, %v6663
        %v6712 = vmin.f32 %v6550, %v6664
        %v6713 = vmin.f32 %v6551, %v6665
        %v6714 = vmin.f32 %v6554, %v6666
        %v6715 = vmin.f32 %v6555, %v6667
        %v6732 = vrot.slane %v6620, 2
        %v6733 = vrot.slane %v6621, 2
        %v6734 = vrot.slane %v6622, 2
        %v6735 = vrot.slane %v6623, 2
        %v6736 = vrot.slane %v6624, 2
        %v6737 = vrot.slane %v6625, 2
        %v6738 = vrot.slane %v6626, 2
        %v6739 = vrot.slane %v6627, 2
        %v6740 = vrot.slane %v6628, 2
        %v6741 = vrot.slane %v6629, 2
        %v6742 = vrot.slane %v6630, 2
        %v6743 = vrot.slane %v6631, 2
        %v6744 = vrot.slane %v6632, 2
        %v6745 = vrot.slane %v6633, 2
        %v6746 = vrot.slane %v6634, 2
        %v6747 = vrot.slane %v6635, 2
        %v6764 = vmax.f32 %v6604, %v6732
        %v6765 = vmax.f32 %v6605, %v6733
        %v6766 = vmax.f32 %v6606, %v6734
        %v6767 = vmax.f32 %v6607, %v6735
        %v6768 = vmax.f32 %v6608, %v6736
        %v6769 = vmax.f32 %v6609, %v6737
        %v6770 = vmax.f32 %v6610, %v6738
        %v6771 = vmax.f32 %v6611, %v6739
        %v6772 = vmax.f32 %v6612, %v6740
        %v6773 = vmax.f32 %v6613, %v6741
        %v6774 = vmax.f32 %v6614, %v6742
        %v6775 = vmax.f32 %v6615, %v6743
        %v6776 = vmax.f32 %v6616, %v6744
        %v6777 = vmax.f32 %v6617, %v6745
        %v6778 = vmax.f32 %v6618, %v6746
        %v6779 = vmax.f32 %v6619, %v6747
        %v6780 = vmin.f32 %v6604, %v6732
        %v6781 = vmin.f32 %v6605, %v6733
        %v6782 = vmin.f32 %v6606, %v6734
        %v6783 = vmin.f32 %v6607, %v6735
        %v6784 = vmin.f32 %v6608, %v6736
        %v6785 = vmin.f32 %v6609, %v6737
        %v6786 = vmin.f32 %v6610, %v6738
        %v6787 = vmin.f32 %v6611, %v6739
        %v6788 = vmin.f32 %v6612, %v6740
        %v6789 = vmin.f32 %v6613, %v6741
        %v6790 = vmin.f32 %v6614, %v6742
        %v6791 = vmin.f32 %v6615, %v6743
        %v6792 = vmin.f32 %v6616, %v6744
        %v6793 = vmin.f32 %v6617, %v6745
        %v6794 = vmin.f32 %v6618, %v6746
        %v6795 = vmin.f32 %v6619, %v6747
        %v6812 = vrot.slane %v6604, 2
        %v6813 = vrot.slane %v6605, 2
        %v6814 = vrot.slane %v6606, 2
        %v6815 = vrot.slane %v6607, 2
        %v6816 = vrot.slane %v6608, 2
        %v6817 = vrot.slane %v6609, 2
        %v6818 = vrot.slane %v6610, 2
        %v6819 = vrot.slane %v6611, 2
        %v6820 = vrot.slane %v6612, 2
        %v6821 = vrot.slane %v6613, 2
        %v6822 = vrot.slane %v6614, 2
        %v6823 = vrot.slane %v6615, 2
        %v6824 = vrot.slane %v6616, 2
        %v6825 = vrot.slane %v6617, 2
        %v6826 = vrot.slane %v6618, 2
        %v6827 = vrot.slane %v6619, 2
        %v6844 = vmax.f32 %v6620, %v6812
        %v6845 = vmax.f32 %v6621, %v6813
        %v6846 = vmax.f32 %v6622, %v6814
        %v6847 = vmax.f32 %v6623, %v6815
        %v6848 = vmax.f32 %v6624, %v6816
        %v6849 = vmax.f32 %v6625, %v6817
        %v6850 = vmax.f32 %v6626, %v6818
        %v6851 = vmax.f32 %v6627, %v6819
        %v6852 = vmax.f32 %v6628, %v6820
        %v6853 = vmax.f32 %v6629, %v6821
        %v6854 = vmax.f32 %v6630, %v6822
        %v6855 = vmax.f32 %v6631, %v6823
        %v6856 = vmax.f32 %v6632, %v6824
        %v6857 = vmax.f32 %v6633, %v6825
        %v6858 = vmax.f32 %v6634, %v6826
        %v6859 = vmax.f32 %v6635, %v6827
        %v6860 = vmin.f32 %v6620, %v6812
        %v6861 = vmin.f32 %v6621, %v6813
        %v6862 = vmin.f32 %v6622, %v6814
        %v6863 = vmin.f32 %v6623, %v6815
        %v6864 = vmin.f32 %v6624, %v6816
        %v6865 = vmin.f32 %v6625, %v6817
        %v6866 = vmin.f32 %v6626, %v6818
        %v6867 = vmin.f32 %v6627, %v6819
        %v6868 = vmin.f32 %v6628, %v6820
        %v6869 = vmin.f32 %v6629, %v6821
        %v6870 = vmin.f32 %v6630, %v6822
        %v6871 = vmin.f32 %v6631, %v6823
        %v6872 = vmin.f32 %v6632, %v6824
        %v6873 = vmin.f32 %v6633, %v6825
        %v6874 = vmin.f32 %v6634, %v6826
        %v6875 = vmin.f32 %v6635, %v6827
        %v6876 = vmax.f32 %v6764, %v6844
        %v6877 = vmax.f32 %v6765, %v6845
        %v6878 = vmax.f32 %v6766, %v6846
        %v6879 = vmax.f32 %v6767, %v6847
        %v6880 = vmax.f32 %v6768, %v6848
        %v6881 = vmax.f32 %v6769, %v6849
        %v6882 = vmax.f32 %v6770, %v6850
        %v6883 = vmax.f32 %v6771, %v6851
        %v6884 = vmax.f32 %v6772, %v6852
        %v6885 = vmax.f32 %v6773, %v6853
        %v6886 = vmax.f32 %v6774, %v6854
        %v6887 = vmax.f32 %v6775, %v6855
        %v6888 = vmax.f32 %v6776, %v6856
        %v6889 = vmax.f32 %v6777, %v6857
        %v6890 = vmax.f32 %v6778, %v6858
        %v6891 = vmax.f32 %v6779, %v6859
        %v6892 = vmin.f32 %v6764, %v6844
        %v6893 = vmin.f32 %v6765, %v6845
        %v6894 = vmin.f32 %v6766, %v6846
        %v6895 = vmin.f32 %v6767, %v6847
        %v6896 = vmin.f32 %v6768, %v6848
        %v6897 = vmin.f32 %v6769, %v6849
        %v6898 = vmin.f32 %v6770, %v6850
        %v6899 = vmin.f32 %v6771, %v6851
        %v6900 = vmin.f32 %v6772, %v6852
        %v6901 = vmin.f32 %v6773, %v6853
        %v6902 = vmin.f32 %v6774, %v6854
        %v6903 = vmin.f32 %v6775, %v6855
        %v6904 = vmin.f32 %v6776, %v6856
        %v6905 = vmin.f32 %v6777, %v6857
        %v6906 = vmin.f32 %v6778, %v6858
        %v6907 = vmin.f32 %v6779, %v6859
        %v6908 = vmax.f32 %v6780, %v6860
        %v6909 = vmax.f32 %v6781, %v6861
        %v6910 = vmax.f32 %v6782, %v6862
        %v6911 = vmax.f32 %v6783, %v6863
        %v6912 = vmax.f32 %v6784, %v6864
        %v6913 = vmax.f32 %v6785, %v6865
        %v6914 = vmax.f32 %v6786, %v6866
        %v6915 = vmax.f32 %v6787, %v6867
        %v6916 = vmax.f32 %v6788, %v6868
        %v6917 = vmax.f32 %v6789, %v6869
        %v6918 = vmax.f32 %v6790, %v6870
        %v6919 = vmax.f32 %v6791, %v6871
        %v6920 = vmax.f32 %v6792, %v6872
        %v6921 = vmax.f32 %v6793, %v6873
        %v6922 = vmax.f32 %v6794, %v6874
        %v6923 = vmax.f32 %v6795, %v6875
        %v6924 = vmin.f32 %v6780, %v6860
        %v6925 = vmin.f32 %v6781, %v6861
        %v6926 = vmin.f32 %v6782, %v6862
        %v6927 = vmin.f32 %v6783, %v6863
        %v6928 = vmin.f32 %v6784, %v6864
        %v6929 = vmin.f32 %v6785, %v6865
        %v6930 = vmin.f32 %v6786, %v6866
        %v6931 = vmin.f32 %v6787, %v6867
        %v6932 = vmin.f32 %v6788, %v6868
        %v6933 = vmin.f32 %v6789, %v6869
        %v6934 = vmin.f32 %v6790, %v6870
        %v6935 = vmin.f32 %v6791, %v6871
        %v6936 = vmin.f32 %v6792, %v6872
        %v6937 = vmin.f32 %v6793, %v6873
        %v6938 = vmin.f32 %v6794, %v6874
        %v6939 = vmin.f32 %v6795, %v6875
        %v6940 = vmax.f32 %v6684, %v6700
        %v6941 = vmax.f32 %v6685, %v6701
        %v6942 = vmax.f32 %v6686, %v6702
        %v6943 = vmax.f32 %v6687, %v6703
        %v6944 = vmax.f32 %v6688, %v6704
        %v6945 = vmax.f32 %v6689, %v6705
        %v6946 = vmax.f32 %v6690, %v6706
        %v6947 = vmax.f32 %v6691, %v6707
        %v6948 = vmax.f32 %v6692, %v6708
        %v6949 = vmax.f32 %v6693, %v6709
        %v6950 = vmax.f32 %v6694, %v6710
        %v6951 = vmax.f32 %v6695, %v6711
        %v6952 = vmax.f32 %v6696, %v6712
        %v6953 = vmax.f32 %v6697, %v6713
        %v6954 = vmax.f32 %v6698, %v6714
        %v6955 = vmax.f32 %v6699, %v6715
        %v6956 = vmin.f32 %v6684, %v6700
        %v6957 = vmin.f32 %v6685, %v6701
        %v6958 = vmin.f32 %v6686, %v6702
        %v6959 = vmin.f32 %v6687, %v6703
        %v6960 = vmin.f32 %v6688, %v6704
        %v6961 = vmin.f32 %v6689, %v6705
        %v6962 = vmin.f32 %v6690, %v6706
        %v6963 = vmin.f32 %v6691, %v6707
        %v6964 = vmin.f32 %v6692, %v6708
        %v6965 = vmin.f32 %v6693, %v6709
        %v6966 = vmin.f32 %v6694, %v6710
        %v6967 = vmin.f32 %v6695, %v6711
        %v6968 = vmin.f32 %v6696, %v6712
        %v6969 = vmin.f32 %v6697, %v6713
        %v6970 = vmin.f32 %v6698, %v6714
        %v6971 = vmin.f32 %v6699, %v6715
        %v6988 = vrot.slane %v6924, 4
        %v6989 = vrot.slane %v6925, 4
        %v6990 = vrot.slane %v6926, 4
        %v6991 = vrot.slane %v6927, 4
        %v6992 = vrot.slane %v6928, 4
        %v6993 = vrot.slane %v6929, 4
        %v6994 = vrot.slane %v6930, 4
        %v6995 = vrot.slane %v6931, 4
        %v6996 = vrot.slane %v6932, 4
        %v6997 = vrot.slane %v6933, 4
        %v6998 = vrot.slane %v6934, 4
        %v6999 = vrot.slane %v6935, 4
        %v7000 = vrot.slane %v6936, 4
        %v7001 = vrot.slane %v6937, 4
        %v7002 = vrot.slane %v6938, 4
        %v7003 = vrot.slane %v6939, 4
        %v7020 = vmax.f32 %v6876, %v6988
        %v7021 = vmax.f32 %v6877, %v6989
        %v7022 = vmax.f32 %v6878, %v6990
        %v7023 = vmax.f32 %v6879, %v6991
        %v7024 = vmax.f32 %v6880, %v6992
        %v7025 = vmax.f32 %v6881, %v6993
        %v7026 = vmax.f32 %v6882, %v6994
        %v7027 = vmax.f32 %v6883, %v6995
        %v7028 = vmax.f32 %v6884, %v6996
        %v7029 = vmax.f32 %v6885, %v6997
        %v7030 = vmax.f32 %v6886, %v6998
        %v7031 = vmax.f32 %v6887, %v6999
        %v7032 = vmax.f32 %v6888, %v7000
        %v7033 = vmax.f32 %v6889, %v7001
        %v7034 = vmax.f32 %v6890, %v7002
        %v7035 = vmax.f32 %v6891, %v7003
        %v7036 = vmin.f32 %v6876, %v6988
        %v7037 = vmin.f32 %v6877, %v6989
        %v7038 = vmin.f32 %v6878, %v6990
        %v7039 = vmin.f32 %v6879, %v6991
        %v7040 = vmin.f32 %v6880, %v6992
        %v7041 = vmin.f32 %v6881, %v6993
        %v7042 = vmin.f32 %v6882, %v6994
        %v7043 = vmin.f32 %v6883, %v6995
        %v7044 = vmin.f32 %v6884, %v6996
        %v7045 = vmin.f32 %v6885, %v6997
        %v7046 = vmin.f32 %v6886, %v6998
        %v7047 = vmin.f32 %v6887, %v6999
        %v7048 = vmin.f32 %v6888, %v7000
        %v7049 = vmin.f32 %v6889, %v7001
        %v7050 = vmin.f32 %v6890, %v7002
        %v7051 = vmin.f32 %v6891, %v7003
        %v7068 = vrot.slane %v6908, 4
        %v7069 = vrot.slane %v6909, 4
        %v7070 = vrot.slane %v6910, 4
        %v7071 = vrot.slane %v6911, 4
        %v7072 = vrot.slane %v6912, 4
        %v7073 = vrot.slane %v6913, 4
        %v7074 = vrot.slane %v6914, 4
        %v7075 = vrot.slane %v6915, 4
        %v7076 = vrot.slane %v6916, 4
        %v7077 = vrot.slane %v6917, 4
        %v7078 = vrot.slane %v6918, 4
        %v7079 = vrot.slane %v6919, 4
        %v7080 = vrot.slane %v6920, 4
        %v7081 = vrot.slane %v6921, 4
        %v7082 = vrot.slane %v6922, 4
        %v7083 = vrot.slane %v6923, 4
        %v7100 = vmax.f32 %v6892, %v7068
        %v7101 = vmax.f32 %v6893, %v7069
        %v7102 = vmax.f32 %v6894, %v7070
        %v7103 = vmax.f32 %v6895, %v7071
        %v7104 = vmax.f32 %v6896, %v7072
        %v7105 = vmax.f32 %v6897, %v7073
        %v7106 = vmax.f32 %v6898, %v7074
        %v7107 = vmax.f32 %v6899, %v7075
        %v7108 = vmax.f32 %v6900, %v7076
        %v7109 = vmax.f32 %v6901, %v7077
        %v7110 = vmax.f32 %v6902, %v7078
        %v7111 = vmax.f32 %v6903, %v7079
        %v7112 = vmax.f32 %v6904, %v7080
        %v7113 = vmax.f32 %v6905, %v7081
        %v7114 = vmax.f32 %v6906, %v7082
        %v7115 = vmax.f32 %v6907, %v7083
        %v7116 = vmin.f32 %v6892, %v7068
        %v7117 = vmin.f32 %v6893, %v7069
        %v7118 = vmin.f32 %v6894, %v7070
        %v7119 = vmin.f32 %v6895, %v7071
        %v7120 = vmin.f32 %v6896, %v7072
        %v7121 = vmin.f32 %v6897, %v7073
        %v7122 = vmin.f32 %v6898, %v7074
        %v7123 = vmin.f32 %v6899, %v7075
        %v7124 = vmin.f32 %v6900, %v7076
        %v7125 = vmin.f32 %v6901, %v7077
        %v7126 = vmin.f32 %v6902, %v7078
        %v7127 = vmin.f32 %v6903, %v7079
        %v7128 = vmin.f32 %v6904, %v7080
        %v7129 = vmin.f32 %v6905, %v7081
        %v7130 = vmin.f32 %v6906, %v7082
        %v7131 = vmin.f32 %v6907, %v7083
        %v7148 = vrot.slane %v6892, 4
        %v7149 = vrot.slane %v6893, 4
        %v7150 = vrot.slane %v6894, 4
        %v7151 = vrot.slane %v6895, 4
        %v7152 = vrot.slane %v6896, 4
        %v7153 = vrot.slane %v6897, 4
        %v7154 = vrot.slane %v6898, 4
        %v7155 = vrot.slane %v6899, 4
        %v7156 = vrot.slane %v6900, 4
        %v7157 = vrot.slane %v6901, 4
        %v7158 = vrot.slane %v6902, 4
        %v7159 = vrot.slane %v6903, 4
        %v7160 = vrot.slane %v6904, 4
        %v7161 = vrot.slane %v6905, 4
        %v7162 = vrot.slane %v6906, 4
        %v7163 = vrot.slane %v6907, 4
        %v7180 = vmax.f32 %v6908, %v7148
        %v7181 = vmax.f32 %v6909, %v7149
        %v7182 = vmax.f32 %v6910, %v7150
        %v7183 = vmax.f32 %v6911, %v7151
        %v7184 = vmax.f32 %v6912, %v7152
        %v7185 = vmax.f32 %v6913, %v7153
        %v7186 = vmax.f32 %v6914, %v7154
        %v7187 = vmax.f32 %v6915, %v7155
        %v7188 = vmax.f32 %v6916, %v7156
        %v7189 = vmax.f32 %v6917, %v7157
        %v7190 = vmax.f32 %v6918, %v7158
        %v7191 = vmax.f32 %v6919, %v7159
        %v7192 = vmax.f32 %v6920, %v7160
        %v7193 = vmax.f32 %v6921, %v7161
        %v7194 = vmax.f32 %v6922, %v7162
        %v7195 = vmax.f32 %v6923, %v7163
        %v7196 = vmin.f32 %v6908, %v7148
        %v7197 = vmin.f32 %v6909, %v7149
        %v7198 = vmin.f32 %v6910, %v7150
        %v7199 = vmin.f32 %v6911, %v7151
        %v7200 = vmin.f32 %v6912, %v7152
        %v7201 = vmin.f32 %v6913, %v7153
        %v7202 = vmin.f32 %v6914, %v7154
        %v7203 = vmin.f32 %v6915, %v7155
        %v7204 = vmin.f32 %v6916, %v7156
        %v7205 = vmin.f32 %v6917, %v7157
        %v7206 = vmin.f32 %v6918, %v7158
        %v7207 = vmin.f32 %v6919, %v7159
        %v7208 = vmin.f32 %v6920, %v7160
        %v7209 = vmin.f32 %v6921, %v7161
        %v7210 = vmin.f32 %v6922, %v7162
        %v7211 = vmin.f32 %v6923, %v7163
        %v7228 = vrot.slane %v6876, 4
        %v7229 = vrot.slane %v6877, 4
        %v7230 = vrot.slane %v6878, 4
        %v7231 = vrot.slane %v6879, 4
        %v7232 = vrot.slane %v6880, 4
        %v7233 = vrot.slane %v6881, 4
        %v7234 = vrot.slane %v6882, 4
        %v7235 = vrot.slane %v6883, 4
        %v7236 = vrot.slane %v6884, 4
        %v7237 = vrot.slane %v6885, 4
        %v7238 = vrot.slane %v6886, 4
        %v7239 = vrot.slane %v6887, 4
        %v7240 = vrot.slane %v6888, 4
        %v7241 = vrot.slane %v6889, 4
        %v7242 = vrot.slane %v6890, 4
        %v7243 = vrot.slane %v6891, 4
        %v7260 = vmax.f32 %v6924, %v7228
        %v7261 = vmax.f32 %v6925, %v7229
        %v7262 = vmax.f32 %v6926, %v7230
        %v7263 = vmax.f32 %v6927, %v7231
        %v7264 = vmax.f32 %v6928, %v7232
        %v7265 = vmax.f32 %v6929, %v7233
        %v7266 = vmax.f32 %v6930, %v7234
        %v7267 = vmax.f32 %v6931, %v7235
        %v7268 = vmax.f32 %v6932, %v7236
        %v7269 = vmax.f32 %v6933, %v7237
        %v7270 = vmax.f32 %v6934, %v7238
        %v7271 = vmax.f32 %v6935, %v7239
        %v7272 = vmax.f32 %v6936, %v7240
        %v7273 = vmax.f32 %v6937, %v7241
        %v7274 = vmax.f32 %v6938, %v7242
        %v7275 = vmax.f32 %v6939, %v7243
        %v7276 = vmin.f32 %v6924, %v7228
        %v7277 = vmin.f32 %v6925, %v7229
        %v7278 = vmin.f32 %v6926, %v7230
        %v7279 = vmin.f32 %v6927, %v7231
        %v7280 = vmin.f32 %v6928, %v7232
        %v7281 = vmin.f32 %v6929, %v7233
        %v7282 = vmin.f32 %v6930, %v7234
        %v7283 = vmin.f32 %v6931, %v7235
        %v7284 = vmin.f32 %v6932, %v7236
        %v7285 = vmin.f32 %v6933, %v7237
        %v7286 = vmin.f32 %v6934, %v7238
        %v7287 = vmin.f32 %v6935, %v7239
        %v7288 = vmin.f32 %v6936, %v7240
        %v7289 = vmin.f32 %v6937, %v7241
        %v7290 = vmin.f32 %v6938, %v7242
        %v7291 = vmin.f32 %v6939, %v7243
        %v7292 = vmax.f32 %v7020, %v7180
        %v7293 = vmax.f32 %v7021, %v7181
        %v7294 = vmax.f32 %v7022, %v7182
        %v7295 = vmax.f32 %v7023, %v7183
        %v7296 = vmax.f32 %v7024, %v7184
        %v7297 = vmax.f32 %v7025, %v7185
        %v7298 = vmax.f32 %v7026, %v7186
        %v7299 = vmax.f32 %v7027, %v7187
        %v7300 = vmax.f32 %v7028, %v7188
        %v7301 = vmax.f32 %v7029, %v7189
        %v7302 = vmax.f32 %v7030, %v7190
        %v7303 = vmax.f32 %v7031, %v7191
        %v7304 = vmax.f32 %v7032, %v7192
        %v7305 = vmax.f32 %v7033, %v7193
        %v7306 = vmax.f32 %v7034, %v7194
        %v7307 = vmax.f32 %v7035, %v7195
        %v7308 = vmin.f32 %v7020, %v7180
        %v7309 = vmin.f32 %v7021, %v7181
        %v7310 = vmin.f32 %v7022, %v7182
        %v7311 = vmin.f32 %v7023, %v7183
        %v7312 = vmin.f32 %v7024, %v7184
        %v7313 = vmin.f32 %v7025, %v7185
        %v7314 = vmin.f32 %v7026, %v7186
        %v7315 = vmin.f32 %v7027, %v7187
        %v7316 = vmin.f32 %v7028, %v7188
        %v7317 = vmin.f32 %v7029, %v7189
        %v7318 = vmin.f32 %v7030, %v7190
        %v7319 = vmin.f32 %v7031, %v7191
        %v7320 = vmin.f32 %v7032, %v7192
        %v7321 = vmin.f32 %v7033, %v7193
        %v7322 = vmin.f32 %v7034, %v7194
        %v7323 = vmin.f32 %v7035, %v7195
        %v7324 = vmax.f32 %v7100, %v7260
        %v7325 = vmax.f32 %v7101, %v7261
        %v7326 = vmax.f32 %v7102, %v7262
        %v7327 = vmax.f32 %v7103, %v7263
        %v7328 = vmax.f32 %v7104, %v7264
        %v7329 = vmax.f32 %v7105, %v7265
        %v7330 = vmax.f32 %v7106, %v7266
        %v7331 = vmax.f32 %v7107, %v7267
        %v7332 = vmax.f32 %v7108, %v7268
        %v7333 = vmax.f32 %v7109, %v7269
        %v7334 = vmax.f32 %v7110, %v7270
        %v7335 = vmax.f32 %v7111, %v7271
        %v7336 = vmax.f32 %v7112, %v7272
        %v7337 = vmax.f32 %v7113, %v7273
        %v7338 = vmax.f32 %v7114, %v7274
        %v7339 = vmax.f32 %v7115, %v7275
        %v7340 = vmin.f32 %v7100, %v7260
        %v7341 = vmin.f32 %v7101, %v7261
        %v7342 = vmin.f32 %v7102, %v7262
        %v7343 = vmin.f32 %v7103, %v7263
        %v7344 = vmin.f32 %v7104, %v7264
        %v7345 = vmin.f32 %v7105, %v7265
        %v7346 = vmin.f32 %v7106, %v7266
        %v7347 = vmin.f32 %v7107, %v7267
        %v7348 = vmin.f32 %v7108, %v7268
        %v7349 = vmin.f32 %v7109, %v7269
        %v7350 = vmin.f32 %v7110, %v7270
        %v7351 = vmin.f32 %v7111, %v7271
        %v7352 = vmin.f32 %v7112, %v7272
        %v7353 = vmin.f32 %v7113, %v7273
        %v7354 = vmin.f32 %v7114, %v7274
        %v7355 = vmin.f32 %v7115, %v7275
        %v7356 = vmax.f32 %v7036, %v7196
        %v7357 = vmax.f32 %v7037, %v7197
        %v7358 = vmax.f32 %v7038, %v7198
        %v7359 = vmax.f32 %v7039, %v7199
        %v7360 = vmax.f32 %v7040, %v7200
        %v7361 = vmax.f32 %v7041, %v7201
        %v7362 = vmax.f32 %v7042, %v7202
        %v7363 = vmax.f32 %v7043, %v7203
        %v7364 = vmax.f32 %v7044, %v7204
        %v7365 = vmax.f32 %v7045, %v7205
        %v7366 = vmax.f32 %v7046, %v7206
        %v7367 = vmax.f32 %v7047, %v7207
        %v7368 = vmax.f32 %v7048, %v7208
        %v7369 = vmax.f32 %v7049, %v7209
        %v7370 = vmax.f32 %v7050, %v7210
        %v7371 = vmax.f32 %v7051, %v7211
        %v7372 = vmin.f32 %v7036, %v7196
        %v7373 = vmin.f32 %v7037, %v7197
        %v7374 = vmin.f32 %v7038, %v7198
        %v7375 = vmin.f32 %v7039, %v7199
        %v7376 = vmin.f32 %v7040, %v7200
        %v7377 = vmin.f32 %v7041, %v7201
        %v7378 = vmin.f32 %v7042, %v7202
        %v7379 = vmin.f32 %v7043, %v7203
        %v7380 = vmin.f32 %v7044, %v7204
        %v7381 = vmin.f32 %v7045, %v7205
        %v7382 = vmin.f32 %v7046, %v7206
        %v7383 = vmin.f32 %v7047, %v7207
        %v7384 = vmin.f32 %v7048, %v7208
        %v7385 = vmin.f32 %v7049, %v7209
        %v7386 = vmin.f32 %v7050, %v7210
        %v7387 = vmin.f32 %v7051, %v7211
        %v7388 = vmax.f32 %v7116, %v7276
        %v7389 = vmax.f32 %v7117, %v7277
        %v7390 = vmax.f32 %v7118, %v7278
        %v7391 = vmax.f32 %v7119, %v7279
        %v7392 = vmax.f32 %v7120, %v7280
        %v7393 = vmax.f32 %v7121, %v7281
        %v7394 = vmax.f32 %v7122, %v7282
        %v7395 = vmax.f32 %v7123, %v7283
        %v7396 = vmax.f32 %v7124, %v7284
        %v7397 = vmax.f32 %v7125, %v7285
        %v7398 = vmax.f32 %v7126, %v7286
        %v7399 = vmax.f32 %v7127, %v7287
        %v7400 = vmax.f32 %v7128, %v7288
        %v7401 = vmax.f32 %v7129, %v7289
        %v7402 = vmax.f32 %v7130, %v7290
        %v7403 = vmax.f32 %v7131, %v7291
        %v7404 = vmin.f32 %v7116, %v7276
        %v7405 = vmin.f32 %v7117, %v7277
        %v7406 = vmin.f32 %v7118, %v7278
        %v7407 = vmin.f32 %v7119, %v7279
        %v7408 = vmin.f32 %v7120, %v7280
        %v7409 = vmin.f32 %v7121, %v7281
        %v7410 = vmin.f32 %v7122, %v7282
        %v7411 = vmin.f32 %v7123, %v7283
        %v7412 = vmin.f32 %v7124, %v7284
        %v7413 = vmin.f32 %v7125, %v7285
        %v7414 = vmin.f32 %v7126, %v7286
        %v7415 = vmin.f32 %v7127, %v7287
        %v7416 = vmin.f32 %v7128, %v7288
        %v7417 = vmin.f32 %v7129, %v7289
        %v7418 = vmin.f32 %v7130, %v7290
        %v7419 = vmin.f32 %v7131, %v7291
        %v7420 = vmax.f32 %v7292, %v7324
        %v7421 = vmax.f32 %v7293, %v7325
        %v7422 = vmax.f32 %v7294, %v7326
        %v7423 = vmax.f32 %v7295, %v7327
        %v7424 = vmax.f32 %v7296, %v7328
        %v7425 = vmax.f32 %v7297, %v7329
        %v7426 = vmax.f32 %v7298, %v7330
        %v7427 = vmax.f32 %v7299, %v7331
        %v7428 = vmax.f32 %v7300, %v7332
        %v7429 = vmax.f32 %v7301, %v7333
        %v7430 = vmax.f32 %v7302, %v7334
        %v7431 = vmax.f32 %v7303, %v7335
        %v7432 = vmax.f32 %v7304, %v7336
        %v7433 = vmax.f32 %v7305, %v7337
        %v7434 = vmax.f32 %v7306, %v7338
        %v7435 = vmax.f32 %v7307, %v7339
        %v7436 = vmin.f32 %v7292, %v7324
        %v7437 = vmin.f32 %v7293, %v7325
        %v7438 = vmin.f32 %v7294, %v7326
        %v7439 = vmin.f32 %v7295, %v7327
        %v7440 = vmin.f32 %v7296, %v7328
        %v7441 = vmin.f32 %v7297, %v7329
        %v7442 = vmin.f32 %v7298, %v7330
        %v7443 = vmin.f32 %v7299, %v7331
        %v7444 = vmin.f32 %v7300, %v7332
        %v7445 = vmin.f32 %v7301, %v7333
        %v7446 = vmin.f32 %v7302, %v7334
        %v7447 = vmin.f32 %v7303, %v7335
        %v7448 = vmin.f32 %v7304, %v7336
        %v7449 = vmin.f32 %v7305, %v7337
        %v7450 = vmin.f32 %v7306, %v7338
        %v7451 = vmin.f32 %v7307, %v7339
        %v7452 = vmax.f32 %v7308, %v7340
        %v7453 = vmax.f32 %v7309, %v7341
        %v7454 = vmax.f32 %v7310, %v7342
        %v7455 = vmax.f32 %v7311, %v7343
        %v7456 = vmax.f32 %v7312, %v7344
        %v7457 = vmax.f32 %v7313, %v7345
        %v7458 = vmax.f32 %v7314, %v7346
        %v7459 = vmax.f32 %v7315, %v7347
        %v7460 = vmax.f32 %v7316, %v7348
        %v7461 = vmax.f32 %v7317, %v7349
        %v7462 = vmax.f32 %v7318, %v7350
        %v7463 = vmax.f32 %v7319, %v7351
        %v7464 = vmax.f32 %v7320, %v7352
        %v7465 = vmax.f32 %v7321, %v7353
        %v7466 = vmax.f32 %v7322, %v7354
        %v7467 = vmax.f32 %v7323, %v7355
        %v7468 = vmin.f32 %v7308, %v7340
        %v7469 = vmin.f32 %v7309, %v7341
        %v7470 = vmin.f32 %v7310, %v7342
        %v7471 = vmin.f32 %v7311, %v7343
        %v7472 = vmin.f32 %v7312, %v7344
        %v7473 = vmin.f32 %v7313, %v7345
        %v7474 = vmin.f32 %v7314, %v7346
        %v7475 = vmin.f32 %v7315, %v7347
        %v7476 = vmin.f32 %v7316, %v7348
        %v7477 = vmin.f32 %v7317, %v7349
        %v7478 = vmin.f32 %v7318, %v7350
        %v7479 = vmin.f32 %v7319, %v7351
        %v7480 = vmin.f32 %v7320, %v7352
        %v7481 = vmin.f32 %v7321, %v7353
        %v7482 = vmin.f32 %v7322, %v7354
        %v7483 = vmin.f32 %v7323, %v7355
        %v7484 = vmax.f32 %v7356, %v7388
        %v7485 = vmax.f32 %v7357, %v7389
        %v7486 = vmax.f32 %v7358, %v7390
        %v7487 = vmax.f32 %v7359, %v7391
        %v7488 = vmax.f32 %v7360, %v7392
        %v7489 = vmax.f32 %v7361, %v7393
        %v7490 = vmax.f32 %v7362, %v7394
        %v7491 = vmax.f32 %v7363, %v7395
        %v7492 = vmax.f32 %v7364, %v7396
        %v7493 = vmax.f32 %v7365, %v7397
        %v7494 = vmax.f32 %v7366, %v7398
        %v7495 = vmax.f32 %v7367, %v7399
        %v7496 = vmax.f32 %v7368, %v7400
        %v7497 = vmax.f32 %v7369, %v7401
        %v7498 = vmax.f32 %v7370, %v7402
        %v7499 = vmax.f32 %v7371, %v7403
        %v7500 = vmin.f32 %v7356, %v7388
        %v7501 = vmin.f32 %v7357, %v7389
        %v7502 = vmin.f32 %v7358, %v7390
        %v7503 = vmin.f32 %v7359, %v7391
        %v7504 = vmin.f32 %v7360, %v7392
        %v7505 = vmin.f32 %v7361, %v7393
        %v7506 = vmin.f32 %v7362, %v7394
        %v7507 = vmin.f32 %v7363, %v7395
        %v7508 = vmin.f32 %v7364, %v7396
        %v7509 = vmin.f32 %v7365, %v7397
        %v7510 = vmin.f32 %v7366, %v7398
        %v7511 = vmin.f32 %v7367, %v7399
        %v7512 = vmin.f32 %v7368, %v7400
        %v7513 = vmin.f32 %v7369, %v7401
        %v7514 = vmin.f32 %v7370, %v7402
        %v7515 = vmin.f32 %v7371, %v7403
        %v7516 = vmax.f32 %v7372, %v7404
        %v7517 = vmax.f32 %v7373, %v7405
        %v7518 = vmax.f32 %v7374, %v7406
        %v7519 = vmax.f32 %v7375, %v7407
        %v7520 = vmax.f32 %v7376, %v7408
        %v7521 = vmax.f32 %v7377, %v7409
        %v7522 = vmax.f32 %v7378, %v7410
        %v7523 = vmax.f32 %v7379, %v7411
        %v7524 = vmax.f32 %v7380, %v7412
        %v7525 = vmax.f32 %v7381, %v7413
        %v7526 = vmax.f32 %v7382, %v7414
        %v7527 = vmax.f32 %v7383, %v7415
        %v7528 = vmax.f32 %v7384, %v7416
        %v7529 = vmax.f32 %v7385, %v7417
        %v7530 = vmax.f32 %v7386, %v7418
        %v7531 = vmax.f32 %v7387, %v7419
        %v7532 = vmin.f32 %v7372, %v7404
        %v7533 = vmin.f32 %v7373, %v7405
        %v7534 = vmin.f32 %v7374, %v7406
        %v7535 = vmin.f32 %v7375, %v7407
        %v7536 = vmin.f32 %v7376, %v7408
        %v7537 = vmin.f32 %v7377, %v7409
        %v7538 = vmin.f32 %v7378, %v7410
        %v7539 = vmin.f32 %v7379, %v7411
        %v7540 = vmin.f32 %v7380, %v7412
        %v7541 = vmin.f32 %v7381, %v7413
        %v7542 = vmin.f32 %v7382, %v7414
        %v7543 = vmin.f32 %v7383, %v7415
        %v7544 = vmin.f32 %v7384, %v7416
        %v7545 = vmin.f32 %v7385, %v7417
        %v7546 = vmin.f32 %v7386, %v7418
        %v7547 = vmin.f32 %v7387, %v7419
        %v7548 = vmax.f32 %v6940, %v6956
        %v7549 = vmax.f32 %v6941, %v6957
        %v7550 = vmax.f32 %v6942, %v6958
        %v7551 = vmax.f32 %v6943, %v6959
        %v7552 = vmax.f32 %v6944, %v6960
        %v7553 = vmax.f32 %v6945, %v6961
        %v7554 = vmax.f32 %v6946, %v6962
        %v7555 = vmax.f32 %v6947, %v6963
        %v7556 = vmax.f32 %v6948, %v6964
        %v7557 = vmax.f32 %v6949, %v6965
        %v7558 = vmax.f32 %v6950, %v6966
        %v7559 = vmax.f32 %v6951, %v6967
        %v7560 = vmax.f32 %v6952, %v6968
        %v7561 = vmax.f32 %v6953, %v6969
        %v7562 = vmax.f32 %v6954, %v6970
        %v7563 = vmax.f32 %v6955, %v6971
        %v7564 = vmin.f32 %v6940, %v6956
        %v7565 = vmin.f32 %v6941, %v6957
        %v7566 = vmin.f32 %v6942, %v6958
        %v7567 = vmin.f32 %v6943, %v6959
        %v7568 = vmin.f32 %v6944, %v6960
        %v7569 = vmin.f32 %v6945, %v6961
        %v7570 = vmin.f32 %v6946, %v6962
        %v7571 = vmin.f32 %v6947, %v6963
        %v7572 = vmin.f32 %v6948, %v6964
        %v7573 = vmin.f32 %v6949, %v6965
        %v7574 = vmin.f32 %v6950, %v6966
        %v7575 = vmin.f32 %v6951, %v6967
        %v7576 = vmin.f32 %v6952, %v6968
        %v7577 = vmin.f32 %v6953, %v6969
        %v7578 = vmin.f32 %v6954, %v6970
        %v7579 = vmin.f32 %v6955, %v6971
        %v7580 = vmax.f32 %v7516, %v7564
        %v7581 = vmax.f32 %v7517, %v7565
        %v7582 = vmax.f32 %v7518, %v7566
        %v7583 = vmax.f32 %v7519, %v7567
        %v7584 = vmax.f32 %v7520, %v7568
        %v7585 = vmax.f32 %v7521, %v7569
        %v7586 = vmax.f32 %v7522, %v7570
        %v7587 = vmax.f32 %v7523, %v7571
        %v7588 = vmax.f32 %v7524, %v7572
        %v7589 = vmax.f32 %v7525, %v7573
        %v7590 = vmax.f32 %v7526, %v7574
        %v7591 = vmax.f32 %v7527, %v7575
        %v7592 = vmax.f32 %v7528, %v7576
        %v7593 = vmax.f32 %v7529, %v7577
        %v7594 = vmax.f32 %v7530, %v7578
        %v7595 = vmax.f32 %v7531, %v7579
        %v7596 = vmin.f32 %v7516, %v7564
        %v7597 = vmin.f32 %v7517, %v7565
        %v7598 = vmin.f32 %v7518, %v7566
        %v7599 = vmin.f32 %v7519, %v7567
        %v7600 = vmin.f32 %v7520, %v7568
        %v7601 = vmin.f32 %v7521, %v7569
        %v7602 = vmin.f32 %v7522, %v7570
        %v7603 = vmin.f32 %v7523, %v7571
        %v7604 = vmin.f32 %v7524, %v7572
        %v7605 = vmin.f32 %v7525, %v7573
        %v7606 = vmin.f32 %v7526, %v7574
        %v7607 = vmin.f32 %v7527, %v7575
        %v7608 = vmin.f32 %v7528, %v7576
        %v7609 = vmin.f32 %v7529, %v7577
        %v7610 = vmin.f32 %v7530, %v7578
        %v7611 = vmin.f32 %v7531, %v7579
        %v7612 = vmax.f32 %v7532, %v7548
        %v7613 = vmax.f32 %v7533, %v7549
        %v7614 = vmax.f32 %v7534, %v7550
        %v7615 = vmax.f32 %v7535, %v7551
        %v7616 = vmax.f32 %v7536, %v7552
        %v7617 = vmax.f32 %v7537, %v7553
        %v7618 = vmax.f32 %v7538, %v7554
        %v7619 = vmax.f32 %v7539, %v7555
        %v7620 = vmax.f32 %v7540, %v7556
        %v7621 = vmax.f32 %v7541, %v7557
        %v7622 = vmax.f32 %v7542, %v7558
        %v7623 = vmax.f32 %v7543, %v7559
        %v7624 = vmax.f32 %v7544, %v7560
        %v7625 = vmax.f32 %v7545, %v7561
        %v7626 = vmax.f32 %v7546, %v7562
        %v7627 = vmax.f32 %v7547, %v7563
        %v7628 = vmin.f32 %v7532, %v7548
        %v7629 = vmin.f32 %v7533, %v7549
        %v7630 = vmin.f32 %v7534, %v7550
        %v7631 = vmin.f32 %v7535, %v7551
        %v7632 = vmin.f32 %v7536, %v7552
        %v7633 = vmin.f32 %v7537, %v7553
        %v7634 = vmin.f32 %v7538, %v7554
        %v7635 = vmin.f32 %v7539, %v7555
        %v7636 = vmin.f32 %v7540, %v7556
        %v7637 = vmin.f32 %v7541, %v7557
        %v7638 = vmin.f32 %v7542, %v7558
        %v7639 = vmin.f32 %v7543, %v7559
        %v7640 = vmin.f32 %v7544, %v7560
        %v7641 = vmin.f32 %v7545, %v7561
        %v7642 = vmin.f32 %v7546, %v7562
        %v7643 = vmin.f32 %v7547, %v7563
        %v7644 = vmax.f32 %v7420, %v7484
        %v7645 = vmax.f32 %v7421, %v7485
        %v7646 = vmax.f32 %v7422, %v7486
        %v7647 = vmax.f32 %v7423, %v7487
        %v7648 = vmax.f32 %v7424, %v7488
        %v7649 = vmax.f32 %v7425, %v7489
        %v7650 = vmax.f32 %v7426, %v7490
        %v7651 = vmax.f32 %v7427, %v7491
        %v7652 = vmax.f32 %v7428, %v7492
        %v7653 = vmax.f32 %v7429, %v7493
        %v7654 = vmax.f32 %v7430, %v7494
        %v7655 = vmax.f32 %v7431, %v7495
        %v7656 = vmax.f32 %v7432, %v7496
        %v7657 = vmax.f32 %v7433, %v7497
        %v7658 = vmax.f32 %v7434, %v7498
        %v7659 = vmax.f32 %v7435, %v7499
        %v7660 = vmin.f32 %v7420, %v7484
        %v7661 = vmin.f32 %v7421, %v7485
        %v7662 = vmin.f32 %v7422, %v7486
        %v7663 = vmin.f32 %v7423, %v7487
        %v7664 = vmin.f32 %v7424, %v7488
        %v7665 = vmin.f32 %v7425, %v7489
        %v7666 = vmin.f32 %v7426, %v7490
        %v7667 = vmin.f32 %v7427, %v7491
        %v7668 = vmin.f32 %v7428, %v7492
        %v7669 = vmin.f32 %v7429, %v7493
        %v7670 = vmin.f32 %v7430, %v7494
        %v7671 = vmin.f32 %v7431, %v7495
        %v7672 = vmin.f32 %v7432, %v7496
        %v7673 = vmin.f32 %v7433, %v7497
        %v7674 = vmin.f32 %v7434, %v7498
        %v7675 = vmin.f32 %v7435, %v7499
        %v7676 = vmax.f32 %v7436, %v7500
        %v7677 = vmax.f32 %v7437, %v7501
        %v7678 = vmax.f32 %v7438, %v7502
        %v7679 = vmax.f32 %v7439, %v7503
        %v7680 = vmax.f32 %v7440, %v7504
        %v7681 = vmax.f32 %v7441, %v7505
        %v7682 = vmax.f32 %v7442, %v7506
        %v7683 = vmax.f32 %v7443, %v7507
        %v7684 = vmax.f32 %v7444, %v7508
        %v7685 = vmax.f32 %v7445, %v7509
        %v7686 = vmax.f32 %v7446, %v7510
        %v7687 = vmax.f32 %v7447, %v7511
        %v7688 = vmax.f32 %v7448, %v7512
        %v7689 = vmax.f32 %v7449, %v7513
        %v7690 = vmax.f32 %v7450, %v7514
        %v7691 = vmax.f32 %v7451, %v7515
        %v7692 = vmin.f32 %v7436, %v7500
        %v7693 = vmin.f32 %v7437, %v7501
        %v7694 = vmin.f32 %v7438, %v7502
        %v7695 = vmin.f32 %v7439, %v7503
        %v7696 = vmin.f32 %v7440, %v7504
        %v7697 = vmin.f32 %v7441, %v7505
        %v7698 = vmin.f32 %v7442, %v7506
        %v7699 = vmin.f32 %v7443, %v7507
        %v7700 = vmin.f32 %v7444, %v7508
        %v7701 = vmin.f32 %v7445, %v7509
        %v7702 = vmin.f32 %v7446, %v7510
        %v7703 = vmin.f32 %v7447, %v7511
        %v7704 = vmin.f32 %v7448, %v7512
        %v7705 = vmin.f32 %v7449, %v7513
        %v7706 = vmin.f32 %v7450, %v7514
        %v7707 = vmin.f32 %v7451, %v7515
        %v7708 = vmax.f32 %v7452, %v7580
        %v7709 = vmax.f32 %v7453, %v7581
        %v7710 = vmax.f32 %v7454, %v7582
        %v7711 = vmax.f32 %v7455, %v7583
        %v7712 = vmax.f32 %v7456, %v7584
        %v7713 = vmax.f32 %v7457, %v7585
        %v7714 = vmax.f32 %v7458, %v7586
        %v7715 = vmax.f32 %v7459, %v7587
        %v7716 = vmax.f32 %v7460, %v7588
        %v7717 = vmax.f32 %v7461, %v7589
        %v7718 = vmax.f32 %v7462, %v7590
        %v7719 = vmax.f32 %v7463, %v7591
        %v7720 = vmax.f32 %v7464, %v7592
        %v7721 = vmax.f32 %v7465, %v7593
        %v7722 = vmax.f32 %v7466, %v7594
        %v7723 = vmax.f32 %v7467, %v7595
        %v7724 = vmin.f32 %v7452, %v7580
        %v7725 = vmin.f32 %v7453, %v7581
        %v7726 = vmin.f32 %v7454, %v7582
        %v7727 = vmin.f32 %v7455, %v7583
        %v7728 = vmin.f32 %v7456, %v7584
        %v7729 = vmin.f32 %v7457, %v7585
        %v7730 = vmin.f32 %v7458, %v7586
        %v7731 = vmin.f32 %v7459, %v7587
        %v7732 = vmin.f32 %v7460, %v7588
        %v7733 = vmin.f32 %v7461, %v7589
        %v7734 = vmin.f32 %v7462, %v7590
        %v7735 = vmin.f32 %v7463, %v7591
        %v7736 = vmin.f32 %v7464, %v7592
        %v7737 = vmin.f32 %v7465, %v7593
        %v7738 = vmin.f32 %v7466, %v7594
        %v7739 = vmin.f32 %v7467, %v7595
        %v7740 = vmax.f32 %v7468, %v7612
        %v7741 = vmax.f32 %v7469, %v7613
        %v7742 = vmax.f32 %v7470, %v7614
        %v7743 = vmax.f32 %v7471, %v7615
        %v7744 = vmax.f32 %v7472, %v7616
        %v7745 = vmax.f32 %v7473, %v7617
        %v7746 = vmax.f32 %v7474, %v7618
        %v7747 = vmax.f32 %v7475, %v7619
        %v7748 = vmax.f32 %v7476, %v7620
        %v7749 = vmax.f32 %v7477, %v7621
        %v7750 = vmax.f32 %v7478, %v7622
        %v7751 = vmax.f32 %v7479, %v7623
        %v7752 = vmax.f32 %v7480, %v7624
        %v7753 = vmax.f32 %v7481, %v7625
        %v7754 = vmax.f32 %v7482, %v7626
        %v7755 = vmax.f32 %v7483, %v7627
        %v7756 = vmin.f32 %v7468, %v7612
        %v7757 = vmin.f32 %v7469, %v7613
        %v7758 = vmin.f32 %v7470, %v7614
        %v7759 = vmin.f32 %v7471, %v7615
        %v7760 = vmin.f32 %v7472, %v7616
        %v7761 = vmin.f32 %v7473, %v7617
        %v7762 = vmin.f32 %v7474, %v7618
        %v7763 = vmin.f32 %v7475, %v7619
        %v7764 = vmin.f32 %v7476, %v7620
        %v7765 = vmin.f32 %v7477, %v7621
        %v7766 = vmin.f32 %v7478, %v7622
        %v7767 = vmin.f32 %v7479, %v7623
        %v7768 = vmin.f32 %v7480, %v7624
        %v7769 = vmin.f32 %v7481, %v7625
        %v7770 = vmin.f32 %v7482, %v7626
        %v7771 = vmin.f32 %v7483, %v7627
        %v7772 = vmax.f32 %v7644, %v7708
        %v7773 = vmax.f32 %v7645, %v7709
        %v7774 = vmax.f32 %v7646, %v7710
        %v7775 = vmax.f32 %v7647, %v7711
        %v7776 = vmax.f32 %v7648, %v7712
        %v7777 = vmax.f32 %v7649, %v7713
        %v7778 = vmax.f32 %v7650, %v7714
        %v7779 = vmax.f32 %v7651, %v7715
        %v7780 = vmax.f32 %v7652, %v7716
        %v7781 = vmax.f32 %v7653, %v7717
        %v7782 = vmax.f32 %v7654, %v7718
        %v7783 = vmax.f32 %v7655, %v7719
        %v7784 = vmax.f32 %v7656, %v7720
        %v7785 = vmax.f32 %v7657, %v7721
        %v7786 = vmax.f32 %v7658, %v7722
        %v7787 = vmax.f32 %v7659, %v7723
        %v7788 = vmin.f32 %v7644, %v7708
        %v7789 = vmin.f32 %v7645, %v7709
        %v7790 = vmin.f32 %v7646, %v7710
        %v7791 = vmin.f32 %v7647, %v7711
        %v7792 = vmin.f32 %v7648, %v7712
        %v7793 = vmin.f32 %v7649, %v7713
        %v7794 = vmin.f32 %v7650, %v7714
        %v7795 = vmin.f32 %v7651, %v7715
        %v7796 = vmin.f32 %v7652, %v7716
        %v7797 = vmin.f32 %v7653, %v7717
        %v7798 = vmin.f32 %v7654, %v7718
        %v7799 = vmin.f32 %v7655, %v7719
        %v7800 = vmin.f32 %v7656, %v7720
        %v7801 = vmin.f32 %v7657, %v7721
        %v7802 = vmin.f32 %v7658, %v7722
        %v7803 = vmin.f32 %v7659, %v7723
        %v7804 = vmax.f32 %v7676, %v7740
        %v7805 = vmax.f32 %v7677, %v7741
        %v7806 = vmax.f32 %v7678, %v7742
        %v7807 = vmax.f32 %v7679, %v7743
        %v7808 = vmax.f32 %v7680, %v7744
        %v7809 = vmax.f32 %v7681, %v7745
        %v7810 = vmax.f32 %v7682, %v7746
        %v7811 = vmax.f32 %v7683, %v7747
        %v7812 = vmax.f32 %v7684, %v7748
        %v7813 = vmax.f32 %v7685, %v7749
        %v7814 = vmax.f32 %v7686, %v7750
        %v7815 = vmax.f32 %v7687, %v7751
        %v7816 = vmax.f32 %v7688, %v7752
        %v7817 = vmax.f32 %v7689, %v7753
        %v7818 = vmax.f32 %v7690, %v7754
        %v7819 = vmax.f32 %v7691, %v7755
        %v7820 = vmin.f32 %v7676, %v7740
        %v7821 = vmin.f32 %v7677, %v7741
        %v7822 = vmin.f32 %v7678, %v7742
        %v7823 = vmin.f32 %v7679, %v7743
        %v7824 = vmin.f32 %v7680, %v7744
        %v7825 = vmin.f32 %v7681, %v7745
        %v7826 = vmin.f32 %v7682, %v7746
        %v7827 = vmin.f32 %v7683, %v7747
        %v7828 = vmin.f32 %v7684, %v7748
        %v7829 = vmin.f32 %v7685, %v7749
        %v7830 = vmin.f32 %v7686, %v7750
        %v7831 = vmin.f32 %v7687, %v7751
        %v7832 = vmin.f32 %v7688, %v7752
        %v7833 = vmin.f32 %v7689, %v7753
        %v7834 = vmin.f32 %v7690, %v7754
        %v7835 = vmin.f32 %v7691, %v7755
        %v7836 = vmax.f32 %v7660, %v7724
        %v7837 = vmax.f32 %v7661, %v7725
        %v7838 = vmax.f32 %v7662, %v7726
        %v7839 = vmax.f32 %v7663, %v7727
        %v7840 = vmax.f32 %v7664, %v7728
        %v7841 = vmax.f32 %v7665, %v7729
        %v7842 = vmax.f32 %v7666, %v7730
        %v7843 = vmax.f32 %v7667, %v7731
        %v7844 = vmax.f32 %v7668, %v7732
        %v7845 = vmax.f32 %v7669, %v7733
        %v7846 = vmax.f32 %v7670, %v7734
        %v7847 = vmax.f32 %v7671, %v7735
        %v7848 = vmax.f32 %v7672, %v7736
        %v7849 = vmax.f32 %v7673, %v7737
        %v7850 = vmax.f32 %v7674, %v7738
        %v7851 = vmax.f32 %v7675, %v7739
        %v7852 = vmin.f32 %v7660, %v7724
        %v7853 = vmin.f32 %v7661, %v7725
        %v7854 = vmin.f32 %v7662, %v7726
        %v7855 = vmin.f32 %v7663, %v7727
        %v7856 = vmin.f32 %v7664, %v7728
        %v7857 = vmin.f32 %v7665, %v7729
        %v7858 = vmin.f32 %v7666, %v7730
        %v7859 = vmin.f32 %v7667, %v7731
        %v7860 = vmin.f32 %v7668, %v7732
        %v7861 = vmin.f32 %v7669, %v7733
        %v7862 = vmin.f32 %v7670, %v7734
        %v7863 = vmin.f32 %v7671, %v7735
        %v7864 = vmin.f32 %v7672, %v7736
        %v7865 = vmin.f32 %v7673, %v7737
        %v7866 = vmin.f32 %v7674, %v7738
        %v7867 = vmin.f32 %v7675, %v7739
        %v7868 = vmax.f32 %v7692, %v7756
        %v7869 = vmax.f32 %v7693, %v7757
        %v7870 = vmax.f32 %v7694, %v7758
        %v7871 = vmax.f32 %v7695, %v7759
        %v7872 = vmax.f32 %v7696, %v7760
        %v7873 = vmax.f32 %v7697, %v7761
        %v7874 = vmax.f32 %v7698, %v7762
        %v7875 = vmax.f32 %v7699, %v7763
        %v7876 = vmax.f32 %v7700, %v7764
        %v7877 = vmax.f32 %v7701, %v7765
        %v7878 = vmax.f32 %v7702, %v7766
        %v7879 = vmax.f32 %v7703, %v7767
        %v7880 = vmax.f32 %v7704, %v7768
        %v7881 = vmax.f32 %v7705, %v7769
        %v7882 = vmax.f32 %v7706, %v7770
        %v7883 = vmax.f32 %v7707, %v7771
        %v7884 = vmin.f32 %v7692, %v7756
        %v7885 = vmin.f32 %v7693, %v7757
        %v7886 = vmin.f32 %v7694, %v7758
        %v7887 = vmin.f32 %v7695, %v7759
        %v7888 = vmin.f32 %v7696, %v7760
        %v7889 = vmin.f32 %v7697, %v7761
        %v7890 = vmin.f32 %v7698, %v7762
        %v7891 = vmin.f32 %v7699, %v7763
        %v7892 = vmin.f32 %v7700, %v7764
        %v7893 = vmin.f32 %v7701, %v7765
        %v7894 = vmin.f32 %v7702, %v7766
        %v7895 = vmin.f32 %v7703, %v7767
        %v7896 = vmin.f32 %v7704, %v7768
        %v7897 = vmin.f32 %v7705, %v7769
        %v7898 = vmin.f32 %v7706, %v7770
        %v7899 = vmin.f32 %v7707, %v7771
        %v7900 = vmax.f32 %v7772, %v7804
        %v7901 = vmax.f32 %v7773, %v7805
        %v7902 = vmax.f32 %v7774, %v7806
        %v7903 = vmax.f32 %v7775, %v7807
        %v7904 = vmax.f32 %v7776, %v7808
        %v7905 = vmax.f32 %v7777, %v7809
        %v7906 = vmax.f32 %v7778, %v7810
        %v7907 = vmax.f32 %v7779, %v7811
        %v7908 = vmax.f32 %v7780, %v7812
        %v7909 = vmax.f32 %v7781, %v7813
        %v7910 = vmax.f32 %v7782, %v7814
        %v7911 = vmax.f32 %v7783, %v7815
        %v7912 = vmax.f32 %v7784, %v7816
        %v7913 = vmax.f32 %v7785, %v7817
        %v7914 = vmax.f32 %v7786, %v7818
        %v7915 = vmax.f32 %v7787, %v7819
        %v7916 = vmin.f32 %v7772, %v7804
        %v7917 = vmin.f32 %v7773, %v7805
        %v7918 = vmin.f32 %v7774, %v7806
        %v7919 = vmin.f32 %v7775, %v7807
        %v7920 = vmin.f32 %v7776, %v7808
        %v7921 = vmin.f32 %v7777, %v7809
        %v7922 = vmin.f32 %v7778, %v7810
        %v7923 = vmin.f32 %v7779, %v7811
        %v7924 = vmin.f32 %v7780, %v7812
        %v7925 = vmin.f32 %v7781, %v7813
        %v7926 = vmin.f32 %v7782, %v7814
        %v7927 = vmin.f32 %v7783, %v7815
        %v7928 = vmin.f32 %v7784, %v7816
        %v7929 = vmin.f32 %v7785, %v7817
        %v7930 = vmin.f32 %v7786, %v7818
        %v7931 = vmin.f32 %v7787, %v7819
        %v7932 = vmax.f32 %v7788, %v7820
        %v7933 = vmax.f32 %v7789, %v7821
        %v7934 = vmax.f32 %v7790, %v7822
        %v7935 = vmax.f32 %v7791, %v7823
        %v7936 = vmax.f32 %v7792, %v7824
        %v7937 = vmax.f32 %v7793, %v7825
        %v7938 = vmax.f32 %v7794, %v7826
        %v7939 = vmax.f32 %v7795, %v7827
        %v7940 = vmax.f32 %v7796, %v7828
        %v7941 = vmax.f32 %v7797, %v7829
        %v7942 = vmax.f32 %v7798, %v7830
        %v7943 = vmax.f32 %v7799, %v7831
        %v7944 = vmax.f32 %v7800, %v7832
        %v7945 = vmax.f32 %v7801, %v7833
        %v7946 = vmax.f32 %v7802, %v7834
        %v7947 = vmax.f32 %v7803, %v7835
        %v7948 = vmin.f32 %v7788, %v7820
        %v7949 = vmin.f32 %v7789, %v7821
        %v7950 = vmin.f32 %v7790, %v7822
        %v7951 = vmin.f32 %v7791, %v7823
        %v7952 = vmin.f32 %v7792, %v7824
        %v7953 = vmin.f32 %v7793, %v7825
        %v7954 = vmin.f32 %v7794, %v7826
        %v7955 = vmin.f32 %v7795, %v7827
        %v7956 = vmin.f32 %v7796, %v7828
        %v7957 = vmin.f32 %v7797, %v7829
        %v7958 = vmin.f32 %v7798, %v7830
        %v7959 = vmin.f32 %v7799, %v7831
        %v7960 = vmin.f32 %v7800, %v7832
        %v7961 = vmin.f32 %v7801, %v7833
        %v7962 = vmin.f32 %v7802, %v7834
        %v7963 = vmin.f32 %v7803, %v7835
        %v7964 = vmax.f32 %v7836, %v7868
        %v7965 = vmax.f32 %v7837, %v7869
        %v7966 = vmax.f32 %v7838, %v7870
        %v7967 = vmax.f32 %v7839, %v7871
        %v7968 = vmax.f32 %v7840, %v7872
        %v7969 = vmax.f32 %v7841, %v7873
        %v7970 = vmax.f32 %v7842, %v7874
        %v7971 = vmax.f32 %v7843, %v7875
        %v7972 = vmax.f32 %v7844, %v7876
        %v7973 = vmax.f32 %v7845, %v7877
        %v7974 = vmax.f32 %v7846, %v7878
        %v7975 = vmax.f32 %v7847, %v7879
        %v7976 = vmax.f32 %v7848, %v7880
        %v7977 = vmax.f32 %v7849, %v7881
        %v7978 = vmax.f32 %v7850, %v7882
        %v7979 = vmax.f32 %v7851, %v7883
        %v7980 = vmin.f32 %v7836, %v7868
        %v7981 = vmin.f32 %v7837, %v7869
        %v7982 = vmin.f32 %v7838, %v7870
        %v7983 = vmin.f32 %v7839, %v7871
        %v7984 = vmin.f32 %v7840, %v7872
        %v7985 = vmin.f32 %v7841, %v7873
        %v7986 = vmin.f32 %v7842, %v7874
        %v7987 = vmin.f32 %v7843, %v7875
        %v7988 = vmin.f32 %v7844, %v7876
        %v7989 = vmin.f32 %v7845, %v7877
        %v7990 = vmin.f32 %v7846, %v7878
        %v7991 = vmin.f32 %v7847, %v7879
        %v7992 = vmin.f32 %v7848, %v7880
        %v7993 = vmin.f32 %v7849, %v7881
        %v7994 = vmin.f32 %v7850, %v7882
        %v7995 = vmin.f32 %v7851, %v7883
        %v7996 = vmax.f32 %v7852, %v7884
        %v7997 = vmax.f32 %v7853, %v7885
        %v7998 = vmax.f32 %v7854, %v7886
        %v7999 = vmax.f32 %v7855, %v7887
        %v8000 = vmax.f32 %v7856, %v7888
        %v8001 = vmax.f32 %v7857, %v7889
        %v8002 = vmax.f32 %v7858, %v7890
        %v8003 = vmax.f32 %v7859, %v7891
        %v8004 = vmax.f32 %v7860, %v7892
        %v8005 = vmax.f32 %v7861, %v7893
        %v8006 = vmax.f32 %v7862, %v7894
        %v8007 = vmax.f32 %v7863, %v7895
        %v8008 = vmax.f32 %v7864, %v7896
        %v8009 = vmax.f32 %v7865, %v7897
        %v8010 = vmax.f32 %v7866, %v7898
        %v8011 = vmax.f32 %v7867, %v7899
        %v8012 = vmin.f32 %v7852, %v7884
        %v8013 = vmin.f32 %v7853, %v7885
        %v8014 = vmin.f32 %v7854, %v7886
        %v8015 = vmin.f32 %v7855, %v7887
        %v8016 = vmin.f32 %v7856, %v7888
        %v8017 = vmin.f32 %v7857, %v7889
        %v8018 = vmin.f32 %v7858, %v7890
        %v8019 = vmin.f32 %v7859, %v7891
        %v8020 = vmin.f32 %v7860, %v7892
        %v8021 = vmin.f32 %v7861, %v7893
        %v8022 = vmin.f32 %v7862, %v7894
        %v8023 = vmin.f32 %v7863, %v7895
        %v8024 = vmin.f32 %v7864, %v7896
        %v8025 = vmin.f32 %v7865, %v7897
        %v8026 = vmin.f32 %v7866, %v7898
        %v8027 = vmin.f32 %v7867, %v7899
        %v8028 = vmax.f32 %v7596, %v7628
        %v8029 = vmax.f32 %v7597, %v7629
        %v8030 = vmax.f32 %v7598, %v7630
        %v8031 = vmax.f32 %v7599, %v7631
        %v8032 = vmax.f32 %v7600, %v7632
        %v8033 = vmax.f32 %v7601, %v7633
        %v8034 = vmax.f32 %v7602, %v7634
        %v8035 = vmax.f32 %v7603, %v7635
        %v8036 = vmax.f32 %v7604, %v7636
        %v8037 = vmax.f32 %v7605, %v7637
        %v8038 = vmax.f32 %v7606, %v7638
        %v8039 = vmax.f32 %v7607, %v7639
        %v8040 = vmax.f32 %v7608, %v7640
        %v8041 = vmax.f32 %v7609, %v7641
        %v8042 = vmax.f32 %v7610, %v7642
        %v8043 = vmax.f32 %v7611, %v7643
        %v8044 = vmin.f32 %v7596, %v7628
        %v8045 = vmin.f32 %v7597, %v7629
        %v8046 = vmin.f32 %v7598, %v7630
        %v8047 = vmin.f32 %v7599, %v7631
        %v8048 = vmin.f32 %v7600, %v7632
        %v8049 = vmin.f32 %v7601, %v7633
        %v8050 = vmin.f32 %v7602, %v7634
        %v8051 = vmin.f32 %v7603, %v7635
        %v8052 = vmin.f32 %v7604, %v7636
        %v8053 = vmin.f32 %v7605, %v7637
        %v8054 = vmin.f32 %v7606, %v7638
        %v8055 = vmin.f32 %v7607, %v7639
        %v8056 = vmin.f32 %v7608, %v7640
        %v8057 = vmin.f32 %v7609, %v7641
        %v8058 = vmin.f32 %v7610, %v7642
        %v8059 = vmin.f32 %v7611, %v7643
        %v8060 = vmul.f32 %v7900, %v1917
        %v8061 = vmul.f32 %v7901, %v1917
        %v8062 = vmul.f32 %v7902, %v1918
        %v8063 = vmul.f32 %v7903, %v1918
        %v8064 = vmul.f32 %v7904, %v1919
        %v8065 = vmul.f32 %v7905, %v1919
        %v8066 = vmul.f32 %v7906, %v1920
        %v8067 = vmul.f32 %v7907, %v1920
        %v8068 = vmul.f32 %v7908, %v1921
        %v8069 = vmul.f32 %v7909, %v1921
        %v8070 = vmul.f32 %v7910, %v1922
        %v8071 = vmul.f32 %v7911, %v1922
        %v8072 = vmul.f32 %v7912, %v1923
        %v8073 = vmul.f32 %v7913, %v1923
        %v8074 = vmul.f32 %v7914, %v1924
        %v8075 = vmul.f32 %v7915, %v1924
        %v8076 = vmul.f32 %v7916, %v1951
        %v8077 = vmul.f32 %v7917, %v1951
        %v8078 = vmul.f32 %v7918, %v1952
        %v8079 = vmul.f32 %v7919, %v1952
        %v8080 = vmul.f32 %v7920, %v1953
        %v8081 = vmul.f32 %v7921, %v1953
        %v8082 = vmul.f32 %v7922, %v1954
        %v8083 = vmul.f32 %v7923, %v1954
        %v8084 = vmul.f32 %v7924, %v1955
        %v8085 = vmul.f32 %v7925, %v1955
        %v8086 = vmul.f32 %v7926, %v1956
        %v8087 = vmul.f32 %v7927, %v1956
        %v8088 = vmul.f32 %v7928, %v1957
        %v8089 = vmul.f32 %v7929, %v1957
        %v8090 = vmul.f32 %v7930, %v1958
        %v8091 = vmul.f32 %v7931, %v1958
        %v8092 = vmul.f32 %v7932, %v1985
        %v8093 = vmul.f32 %v7933, %v1985
        %v8094 = vmul.f32 %v7934, %v1986
        %v8095 = vmul.f32 %v7935, %v1986
        %v8096 = vmul.f32 %v7936, %v1987
        %v8097 = vmul.f32 %v7937, %v1987
        %v8098 = vmul.f32 %v7938, %v1988
        %v8099 = vmul.f32 %v7939, %v1988
        %v8100 = vmul.f32 %v7940, %v1989
        %v8101 = vmul.f32 %v7941, %v1989
        %v8102 = vmul.f32 %v7942, %v1990
        %v8103 = vmul.f32 %v7943, %v1990
        %v8104 = vmul.f32 %v7944, %v1991
        %v8105 = vmul.f32 %v7945, %v1991
        %v8106 = vmul.f32 %v7946, %v1992
        %v8107 = vmul.f32 %v7947, %v1992
        %v8108 = vmul.f32 %v7948, %v2019
        %v8109 = vmul.f32 %v7949, %v2019
        %v8110 = vmul.f32 %v7950, %v2020
        %v8111 = vmul.f32 %v7951, %v2020
        %v8112 = vmul.f32 %v7952, %v2021
        %v8113 = vmul.f32 %v7953, %v2021
        %v8114 = vmul.f32 %v7954, %v2022
        %v8115 = vmul.f32 %v7955, %v2022
        %v8116 = vmul.f32 %v7956, %v2023
        %v8117 = vmul.f32 %v7957, %v2023
        %v8118 = vmul.f32 %v7958, %v2024
        %v8119 = vmul.f32 %v7959, %v2024
        %v8120 = vmul.f32 %v7960, %v2025
        %v8121 = vmul.f32 %v7961, %v2025
        %v8122 = vmul.f32 %v7962, %v2026
        %v8123 = vmul.f32 %v7963, %v2026
        %v8124 = vmul.f32 %v7964, %v2053
        %v8125 = vmul.f32 %v7965, %v2053
        %v8126 = vmul.f32 %v7966, %v2054
        %v8127 = vmul.f32 %v7967, %v2054
        %v8128 = vmul.f32 %v7968, %v2055
        %v8129 = vmul.f32 %v7969, %v2055
        %v8130 = vmul.f32 %v7970, %v2056
        %v8131 = vmul.f32 %v7971, %v2056
        %v8132 = vmul.f32 %v7972, %v2057
        %v8133 = vmul.f32 %v7973, %v2057
        %v8134 = vmul.f32 %v7974, %v2058
        %v8135 = vmul.f32 %v7975, %v2058
        %v8136 = vmul.f32 %v7976, %v2059
        %v8137 = vmul.f32 %v7977, %v2059
        %v8138 = vmul.f32 %v7978, %v2060
        %v8139 = vmul.f32 %v7979, %v2060
        %v8140 = vmul.f32 %v7980, %v2087
        %v8141 = vmul.f32 %v7981, %v2087
        %v8142 = vmul.f32 %v7982, %v2088
        %v8143 = vmul.f32 %v7983, %v2088
        %v8144 = vmul.f32 %v7984, %v2089
        %v8145 = vmul.f32 %v7985, %v2089
        %v8146 = vmul.f32 %v7986, %v2090
        %v8147 = vmul.f32 %v7987, %v2090
        %v8148 = vmul.f32 %v7988, %v2091
        %v8149 = vmul.f32 %v7989, %v2091
        %v8150 = vmul.f32 %v7990, %v2092
        %v8151 = vmul.f32 %v7991, %v2092
        %v8152 = vmul.f32 %v7992, %v2093
        %v8153 = vmul.f32 %v7993, %v2093
        %v8154 = vmul.f32 %v7994, %v2094
        %v8155 = vmul.f32 %v7995, %v2094
        %v8156 = vmul.f32 %v7996, %v2121
        %v8157 = vmul.f32 %v7997, %v2121
        %v8158 = vmul.f32 %v7998, %v2122
        %v8159 = vmul.f32 %v7999, %v2122
        %v8160 = vmul.f32 %v8000, %v2123
        %v8161 = vmul.f32 %v8001, %v2123
        %v8162 = vmul.f32 %v8002, %v2124
        %v8163 = vmul.f32 %v8003, %v2124
        %v8164 = vmul.f32 %v8004, %v2125
        %v8165 = vmul.f32 %v8005, %v2125
        %v8166 = vmul.f32 %v8006, %v2126
        %v8167 = vmul.f32 %v8007, %v2126
        %v8168 = vmul.f32 %v8008, %v2127
        %v8169 = vmul.f32 %v8009, %v2127
        %v8170 = vmul.f32 %v8010, %v2128
        %v8171 = vmul.f32 %v8011, %v2128
        %v8172 = vmul.f32 %v8012, %v2155
        %v8173 = vmul.f32 %v8013, %v2155
        %v8174 = vmul.f32 %v8014, %v2156
        %v8175 = vmul.f32 %v8015, %v2156
        %v8176 = vmul.f32 %v8016, %v2157
        %v8177 = vmul.f32 %v8017, %v2157
        %v8178 = vmul.f32 %v8018, %v2158
        %v8179 = vmul.f32 %v8019, %v2158
        %v8180 = vmul.f32 %v8020, %v2159
        %v8181 = vmul.f32 %v8021, %v2159
        %v8182 = vmul.f32 %v8022, %v2160
        %v8183 = vmul.f32 %v8023, %v2160
        %v8184 = vmul.f32 %v8024, %v2161
        %v8185 = vmul.f32 %v8025, %v2161
        %v8186 = vmul.f32 %v8026, %v2162
        %v8187 = vmul.f32 %v8027, %v2162
        %v8188 = vmul.f32 %v8028, %v2189
        %v8189 = vmul.f32 %v8029, %v2189
        %v8190 = vmul.f32 %v8030, %v2190
        %v8191 = vmul.f32 %v8031, %v2190
        %v8192 = vmul.f32 %v8032, %v2191
        %v8193 = vmul.f32 %v8033, %v2191
        %v8194 = vmul.f32 %v8034, %v2192
        %v8195 = vmul.f32 %v8035, %v2192
        %v8196 = vmul.f32 %v8036, %v2193
        %v8197 = vmul.f32 %v8037, %v2193
        %v8198 = vmul.f32 %v8038, %v2194
        %v8199 = vmul.f32 %v8039, %v2194
        %v8200 = vmul.f32 %v8040, %v2195
        %v8201 = vmul.f32 %v8041, %v2195
        %v8202 = vmul.f32 %v8042, %v2196
        %v8203 = vmul.f32 %v8043, %v2196
        %v8204 = vmul.f32 %v8044, %v2223
        %v8205 = vmul.f32 %v8045, %v2223
        %v8206 = vmul.f32 %v8046, %v2224
        %v8207 = vmul.f32 %v8047, %v2224
        %v8208 = vmul.f32 %v8048, %v2225
        %v8209 = vmul.f32 %v8049, %v2225
        %v8210 = vmul.f32 %v8050, %v2226
        %v8211 = vmul.f32 %v8051, %v2226
        %v8212 = vmul.f32 %v8052, %v2227
        %v8213 = vmul.f32 %v8053, %v2227
        %v8214 = vmul.f32 %v8054, %v2228
        %v8215 = vmul.f32 %v8055, %v2228
        %v8216 = vmul.f32 %v8056, %v2229
        %v8217 = vmul.f32 %v8057, %v2229
        %v8218 = vmul.f32 %v8058, %v2230
        %v8219 = vmul.f32 %v8059, %v2230
        %v8220 = vadd.f32 %v8060, %v8076
        %v8221 = vadd.f32 %v8061, %v8077
        %v8222 = vadd.f32 %v8062, %v8078
        %v8223 = vadd.f32 %v8063, %v8079
        %v8224 = vadd.f32 %v8064, %v8080
        %v8225 = vadd.f32 %v8065, %v8081
        %v8226 = vadd.f32 %v8066, %v8082
        %v8227 = vadd.f32 %v8067, %v8083
        %v8228 = vadd.f32 %v8068, %v8084
        %v8229 = vadd.f32 %v8069, %v8085
        %v8230 = vadd.f32 %v8070, %v8086
        %v8231 = vadd.f32 %v8071, %v8087
        %v8232 = vadd.f32 %v8072, %v8088
        %v8233 = vadd.f32 %v8073, %v8089
        %v8234 = vadd.f32 %v8074, %v8090
        %v8235 = vadd.f32 %v8075, %v8091
        %v8236 = vadd.f32 %v8092, %v8108
        %v8237 = vadd.f32 %v8093, %v8109
        %v8238 = vadd.f32 %v8094, %v8110
        %v8239 = vadd.f32 %v8095, %v8111
        %v8240 = vadd.f32 %v8096, %v8112
        %v8241 = vadd.f32 %v8097, %v8113
        %v8242 = vadd.f32 %v8098, %v8114
        %v8243 = vadd.f32 %v8099, %v8115
        %v8244 = vadd.f32 %v8100, %v8116
        %v8245 = vadd.f32 %v8101, %v8117
        %v8246 = vadd.f32 %v8102, %v8118
        %v8247 = vadd.f32 %v8103, %v8119
        %v8248 = vadd.f32 %v8104, %v8120
        %v8249 = vadd.f32 %v8105, %v8121
        %v8250 = vadd.f32 %v8106, %v8122
        %v8251 = vadd.f32 %v8107, %v8123
        %v8252 = vadd.f32 %v8124, %v8140
        %v8253 = vadd.f32 %v8125, %v8141
        %v8254 = vadd.f32 %v8126, %v8142
        %v8255 = vadd.f32 %v8127, %v8143
        %v8256 = vadd.f32 %v8128, %v8144
        %v8257 = vadd.f32 %v8129, %v8145
        %v8258 = vadd.f32 %v8130, %v8146
        %v8259 = vadd.f32 %v8131, %v8147
        %v8260 = vadd.f32 %v8132, %v8148
        %v8261 = vadd.f32 %v8133, %v8149
        %v8262 = vadd.f32 %v8134, %v8150
        %v8263 = vadd.f32 %v8135, %v8151
        %v8264 = vadd.f32 %v8136, %v8152
        %v8265 = vadd.f32 %v8137, %v8153
        %v8266 = vadd.f32 %v8138, %v8154
        %v8267 = vadd.f32 %v8139, %v8155
        %v8268 = vadd.f32 %v8156, %v8172
        %v8269 = vadd.f32 %v8157, %v8173
        %v8270 = vadd.f32 %v8158, %v8174
        %v8271 = vadd.f32 %v8159, %v8175
        %v8272 = vadd.f32 %v8160, %v8176
        %v8273 = vadd.f32 %v8161, %v8177
        %v8274 = vadd.f32 %v8162, %v8178
        %v8275 = vadd.f32 %v8163, %v8179
        %v8276 = vadd.f32 %v8164, %v8180
        %v8277 = vadd.f32 %v8165, %v8181
        %v8278 = vadd.f32 %v8166, %v8182
        %v8279 = vadd.f32 %v8167, %v8183
        %v8280 = vadd.f32 %v8168, %v8184
        %v8281 = vadd.f32 %v8169, %v8185
        %v8282 = vadd.f32 %v8170, %v8186
        %v8283 = vadd.f32 %v8171, %v8187
        %v8284 = vadd.f32 %v8188, %v8204
        %v8285 = vadd.f32 %v8189, %v8205
        %v8286 = vadd.f32 %v8190, %v8206
        %v8287 = vadd.f32 %v8191, %v8207
        %v8288 = vadd.f32 %v8192, %v8208
        %v8289 = vadd.f32 %v8193, %v8209
        %v8290 = vadd.f32 %v8194, %v8210
        %v8291 = vadd.f32 %v8195, %v8211
        %v8292 = vadd.f32 %v8196, %v8212
        %v8293 = vadd.f32 %v8197, %v8213
        %v8294 = vadd.f32 %v8198, %v8214
        %v8295 = vadd.f32 %v8199, %v8215
        %v8296 = vadd.f32 %v8200, %v8216
        %v8297 = vadd.f32 %v8201, %v8217
        %v8298 = vadd.f32 %v8202, %v8218
        %v8299 = vadd.f32 %v8203, %v8219
        %v8300 = vadd.f32 %v8220, %v8236
        %v8301 = vadd.f32 %v8221, %v8237
        %v8302 = vadd.f32 %v8222, %v8238
        %v8303 = vadd.f32 %v8223, %v8239
        %v8304 = vadd.f32 %v8224, %v8240
        %v8305 = vadd.f32 %v8225, %v8241
        %v8306 = vadd.f32 %v8226, %v8242
        %v8307 = vadd.f32 %v8227, %v8243
        %v8308 = vadd.f32 %v8228, %v8244
        %v8309 = vadd.f32 %v8229, %v8245
        %v8310 = vadd.f32 %v8230, %v8246
        %v8311 = vadd.f32 %v8231, %v8247
        %v8312 = vadd.f32 %v8232, %v8248
        %v8313 = vadd.f32 %v8233, %v8249
        %v8314 = vadd.f32 %v8234, %v8250
        %v8315 = vadd.f32 %v8235, %v8251
        %v8316 = vadd.f32 %v8252, %v8268
        %v8317 = vadd.f32 %v8253, %v8269
        %v8318 = vadd.f32 %v8254, %v8270
        %v8319 = vadd.f32 %v8255, %v8271
        %v8320 = vadd.f32 %v8256, %v8272
        %v8321 = vadd.f32 %v8257, %v8273
        %v8322 = vadd.f32 %v8258, %v8274
        %v8323 = vadd.f32 %v8259, %v8275
        %v8324 = vadd.f32 %v8260, %v8276
        %v8325 = vadd.f32 %v8261, %v8277
        %v8326 = vadd.f32 %v8262, %v8278
        %v8327 = vadd.f32 %v8263, %v8279
        %v8328 = vadd.f32 %v8264, %v8280
        %v8329 = vadd.f32 %v8265, %v8281
        %v8330 = vadd.f32 %v8266, %v8282
        %v8331 = vadd.f32 %v8267, %v8283
        %v8332 = vadd.f32 %v8300, %v8316
        %v8333 = vadd.f32 %v8301, %v8317
        %v8334 = vadd.f32 %v8302, %v8318
        %v8335 = vadd.f32 %v8303, %v8319
        %v8336 = vadd.f32 %v8304, %v8320
        %v8337 = vadd.f32 %v8305, %v8321
        %v8338 = vadd.f32 %v8306, %v8322
        %v8339 = vadd.f32 %v8307, %v8323
        %v8340 = vadd.f32 %v8308, %v8324
        %v8341 = vadd.f32 %v8309, %v8325
        %v8342 = vadd.f32 %v8310, %v8326
        %v8343 = vadd.f32 %v8311, %v8327
        %v8344 = vadd.f32 %v8312, %v8328
        %v8345 = vadd.f32 %v8313, %v8329
        %v8346 = vadd.f32 %v8314, %v8330
        %v8347 = vadd.f32 %v8315, %v8331
        %v8348 = vadd.f32 %v8332, %v8284
        %v8349 = vadd.f32 %v8333, %v8285
        %v8350 = vadd.f32 %v8334, %v8286
        %v8351 = vadd.f32 %v8335, %v8287
        %v8352 = vadd.f32 %v8336, %v8288
        %v8353 = vadd.f32 %v8337, %v8289
        %v8354 = vadd.f32 %v8338, %v8290
        %v8355 = vadd.f32 %v8339, %v8291
        %v8356 = vadd.f32 %v8340, %v8292
        %v8357 = vadd.f32 %v8341, %v8293
        %v8358 = vadd.f32 %v8342, %v8294
        %v8359 = vadd.f32 %v8343, %v8295
        %v8360 = vadd.f32 %v8344, %v8296
        %v8361 = vadd.f32 %v8345, %v8297
        %v8362 = vadd.f32 %v8346, %v8298
        %v8363 = vadd.f32 %v8347, %v8299
        %v8364 = vmul.f32 %v8348, %v8348
        %v8365 = vmul.f32 %v8349, %v8349
        %v8366 = vmul.f32 %v8350, %v8350
        %v8367 = vmul.f32 %v8351, %v8351
        %v8368 = vmul.f32 %v8352, %v8352
        %v8369 = vmul.f32 %v8353, %v8353
        %v8370 = vmul.f32 %v8354, %v8354
        %v8371 = vmul.f32 %v8355, %v8355
        %v8372 = vmul.f32 %v8356, %v8356
        %v8373 = vmul.f32 %v8357, %v8357
        %v8374 = vmul.f32 %v8358, %v8358
        %v8375 = vmul.f32 %v8359, %v8359
        %v8376 = vmul.f32 %v8360, %v8360
        %v8377 = vmul.f32 %v8361, %v8361
        %v8378 = vmul.f32 %v8362, %v8362
        %v8379 = vmul.f32 %v8363, %v8363
        %v8396 = vrot.slane %v8366, 7
        %v8397 = vsel %vm2432, %v8396, %v8364
        %v8398 = vrot.slane %v8368, 6
        %v8399 = vsel %vm2435, %v8398, %v8397
        %v8400 = vrot.slane %v8370, 5
        %v8401 = vsel %vm2438, %v8400, %v8399
        %v8402 = vrot.slane %v8372, 4
        %v8403 = vsel %vm2441, %v8402, %v8401
        %v8404 = vrot.slane %v8374, 3
        %v8405 = vsel %vm2444, %v8404, %v8403
        %v8406 = vrot.slane %v8376, 2
        %v8407 = vsel %vm2447, %v8406, %v8405
        %v8408 = vrot.slane %v8378, 1
        %v8409 = vsel %vm2450, %v8408, %v8407
        %v8410 = vrot.slane %v8367, 7
        %v8411 = vsel %vm2432, %v8410, %v8365
        %v8412 = vrot.slane %v8369, 6
        %v8413 = vsel %vm2435, %v8412, %v8411
        %v8414 = vrot.slane %v8371, 5
        %v8415 = vsel %vm2438, %v8414, %v8413
        %v8416 = vrot.slane %v8373, 4
        %v8417 = vsel %vm2441, %v8416, %v8415
        %v8418 = vrot.slane %v8375, 3
        %v8419 = vsel %vm2444, %v8418, %v8417
        %v8420 = vrot.slane %v8377, 2
        %v8421 = vsel %vm2447, %v8420, %v8419
        %v8422 = vrot.slane %v8379, 1
        %v8423 = vsel %vm2450, %v8422, %v8421
        %v8426 = vadd.f32 %v8409, %v8423
        %8427 = vadd.xlane.f32.xlu0 %v8426
        %v8428 = vpop.xlane.xlu0 %8427
        %v8429 = vadd.f32 %v6443, %v8428
        %v8446 = vrot.slane %v8350, 7
        %v8447 = vsel %vm2432, %v8446, %v8348
        %v8448 = vrot.slane %v8352, 6
        %v8449 = vsel %vm2435, %v8448, %v8447
        %v8450 = vrot.slane %v8354, 5
        %v8451 = vsel %vm2438, %v8450, %v8449
        %v8452 = vrot.slane %v8356, 4
        %v8453 = vsel %vm2441, %v8452, %v8451
        %v8454 = vrot.slane %v8358, 3
        %v8455 = vsel %vm2444, %v8454, %v8453
        %v8456 = vrot.slane %v8360, 2
        %v8457 = vsel %vm2447, %v8456, %v8455
        %v8458 = vrot.slane %v8362, 1
        %v8459 = vsel %vm2450, %v8458, %v8457
        %v8460 = vrot.slane %v8351, 7
        %v8461 = vsel %vm2432, %v8460, %v8349
        %v8462 = vrot.slane %v8353, 6
        %v8463 = vsel %vm2435, %v8462, %v8461
        %v8464 = vrot.slane %v8355, 5
        %v8465 = vsel %vm2438, %v8464, %v8463
        %v8466 = vrot.slane %v8357, 4
        %v8467 = vsel %vm2441, %v8466, %v8465
        %v8468 = vrot.slane %v8359, 3
        %v8469 = vsel %vm2444, %v8468, %v8467
        %v8470 = vrot.slane %v8361, 2
        %v8471 = vsel %vm2447, %v8470, %v8469
        %v8472 = vrot.slane %v8363, 1
        %v8473 = vsel %vm2450, %v8472, %v8471
        %8476 = vst [vmem:[%s192 + $0x30] sm:$0xff] %v8459
        %8477 = vst [vmem:[%s192 + $0x38] sm:$0xff] %v8473
        %v8478 = vrsqrt.pop %v8429
        %v8479 = vmul.f32 %v8429, %v8478
        %vm8480 = vcmp.eq.f32.partialorder %v8429, inf
        %v8481 = vsel %vm8480, %v8429, %v8479
        %vm8482 = vcmp.eq.f32.partialorder %v8429, 0.0
        %v8483 = vand.u32 %v8429, 2147483648
        %v8484 = vsel %vm8482, %v8483, %v8481
        %v8485 = vadd.f32 %v8484, 1e-08
        %v8486 = vld [vmem:[%s192] sm:$0xff]
        %v8487 = vld [vmem:[%s192 + $0x8] sm:$0xff]
        %v8488 = vld [vmem:[%s192 + $0x10] sm:$0xff]
        %v8489 = vld [vmem:[%s192 + $0x18] sm:$0xff]
        %v8490 = vld [vmem:[%s192 + $0x20] sm:$0xff]
        %v8491 = vld [vmem:[%s192 + $0x28] sm:$0xff]
        %v8492 = vld [vmem:[%s192 + $0x30] sm:$0xff]
        %v8493 = vld [vmem:[%s192 + $0x38] sm:$0xff]
        %v8494 = vrcp.pop %v8485
        %v8495 = vmul.f32 %v8486, %v8494
        %v8496 = vmul.f32 %v8487, %v8494
        %v8497 = vmul.f32 %v8488, %v8494
        %v8498 = vmul.f32 %v8489, %v8494
        %v8499 = vmul.f32 %v8490, %v8494
        %v8500 = vmul.f32 %v8491, %v8494
        %v8501 = vmul.f32 %v8492, %v8494
        %v8502 = vmul.f32 %v8493, %v8494
        %8503 = vst [vmem:[%s192] sm:$0xff] %v8495
        %8504 = vst [vmem:[%s192 + $0x8] sm:$0xff] %v8496
        %8505 = vst [vmem:[%s192 + $0x10] sm:$0xff] %v8497
        %8506 = vst [vmem:[%s192 + $0x18] sm:$0xff] %v8498
        %8507 = vst [vmem:[%s192 + $0x20] sm:$0xff] %v8499
        %8508 = vst [vmem:[%s192 + $0x28] sm:$0xff] %v8500
        %8509 = vst [vmem:[%s192 + $0x30] sm:$0xff] %v8501
        %8510 = vst [vmem:[%s192 + $0x38] sm:$0xff] %v8502
        %s8511 = sand.u32 %s103, 1
        %s8512 = scalar_lea.sflag [#allocation3], %s8511
        %s8513 = sand.u32 %s103, 1
        %s8514 = smul.addr %s8513, 64
        %s8515 = scalar_lea.vmem [#allocation2], %s8514
        // Predicated region
        $region33: #{_forward.1} parent=31 // pred_check
          %p8516 = pneg %p113
        $region34: #{_forward.1} parent=31 // pred_check_branch
          %8518 = sbr.rel (%p8516) target = $region36
        $region35: #{_forward.1} parent=31 // pred_region
          %s8520 = ssub.s32 1024, 1024
          %8521 = vsyncadd %s8512, %s8520
          %s8522 = smul.addr %s17, 8
          %s8523 = smul.addr %s8522, 128
          %s8524 = scalar_lea.hbm %s3, %s8523
          %s8526 = sshll.u32 %s8515, 4
          %s8527 = int_to_ptr.vmem [resolvable:$true] %s8526
          %8529 = dma.vmem_to_hbm [thread:$0]  %s8527, 1024, %s8524, %s8512
        $region36: #{_forward.1} parent=31 // pred_fallthru
          _
      $region32: #{_forward.1} parent=5 // pred_fallthru
        _
      %p8530 = scmp.le.s32.totalorder 2, %s12
      // Predicated region
      $region37: #{_forward.1} parent=5 // pred_check
        %p8531 = pneg %p8530
      $region38: #{_forward.1} parent=5 // pred_check_branch
        %8533 = sbr.rel (%p8531) target = $region40
      $region39: #{_forward.1} parent=5 // pred_region
        %s8534 = ssub.s32 %s12, 2
        // Predicated region
        $region41: #{_forward.1} parent=39 // pred_check
          %p8535 = pneg %p119
        $region42: #{_forward.1} parent=39 // pred_check_branch
          %8537 = sbr.rel (%p8535) target = $region44
        $region43: #{_forward.1} parent=39 // pred_region
          %s8538 = sand.u32 %s104, 1
          %s8539 = scalar_lea.sflag [#allocation3], %s8538
          %s8540 = sand.u32 %s104, 1
          %s8541 = smul.addr %s8540, 64
          %s8542 = scalar_lea.vmem [#allocation2], %s8541
          %8543 = dma.done %s8539, 1024
        $region44: #{_forward.1} parent=39 // pred_fallthru
          _
      $region40: #{_forward.1} parent=5 // pred_fallthru
        _
    $region6: #{_forward.1} parent=1 // loop_footer
      %s16 = sadd.s32 1, %s12
    $region7: #{_forward.1} parent=1 // loop_footer_branch
      %11 = sbr.rel target = $region3
    $region8: #{_forward.1} parent=1 // loop_exit
      _
    %8544 = vsyncpa [#allocation3], 1
    %s8545 = scalar_lea.sflag [#allocation3], 1
    %8546 = vsyncpa %s8545, 1

</llo_original>
